<compile_context>
chip_gen: v6e
topology: v6e:2x2x1
jax: 0.10.0
libtpu: 0.0.40
codegen_flags: <defaults>
</compile_context>

<pallas_src>
import functools
import math

import jax
import jax.numpy as jnp
from jax import lax
from jax.experimental import pallas as pl
from jax.experimental.pallas import tpu as pltpu

EPS = 1e-5  # nn.LayerNorm / TransformerEncoderLayer default eps


# ------------------------------ small helpers --------------------------------
def _ln(x, g, b):
    """LayerNorm in f32 (population variance, eps=1e-5)."""
    mu = jnp.mean(x, axis=-1, keepdims=True)
    var = jnp.mean((x - mu) ** 2, axis=-1, keepdims=True)
    return (x - mu) * lax.rsqrt(var + EPS) * g + b


def _mm(a, b):
    """bf16 MXU matmul with f32 accumulation."""
    return jnp.dot(a.astype(jnp.bfloat16), b.astype(jnp.bfloat16),
                   preferred_element_type=jnp.float32)


def _bmm(eq, a, b):
    """bag-batched bf16 einsum with f32 accumulation."""
    return jnp.einsum(eq, a.astype(jnp.bfloat16), b.astype(jnp.bfloat16),
                      preferred_element_type=jnp.float32)


def _const_spec(shape):
    """Full-array block whose index_map is constant across the 1-D grid."""
    nd = len(shape)
    return pl.BlockSpec(shape, lambda g, nd=nd: (0,) * nd)


def _choose_bag_tile(B, N, target_rows=256):
    """Pick a bag-tile size TB that divides B, keeps TB*N rows near the target
    (MXU fill / bounded VMEM — important on v7x's smaller VMEM) and, when
    possible, leaves >=2 grid steps for megacore / pipelining."""
    divisors = [t for t in range(1, B + 1) if B % t == 0]
    fitting = [t for t in divisors if t * N <= max(N, target_rows)]
    multi = [t for t in fitting if B // t >= 2]
    return max(multi) if multi else max(fitting)


# -------- fused kernel: depth block + transformer layer + residual path -------
def depth_step_kernel(*refs, num_heads, num_chain):
    x_ref, img_ref = refs[0], refs[1]
    rest = refs[2:]
    chain = [rest[4 * i: 4 * i + 4] for i in range(num_chain)]
    t0 = 4 * num_chain
    (wq, bq, wk, bk, wv, bv, wo, bo,
     g1, be1, w1, b1, w2, b2, g2, be2) = rest[t0:t0 + 16]
    rw, rb = rest[t0 + 16], rest[t0 + 17]
    o_ref = rest[t0 + 18]

    tb, n, _ = x_ref.shape
    rows = tb * n
    d = o_ref.shape[-1]
    dh = d // num_heads
    scale = 1.0 / math.sqrt(dh)

    # ---- depth block: 5x fused Linear -> Tanh -> LayerNorm, batched over rows
    h = x_ref[...].reshape(rows, x_ref.shape[-1]).astype(jnp.float32)
    for (w, b, g, be) in chain:
        h = _ln(jnp.tanh(_mm(h, w[...]) + b[...]), g[...], be[...])

    # ---- transformer encoder layer (post-norm) -------------------------------
    # position-wise projections batched over all TB*N rows
    q = _mm(h, wq[...]) + bq[...]
    k = _mm(h, wk[...]) + bk[...]
    v = _mm(h, wv[...]) + bv[...]
    q3 = q.reshape(tb, n, d)
    k3 = k.reshape(tb, n, d)
    v3 = v.reshape(tb, n, d)

    wo_m = wo[...]
    att = jnp.zeros((rows, d), jnp.float32)
    for hd in range(num_heads):  # static loop (nhead=2 in this module)
        sl = slice(hd * dh, (hd + 1) * dh)
        # bag-batched scores / AV; softmax statistics in f32
        s = _bmm('bnd,bmd->bnm', q3[:, :, sl] * scale, k3[:, :, sl])  # (tb,n,n)
        s = s - jnp.max(s, axis=-1, keepdims=True)
        p = jnp.exp(s)
        p = p * pl.reciprocal(jnp.sum(p, axis=-1, keepdims=True), approx=True)
        o_h = _bmm('bnm,bmd->bnd', p, v3[:, :, sl])                   # (tb,n,dh)
        # accumulate through the matching row-slice of the output projection
        # (equivalent to concat(heads) @ wo, without the concat/relayout)
        att = att + _mm(o_h.reshape(rows, dh), wo_m[sl, :])
    att = att + bo[...]

    src = _ln(h + att, g1[...], be1[...])                  # norm1(x + attn)
    hid = jnp.maximum(_mm(src, w1[...]) + b1[...], 0.0)    # relu(linear1)
    ff = _mm(hid, w2[...]) + b2[...]                       # linear2
    src = _ln(src + ff, g2[...], be2[...])                 # norm2(src + ffn)

    # ---- residual path: x + relu(res(img)), fused into the same kernel -------
    img2 = img_ref[...].reshape(rows, img_ref.shape[-1]).astype(jnp.float32)
    r = jnp.maximum(_mm(img2, rw[...]) + rb[...], 0.0)
    o_ref[...] = (src + r).reshape(tb, n, d).astype(o_ref.dtype)


# ------------------ head kernel: LayerNorm -> Linear (padded) -----------------
def mlp_head_kernel(x_ref, g_ref, be_ref, w_ref, b_ref, o_ref):
    xn = _ln(x_ref[...].astype(jnp.float32), g_ref[...], be_ref[...])
    o_ref[...] = (_mm(xn, w_ref[...]) + b_ref[...]).astype(o_ref.dtype)


# ------------------------------ pallas_call glue ------------------------------
def _depth_step(x, img, chain, tp, res, *, num_heads, tb):
    B, N, in_d = x.shape
    P = img.shape[-1]
    D = tp["wo"].shape[-1]

    chain_args = [p for layer in chain for p in layer]
    trans_args = [tp["wq"], tp["bq"], tp["wk"], tp["bk"], tp["wv"], tp["bv"],
                  tp["wo"], tp["bo"], tp["ln1_g"], tp["ln1_b"],
                  tp["w1"], tp["b1"], tp["w2"], tp["b2"],
                  tp["ln2_g"], tp["ln2_b"]]
    rw, rb = res
    args = [x, img, *chain_args, *trans_args, rw, rb]

    in_specs = [pl.BlockSpec((tb, N, in_d), lambda g: (g, 0, 0)),
                pl.BlockSpec((tb, N, P), lambda g: (g, 0, 0))]
    # weights / biases / LN params: full-array blocks, constant index_map
    # (Pallas skips re-fetching blocks whose index does not change across steps).
    in_specs += [_const_spec(a.shape) for a in args[2:]]

    return pl.pallas_call(
        functools.partial(depth_step_kernel,
                          num_heads=num_heads, num_chain=len(chain)),
        out_shape=jax.ShapeDtypeStruct((B, N, D), jnp.float32),
        grid=(B // tb,),
        in_specs=in_specs,
        out_specs=pl.BlockSpec((tb, N, D), lambda g: (g, 0, 0)),
        compiler_params=pltpu.CompilerParams(dimension_semantics=("parallel",)),
    )(*args)


def _mlp_head(x2, head, num_classes):
    rows, d = x2.shape
    hg, hbe, hw_pad, hb_pad = head
    c_pad = hw_pad.shape[1]
    tm = rows if rows <= 512 else 512
    out = pl.pallas_call(
        mlp_head_kernel,
        out_shape=jax.ShapeDtypeStruct((rows, c_pad), jnp.float32),
        grid=(pl.cdiv(rows, tm),),
        in_specs=[pl.BlockSpec((tm, d), lambda i: (i, 0)),
                  _const_spec(hg.shape), _const_spec(hbe.shape),
                  _const_spec(hw_pad.shape), _const_spec(hb_pad.shape)],
        out_specs=pl.BlockSpec((tm, c_pad), lambda i: (i, 0)),
        compiler_params=pltpu.CompilerParams(dimension_semantics=("parallel",)),
    )(x2, hg, hbe, hw_pad, hb_pad)
    return out[:, :num_classes]   # drop lane padding


# ------------------------------- parameter init -------------------------------
def init_params(key, num_classes, patch_dim, dim, depth, dff=2048, nhead=2):
    keys = iter(jax.random.split(key, 4096))

    def linear(in_d, out_d):
        w = jax.random.normal(next(keys), (in_d, out_d), jnp.float32) / jnp.sqrt(
            jnp.float32(in_d))
        b = 0.01 * jax.random.normal(next(keys), (1, out_d), jnp.float32)
        return w, b

    def blin(in_d, out_d):                       # bf16-stored matmul weight
        w, b = linear(in_d, out_d)
        return w.astype(jnp.bfloat16), b

    def ln(d):
        return jnp.ones((1, d), jnp.float32), jnp.zeros((1, d), jnp.float32)

    params = dict(dim=dim, depth=depth, num_classes=num_classes, nhead=nhead)
    depth_blocks, trans_blocks, res_blocks = [], [], []
    for i in range(depth):
        in_d = patch_dim if i == 0 else dim
        dims = [(in_d, 2 * dim), (2 * dim, 4 * dim), (4 * dim, 2 * dim),
                (2 * dim, 2 * dim), (2 * dim, dim)]
        blk = []
        for a, b_ in dims:
            w, b = blin(a, b_)
            g, be = ln(b_)
            blk.append((w, b, g, be))
        depth_blocks.append(blk)

        wq, bq = blin(dim, dim)
        wk, bk = blin(dim, dim)
        wv, bv = blin(dim, dim)
        wo, bo = blin(dim, dim)
        g1, be1 = ln(dim)
        w1, b1 = blin(dim, dff)      # dim_feedforward=2048 (PyTorch default)
        w2, b2 = blin(dff, dim)
        g2, be2 = ln(dim)
        trans_blocks.append(dict(wq=wq, wk=wk, wv=wv, bq=bq, bk=bk, bv=bv,
                                 wo=wo, bo=bo, ln1_g=g1, ln1_b=be1,
                                 w1=w1, b1=b1, w2=w2, b2=b2,
                                 ln2_g=g2, ln2_b=be2))
        res_blocks.append(blin(patch_dim, dim))

    hg, hbe = ln(dim)
    hw, hb = linear(dim, num_classes)
    c_pad = ((num_classes + 127) // 128) * 128   # lane-dense (multiple of 128)
    hw_pad = jnp.zeros((dim, c_pad), jnp.float32).at[:, :num_classes].set(hw)
    hb_pad = jnp.zeros((1, c_pad), jnp.float32).at[:, :num_classes].set(hb)
    params.update(depth_blocks=depth_blocks, trans_blocks=trans_blocks,
                  res_blocks=res_blocks,
                  head=(hg, hbe, hw_pad.astype(jnp.bfloat16), hb_pad))
    return params


# --------------------------------- forward ------------------------------------
def iibmil_encoder_forward(img, params):
    # couple=True path: the NestedTensor mask is unused in the reference forward
    B, N, P = img.shape
    D = params["dim"]
    H = params["nhead"]
    C = params["num_classes"]
    assert D % H == 0, "d_model must be divisible by nhead"

    tb = _choose_bag_tile(B, N)

    x = img
    for i in range(params["depth"]):
        # one fused kernel per depth iteration:
        #   5x(Linear-Tanh-LN) -> TransformerEncoderLayer -> + relu(res(img))
        x = _depth_step(x, img,
                        params["depth_blocks"][i],
                        params["trans_blocks"][i],
                        params["res_blocks"][i],
                        num_heads=H, tb=tb)

    logits = _mlp_head(x.reshape(B * N, D), params["head"], C)
    return logits.reshape(B, N, C), x


# TODO(synk): dropout layers are eval-mode identities and are intentionally omitted.

if __name__ == "__main__":
    key = jax.random.PRNGKey(0)
    k_img, k_par = jax.random.split(key)

    B, N, PATCH_DIM, DIM, DEPTH, NUM_CLASSES = 2, 8, 16, 32, 2, 3
    img = jax.random.normal(k_img, (B, N, PATCH_DIM), jnp.float32)
    params = init_params(k_par, NUM_CLASSES, PATCH_DIM, DIM, DEPTH)

    fwd = jax.jit(functools.partial(iibmil_encoder_forward, params=params))
    logits, feats = fwd(img)
    jax.block_until_ready(logits)
    jax.block_until_ready(feats)

    assert logits.shape == (B, N, NUM_CLASSES)
    assert feats.shape == (B, N, DIM)
    print("KERNEL_OK")
</pallas_src>

<mosaic_0001>
module attributes {stable_mosaic.version = 11 : i64} {
  func.func @depth_step_kernel(%arg0: i32, %arg1: memref<1x8x16xf32, #tpu.memory_space<vmem>>, %arg2: memref<1x8x16xf32, #tpu.memory_space<vmem>>, %arg3: memref<16x64xbf16, #tpu.memory_space<vmem>>, %arg4: memref<1x64xf32, #tpu.memory_space<vmem>>, %arg5: memref<1x64xf32, #tpu.memory_space<vmem>>, %arg6: memref<1x64xf32, #tpu.memory_space<vmem>>, %arg7: memref<64x128xbf16, #tpu.memory_space<vmem>>, %arg8: memref<1x128xf32, #tpu.memory_space<vmem>>, %arg9: memref<1x128xf32, #tpu.memory_space<vmem>>, %arg10: memref<1x128xf32, #tpu.memory_space<vmem>>, %arg11: memref<128x64xbf16, #tpu.memory_space<vmem>>, %arg12: memref<1x64xf32, #tpu.memory_space<vmem>>, %arg13: memref<1x64xf32, #tpu.memory_space<vmem>>, %arg14: memref<1x64xf32, #tpu.memory_space<vmem>>, %arg15: memref<64x64xbf16, #tpu.memory_space<vmem>>, %arg16: memref<1x64xf32, #tpu.memory_space<vmem>>, %arg17: memref<1x64xf32, #tpu.memory_space<vmem>>, %arg18: memref<1x64xf32, #tpu.memory_space<vmem>>, %arg19: memref<64x32xbf16, #tpu.memory_space<vmem>>, %arg20: memref<1x32xf32, #tpu.memory_space<vmem>>, %arg21: memref<1x32xf32, #tpu.memory_space<vmem>>, %arg22: memref<1x32xf32, #tpu.memory_space<vmem>>, %arg23: memref<32x32xbf16, #tpu.memory_space<vmem>>, %arg24: memref<1x32xf32, #tpu.memory_space<vmem>>, %arg25: memref<32x32xbf16, #tpu.memory_space<vmem>>, %arg26: memref<1x32xf32, #tpu.memory_space<vmem>>, %arg27: memref<32x32xbf16, #tpu.memory_space<vmem>>, %arg28: memref<1x32xf32, #tpu.memory_space<vmem>>, %arg29: memref<32x32xbf16, #tpu.memory_space<vmem>>, %arg30: memref<1x32xf32, #tpu.memory_space<vmem>>, %arg31: memref<1x32xf32, #tpu.memory_space<vmem>>, %arg32: memref<1x32xf32, #tpu.memory_space<vmem>>, %arg33: memref<32x2048xbf16, #tpu.memory_space<vmem>>, %arg34: memref<1x2048xf32, #tpu.memory_space<vmem>>, %arg35: memref<2048x32xbf16, #tpu.memory_space<vmem>>, %arg36: memref<1x32xf32, #tpu.memory_space<vmem>>, %arg37: memref<1x32xf32, #tpu.memory_space<vmem>>, %arg38: memref<1x32xf32, #tpu.memory_space<vmem>>, %arg39: memref<16x32xbf16, #tpu.memory_space<vmem>>, %arg40: memref<1x32xf32, #tpu.memory_space<vmem>>, %arg41: memref<1x8x32xf32, #tpu.memory_space<vmem>>) attributes {dimension_semantics = [#tpu.dimension_semantics<parallel>], iteration_bounds = array<i64: 2>, scalar_prefetch = 0 : i64, scratch_operands = 0 : i64, tpu.core_type = #tpu.core_type<tc>, window_params = [{transform_indices = @transform_0, window_bounds = array<i64: 1, 8, 16>}, {transform_indices = @transform_1, window_bounds = array<i64: 1, 8, 16>}, {pipeline_mode = #tpu.pipeline_mode<synchronous>, transform_indices = @transform_2, window_bounds = array<i64: 16, 64>}, {pipeline_mode = #tpu.pipeline_mode<synchronous>, transform_indices = @transform_3, window_bounds = array<i64: 1, 64>}, {pipeline_mode = #tpu.pipeline_mode<synchronous>, transform_indices = @transform_4, window_bounds = array<i64: 1, 64>}, {pipeline_mode = #tpu.pipeline_mode<synchronous>, transform_indices = @transform_5, window_bounds = array<i64: 1, 64>}, {pipeline_mode = #tpu.pipeline_mode<synchronous>, transform_indices = @transform_6, window_bounds = array<i64: 64, 128>}, {pipeline_mode = #tpu.pipeline_mode<synchronous>, transform_indices = @transform_7, window_bounds = array<i64: 1, 128>}, {pipeline_mode = #tpu.pipeline_mode<synchronous>, transform_indices = @transform_8, window_bounds = array<i64: 1, 128>}, {pipeline_mode = #tpu.pipeline_mode<synchronous>, transform_indices = @transform_9, window_bounds = array<i64: 1, 128>}, {pipeline_mode = #tpu.pipeline_mode<synchronous>, transform_indices = @transform_10, window_bounds = array<i64: 128, 64>}, {pipeline_mode = #tpu.pipeline_mode<synchronous>, transform_indices = @transform_11, window_bounds = array<i64: 1, 64>}, {pipeline_mode = #tpu.pipeline_mode<synchronous>, transform_indices = @transform_12, window_bounds = array<i64: 1, 64>}, {pipeline_mode = #tpu.pipeline_mode<synchronous>, transform_indices = @transform_13, window_bounds = array<i64: 1, 64>}, {pipeline_mode = #tpu.pipeline_mode<synchronous>, transform_indices = @transform_14, window_bounds = array<i64: 64, 64>}, {pipeline_mode = #tpu.pipeline_mode<synchronous>, transform_indices = @transform_15, window_bounds = array<i64: 1, 64>}, {pipeline_mode = #tpu.pipeline_mode<synchronous>, transform_indices = @transform_16, window_bounds = array<i64: 1, 64>}, {pipeline_mode = #tpu.pipeline_mode<synchronous>, transform_indices = @transform_17, window_bounds = array<i64: 1, 64>}, {pipeline_mode = #tpu.pipeline_mode<synchronous>, transform_indices = @transform_18, window_bounds = array<i64: 64, 32>}, {pipeline_mode = #tpu.pipeline_mode<synchronous>, transform_indices = @transform_19, window_bounds = array<i64: 1, 32>}, {pipeline_mode = #tpu.pipeline_mode<synchronous>, transform_indices = @transform_20, window_bounds = array<i64: 1, 32>}, {pipeline_mode = #tpu.pipeline_mode<synchronous>, transform_indices = @transform_21, window_bounds = array<i64: 1, 32>}, {pipeline_mode = #tpu.pipeline_mode<synchronous>, transform_indices = @transform_22, window_bounds = array<i64: 32, 32>}, {pipeline_mode = #tpu.pipeline_mode<synchronous>, transform_indices = @transform_23, window_bounds = array<i64: 1, 32>}, {pipeline_mode = #tpu.pipeline_mode<synchronous>, transform_indices = @transform_24, window_bounds = array<i64: 32, 32>}, {pipeline_mode = #tpu.pipeline_mode<synchronous>, transform_indices = @transform_25, window_bounds = array<i64: 1, 32>}, {pipeline_mode = #tpu.pipeline_mode<synchronous>, transform_indices = @transform_26, window_bounds = array<i64: 32, 32>}, {pipeline_mode = #tpu.pipeline_mode<synchronous>, transform_indices = @transform_27, window_bounds = array<i64: 1, 32>}, {pipeline_mode = #tpu.pipeline_mode<synchronous>, transform_indices = @transform_28, window_bounds = array<i64: 32, 32>}, {pipeline_mode = #tpu.pipeline_mode<synchronous>, transform_indices = @transform_29, window_bounds = array<i64: 1, 32>}, {pipeline_mode = #tpu.pipeline_mode<synchronous>, transform_indices = @transform_30, window_bounds = array<i64: 1, 32>}, {pipeline_mode = #tpu.pipeline_mode<synchronous>, transform_indices = @transform_31, window_bounds = array<i64: 1, 32>}, {pipeline_mode = #tpu.pipeline_mode<synchronous>, transform_indices = @transform_32, window_bounds = array<i64: 32, 2048>}, {pipeline_mode = #tpu.pipeline_mode<synchronous>, transform_indices = @transform_33, window_bounds = array<i64: 1, 2048>}, {pipeline_mode = #tpu.pipeline_mode<synchronous>, transform_indices = @transform_34, window_bounds = array<i64: 2048, 32>}, {pipeline_mode = #tpu.pipeline_mode<synchronous>, transform_indices = @transform_35, window_bounds = array<i64: 1, 32>}, {pipeline_mode = #tpu.pipeline_mode<synchronous>, transform_indices = @transform_36, window_bounds = array<i64: 1, 32>}, {pipeline_mode = #tpu.pipeline_mode<synchronous>, transform_indices = @transform_37, window_bounds = array<i64: 1, 32>}, {pipeline_mode = #tpu.pipeline_mode<synchronous>, transform_indices = @transform_38, window_bounds = array<i64: 16, 32>}, {pipeline_mode = #tpu.pipeline_mode<synchronous>, transform_indices = @transform_39, window_bounds = array<i64: 1, 32>}, {transform_indices = @transform_40, window_bounds = array<i64: 1, 8, 32>}]} {
    %c0 = arith.constant 0 : index
    %c0_0 = arith.constant 0 : index
    %c0_1 = arith.constant 0 : index
    %0 = vector.load %arg1[%c0, %c0_0, %c0_1] : memref<1x8x16xf32, #tpu.memory_space<vmem>>, vector<1x8x16xf32>
    %1 = vector.shape_cast %0 : vector<1x8x16xf32> to vector<8x16xf32>
    %c0_2 = arith.constant 0 : index
    %c0_3 = arith.constant 0 : index
    %2 = vector.load %arg3[%c0_2, %c0_3] : memref<16x64xbf16, #tpu.memory_space<vmem>>, vector<16x64xbf16>
    %3 = arith.truncf %1 : vector<8x16xf32> to vector<8x16xbf16>
    %cst = arith.constant dense<0.000000e+00> : vector<8x64xf32>
    %4 = tpu.matmul %3, %2, %cst {dimension_numbers = #tpu.dot_dimension_numbers<[1], [0], [0], [1], [0, 0, 1, 1], [], []>} : vector<8x16xbf16>, vector<16x64xbf16>, vector<8x64xf32> -> vector<8x64xf32>
    %c0_4 = arith.constant 0 : index
    %c0_5 = arith.constant 0 : index
    %5 = vector.load %arg4[%c0_4, %c0_5] : memref<1x64xf32, #tpu.memory_space<vmem>>, vector<1x64xf32>
    %6 = vector.broadcast %5 : vector<1x64xf32> to vector<8x64xf32>
    %7 = arith.addf %4, %6 : vector<8x64xf32>
    %8 = math.tanh %7 : vector<8x64xf32>
    %c0_6 = arith.constant 0 : index
    %c0_7 = arith.constant 0 : index
    %9 = vector.load %arg5[%c0_6, %c0_7] : memref<1x64xf32, #tpu.memory_space<vmem>>, vector<1x64xf32>
    %c0_8 = arith.constant 0 : index
    %c0_9 = arith.constant 0 : index
    %10 = vector.load %arg6[%c0_8, %c0_9] : memref<1x64xf32, #tpu.memory_space<vmem>>, vector<1x64xf32>
    %cst_10 = arith.constant dense<0.000000e+00> : vector<8xf32>
    %11 = vector.multi_reduction <add>, %8, %cst_10 [1] : vector<8x64xf32> to vector<8xf32>
    %12 = vector.shape_cast %11 : vector<8xf32> to vector<8x1xf32>
    %cst_11 = arith.constant 6.400000e+01 : f32
    %13 = vector.broadcast %cst_11 : f32 to vector<8x1xf32>
    %14 = arith.divf %12, %13 : vector<8x1xf32>
    %15 = vector.broadcast %14 : vector<8x1xf32> to vector<8x64xf32>
    %16 = arith.subf %8, %15 : vector<8x64xf32>
    %17 = arith.mulf %16, %16 : vector<8x64xf32>
    %cst_12 = arith.constant dense<0.000000e+00> : vector<8xf32>
    %18 = vector.multi_reduction <add>, %17, %cst_12 [1] : vector<8x64xf32> to vector<8xf32>
    %19 = vector.shape_cast %18 : vector<8xf32> to vector<8x1xf32>
    %cst_13 = arith.constant 6.400000e+01 : f32
    %20 = vector.broadcast %cst_13 : f32 to vector<8x1xf32>
    %21 = arith.divf %19, %20 : vector<8x1xf32>
    %22 = vector.broadcast %14 : vector<8x1xf32> to vector<8x64xf32>
    %23 = arith.subf %8, %22 : vector<8x64xf32>
    %cst_14 = arith.constant 9.99999974E-6 : f32
    %24 = vector.broadcast %cst_14 : f32 to vector<8x1xf32>
    %25 = arith.addf %21, %24 : vector<8x1xf32>
    %26 = math.rsqrt %25 : vector<8x1xf32>
    %27 = vector.broadcast %26 : vector<8x1xf32> to vector<8x64xf32>
    %28 = arith.mulf %23, %27 : vector<8x64xf32>
    %29 = vector.broadcast %9 : vector<1x64xf32> to vector<8x64xf32>
    %30 = arith.mulf %28, %29 : vector<8x64xf32>
    %31 = vector.broadcast %10 : vector<1x64xf32> to vector<8x64xf32>
    %32 = arith.addf %30, %31 : vector<8x64xf32>
    %c0_15 = arith.constant 0 : index
    %c0_16 = arith.constant 0 : index
    %33 = vector.load %arg7[%c0_15, %c0_16] : memref<64x128xbf16, #tpu.memory_space<vmem>>, vector<64x128xbf16>
    %34 = arith.truncf %32 : vector<8x64xf32> to vector<8x64xbf16>
    %cst_17 = arith.constant dense<0.000000e+00> : vector<8x128xf32>
    %35 = tpu.matmul %34, %33, %cst_17 {dimension_numbers = #tpu.dot_dimension_numbers<[1], [0], [0], [1], [0, 0, 1, 1], [], []>} : vector<8x64xbf16>, vector<64x128xbf16>, vector<8x128xf32> -> vector<8x128xf32>
    %c0_18 = arith.constant 0 : index
    %c0_19 = arith.constant 0 : index
    %36 = vector.load %arg8[%c0_18, %c0_19] : memref<1x128xf32, #tpu.memory_space<vmem>>, vector<1x128xf32>
    %37 = vector.broadcast %36 : vector<1x128xf32> to vector<8x128xf32>
    %38 = arith.addf %35, %37 : vector<8x128xf32>
    %39 = math.tanh %38 : vector<8x128xf32>
    %c0_20 = arith.constant 0 : index
    %c0_21 = arith.constant 0 : index
    %40 = vector.load %arg9[%c0_20, %c0_21] : memref<1x128xf32, #tpu.memory_space<vmem>>, vector<1x128xf32>
    %c0_22 = arith.constant 0 : index
    %c0_23 = arith.constant 0 : index
    %41 = vector.load %arg10[%c0_22, %c0_23] : memref<1x128xf32, #tpu.memory_space<vmem>>, vector<1x128xf32>
    %cst_24 = arith.constant dense<0.000000e+00> : vector<8xf32>
    %42 = vector.multi_reduction <add>, %39, %cst_24 [1] : vector<8x128xf32> to vector<8xf32>
    %43 = vector.shape_cast %42 : vector<8xf32> to vector<8x1xf32>
    %cst_25 = arith.constant 1.280000e+02 : f32
    %44 = vector.broadcast %cst_25 : f32 to vector<8x1xf32>
    %45 = arith.divf %43, %44 : vector<8x1xf32>
    %46 = vector.broadcast %45 : vector<8x1xf32> to vector<8x128xf32>
    %47 = arith.subf %39, %46 : vector<8x128xf32>
    %48 = arith.mulf %47, %47 : vector<8x128xf32>
    %cst_26 = arith.constant dense<0.000000e+00> : vector<8xf32>
    %49 = vector.multi_reduction <add>, %48, %cst_26 [1] : vector<8x128xf32> to vector<8xf32>
    %50 = vector.shape_cast %49 : vector<8xf32> to vector<8x1xf32>
    %cst_27 = arith.constant 1.280000e+02 : f32
    %51 = vector.broadcast %cst_27 : f32 to vector<8x1xf32>
    %52 = arith.divf %50, %51 : vector<8x1xf32>
    %53 = vector.broadcast %45 : vector<8x1xf32> to vector<8x128xf32>
    %54 = arith.subf %39, %53 : vector<8x128xf32>
    %cst_28 = arith.constant 9.99999974E-6 : f32
    %55 = vector.broadcast %cst_28 : f32 to vector<8x1xf32>
    %56 = arith.addf %52, %55 : vector<8x1xf32>
    %57 = math.rsqrt %56 : vector<8x1xf32>
    %58 = vector.broadcast %57 : vector<8x1xf32> to vector<8x128xf32>
    %59 = arith.mulf %54, %58 : vector<8x128xf32>
    %60 = vector.broadcast %40 : vector<1x128xf32> to vector<8x128xf32>
    %61 = arith.mulf %59, %60 : vector<8x128xf32>
    %62 = vector.broadcast %41 : vector<1x128xf32> to vector<8x128xf32>
    %63 = arith.addf %61, %62 : vector<8x128xf32>
    %c0_29 = arith.constant 0 : index
    %c0_30 = arith.constant 0 : index
    %64 = vector.load %arg11[%c0_29, %c0_30] : memref<128x64xbf16, #tpu.memory_space<vmem>>, vector<128x64xbf16>
    %65 = arith.truncf %63 : vector<8x128xf32> to vector<8x128xbf16>
    %cst_31 = arith.constant dense<0.000000e+00> : vector<8x64xf32>
    %66 = tpu.matmul %65, %64, %cst_31 {dimension_numbers = #tpu.dot_dimension_numbers<[1], [0], [0], [1], [0, 0, 1, 1], [], []>} : vector<8x128xbf16>, vector<128x64xbf16>, vector<8x64xf32> -> vector<8x64xf32>
    %c0_32 = arith.constant 0 : index
    %c0_33 = arith.constant 0 : index
    %67 = vector.load %arg12[%c0_32, %c0_33] : memref<1x64xf32, #tpu.memory_space<vmem>>, vector<1x64xf32>
    %68 = vector.broadcast %67 : vector<1x64xf32> to vector<8x64xf32>
    %69 = arith.addf %66, %68 : vector<8x64xf32>
    %70 = math.tanh %69 : vector<8x64xf32>
    %c0_34 = arith.constant 0 : index
    %c0_35 = arith.constant 0 : index
    %71 = vector.load %arg13[%c0_34, %c0_35] : memref<1x64xf32, #tpu.memory_space<vmem>>, vector<1x64xf32>
    %c0_36 = arith.constant 0 : index
    %c0_37 = arith.constant 0 : index
    %72 = vector.load %arg14[%c0_36, %c0_37] : memref<1x64xf32, #tpu.memory_space<vmem>>, vector<1x64xf32>
    %cst_38 = arith.constant dense<0.000000e+00> : vector<8xf32>
    %73 = vector.multi_reduction <add>, %70, %cst_38 [1] : vector<8x64xf32> to vector<8xf32>
    %74 = vector.shape_cast %73 : vector<8xf32> to vector<8x1xf32>
    %cst_39 = arith.constant 6.400000e+01 : f32
    %75 = vector.broadcast %cst_39 : f32 to vector<8x1xf32>
    %76 = arith.divf %74, %75 : vector<8x1xf32>
    %77 = vector.broadcast %76 : vector<8x1xf32> to vector<8x64xf32>
    %78 = arith.subf %70, %77 : vector<8x64xf32>
    %79 = arith.mulf %78, %78 : vector<8x64xf32>
    %cst_40 = arith.constant dense<0.000000e+00> : vector<8xf32>
    %80 = vector.multi_reduction <add>, %79, %cst_40 [1] : vector<8x64xf32> to vector<8xf32>
    %81 = vector.shape_cast %80 : vector<8xf32> to vector<8x1xf32>
    %cst_41 = arith.constant 6.400000e+01 : f32
    %82 = vector.broadcast %cst_41 : f32 to vector<8x1xf32>
    %83 = arith.divf %81, %82 : vector<8x1xf32>
    %84 = vector.broadcast %76 : vector<8x1xf32> to vector<8x64xf32>
    %85 = arith.subf %70, %84 : vector<8x64xf32>
    %cst_42 = arith.constant 9.99999974E-6 : f32
    %86 = vector.broadcast %cst_42 : f32 to vector<8x1xf32>
    %87 = arith.addf %83, %86 : vector<8x1xf32>
    %88 = math.rsqrt %87 : vector<8x1xf32>
    %89 = vector.broadcast %88 : vector<8x1xf32> to vector<8x64xf32>
    %90 = arith.mulf %85, %89 : vector<8x64xf32>
    %91 = vector.broadcast %71 : vector<1x64xf32> to vector<8x64xf32>
    %92 = arith.mulf %90, %91 : vector<8x64xf32>
    %93 = vector.broadcast %72 : vector<1x64xf32> to vector<8x64xf32>
    %94 = arith.addf %92, %93 : vector<8x64xf32>
    %c0_43 = arith.constant 0 : index
    %c0_44 = arith.constant 0 : index
    %95 = vector.load %arg15[%c0_43, %c0_44] : memref<64x64xbf16, #tpu.memory_space<vmem>>, vector<64x64xbf16>
    %96 = arith.truncf %94 : vector<8x64xf32> to vector<8x64xbf16>
    %cst_45 = arith.constant dense<0.000000e+00> : vector<8x64xf32>
    %97 = tpu.matmul %96, %95, %cst_45 {dimension_numbers = #tpu.dot_dimension_numbers<[1], [0], [0], [1], [0, 0, 1, 1], [], []>} : vector<8x64xbf16>, vector<64x64xbf16>, vector<8x64xf32> -> vector<8x64xf32>
    %c0_46 = arith.constant 0 : index
    %c0_47 = arith.constant 0 : index
    %98 = vector.load %arg16[%c0_46, %c0_47] : memref<1x64xf32, #tpu.memory_space<vmem>>, vector<1x64xf32>
    %99 = vector.broadcast %98 : vector<1x64xf32> to vector<8x64xf32>
    %100 = arith.addf %97, %99 : vector<8x64xf32>
    %101 = math.tanh %100 : vector<8x64xf32>
    %c0_48 = arith.constant 0 : index
    %c0_49 = arith.constant 0 : index
    %102 = vector.load %arg17[%c0_48, %c0_49] : memref<1x64xf32, #tpu.memory_space<vmem>>, vector<1x64xf32>
    %c0_50 = arith.constant 0 : index
    %c0_51 = arith.constant 0 : index
    %103 = vector.load %arg18[%c0_50, %c0_51] : memref<1x64xf32, #tpu.memory_space<vmem>>, vector<1x64xf32>
    %cst_52 = arith.constant dense<0.000000e+00> : vector<8xf32>
    %104 = vector.multi_reduction <add>, %101, %cst_52 [1] : vector<8x64xf32> to vector<8xf32>
    %105 = vector.shape_cast %104 : vector<8xf32> to vector<8x1xf32>
    %cst_53 = arith.constant 6.400000e+01 : f32
    %106 = vector.broadcast %cst_53 : f32 to vector<8x1xf32>
    %107 = arith.divf %105, %106 : vector<8x1xf32>
    %108 = vector.broadcast %107 : vector<8x1xf32> to vector<8x64xf32>
    %109 = arith.subf %101, %108 : vector<8x64xf32>
    %110 = arith.mulf %109, %109 : vector<8x64xf32>
    %cst_54 = arith.constant dense<0.000000e+00> : vector<8xf32>
    %111 = vector.multi_reduction <add>, %110, %cst_54 [1] : vector<8x64xf32> to vector<8xf32>
    %112 = vector.shape_cast %111 : vector<8xf32> to vector<8x1xf32>
    %cst_55 = arith.constant 6.400000e+01 : f32
    %113 = vector.broadcast %cst_55 : f32 to vector<8x1xf32>
    %114 = arith.divf %112, %113 : vector<8x1xf32>
    %115 = vector.broadcast %107 : vector<8x1xf32> to vector<8x64xf32>
    %116 = arith.subf %101, %115 : vector<8x64xf32>
    %cst_56 = arith.constant 9.99999974E-6 : f32
    %117 = vector.broadcast %cst_56 : f32 to vector<8x1xf32>
    %118 = arith.addf %114, %117 : vector<8x1xf32>
    %119 = math.rsqrt %118 : vector<8x1xf32>
    %120 = vector.broadcast %119 : vector<8x1xf32> to vector<8x64xf32>
    %121 = arith.mulf %116, %120 : vector<8x64xf32>
    %122 = vector.broadcast %102 : vector<1x64xf32> to vector<8x64xf32>
    %123 = arith.mulf %121, %122 : vector<8x64xf32>
    %124 = vector.broadcast %103 : vector<1x64xf32> to vector<8x64xf32>
    %125 = arith.addf %123, %124 : vector<8x64xf32>
    %c0_57 = arith.constant 0 : index
    %c0_58 = arith.constant 0 : index
    %126 = vector.load %arg19[%c0_57, %c0_58] : memref<64x32xbf16, #tpu.memory_space<vmem>>, vector<64x32xbf16>
    %127 = arith.truncf %125 : vector<8x64xf32> to vector<8x64xbf16>
    %cst_59 = arith.constant dense<0.000000e+00> : vector<8x32xf32>
    %128 = tpu.matmul %127, %126, %cst_59 {dimension_numbers = #tpu.dot_dimension_numbers<[1], [0], [0], [1], [0, 0, 1, 1], [], []>} : vector<8x64xbf16>, vector<64x32xbf16>, vector<8x32xf32> -> vector<8x32xf32>
    %c0_60 = arith.constant 0 : index
    %c0_61 = arith.constant 0 : index
    %129 = vector.load %arg20[%c0_60, %c0_61] : memref<1x32xf32, #tpu.memory_space<vmem>>, vector<1x32xf32>
    %130 = vector.broadcast %129 : vector<1x32xf32> to vector<8x32xf32>
    %131 = arith.addf %128, %130 : vector<8x32xf32>
    %132 = math.tanh %131 : vector<8x32xf32>
    %c0_62 = arith.constant 0 : index
    %c0_63 = arith.constant 0 : index
    %133 = vector.load %arg21[%c0_62, %c0_63] : memref<1x32xf32, #tpu.memory_space<vmem>>, vector<1x32xf32>
    %c0_64 = arith.constant 0 : index
    %c0_65 = arith.constant 0 : index
    %134 = vector.load %arg22[%c0_64, %c0_65] : memref<1x32xf32, #tpu.memory_space<vmem>>, vector<1x32xf32>
    %cst_66 = arith.constant dense<0.000000e+00> : vector<8xf32>
    %135 = vector.multi_reduction <add>, %132, %cst_66 [1] : vector<8x32xf32> to vector<8xf32>
    %136 = vector.shape_cast %135 : vector<8xf32> to vector<8x1xf32>
    %cst_67 = arith.constant 3.200000e+01 : f32
    %137 = vector.broadcast %cst_67 : f32 to vector<8x1xf32>
    %138 = arith.divf %136, %137 : vector<8x1xf32>
    %139 = vector.broadcast %138 : vector<8x1xf32> to vector<8x32xf32>
    %140 = arith.subf %132, %139 : vector<8x32xf32>
    %141 = arith.mulf %140, %140 : vector<8x32xf32>
    %cst_68 = arith.constant dense<0.000000e+00> : vector<8xf32>
    %142 = vector.multi_reduction <add>, %141, %cst_68 [1] : vector<8x32xf32> to vector<8xf32>
    %143 = vector.shape_cast %142 : vector<8xf32> to vector<8x1xf32>
    %cst_69 = arith.constant 3.200000e+01 : f32
    %144 = vector.broadcast %cst_69 : f32 to vector<8x1xf32>
    %145 = arith.divf %143, %144 : vector<8x1xf32>
    %146 = vector.broadcast %138 : vector<8x1xf32> to vector<8x32xf32>
    %147 = arith.subf %132, %146 : vector<8x32xf32>
    %cst_70 = arith.constant 9.99999974E-6 : f32
    %148 = vector.broadcast %cst_70 : f32 to vector<8x1xf32>
    %149 = arith.addf %145, %148 : vector<8x1xf32>
    %150 = math.rsqrt %149 : vector<8x1xf32>
    %151 = vector.broadcast %150 : vector<8x1xf32> to vector<8x32xf32>
    %152 = arith.mulf %147, %151 : vector<8x32xf32>
    %153 = vector.broadcast %133 : vector<1x32xf32> to vector<8x32xf32>
    %154 = arith.mulf %152, %153 : vector<8x32xf32>
    %155 = vector.broadcast %134 : vector<1x32xf32> to vector<8x32xf32>
    %156 = arith.addf %154, %155 : vector<8x32xf32>
    %c0_71 = arith.constant 0 : index
    %c0_72 = arith.constant 0 : index
    %157 = vector.load %arg23[%c0_71, %c0_72] : memref<32x32xbf16, #tpu.memory_space<vmem>>, vector<32x32xbf16>
    %158 = arith.truncf %156 : vector<8x32xf32> to vector<8x32xbf16>
    %cst_73 = arith.constant dense<0.000000e+00> : vector<8x32xf32>
    %159 = tpu.matmul %158, %157, %cst_73 {dimension_numbers = #tpu.dot_dimension_numbers<[1], [0], [0], [1], [0, 0, 1, 1], [], []>} : vector<8x32xbf16>, vector<32x32xbf16>, vector<8x32xf32> -> vector<8x32xf32>
    %c0_74 = arith.constant 0 : index
    %c0_75 = arith.constant 0 : index
    %160 = vector.load %arg24[%c0_74, %c0_75] : memref<1x32xf32, #tpu.memory_space<vmem>>, vector<1x32xf32>
    %161 = vector.broadcast %160 : vector<1x32xf32> to vector<8x32xf32>
    %162 = arith.addf %159, %161 : vector<8x32xf32>
    %c0_76 = arith.constant 0 : index
    %c0_77 = arith.constant 0 : index
    %163 = vector.load %arg25[%c0_76, %c0_77] : memref<32x32xbf16, #tpu.memory_space<vmem>>, vector<32x32xbf16>
    %164 = arith.truncf %156 : vector<8x32xf32> to vector<8x32xbf16>
    %cst_78 = arith.constant dense<0.000000e+00> : vector<8x32xf32>
    %165 = tpu.matmul %164, %163, %cst_78 {dimension_numbers = #tpu.dot_dimension_numbers<[1], [0], [0], [1], [0, 0, 1, 1], [], []>} : vector<8x32xbf16>, vector<32x32xbf16>, vector<8x32xf32> -> vector<8x32xf32>
    %c0_79 = arith.constant 0 : index
    %c0_80 = arith.constant 0 : index
    %166 = vector.load %arg26[%c0_79, %c0_80] : memref<1x32xf32, #tpu.memory_space<vmem>>, vector<1x32xf32>
    %167 = vector.broadcast %166 : vector<1x32xf32> to vector<8x32xf32>
    %168 = arith.addf %165, %167 : vector<8x32xf32>
    %c0_81 = arith.constant 0 : index
    %c0_82 = arith.constant 0 : index
    %169 = vector.load %arg27[%c0_81, %c0_82] : memref<32x32xbf16, #tpu.memory_space<vmem>>, vector<32x32xbf16>
    %170 = arith.truncf %156 : vector<8x32xf32> to vector<8x32xbf16>
    %cst_83 = arith.constant dense<0.000000e+00> : vector<8x32xf32>
    %171 = tpu.matmul %170, %169, %cst_83 {dimension_numbers = #tpu.dot_dimension_numbers<[1], [0], [0], [1], [0, 0, 1, 1], [], []>} : vector<8x32xbf16>, vector<32x32xbf16>, vector<8x32xf32> -> vector<8x32xf32>
    %c0_84 = arith.constant 0 : index
    %c0_85 = arith.constant 0 : index
    %172 = vector.load %arg28[%c0_84, %c0_85] : memref<1x32xf32, #tpu.memory_space<vmem>>, vector<1x32xf32>
    %173 = vector.broadcast %172 : vector<1x32xf32> to vector<8x32xf32>
    %174 = arith.addf %171, %173 : vector<8x32xf32>
    %175 = vector.shape_cast %162 : vector<8x32xf32> to vector<1x8x32xf32>
    %176 = vector.shape_cast %168 : vector<8x32xf32> to vector<1x8x32xf32>
    %177 = vector.shape_cast %174 : vector<8x32xf32> to vector<1x8x32xf32>
    %c0_86 = arith.constant 0 : index
    %c0_87 = arith.constant 0 : index
    %178 = vector.load %arg29[%c0_86, %c0_87] : memref<32x32xbf16, #tpu.memory_space<vmem>>, vector<32x32xbf16>
    %cst_88 = arith.constant 0.000000e+00 : f32
    %179 = vector.broadcast %cst_88 : f32 to vector<8x32xf32>
    %180 = vector.extract_strided_slice %175 {offsets = [0, 0, 0], sizes = [1, 8, 16], strides = [1, 1, 1]} : vector<1x8x32xf32> to vector<1x8x16xf32>
    %cst_89 = arith.constant 2.500000e-01 : f32
    %181 = vector.broadcast %cst_89 : f32 to vector<1x8x16xf32>
    %182 = arith.mulf %180, %181 : vector<1x8x16xf32>
    %183 = vector.extract_strided_slice %176 {offsets = [0, 0, 0], sizes = [1, 8, 16], strides = [1, 1, 1]} : vector<1x8x32xf32> to vector<1x8x16xf32>
    %184 = arith.truncf %182 : vector<1x8x16xf32> to vector<1x8x16xbf16>
    %185 = arith.truncf %183 : vector<1x8x16xf32> to vector<1x8x16xbf16>
    "tpu.trace_start"() <{level = 10 : i32, message = "bnd,bmd->bnm"}> : () -> ()
    %cst_90 = arith.constant dense<0.000000e+00> : vector<1x8x8xf32>
    %186 = tpu.matmul %184, %185, %cst_90 {dimension_numbers = #tpu.dot_dimension_numbers<[2], [2], [1], [1], [0, 0, 0, 1, 1, 1], [0], [0]>} : vector<1x8x16xbf16>, vector<1x8x16xbf16>, vector<1x8x8xf32> -> vector<1x8x8xf32>
    "tpu.trace_stop"() : () -> ()
    %cst_91 = arith.constant dense<0xFF800000> : vector<1x8xf32>
    %187 = vector.multi_reduction <maximumf>, %186, %cst_91 [2] : vector<1x8x8xf32> to vector<1x8xf32>
    %188 = vector.shape_cast %187 : vector<1x8xf32> to vector<1x8x1xf32>
    %189 = vector.broadcast %188 : vector<1x8x1xf32> to vector<1x8x8xf32>
    %190 = arith.subf %186, %189 : vector<1x8x8xf32>
    %191 = math.exp %190 : vector<1x8x8xf32>
    %cst_92 = arith.constant dense<0.000000e+00> : vector<1x8xf32>
    %192 = vector.multi_reduction <add>, %191, %cst_92 [2] : vector<1x8x8xf32> to vector<1x8xf32>
    %193 = vector.shape_cast %192 : vector<1x8xf32> to vector<1x8x1xf32>
    %194 = tpu.reciprocal %193 {approx = true} : vector<1x8x1xf32> -> vector<1x8x1xf32>
    %195 = vector.broadcast %194 : vector<1x8x1xf32> to vector<1x8x8xf32>
    %196 = arith.mulf %191, %195 : vector<1x8x8xf32>
    %197 = vector.extract_strided_slice %177 {offsets = [0, 0, 0], sizes = [1, 8, 16], strides = [1, 1, 1]} : vector<1x8x32xf32> to vector<1x8x16xf32>
    %198 = arith.truncf %196 : vector<1x8x8xf32> to vector<1x8x8xbf16>
    %199 = arith.truncf %197 : vector<1x8x16xf32> to vector<1x8x16xbf16>
    "tpu.trace_start"() <{level = 10 : i32, message = "bnm,bmd->bnd"}> : () -> ()
    %cst_93 = arith.constant dense<0.000000e+00> : vector<1x8x16xf32>
    %200 = tpu.matmul %198, %199, %cst_93 {dimension_numbers = #tpu.dot_dimension_numbers<[2], [1], [1], [2], [0, 0, 0, 1, 1, 2], [0], [0]>} : vector<1x8x8xbf16>, vector<1x8x16xbf16>, vector<1x8x16xf32> -> vector<1x8x16xf32>
    "tpu.trace_stop"() : () -> ()
    %201 = vector.shape_cast %200 : vector<1x8x16xf32> to vector<8x16xf32>
    %202 = vector.extract_strided_slice %178 {offsets = [0, 0], sizes = [16, 32], strides = [1, 1]} : vector<32x32xbf16> to vector<16x32xbf16>
    %203 = arith.truncf %201 : vector<8x16xf32> to vector<8x16xbf16>
    %cst_94 = arith.constant dense<0.000000e+00> : vector<8x32xf32>
    %204 = tpu.matmul %203, %202, %cst_94 {dimension_numbers = #tpu.dot_dimension_numbers<[1], [0], [0], [1], [0, 0, 1, 1], [], []>} : vector<8x16xbf16>, vector<16x32xbf16>, vector<8x32xf32> -> vector<8x32xf32>
    %205 = arith.addf %179, %204 : vector<8x32xf32>
    %206 = vector.extract_strided_slice %175 {offsets = [0, 0, 16], sizes = [1, 8, 16], strides = [1, 1, 1]} : vector<1x8x32xf32> to vector<1x8x16xf32>
    %cst_95 = arith.constant 2.500000e-01 : f32
    %207 = vector.broadcast %cst_95 : f32 to vector<1x8x16xf32>
    %208 = arith.mulf %206, %207 : vector<1x8x16xf32>
    %209 = vector.extract_strided_slice %176 {offsets = [0, 0, 16], sizes = [1, 8, 16], strides = [1, 1, 1]} : vector<1x8x32xf32> to vector<1x8x16xf32>
    %210 = arith.truncf %208 : vector<1x8x16xf32> to vector<1x8x16xbf16>
    %211 = arith.truncf %209 : vector<1x8x16xf32> to vector<1x8x16xbf16>
    "tpu.trace_start"() <{level = 10 : i32, message = "bnd,bmd->bnm"}> : () -> ()
    %cst_96 = arith.constant dense<0.000000e+00> : vector<1x8x8xf32>
    %212 = tpu.matmul %210, %211, %cst_96 {dimension_numbers = #tpu.dot_dimension_numbers<[2], [2], [1], [1], [0, 0, 0, 1, 1, 1], [0], [0]>} : vector<1x8x16xbf16>, vector<1x8x16xbf16>, vector<1x8x8xf32> -> vector<1x8x8xf32>
    "tpu.trace_stop"() : () -> ()
    %cst_97 = arith.constant dense<0xFF800000> : vector<1x8xf32>
    %213 = vector.multi_reduction <maximumf>, %212, %cst_97 [2] : vector<1x8x8xf32> to vector<1x8xf32>
    %214 = vector.shape_cast %213 : vector<1x8xf32> to vector<1x8x1xf32>
    %215 = vector.broadcast %214 : vector<1x8x1xf32> to vector<1x8x8xf32>
    %216 = arith.subf %212, %215 : vector<1x8x8xf32>
    %217 = math.exp %216 : vector<1x8x8xf32>
    %cst_98 = arith.constant dense<0.000000e+00> : vector<1x8xf32>
    %218 = vector.multi_reduction <add>, %217, %cst_98 [2] : vector<1x8x8xf32> to vector<1x8xf32>
    %219 = vector.shape_cast %218 : vector<1x8xf32> to vector<1x8x1xf32>
    %220 = tpu.reciprocal %219 {approx = true} : vector<1x8x1xf32> -> vector<1x8x1xf32>
    %221 = vector.broadcast %220 : vector<1x8x1xf32> to vector<1x8x8xf32>
    %222 = arith.mulf %217, %221 : vector<1x8x8xf32>
    %223 = vector.extract_strided_slice %177 {offsets = [0, 0, 16], sizes = [1, 8, 16], strides = [1, 1, 1]} : vector<1x8x32xf32> to vector<1x8x16xf32>
    %224 = arith.truncf %222 : vector<1x8x8xf32> to vector<1x8x8xbf16>
    %225 = arith.truncf %223 : vector<1x8x16xf32> to vector<1x8x16xbf16>
    "tpu.trace_start"() <{level = 10 : i32, message = "bnm,bmd->bnd"}> : () -> ()
    %cst_99 = arith.constant dense<0.000000e+00> : vector<1x8x16xf32>
    %226 = tpu.matmul %224, %225, %cst_99 {dimension_numbers = #tpu.dot_dimension_numbers<[2], [1], [1], [2], [0, 0, 0, 1, 1, 2], [0], [0]>} : vector<1x8x8xbf16>, vector<1x8x16xbf16>, vector<1x8x16xf32> -> vector<1x8x16xf32>
    "tpu.trace_stop"() : () -> ()
    %227 = vector.shape_cast %226 : vector<1x8x16xf32> to vector<8x16xf32>
    %228 = vector.extract_strided_slice %178 {offsets = [16, 0], sizes = [16, 32], strides = [1, 1]} : vector<32x32xbf16> to vector<16x32xbf16>
    %229 = arith.truncf %227 : vector<8x16xf32> to vector<8x16xbf16>
    %cst_100 = arith.constant dense<0.000000e+00> : vector<8x32xf32>
    %230 = tpu.matmul %229, %228, %cst_100 {dimension_numbers = #tpu.dot_dimension_numbers<[1], [0], [0], [1], [0, 0, 1, 1], [], []>} : vector<8x16xbf16>, vector<16x32xbf16>, vector<8x32xf32> -> vector<8x32xf32>
    %231 = arith.addf %205, %230 : vector<8x32xf32>
    %c0_101 = arith.constant 0 : index
    %c0_102 = arith.constant 0 : index
    %232 = vector.load %arg30[%c0_101, %c0_102] : memref<1x32xf32, #tpu.memory_space<vmem>>, vector<1x32xf32>
    %233 = vector.broadcast %232 : vector<1x32xf32> to vector<8x32xf32>
    %234 = arith.addf %231, %233 : vector<8x32xf32>
    %235 = arith.addf %156, %234 : vector<8x32xf32>
    %c0_103 = arith.constant 0 : index
    %c0_104 = arith.constant 0 : index
    %236 = vector.load %arg31[%c0_103, %c0_104] : memref<1x32xf32, #tpu.memory_space<vmem>>, vector<1x32xf32>
    %c0_105 = arith.constant 0 : index
    %c0_106 = arith.constant 0 : index
    %237 = vector.load %arg32[%c0_105, %c0_106] : memref<1x32xf32, #tpu.memory_space<vmem>>, vector<1x32xf32>
    %cst_107 = arith.constant dense<0.000000e+00> : vector<8xf32>
    %238 = vector.multi_reduction <add>, %235, %cst_107 [1] : vector<8x32xf32> to vector<8xf32>
    %239 = vector.shape_cast %238 : vector<8xf32> to vector<8x1xf32>
    %cst_108 = arith.constant 3.200000e+01 : f32
    %240 = vector.broadcast %cst_108 : f32 to vector<8x1xf32>
    %241 = arith.divf %239, %240 : vector<8x1xf32>
    %242 = vector.broadcast %241 : vector<8x1xf32> to vector<8x32xf32>
    %243 = arith.subf %235, %242 : vector<8x32xf32>
    %244 = arith.mulf %243, %243 : vector<8x32xf32>
    %cst_109 = arith.constant dense<0.000000e+00> : vector<8xf32>
    %245 = vector.multi_reduction <add>, %244, %cst_109 [1] : vector<8x32xf32> to vector<8xf32>
    %246 = vector.shape_cast %245 : vector<8xf32> to vector<8x1xf32>
    %cst_110 = arith.constant 3.200000e+01 : f32
    %247 = vector.broadcast %cst_110 : f32 to vector<8x1xf32>
    %248 = arith.divf %246, %247 : vector<8x1xf32>
    %249 = vector.broadcast %241 : vector<8x1xf32> to vector<8x32xf32>
    %250 = arith.subf %235, %249 : vector<8x32xf32>
    %cst_111 = arith.constant 9.99999974E-6 : f32
    %251 = vector.broadcast %cst_111 : f32 to vector<8x1xf32>
    %252 = arith.addf %248, %251 : vector<8x1xf32>
    %253 = math.rsqrt %252 : vector<8x1xf32>
    %254 = vector.broadcast %253 : vector<8x1xf32> to vector<8x32xf32>
    %255 = arith.mulf %250, %254 : vector<8x32xf32>
    %256 = vector.broadcast %236 : vector<1x32xf32> to vector<8x32xf32>
    %257 = arith.mulf %255, %256 : vector<8x32xf32>
    %258 = vector.broadcast %237 : vector<1x32xf32> to vector<8x32xf32>
    %259 = arith.addf %257, %258 : vector<8x32xf32>
    %c0_112 = arith.constant 0 : index
    %c0_113 = arith.constant 0 : index
    %260 = vector.load %arg33[%c0_112, %c0_113] : memref<32x2048xbf16, #tpu.memory_space<vmem>>, vector<32x2048xbf16>
    %261 = arith.truncf %259 : vector<8x32xf32> to vector<8x32xbf16>
    %cst_114 = arith.constant dense<0.000000e+00> : vector<8x2048xf32>
    %262 = tpu.matmul %261, %260, %cst_114 {dimension_numbers = #tpu.dot_dimension_numbers<[1], [0], [0], [1], [0, 0, 1, 1], [], []>} : vector<8x32xbf16>, vector<32x2048xbf16>, vector<8x2048xf32> -> vector<8x2048xf32>
    %c0_115 = arith.constant 0 : index
    %c0_116 = arith.constant 0 : index
    %263 = vector.load %arg34[%c0_115, %c0_116] : memref<1x2048xf32, #tpu.memory_space<vmem>>, vector<1x2048xf32>
    %264 = vector.broadcast %263 : vector<1x2048xf32> to vector<8x2048xf32>
    %265 = arith.addf %262, %264 : vector<8x2048xf32>
    %cst_117 = arith.constant 0.000000e+00 : f32
    %266 = vector.broadcast %cst_117 : f32 to vector<8x2048xf32>
    %267 = arith.maximumf %265, %266 : vector<8x2048xf32>
    %c0_118 = arith.constant 0 : index
    %c0_119 = arith.constant 0 : index
    %268 = vector.load %arg35[%c0_118, %c0_119] : memref<2048x32xbf16, #tpu.memory_space<vmem>>, vector<2048x32xbf16>
    %269 = arith.truncf %267 : vector<8x2048xf32> to vector<8x2048xbf16>
    %cst_120 = arith.constant dense<0.000000e+00> : vector<8x32xf32>
    %270 = tpu.matmul %269, %268, %cst_120 {dimension_numbers = #tpu.dot_dimension_numbers<[1], [0], [0], [1], [0, 0, 1, 1], [], []>} : vector<8x2048xbf16>, vector<2048x32xbf16>, vector<8x32xf32> -> vector<8x32xf32>
    %c0_121 = arith.constant 0 : index
    %c0_122 = arith.constant 0 : index
    %271 = vector.load %arg36[%c0_121, %c0_122] : memref<1x32xf32, #tpu.memory_space<vmem>>, vector<1x32xf32>
    %272 = vector.broadcast %271 : vector<1x32xf32> to vector<8x32xf32>
    %273 = arith.addf %270, %272 : vector<8x32xf32>
    %274 = arith.addf %259, %273 : vector<8x32xf32>
    %c0_123 = arith.constant 0 : index
    %c0_124 = arith.constant 0 : index
    %275 = vector.load %arg37[%c0_123, %c0_124] : memref<1x32xf32, #tpu.memory_space<vmem>>, vector<1x32xf32>
    %c0_125 = arith.constant 0 : index
    %c0_126 = arith.constant 0 : index
    %276 = vector.load %arg38[%c0_125, %c0_126] : memref<1x32xf32, #tpu.memory_space<vmem>>, vector<1x32xf32>
    %cst_127 = arith.constant dense<0.000000e+00> : vector<8xf32>
    %277 = vector.multi_reduction <add>, %274, %cst_127 [1] : vector<8x32xf32> to vector<8xf32>
    %278 = vector.shape_cast %277 : vector<8xf32> to vector<8x1xf32>
    %cst_128 = arith.constant 3.200000e+01 : f32
    %279 = vector.broadcast %cst_128 : f32 to vector<8x1xf32>
    %280 = arith.divf %278, %279 : vector<8x1xf32>
    %281 = vector.broadcast %280 : vector<8x1xf32> to vector<8x32xf32>
    %282 = arith.subf %274, %281 : vector<8x32xf32>
    %283 = arith.mulf %282, %282 : vector<8x32xf32>
    %cst_129 = arith.constant dense<0.000000e+00> : vector<8xf32>
    %284 = vector.multi_reduction <add>, %283, %cst_129 [1] : vector<8x32xf32> to vector<8xf32>
    %285 = vector.shape_cast %284 : vector<8xf32> to vector<8x1xf32>
    %cst_130 = arith.constant 3.200000e+01 : f32
    %286 = vector.broadcast %cst_130 : f32 to vector<8x1xf32>
    %287 = arith.divf %285, %286 : vector<8x1xf32>
    %288 = vector.broadcast %280 : vector<8x1xf32> to vector<8x32xf32>
    %289 = arith.subf %274, %288 : vector<8x32xf32>
    %cst_131 = arith.constant 9.99999974E-6 : f32
    %290 = vector.broadcast %cst_131 : f32 to vector<8x1xf32>
    %291 = arith.addf %287, %290 : vector<8x1xf32>
    %292 = math.rsqrt %291 : vector<8x1xf32>
    %293 = vector.broadcast %292 : vector<8x1xf32> to vector<8x32xf32>
    %294 = arith.mulf %289, %293 : vector<8x32xf32>
    %295 = vector.broadcast %275 : vector<1x32xf32> to vector<8x32xf32>
    %296 = arith.mulf %294, %295 : vector<8x32xf32>
    %297 = vector.broadcast %276 : vector<1x32xf32> to vector<8x32xf32>
    %298 = arith.addf %296, %297 : vector<8x32xf32>
    %c0_132 = arith.constant 0 : index
    %c0_133 = arith.constant 0 : index
    %c0_134 = arith.constant 0 : index
    %299 = vector.load %arg2[%c0_132, %c0_133, %c0_134] : memref<1x8x16xf32, #tpu.memory_space<vmem>>, vector<1x8x16xf32>
    %300 = vector.shape_cast %299 : vector<1x8x16xf32> to vector<8x16xf32>
    %c0_135 = arith.constant 0 : index
    %c0_136 = arith.constant 0 : index
    %301 = vector.load %arg39[%c0_135, %c0_136] : memref<16x32xbf16, #tpu.memory_space<vmem>>, vector<16x32xbf16>
    %302 = arith.truncf %300 : vector<8x16xf32> to vector<8x16xbf16>
    %cst_137 = arith.constant dense<0.000000e+00> : vector<8x32xf32>
    %303 = tpu.matmul %302, %301, %cst_137 {dimension_numbers = #tpu.dot_dimension_numbers<[1], [0], [0], [1], [0, 0, 1, 1], [], []>} : vector<8x16xbf16>, vector<16x32xbf16>, vector<8x32xf32> -> vector<8x32xf32>
    %c0_138 = arith.constant 0 : index
    %c0_139 = arith.constant 0 : index
    %304 = vector.load %arg40[%c0_138, %c0_139] : memref<1x32xf32, #tpu.memory_space<vmem>>, vector<1x32xf32>
    %305 = vector.broadcast %304 : vector<1x32xf32> to vector<8x32xf32>
    %306 = arith.addf %303, %305 : vector<8x32xf32>
    %cst_140 = arith.constant 0.000000e+00 : f32
    %307 = vector.broadcast %cst_140 : f32 to vector<8x32xf32>
    %308 = arith.maximumf %306, %307 : vector<8x32xf32>
    %309 = arith.addf %298, %308 : vector<8x32xf32>
    %310 = vector.shape_cast %309 : vector<8x32xf32> to vector<1x8x32xf32>
    %c0_141 = arith.constant 0 : index
    %c0_142 = arith.constant 0 : index
    %c0_143 = arith.constant 0 : index
    %311 = vector.load %arg41[%c0_141, %c0_142, %c0_143] : memref<1x8x32xf32, #tpu.memory_space<vmem>>, vector<1x8x32xf32>
    tpu.vector_store %arg41[%c0_141, %c0_142, %c0_143], %310 {strides = array<i32>} : memref<1x8x32xf32, #tpu.memory_space<vmem>>, vector<1x8x32xf32>,
    return
  }
  func.func @transform_0(%arg0: i32) -> (i32, i32, i32) {
    %c0_i32 = arith.constant 0 : i32
    %c0_i32_0 = arith.constant 0 : i32
    %c0_i32_1 = arith.constant 0 : i32
    return %arg0, %c0_i32, %c0_i32_0 : i32, i32, i32
  }
  func.func @transform_1(%arg0: i32) -> (i32, i32, i32) {
    %c0_i32 = arith.constant 0 : i32
    %c0_i32_0 = arith.constant 0 : i32
    %c0_i32_1 = arith.constant 0 : i32
    return %arg0, %c0_i32, %c0_i32_0 : i32, i32, i32
  }
  func.func @transform_2(%arg0: i32) -> (i32, i32) {
    %c0_i32 = arith.constant 0 : i32
    %c0_i32_0 = arith.constant 0 : i32
    %c0_i32_1 = arith.constant 0 : i32
    return %c0_i32, %c0_i32_0 : i32, i32
  }
  func.func @transform_3(%arg0: i32) -> (i32, i32) {
    %c0_i32 = arith.constant 0 : i32
    %c0_i32_0 = arith.constant 0 : i32
    %c0_i32_1 = arith.constant 0 : i32
    return %c0_i32, %c0_i32_0 : i32, i32
  }
  func.func @transform_4(%arg0: i32) -> (i32, i32) {
    %c0_i32 = arith.constant 0 : i32
    %c0_i32_0 = arith.constant 0 : i32
    %c0_i32_1 = arith.constant 0 : i32
    return %c0_i32, %c0_i32_0 : i32, i32
  }
  func.func @transform_5(%arg0: i32) -> (i32, i32) {
    %c0_i32 = arith.constant 0 : i32
    %c0_i32_0 = arith.constant 0 : i32
    %c0_i32_1 = arith.constant 0 : i32
    return %c0_i32, %c0_i32_0 : i32, i32
  }
  func.func @transform_6(%arg0: i32) -> (i32, i32) {
    %c0_i32 = arith.constant 0 : i32
    %c0_i32_0 = arith.constant 0 : i32
    %c0_i32_1 = arith.constant 0 : i32
    return %c0_i32, %c0_i32_0 : i32, i32
  }
  func.func @transform_7(%arg0: i32) -> (i32, i32) {
    %c0_i32 = arith.constant 0 : i32
    %c0_i32_0 = arith.constant 0 : i32
    %c0_i32_1 = arith.constant 0 : i32
    return %c0_i32, %c0_i32_0 : i32, i32
  }
  func.func @transform_8(%arg0: i32) -> (i32, i32) {
    %c0_i32 = arith.constant 0 : i32
    %c0_i32_0 = arith.constant 0 : i32
    %c0_i32_1 = arith.constant 0 : i32
    return %c0_i32, %c0_i32_0 : i32, i32
  }
  func.func @transform_9(%arg0: i32) -> (i32, i32) {
    %c0_i32 = arith.constant 0 : i32
    %c0_i32_0 = arith.constant 0 : i32
    %c0_i32_1 = arith.constant 0 : i32
    return %c0_i32, %c0_i32_0 : i32, i32
  }
  func.func @transform_10(%arg0: i32) -> (i32, i32) {
    %c0_i32 = arith.constant 0 : i32
    %c0_i32_0 = arith.constant 0 : i32
    %c0_i32_1 = arith.constant 0 : i32
    return %c0_i32, %c0_i32_0 : i32, i32
  }
  func.func @transform_11(%arg0: i32) -> (i32, i32) {
    %c0_i32 = arith.constant 0 : i32
    %c0_i32_0 = arith.constant 0 : i32
    %c0_i32_1 = arith.constant 0 : i32
    return %c0_i32, %c0_i32_0 : i32, i32
  }
  func.func @transform_12(%arg0: i32) -> (i32, i32) {
    %c0_i32 = arith.constant 0 : i32
    %c0_i32_0 = arith.constant 0 : i32
    %c0_i32_1 = arith.constant 0 : i32
    return %c0_i32, %c0_i32_0 : i32, i32
  }
  func.func @transform_13(%arg0: i32) -> (i32, i32) {
    %c0_i32 = arith.constant 0 : i32
    %c0_i32_0 = arith.constant 0 : i32
    %c0_i32_1 = arith.constant 0 : i32
    return %c0_i32, %c0_i32_0 : i32, i32
  }
  func.func @transform_14(%arg0: i32) -> (i32, i32) {
    %c0_i32 = arith.constant 0 : i32
    %c0_i32_0 = arith.constant 0 : i32
    %c0_i32_1 = arith.constant 0 : i32
    return %c0_i32, %c0_i32_0 : i32, i32
  }
  func.func @transform_15(%arg0: i32) -> (i32, i32) {
    %c0_i32 = arith.constant 0 : i32
    %c0_i32_0 = arith.constant 0 : i32
    %c0_i32_1 = arith.constant 0 : i32
    return %c0_i32, %c0_i32_0 : i32, i32
  }
  func.func @transform_16(%arg0: i32) -> (i32, i32) {
    %c0_i32 = arith.constant 0 : i32
    %c0_i32_0 = arith.constant 0 : i32
    %c0_i32_1 = arith.constant 0 : i32
    return %c0_i32, %c0_i32_0 : i32, i32
  }
  func.func @transform_17(%arg0: i32) -> (i32, i32) {
    %c0_i32 = arith.constant 0 : i32
    %c0_i32_0 = arith.constant 0 : i32
    %c0_i32_1 = arith.constant 0 : i32
    return %c0_i32, %c0_i32_0 : i32, i32
  }
  func.func @transform_18(%arg0: i32) -> (i32, i32) {
    %c0_i32 = arith.constant 0 : i32
    %c0_i32_0 = arith.constant 0 : i32
    %c0_i32_1 = arith.constant 0 : i32
    return %c0_i32, %c0_i32_0 : i32, i32
  }
  func.func @transform_19(%arg0: i32) -> (i32, i32) {
    %c0_i32 = arith.constant 0 : i32
    %c0_i32_0 = arith.constant 0 : i32
    %c0_i32_1 = arith.constant 0 : i32
    return %c0_i32, %c0_i32_0 : i32, i32
  }
  func.func @transform_20(%arg0: i32) -> (i32, i32) {
    %c0_i32 = arith.constant 0 : i32
    %c0_i32_0 = arith.constant 0 : i32
    %c0_i32_1 = arith.constant 0 : i32
    return %c0_i32, %c0_i32_0 : i32, i32
  }
  func.func @transform_21(%arg0: i32) -> (i32, i32) {
    %c0_i32 = arith.constant 0 : i32
    %c0_i32_0 = arith.constant 0 : i32
    %c0_i32_1 = arith.constant 0 : i32
    return %c0_i32, %c0_i32_0 : i32, i32
  }
  func.func @transform_22(%arg0: i32) -> (i32, i32) {
    %c0_i32 = arith.constant 0 : i32
    %c0_i32_0 = arith.constant 0 : i32
    %c0_i32_1 = arith.constant 0 : i32
    return %c0_i32, %c0_i32_0 : i32, i32
  }
  func.func @transform_23(%arg0: i32) -> (i32, i32) {
    %c0_i32 = arith.constant 0 : i32
    %c0_i32_0 = arith.constant 0 : i32
    %c0_i32_1 = arith.constant 0 : i32
    return %c0_i32, %c0_i32_0 : i32, i32
  }
  func.func @transform_24(%arg0: i32) -> (i32, i32) {
    %c0_i32 = arith.constant 0 : i32
    %c0_i32_0 = arith.constant 0 : i32
    %c0_i32_1 = arith.constant 0 : i32
    return %c0_i32, %c0_i32_0 : i32, i32
  }
  func.func @transform_25(%arg0: i32) -> (i32, i32) {
    %c0_i32 = arith.constant 0 : i32
    %c0_i32_0 = arith.constant 0 : i32
    %c0_i32_1 = arith.constant 0 : i32
    return %c0_i32, %c0_i32_0 : i32, i32
  }
  func.func @transform_26(%arg0: i32) -> (i32, i32) {
    %c0_i32 = arith.constant 0 : i32
    %c0_i32_0 = arith.constant 0 : i32
    %c0_i32_1 = arith.constant 0 : i32
    return %c0_i32, %c0_i32_0 : i32, i32
  }
  func.func @transform_27(%arg0: i32) -> (i32, i32) {
    %c0_i32 = arith.constant 0 : i32
    %c0_i32_0 = arith.constant 0 : i32
    %c0_i32_1 = arith.constant 0 : i32
    return %c0_i32, %c0_i32_0 : i32, i32
  }
  func.func @transform_28(%arg0: i32) -> (i32, i32) {
    %c0_i32 = arith.constant 0 : i32
    %c0_i32_0 = arith.constant 0 : i32
    %c0_i32_1 = arith.constant 0 : i32
    return %c0_i32, %c0_i32_0 : i32, i32
  }
  func.func @transform_29(%arg0: i32) -> (i32, i32) {
    %c0_i32 = arith.constant 0 : i32
    %c0_i32_0 = arith.constant 0 : i32
    %c0_i32_1 = arith.constant 0 : i32
    return %c0_i32, %c0_i32_0 : i32, i32
  }
  func.func @transform_30(%arg0: i32) -> (i32, i32) {
    %c0_i32 = arith.constant 0 : i32
    %c0_i32_0 = arith.constant 0 : i32
    %c0_i32_1 = arith.constant 0 : i32
    return %c0_i32, %c0_i32_0 : i32, i32
  }
  func.func @transform_31(%arg0: i32) -> (i32, i32) {
    %c0_i32 = arith.constant 0 : i32
    %c0_i32_0 = arith.constant 0 : i32
    %c0_i32_1 = arith.constant 0 : i32
    return %c0_i32, %c0_i32_0 : i32, i32
  }
  func.func @transform_32(%arg0: i32) -> (i32, i32) {
    %c0_i32 = arith.constant 0 : i32
    %c0_i32_0 = arith.constant 0 : i32
    %c0_i32_1 = arith.constant 0 : i32
    return %c0_i32, %c0_i32_0 : i32, i32
  }
  func.func @transform_33(%arg0: i32) -> (i32, i32) {
    %c0_i32 = arith.constant 0 : i32
    %c0_i32_0 = arith.constant 0 : i32
    %c0_i32_1 = arith.constant 0 : i32
    return %c0_i32, %c0_i32_0 : i32, i32
  }
  func.func @transform_34(%arg0: i32) -> (i32, i32) {
    %c0_i32 = arith.constant 0 : i32
    %c0_i32_0 = arith.constant 0 : i32
    %c0_i32_1 = arith.constant 0 : i32
    return %c0_i32, %c0_i32_0 : i32, i32
  }
  func.func @transform_35(%arg0: i32) -> (i32, i32) {
    %c0_i32 = arith.constant 0 : i32
    %c0_i32_0 = arith.constant 0 : i32
    %c0_i32_1 = arith.constant 0 : i32
    return %c0_i32, %c0_i32_0 : i32, i32
  }
  func.func @transform_36(%arg0: i32) -> (i32, i32) {
    %c0_i32 = arith.constant 0 : i32
    %c0_i32_0 = arith.constant 0 : i32
    %c0_i32_1 = arith.constant 0 : i32
    return %c0_i32, %c0_i32_0 : i32, i32
  }
  func.func @transform_37(%arg0: i32) -> (i32, i32) {
    %c0_i32 = arith.constant 0 : i32
    %c0_i32_0 = arith.constant 0 : i32
    %c0_i32_1 = arith.constant 0 : i32
    return %c0_i32, %c0_i32_0 : i32, i32
  }
  func.func @transform_38(%arg0: i32) -> (i32, i32) {
    %c0_i32 = arith.constant 0 : i32
    %c0_i32_0 = arith.constant 0 : i32
    %c0_i32_1 = arith.constant 0 : i32
    return %c0_i32, %c0_i32_0 : i32, i32
  }
  func.func @transform_39(%arg0: i32) -> (i32, i32) {
    %c0_i32 = arith.constant 0 : i32
    %c0_i32_0 = arith.constant 0 : i32
    %c0_i32_1 = arith.constant 0 : i32
    return %c0_i32, %c0_i32_0 : i32, i32
  }
  func.func @transform_40(%arg0: i32) -> (i32, i32, i32) {
    %c0_i32 = arith.constant 0 : i32
    %c0_i32_0 = arith.constant 0 : i32
    %c0_i32_1 = arith.constant 0 : i32
    return %arg0, %c0_i32, %c0_i32_0 : i32, i32, i32
  }
}

module attributes {stable_mosaic.version = 11 : i64} {
  func.func @mlp_head_kernel(%arg0: i32, %arg1: memref<16x32xf32, #tpu.memory_space<vmem>>, %arg2: memref<1x32xf32, #tpu.memory_space<vmem>>, %arg3: memref<1x32xf32, #tpu.memory_space<vmem>>, %arg4: memref<32x128xbf16, #tpu.memory_space<vmem>>, %arg5: memref<1x128xf32, #tpu.memory_space<vmem>>, %arg6: memref<16x128xf32, #tpu.memory_space<vmem>>) attributes {dimension_semantics = [#tpu.dimension_semantics<parallel>], iteration_bounds = array<i64: 1>, scalar_prefetch = 0 : i64, scratch_operands = 0 : i64, tpu.core_type = #tpu.core_type<tc>, window_params = [{transform_indices = @transform_0, window_bounds = array<i64: 16, 32>}, {pipeline_mode = #tpu.pipeline_mode<synchronous>, transform_indices = @transform_1, window_bounds = array<i64: 1, 32>}, {pipeline_mode = #tpu.pipeline_mode<synchronous>, transform_indices = @transform_2, window_bounds = array<i64: 1, 32>}, {pipeline_mode = #tpu.pipeline_mode<synchronous>, transform_indices = @transform_3, window_bounds = array<i64: 32, 128>}, {pipeline_mode = #tpu.pipeline_mode<synchronous>, transform_indices = @transform_4, window_bounds = array<i64: 1, 128>}, {transform_indices = @transform_5, window_bounds = array<i64: 16, 128>}]} {
    %c0 = arith.constant 0 : index
    %c0_0 = arith.constant 0 : index
    %0 = vector.load %arg1[%c0, %c0_0] : memref<16x32xf32, #tpu.memory_space<vmem>>, vector<16x32xf32>
    %c0_1 = arith.constant 0 : index
    %c0_2 = arith.constant 0 : index
    %1 = vector.load %arg2[%c0_1, %c0_2] : memref<1x32xf32, #tpu.memory_space<vmem>>, vector<1x32xf32>
    %c0_3 = arith.constant 0 : index
    %c0_4 = arith.constant 0 : index
    %2 = vector.load %arg3[%c0_3, %c0_4] : memref<1x32xf32, #tpu.memory_space<vmem>>, vector<1x32xf32>
    %cst = arith.constant dense<0.000000e+00> : vector<16xf32>
    %3 = vector.multi_reduction <add>, %0, %cst [1] : vector<16x32xf32> to vector<16xf32>
    %4 = vector.shape_cast %3 : vector<16xf32> to vector<16x1xf32>
    %cst_5 = arith.constant 3.200000e+01 : f32
    %5 = vector.broadcast %cst_5 : f32 to vector<16x1xf32>
    %6 = arith.divf %4, %5 : vector<16x1xf32>
    %7 = vector.broadcast %6 : vector<16x1xf32> to vector<16x32xf32>
    %8 = arith.subf %0, %7 : vector<16x32xf32>
    %9 = arith.mulf %8, %8 : vector<16x32xf32>
    %cst_6 = arith.constant dense<0.000000e+00> : vector<16xf32>
    %10 = vector.multi_reduction <add>, %9, %cst_6 [1] : vector<16x32xf32> to vector<16xf32>
    %11 = vector.shape_cast %10 : vector<16xf32> to vector<16x1xf32>
    %cst_7 = arith.constant 3.200000e+01 : f32
    %12 = vector.broadcast %cst_7 : f32 to vector<16x1xf32>
    %13 = arith.divf %11, %12 : vector<16x1xf32>
    %14 = vector.broadcast %6 : vector<16x1xf32> to vector<16x32xf32>
    %15 = arith.subf %0, %14 : vector<16x32xf32>
    %cst_8 = arith.constant 9.99999974E-6 : f32
    %16 = vector.broadcast %cst_8 : f32 to vector<16x1xf32>
    %17 = arith.addf %13, %16 : vector<16x1xf32>
    %18 = math.rsqrt %17 : vector<16x1xf32>
    %19 = vector.broadcast %18 : vector<16x1xf32> to vector<16x32xf32>
    %20 = arith.mulf %15, %19 : vector<16x32xf32>
    %21 = vector.broadcast %1 : vector<1x32xf32> to vector<16x32xf32>
    %22 = arith.mulf %20, %21 : vector<16x32xf32>
    %23 = vector.broadcast %2 : vector<1x32xf32> to vector<16x32xf32>
    %24 = arith.addf %22, %23 : vector<16x32xf32>
    %c0_9 = arith.constant 0 : index
    %c0_10 = arith.constant 0 : index
    %25 = vector.load %arg4[%c0_9, %c0_10] : memref<32x128xbf16, #tpu.memory_space<vmem>>, vector<32x128xbf16>
    %26 = arith.truncf %24 : vector<16x32xf32> to vector<16x32xbf16>
    %cst_11 = arith.constant dense<0.000000e+00> : vector<16x128xf32>
    %27 = tpu.matmul %26, %25, %cst_11 {dimension_numbers = #tpu.dot_dimension_numbers<[1], [0], [0], [1], [0, 0, 1, 1], [], []>} : vector<16x32xbf16>, vector<32x128xbf16>, vector<16x128xf32> -> vector<16x128xf32>
    %c0_12 = arith.constant 0 : index
    %c0_13 = arith.constant 0 : index
    %28 = vector.load %arg5[%c0_12, %c0_13] : memref<1x128xf32, #tpu.memory_space<vmem>>, vector<1x128xf32>
    %29 = vector.broadcast %28 : vector<1x128xf32> to vector<16x128xf32>
    %30 = arith.addf %27, %29 : vector<16x128xf32>
    %c0_14 = arith.constant 0 : index
    %c0_15 = arith.constant 0 : index
    %31 = vector.load %arg6[%c0_14, %c0_15] : memref<16x128xf32, #tpu.memory_space<vmem>>, vector<16x128xf32>
    tpu.vector_store %arg6[%c0_14, %c0_15], %30 {strides = array<i32>} : memref<16x128xf32, #tpu.memory_space<vmem>>, vector<16x128xf32>,
    return
  }
  func.func @transform_0(%arg0: i32) -> (i32, i32) {
    %c0_i32 = arith.constant 0 : i32
    %c0_i32_0 = arith.constant 0 : i32
    return %arg0, %c0_i32 : i32, i32
  }
  func.func @transform_1(%arg0: i32) -> (i32, i32) {
    %c0_i32 = arith.constant 0 : i32
    %c0_i32_0 = arith.constant 0 : i32
    %c0_i32_1 = arith.constant 0 : i32
    return %c0_i32, %c0_i32_0 : i32, i32
  }
  func.func @transform_2(%arg0: i32) -> (i32, i32) {
    %c0_i32 = arith.constant 0 : i32
    %c0_i32_0 = arith.constant 0 : i32
    %c0_i32_1 = arith.constant 0 : i32
    return %c0_i32, %c0_i32_0 : i32, i32
  }
  func.func @transform_3(%arg0: i32) -> (i32, i32) {
    %c0_i32 = arith.constant 0 : i32
    %c0_i32_0 = arith.constant 0 : i32
    %c0_i32_1 = arith.constant 0 : i32
    return %c0_i32, %c0_i32_0 : i32, i32
  }
  func.func @transform_4(%arg0: i32) -> (i32, i32) {
    %c0_i32 = arith.constant 0 : i32
    %c0_i32_0 = arith.constant 0 : i32
    %c0_i32_1 = arith.constant 0 : i32
    return %c0_i32, %c0_i32_0 : i32, i32
  }
  func.func @transform_5(%arg0: i32) -> (i32, i32) {
    %c0_i32 = arith.constant 0 : i32
    %c0_i32_0 = arith.constant 0 : i32
    return %arg0, %c0_i32 : i32, i32
  }
}

module attributes {stable_mosaic.version = 11 : i64} {
  func.func @depth_step_kernel(%arg0: i32, %arg1: memref<1x8x32xf32, #tpu.memory_space<vmem>>, %arg2: memref<1x8x16xf32, #tpu.memory_space<vmem>>, %arg3: memref<32x64xbf16, #tpu.memory_space<vmem>>, %arg4: memref<1x64xf32, #tpu.memory_space<vmem>>, %arg5: memref<1x64xf32, #tpu.memory_space<vmem>>, %arg6: memref<1x64xf32, #tpu.memory_space<vmem>>, %arg7: memref<64x128xbf16, #tpu.memory_space<vmem>>, %arg8: memref<1x128xf32, #tpu.memory_space<vmem>>, %arg9: memref<1x128xf32, #tpu.memory_space<vmem>>, %arg10: memref<1x128xf32, #tpu.memory_space<vmem>>, %arg11: memref<128x64xbf16, #tpu.memory_space<vmem>>, %arg12: memref<1x64xf32, #tpu.memory_space<vmem>>, %arg13: memref<1x64xf32, #tpu.memory_space<vmem>>, %arg14: memref<1x64xf32, #tpu.memory_space<vmem>>, %arg15: memref<64x64xbf16, #tpu.memory_space<vmem>>, %arg16: memref<1x64xf32, #tpu.memory_space<vmem>>, %arg17: memref<1x64xf32, #tpu.memory_space<vmem>>, %arg18: memref<1x64xf32, #tpu.memory_space<vmem>>, %arg19: memref<64x32xbf16, #tpu.memory_space<vmem>>, %arg20: memref<1x32xf32, #tpu.memory_space<vmem>>, %arg21: memref<1x32xf32, #tpu.memory_space<vmem>>, %arg22: memref<1x32xf32, #tpu.memory_space<vmem>>, %arg23: memref<32x32xbf16, #tpu.memory_space<vmem>>, %arg24: memref<1x32xf32, #tpu.memory_space<vmem>>, %arg25: memref<32x32xbf16, #tpu.memory_space<vmem>>, %arg26: memref<1x32xf32, #tpu.memory_space<vmem>>, %arg27: memref<32x32xbf16, #tpu.memory_space<vmem>>, %arg28: memref<1x32xf32, #tpu.memory_space<vmem>>, %arg29: memref<32x32xbf16, #tpu.memory_space<vmem>>, %arg30: memref<1x32xf32, #tpu.memory_space<vmem>>, %arg31: memref<1x32xf32, #tpu.memory_space<vmem>>, %arg32: memref<1x32xf32, #tpu.memory_space<vmem>>, %arg33: memref<32x2048xbf16, #tpu.memory_space<vmem>>, %arg34: memref<1x2048xf32, #tpu.memory_space<vmem>>, %arg35: memref<2048x32xbf16, #tpu.memory_space<vmem>>, %arg36: memref<1x32xf32, #tpu.memory_space<vmem>>, %arg37: memref<1x32xf32, #tpu.memory_space<vmem>>, %arg38: memref<1x32xf32, #tpu.memory_space<vmem>>, %arg39: memref<16x32xbf16, #tpu.memory_space<vmem>>, %arg40: memref<1x32xf32, #tpu.memory_space<vmem>>, %arg41: memref<1x8x32xf32, #tpu.memory_space<vmem>>) attributes {dimension_semantics = [#tpu.dimension_semantics<parallel>], iteration_bounds = array<i64: 2>, scalar_prefetch = 0 : i64, scratch_operands = 0 : i64, tpu.core_type = #tpu.core_type<tc>, window_params = [{transform_indices = @transform_0, window_bounds = array<i64: 1, 8, 32>}, {transform_indices = @transform_1, window_bounds = array<i64: 1, 8, 16>}, {pipeline_mode = #tpu.pipeline_mode<synchronous>, transform_indices = @transform_2, window_bounds = array<i64: 32, 64>}, {pipeline_mode = #tpu.pipeline_mode<synchronous>, transform_indices = @transform_3, window_bounds = array<i64: 1, 64>}, {pipeline_mode = #tpu.pipeline_mode<synchronous>, transform_indices = @transform_4, window_bounds = array<i64: 1, 64>}, {pipeline_mode = #tpu.pipeline_mode<synchronous>, transform_indices = @transform_5, window_bounds = array<i64: 1, 64>}, {pipeline_mode = #tpu.pipeline_mode<synchronous>, transform_indices = @transform_6, window_bounds = array<i64: 64, 128>}, {pipeline_mode = #tpu.pipeline_mode<synchronous>, transform_indices = @transform_7, window_bounds = array<i64: 1, 128>}, {pipeline_mode = #tpu.pipeline_mode<synchronous>, transform_indices = @transform_8, window_bounds = array<i64: 1, 128>}, {pipeline_mode = #tpu.pipeline_mode<synchronous>, transform_indices = @transform_9, window_bounds = array<i64: 1, 128>}, {pipeline_mode = #tpu.pipeline_mode<synchronous>, transform_indices = @transform_10, window_bounds = array<i64: 128, 64>}, {pipeline_mode = #tpu.pipeline_mode<synchronous>, transform_indices = @transform_11, window_bounds = array<i64: 1, 64>}, {pipeline_mode = #tpu.pipeline_mode<synchronous>, transform_indices = @transform_12, window_bounds = array<i64: 1, 64>}, {pipeline_mode = #tpu.pipeline_mode<synchronous>, transform_indices = @transform_13, window_bounds = array<i64: 1, 64>}, {pipeline_mode = #tpu.pipeline_mode<synchronous>, transform_indices = @transform_14, window_bounds = array<i64: 64, 64>}, {pipeline_mode = #tpu.pipeline_mode<synchronous>, transform_indices = @transform_15, window_bounds = array<i64: 1, 64>}, {pipeline_mode = #tpu.pipeline_mode<synchronous>, transform_indices = @transform_16, window_bounds = array<i64: 1, 64>}, {pipeline_mode = #tpu.pipeline_mode<synchronous>, transform_indices = @transform_17, window_bounds = array<i64: 1, 64>}, {pipeline_mode = #tpu.pipeline_mode<synchronous>, transform_indices = @transform_18, window_bounds = array<i64: 64, 32>}, {pipeline_mode = #tpu.pipeline_mode<synchronous>, transform_indices = @transform_19, window_bounds = array<i64: 1, 32>}, {pipeline_mode = #tpu.pipeline_mode<synchronous>, transform_indices = @transform_20, window_bounds = array<i64: 1, 32>}, {pipeline_mode = #tpu.pipeline_mode<synchronous>, transform_indices = @transform_21, window_bounds = array<i64: 1, 32>}, {pipeline_mode = #tpu.pipeline_mode<synchronous>, transform_indices = @transform_22, window_bounds = array<i64: 32, 32>}, {pipeline_mode = #tpu.pipeline_mode<synchronous>, transform_indices = @transform_23, window_bounds = array<i64: 1, 32>}, {pipeline_mode = #tpu.pipeline_mode<synchronous>, transform_indices = @transform_24, window_bounds = array<i64: 32, 32>}, {pipeline_mode = #tpu.pipeline_mode<synchronous>, transform_indices = @transform_25, window_bounds = array<i64: 1, 32>}, {pipeline_mode = #tpu.pipeline_mode<synchronous>, transform_indices = @transform_26, window_bounds = array<i64: 32, 32>}, {pipeline_mode = #tpu.pipeline_mode<synchronous>, transform_indices = @transform_27, window_bounds = array<i64: 1, 32>}, {pipeline_mode = #tpu.pipeline_mode<synchronous>, transform_indices = @transform_28, window_bounds = array<i64: 32, 32>}, {pipeline_mode = #tpu.pipeline_mode<synchronous>, transform_indices = @transform_29, window_bounds = array<i64: 1, 32>}, {pipeline_mode = #tpu.pipeline_mode<synchronous>, transform_indices = @transform_30, window_bounds = array<i64: 1, 32>}, {pipeline_mode = #tpu.pipeline_mode<synchronous>, transform_indices = @transform_31, window_bounds = array<i64: 1, 32>}, {pipeline_mode = #tpu.pipeline_mode<synchronous>, transform_indices = @transform_32, window_bounds = array<i64: 32, 2048>}, {pipeline_mode = #tpu.pipeline_mode<synchronous>, transform_indices = @transform_33, window_bounds = array<i64: 1, 2048>}, {pipeline_mode = #tpu.pipeline_mode<synchronous>, transform_indices = @transform_34, window_bounds = array<i64: 2048, 32>}, {pipeline_mode = #tpu.pipeline_mode<synchronous>, transform_indices = @transform_35, window_bounds = array<i64: 1, 32>}, {pipeline_mode = #tpu.pipeline_mode<synchronous>, transform_indices = @transform_36, window_bounds = array<i64: 1, 32>}, {pipeline_mode = #tpu.pipeline_mode<synchronous>, transform_indices = @transform_37, window_bounds = array<i64: 1, 32>}, {pipeline_mode = #tpu.pipeline_mode<synchronous>, transform_indices = @transform_38, window_bounds = array<i64: 16, 32>}, {pipeline_mode = #tpu.pipeline_mode<synchronous>, transform_indices = @transform_39, window_bounds = array<i64: 1, 32>}, {transform_indices = @transform_40, window_bounds = array<i64: 1, 8, 32>}]} {
    %c0 = arith.constant 0 : index
    %c0_0 = arith.constant 0 : index
    %c0_1 = arith.constant 0 : index
    %0 = vector.load %arg1[%c0, %c0_0, %c0_1] : memref<1x8x32xf32, #tpu.memory_space<vmem>>, vector<1x8x32xf32>
    %1 = vector.shape_cast %0 : vector<1x8x32xf32> to vector<8x32xf32>
    %c0_2 = arith.constant 0 : index
    %c0_3 = arith.constant 0 : index
    %2 = vector.load %arg3[%c0_2, %c0_3] : memref<32x64xbf16, #tpu.memory_space<vmem>>, vector<32x64xbf16>
    %3 = arith.truncf %1 : vector<8x32xf32> to vector<8x32xbf16>
    %cst = arith.constant dense<0.000000e+00> : vector<8x64xf32>
    %4 = tpu.matmul %3, %2, %cst {dimension_numbers = #tpu.dot_dimension_numbers<[1], [0], [0], [1], [0, 0, 1, 1], [], []>} : vector<8x32xbf16>, vector<32x64xbf16>, vector<8x64xf32> -> vector<8x64xf32>
    %c0_4 = arith.constant 0 : index
    %c0_5 = arith.constant 0 : index
    %5 = vector.load %arg4[%c0_4, %c0_5] : memref<1x64xf32, #tpu.memory_space<vmem>>, vector<1x64xf32>
    %6 = vector.broadcast %5 : vector<1x64xf32> to vector<8x64xf32>
    %7 = arith.addf %4, %6 : vector<8x64xf32>
    %8 = math.tanh %7 : vector<8x64xf32>
    %c0_6 = arith.constant 0 : index
    %c0_7 = arith.constant 0 : index
    %9 = vector.load %arg5[%c0_6, %c0_7] : memref<1x64xf32, #tpu.memory_space<vmem>>, vector<1x64xf32>
    %c0_8 = arith.constant 0 : index
    %c0_9 = arith.constant 0 : index
    %10 = vector.load %arg6[%c0_8, %c0_9] : memref<1x64xf32, #tpu.memory_space<vmem>>, vector<1x64xf32>
    %cst_10 = arith.constant dense<0.000000e+00> : vector<8xf32>
    %11 = vector.multi_reduction <add>, %8, %cst_10 [1] : vector<8x64xf32> to vector<8xf32>
    %12 = vector.shape_cast %11 : vector<8xf32> to vector<8x1xf32>
    %cst_11 = arith.constant 6.400000e+01 : f32
    %13 = vector.broadcast %cst_11 : f32 to vector<8x1xf32>
    %14 = arith.divf %12, %13 : vector<8x1xf32>
    %15 = vector.broadcast %14 : vector<8x1xf32> to vector<8x64xf32>
    %16 = arith.subf %8, %15 : vector<8x64xf32>
    %17 = arith.mulf %16, %16 : vector<8x64xf32>
    %cst_12 = arith.constant dense<0.000000e+00> : vector<8xf32>
    %18 = vector.multi_reduction <add>, %17, %cst_12 [1] : vector<8x64xf32> to vector<8xf32>
    %19 = vector.shape_cast %18 : vector<8xf32> to vector<8x1xf32>
    %cst_13 = arith.constant 6.400000e+01 : f32
    %20 = vector.broadcast %cst_13 : f32 to vector<8x1xf32>
    %21 = arith.divf %19, %20 : vector<8x1xf32>
    %22 = vector.broadcast %14 : vector<8x1xf32> to vector<8x64xf32>
    %23 = arith.subf %8, %22 : vector<8x64xf32>
    %cst_14 = arith.constant 9.99999974E-6 : f32
    %24 = vector.broadcast %cst_14 : f32 to vector<8x1xf32>
    %25 = arith.addf %21, %24 : vector<8x1xf32>
    %26 = math.rsqrt %25 : vector<8x1xf32>
    %27 = vector.broadcast %26 : vector<8x1xf32> to vector<8x64xf32>
    %28 = arith.mulf %23, %27 : vector<8x64xf32>
    %29 = vector.broadcast %9 : vector<1x64xf32> to vector<8x64xf32>
    %30 = arith.mulf %28, %29 : vector<8x64xf32>
    %31 = vector.broadcast %10 : vector<1x64xf32> to vector<8x64xf32>
    %32 = arith.addf %30, %31 : vector<8x64xf32>
    %c0_15 = arith.constant 0 : index
    %c0_16 = arith.constant 0 : index
    %33 = vector.load %arg7[%c0_15, %c0_16] : memref<64x128xbf16, #tpu.memory_space<vmem>>, vector<64x128xbf16>
    %34 = arith.truncf %32 : vector<8x64xf32> to vector<8x64xbf16>
    %cst_17 = arith.constant dense<0.000000e+00> : vector<8x128xf32>
    %35 = tpu.matmul %34, %33, %cst_17 {dimension_numbers = #tpu.dot_dimension_numbers<[1], [0], [0], [1], [0, 0, 1, 1], [], []>} : vector<8x64xbf16>, vector<64x128xbf16>, vector<8x128xf32> -> vector<8x128xf32>
    %c0_18 = arith.constant 0 : index
    %c0_19 = arith.constant 0 : index
    %36 = vector.load %arg8[%c0_18, %c0_19] : memref<1x128xf32, #tpu.memory_space<vmem>>, vector<1x128xf32>
    %37 = vector.broadcast %36 : vector<1x128xf32> to vector<8x128xf32>
    %38 = arith.addf %35, %37 : vector<8x128xf32>
    %39 = math.tanh %38 : vector<8x128xf32>
    %c0_20 = arith.constant 0 : index
    %c0_21 = arith.constant 0 : index
    %40 = vector.load %arg9[%c0_20, %c0_21] : memref<1x128xf32, #tpu.memory_space<vmem>>, vector<1x128xf32>
    %c0_22 = arith.constant 0 : index
    %c0_23 = arith.constant 0 : index
    %41 = vector.load %arg10[%c0_22, %c0_23] : memref<1x128xf32, #tpu.memory_space<vmem>>, vector<1x128xf32>
    %cst_24 = arith.constant dense<0.000000e+00> : vector<8xf32>
    %42 = vector.multi_reduction <add>, %39, %cst_24 [1] : vector<8x128xf32> to vector<8xf32>
    %43 = vector.shape_cast %42 : vector<8xf32> to vector<8x1xf32>
    %cst_25 = arith.constant 1.280000e+02 : f32
    %44 = vector.broadcast %cst_25 : f32 to vector<8x1xf32>
    %45 = arith.divf %43, %44 : vector<8x1xf32>
    %46 = vector.broadcast %45 : vector<8x1xf32> to vector<8x128xf32>
    %47 = arith.subf %39, %46 : vector<8x128xf32>
    %48 = arith.mulf %47, %47 : vector<8x128xf32>
    %cst_26 = arith.constant dense<0.000000e+00> : vector<8xf32>
    %49 = vector.multi_reduction <add>, %48, %cst_26 [1] : vector<8x128xf32> to vector<8xf32>
    %50 = vector.shape_cast %49 : vector<8xf32> to vector<8x1xf32>
    %cst_27 = arith.constant 1.280000e+02 : f32
    %51 = vector.broadcast %cst_27 : f32 to vector<8x1xf32>
    %52 = arith.divf %50, %51 : vector<8x1xf32>
    %53 = vector.broadcast %45 : vector<8x1xf32> to vector<8x128xf32>
    %54 = arith.subf %39, %53 : vector<8x128xf32>
    %cst_28 = arith.constant 9.99999974E-6 : f32
    %55 = vector.broadcast %cst_28 : f32 to vector<8x1xf32>
    %56 = arith.addf %52, %55 : vector<8x1xf32>
    %57 = math.rsqrt %56 : vector<8x1xf32>
    %58 = vector.broadcast %57 : vector<8x1xf32> to vector<8x128xf32>
    %59 = arith.mulf %54, %58 : vector<8x128xf32>
    %60 = vector.broadcast %40 : vector<1x128xf32> to vector<8x128xf32>
    %61 = arith.mulf %59, %60 : vector<8x128xf32>
    %62 = vector.broadcast %41 : vector<1x128xf32> to vector<8x128xf32>
    %63 = arith.addf %61, %62 : vector<8x128xf32>
    %c0_29 = arith.constant 0 : index
    %c0_30 = arith.constant 0 : index
    %64 = vector.load %arg11[%c0_29, %c0_30] : memref<128x64xbf16, #tpu.memory_space<vmem>>, vector<128x64xbf16>
    %65 = arith.truncf %63 : vector<8x128xf32> to vector<8x128xbf16>
    %cst_31 = arith.constant dense<0.000000e+00> : vector<8x64xf32>
    %66 = tpu.matmul %65, %64, %cst_31 {dimension_numbers = #tpu.dot_dimension_numbers<[1], [0], [0], [1], [0, 0, 1, 1], [], []>} : vector<8x128xbf16>, vector<128x64xbf16>, vector<8x64xf32> -> vector<8x64xf32>
    %c0_32 = arith.constant 0 : index
    %c0_33 = arith.constant 0 : index
    %67 = vector.load %arg12[%c0_32, %c0_33] : memref<1x64xf32, #tpu.memory_space<vmem>>, vector<1x64xf32>
    %68 = vector.broadcast %67 : vector<1x64xf32> to vector<8x64xf32>
    %69 = arith.addf %66, %68 : vector<8x64xf32>
    %70 = math.tanh %69 : vector<8x64xf32>
    %c0_34 = arith.constant 0 : index
    %c0_35 = arith.constant 0 : index
    %71 = vector.load %arg13[%c0_34, %c0_35] : memref<1x64xf32, #tpu.memory_space<vmem>>, vector<1x64xf32>
    %c0_36 = arith.constant 0 : index
    %c0_37 = arith.constant 0 : index
    %72 = vector.load %arg14[%c0_36, %c0_37] : memref<1x64xf32, #tpu.memory_space<vmem>>, vector<1x64xf32>
    %cst_38 = arith.constant dense<0.000000e+00> : vector<8xf32>
    %73 = vector.multi_reduction <add>, %70, %cst_38 [1] : vector<8x64xf32> to vector<8xf32>
    %74 = vector.shape_cast %73 : vector<8xf32> to vector<8x1xf32>
    %cst_39 = arith.constant 6.400000e+01 : f32
    %75 = vector.broadcast %cst_39 : f32 to vector<8x1xf32>
    %76 = arith.divf %74, %75 : vector<8x1xf32>
    %77 = vector.broadcast %76 : vector<8x1xf32> to vector<8x64xf32>
    %78 = arith.subf %70, %77 : vector<8x64xf32>
    %79 = arith.mulf %78, %78 : vector<8x64xf32>
    %cst_40 = arith.constant dense<0.000000e+00> : vector<8xf32>
    %80 = vector.multi_reduction <add>, %79, %cst_40 [1] : vector<8x64xf32> to vector<8xf32>
    %81 = vector.shape_cast %80 : vector<8xf32> to vector<8x1xf32>
    %cst_41 = arith.constant 6.400000e+01 : f32
    %82 = vector.broadcast %cst_41 : f32 to vector<8x1xf32>
    %83 = arith.divf %81, %82 : vector<8x1xf32>
    %84 = vector.broadcast %76 : vector<8x1xf32> to vector<8x64xf32>
    %85 = arith.subf %70, %84 : vector<8x64xf32>
    %cst_42 = arith.constant 9.99999974E-6 : f32
    %86 = vector.broadcast %cst_42 : f32 to vector<8x1xf32>
    %87 = arith.addf %83, %86 : vector<8x1xf32>
    %88 = math.rsqrt %87 : vector<8x1xf32>
    %89 = vector.broadcast %88 : vector<8x1xf32> to vector<8x64xf32>
    %90 = arith.mulf %85, %89 : vector<8x64xf32>
    %91 = vector.broadcast %71 : vector<1x64xf32> to vector<8x64xf32>
    %92 = arith.mulf %90, %91 : vector<8x64xf32>
    %93 = vector.broadcast %72 : vector<1x64xf32> to vector<8x64xf32>
    %94 = arith.addf %92, %93 : vector<8x64xf32>
    %c0_43 = arith.constant 0 : index
    %c0_44 = arith.constant 0 : index
    %95 = vector.load %arg15[%c0_43, %c0_44] : memref<64x64xbf16, #tpu.memory_space<vmem>>, vector<64x64xbf16>
    %96 = arith.truncf %94 : vector<8x64xf32> to vector<8x64xbf16>
    %cst_45 = arith.constant dense<0.000000e+00> : vector<8x64xf32>
    %97 = tpu.matmul %96, %95, %cst_45 {dimension_numbers = #tpu.dot_dimension_numbers<[1], [0], [0], [1], [0, 0, 1, 1], [], []>} : vector<8x64xbf16>, vector<64x64xbf16>, vector<8x64xf32> -> vector<8x64xf32>
    %c0_46 = arith.constant 0 : index
    %c0_47 = arith.constant 0 : index
    %98 = vector.load %arg16[%c0_46, %c0_47] : memref<1x64xf32, #tpu.memory_space<vmem>>, vector<1x64xf32>
    %99 = vector.broadcast %98 : vector<1x64xf32> to vector<8x64xf32>
    %100 = arith.addf %97, %99 : vector<8x64xf32>
    %101 = math.tanh %100 : vector<8x64xf32>
    %c0_48 = arith.constant 0 : index
    %c0_49 = arith.constant 0 : index
    %102 = vector.load %arg17[%c0_48, %c0_49] : memref<1x64xf32, #tpu.memory_space<vmem>>, vector<1x64xf32>
    %c0_50 = arith.constant 0 : index
    %c0_51 = arith.constant 0 : index
    %103 = vector.load %arg18[%c0_50, %c0_51] : memref<1x64xf32, #tpu.memory_space<vmem>>, vector<1x64xf32>
    %cst_52 = arith.constant dense<0.000000e+00> : vector<8xf32>
    %104 = vector.multi_reduction <add>, %101, %cst_52 [1] : vector<8x64xf32> to vector<8xf32>
    %105 = vector.shape_cast %104 : vector<8xf32> to vector<8x1xf32>
    %cst_53 = arith.constant 6.400000e+01 : f32
    %106 = vector.broadcast %cst_53 : f32 to vector<8x1xf32>
    %107 = arith.divf %105, %106 : vector<8x1xf32>
    %108 = vector.broadcast %107 : vector<8x1xf32> to vector<8x64xf32>
    %109 = arith.subf %101, %108 : vector<8x64xf32>
    %110 = arith.mulf %109, %109 : vector<8x64xf32>
    %cst_54 = arith.constant dense<0.000000e+00> : vector<8xf32>
    %111 = vector.multi_reduction <add>, %110, %cst_54 [1] : vector<8x64xf32> to vector<8xf32>
    %112 = vector.shape_cast %111 : vector<8xf32> to vector<8x1xf32>
    %cst_55 = arith.constant 6.400000e+01 : f32
    %113 = vector.broadcast %cst_55 : f32 to vector<8x1xf32>
    %114 = arith.divf %112, %113 : vector<8x1xf32>
    %115 = vector.broadcast %107 : vector<8x1xf32> to vector<8x64xf32>
    %116 = arith.subf %101, %115 : vector<8x64xf32>
    %cst_56 = arith.constant 9.99999974E-6 : f32
    %117 = vector.broadcast %cst_56 : f32 to vector<8x1xf32>
    %118 = arith.addf %114, %117 : vector<8x1xf32>
    %119 = math.rsqrt %118 : vector<8x1xf32>
    %120 = vector.broadcast %119 : vector<8x1xf32> to vector<8x64xf32>
    %121 = arith.mulf %116, %120 : vector<8x64xf32>
    %122 = vector.broadcast %102 : vector<1x64xf32> to vector<8x64xf32>
    %123 = arith.mulf %121, %122 : vector<8x64xf32>
    %124 = vector.broadcast %103 : vector<1x64xf32> to vector<8x64xf32>
    %125 = arith.addf %123, %124 : vector<8x64xf32>
    %c0_57 = arith.constant 0 : index
    %c0_58 = arith.constant 0 : index
    %126 = vector.load %arg19[%c0_57, %c0_58] : memref<64x32xbf16, #tpu.memory_space<vmem>>, vector<64x32xbf16>
    %127 = arith.truncf %125 : vector<8x64xf32> to vector<8x64xbf16>
    %cst_59 = arith.constant dense<0.000000e+00> : vector<8x32xf32>
    %128 = tpu.matmul %127, %126, %cst_59 {dimension_numbers = #tpu.dot_dimension_numbers<[1], [0], [0], [1], [0, 0, 1, 1], [], []>} : vector<8x64xbf16>, vector<64x32xbf16>, vector<8x32xf32> -> vector<8x32xf32>
    %c0_60 = arith.constant 0 : index
    %c0_61 = arith.constant 0 : index
    %129 = vector.load %arg20[%c0_60, %c0_61] : memref<1x32xf32, #tpu.memory_space<vmem>>, vector<1x32xf32>
    %130 = vector.broadcast %129 : vector<1x32xf32> to vector<8x32xf32>
    %131 = arith.addf %128, %130 : vector<8x32xf32>
    %132 = math.tanh %131 : vector<8x32xf32>
    %c0_62 = arith.constant 0 : index
    %c0_63 = arith.constant 0 : index
    %133 = vector.load %arg21[%c0_62, %c0_63] : memref<1x32xf32, #tpu.memory_space<vmem>>, vector<1x32xf32>
    %c0_64 = arith.constant 0 : index
    %c0_65 = arith.constant 0 : index
    %134 = vector.load %arg22[%c0_64, %c0_65] : memref<1x32xf32, #tpu.memory_space<vmem>>, vector<1x32xf32>
    %cst_66 = arith.constant dense<0.000000e+00> : vector<8xf32>
    %135 = vector.multi_reduction <add>, %132, %cst_66 [1] : vector<8x32xf32> to vector<8xf32>
    %136 = vector.shape_cast %135 : vector<8xf32> to vector<8x1xf32>
    %cst_67 = arith.constant 3.200000e+01 : f32
    %137 = vector.broadcast %cst_67 : f32 to vector<8x1xf32>
    %138 = arith.divf %136, %137 : vector<8x1xf32>
    %139 = vector.broadcast %138 : vector<8x1xf32> to vector<8x32xf32>
    %140 = arith.subf %132, %139 : vector<8x32xf32>
    %141 = arith.mulf %140, %140 : vector<8x32xf32>
    %cst_68 = arith.constant dense<0.000000e+00> : vector<8xf32>
    %142 = vector.multi_reduction <add>, %141, %cst_68 [1] : vector<8x32xf32> to vector<8xf32>
    %143 = vector.shape_cast %142 : vector<8xf32> to vector<8x1xf32>
    %cst_69 = arith.constant 3.200000e+01 : f32
    %144 = vector.broadcast %cst_69 : f32 to vector<8x1xf32>
    %145 = arith.divf %143, %144 : vector<8x1xf32>
    %146 = vector.broadcast %138 : vector<8x1xf32> to vector<8x32xf32>
    %147 = arith.subf %132, %146 : vector<8x32xf32>
    %cst_70 = arith.constant 9.99999974E-6 : f32
    %148 = vector.broadcast %cst_70 : f32 to vector<8x1xf32>
    %149 = arith.addf %145, %148 : vector<8x1xf32>
    %150 = math.rsqrt %149 : vector<8x1xf32>
    %151 = vector.broadcast %150 : vector<8x1xf32> to vector<8x32xf32>
    %152 = arith.mulf %147, %151 : vector<8x32xf32>
    %153 = vector.broadcast %133 : vector<1x32xf32> to vector<8x32xf32>
    %154 = arith.mulf %152, %153 : vector<8x32xf32>
    %155 = vector.broadcast %134 : vector<1x32xf32> to vector<8x32xf32>
    %156 = arith.addf %154, %155 : vector<8x32xf32>
    %c0_71 = arith.constant 0 : index
    %c0_72 = arith.constant 0 : index
    %157 = vector.load %arg23[%c0_71, %c0_72] : memref<32x32xbf16, #tpu.memory_space<vmem>>, vector<32x32xbf16>
    %158 = arith.truncf %156 : vector<8x32xf32> to vector<8x32xbf16>
    %cst_73 = arith.constant dense<0.000000e+00> : vector<8x32xf32>
    %159 = tpu.matmul %158, %157, %cst_73 {dimension_numbers = #tpu.dot_dimension_numbers<[1], [0], [0], [1], [0, 0, 1, 1], [], []>} : vector<8x32xbf16>, vector<32x32xbf16>, vector<8x32xf32> -> vector<8x32xf32>
    %c0_74 = arith.constant 0 : index
    %c0_75 = arith.constant 0 : index
    %160 = vector.load %arg24[%c0_74, %c0_75] : memref<1x32xf32, #tpu.memory_space<vmem>>, vector<1x32xf32>
    %161 = vector.broadcast %160 : vector<1x32xf32> to vector<8x32xf32>
    %162 = arith.addf %159, %161 : vector<8x32xf32>
    %c0_76 = arith.constant 0 : index
    %c0_77 = arith.constant 0 : index
    %163 = vector.load %arg25[%c0_76, %c0_77] : memref<32x32xbf16, #tpu.memory_space<vmem>>, vector<32x32xbf16>
    %164 = arith.truncf %156 : vector<8x32xf32> to vector<8x32xbf16>
    %cst_78 = arith.constant dense<0.000000e+00> : vector<8x32xf32>
    %165 = tpu.matmul %164, %163, %cst_78 {dimension_numbers = #tpu.dot_dimension_numbers<[1], [0], [0], [1], [0, 0, 1, 1], [], []>} : vector<8x32xbf16>, vector<32x32xbf16>, vector<8x32xf32> -> vector<8x32xf32>
    %c0_79 = arith.constant 0 : index
    %c0_80 = arith.constant 0 : index
    %166 = vector.load %arg26[%c0_79, %c0_80] : memref<1x32xf32, #tpu.memory_space<vmem>>, vector<1x32xf32>
    %167 = vector.broadcast %166 : vector<1x32xf32> to vector<8x32xf32>
    %168 = arith.addf %165, %167 : vector<8x32xf32>
    %c0_81 = arith.constant 0 : index
    %c0_82 = arith.constant 0 : index
    %169 = vector.load %arg27[%c0_81, %c0_82] : memref<32x32xbf16, #tpu.memory_space<vmem>>, vector<32x32xbf16>
    %170 = arith.truncf %156 : vector<8x32xf32> to vector<8x32xbf16>
    %cst_83 = arith.constant dense<0.000000e+00> : vector<8x32xf32>
    %171 = tpu.matmul %170, %169, %cst_83 {dimension_numbers = #tpu.dot_dimension_numbers<[1], [0], [0], [1], [0, 0, 1, 1], [], []>} : vector<8x32xbf16>, vector<32x32xbf16>, vector<8x32xf32> -> vector<8x32xf32>
    %c0_84 = arith.constant 0 : index
    %c0_85 = arith.constant 0 : index
    %172 = vector.load %arg28[%c0_84, %c0_85] : memref<1x32xf32, #tpu.memory_space<vmem>>, vector<1x32xf32>
    %173 = vector.broadcast %172 : vector<1x32xf32> to vector<8x32xf32>
    %174 = arith.addf %171, %173 : vector<8x32xf32>
    %175 = vector.shape_cast %162 : vector<8x32xf32> to vector<1x8x32xf32>
    %176 = vector.shape_cast %168 : vector<8x32xf32> to vector<1x8x32xf32>
    %177 = vector.shape_cast %174 : vector<8x32xf32> to vector<1x8x32xf32>
    %c0_86 = arith.constant 0 : index
    %c0_87 = arith.constant 0 : index
    %178 = vector.load %arg29[%c0_86, %c0_87] : memref<32x32xbf16, #tpu.memory_space<vmem>>, vector<32x32xbf16>
    %cst_88 = arith.constant 0.000000e+00 : f32
    %179 = vector.broadcast %cst_88 : f32 to vector<8x32xf32>
    %180 = vector.extract_strided_slice %175 {offsets = [0, 0, 0], sizes = [1, 8, 16], strides = [1, 1, 1]} : vector<1x8x32xf32> to vector<1x8x16xf32>
    %cst_89 = arith.constant 2.500000e-01 : f32
    %181 = vector.broadcast %cst_89 : f32 to vector<1x8x16xf32>
    %182 = arith.mulf %180, %181 : vector<1x8x16xf32>
    %183 = vector.extract_strided_slice %176 {offsets = [0, 0, 0], sizes = [1, 8, 16], strides = [1, 1, 1]} : vector<1x8x32xf32> to vector<1x8x16xf32>
    %184 = arith.truncf %182 : vector<1x8x16xf32> to vector<1x8x16xbf16>
    %185 = arith.truncf %183 : vector<1x8x16xf32> to vector<1x8x16xbf16>
    "tpu.trace_start"() <{level = 10 : i32, message = "bnd,bmd->bnm"}> : () -> ()
    %cst_90 = arith.constant dense<0.000000e+00> : vector<1x8x8xf32>
    %186 = tpu.matmul %184, %185, %cst_90 {dimension_numbers = #tpu.dot_dimension_numbers<[2], [2], [1], [1], [0, 0, 0, 1, 1, 1], [0], [0]>} : vector<1x8x16xbf16>, vector<1x8x16xbf16>, vector<1x8x8xf32> -> vector<1x8x8xf32>
    "tpu.trace_stop"() : () -> ()
    %cst_91 = arith.constant dense<0xFF800000> : vector<1x8xf32>
    %187 = vector.multi_reduction <maximumf>, %186, %cst_91 [2] : vector<1x8x8xf32> to vector<1x8xf32>
    %188 = vector.shape_cast %187 : vector<1x8xf32> to vector<1x8x1xf32>
    %189 = vector.broadcast %188 : vector<1x8x1xf32> to vector<1x8x8xf32>
    %190 = arith.subf %186, %189 : vector<1x8x8xf32>
    %191 = math.exp %190 : vector<1x8x8xf32>
    %cst_92 = arith.constant dense<0.000000e+00> : vector<1x8xf32>
    %192 = vector.multi_reduction <add>, %191, %cst_92 [2] : vector<1x8x8xf32> to vector<1x8xf32>
    %193 = vector.shape_cast %192 : vector<1x8xf32> to vector<1x8x1xf32>
    %194 = tpu.reciprocal %193 {approx = true} : vector<1x8x1xf32> -> vector<1x8x1xf32>
    %195 = vector.broadcast %194 : vector<1x8x1xf32> to vector<1x8x8xf32>
    %196 = arith.mulf %191, %195 : vector<1x8x8xf32>
    %197 = vector.extract_strided_slice %177 {offsets = [0, 0, 0], sizes = [1, 8, 16], strides = [1, 1, 1]} : vector<1x8x32xf32> to vector<1x8x16xf32>
    %198 = arith.truncf %196 : vector<1x8x8xf32> to vector<1x8x8xbf16>
    %199 = arith.truncf %197 : vector<1x8x16xf32> to vector<1x8x16xbf16>
    "tpu.trace_start"() <{level = 10 : i32, message = "bnm,bmd->bnd"}> : () -> ()
    %cst_93 = arith.constant dense<0.000000e+00> : vector<1x8x16xf32>
    %200 = tpu.matmul %198, %199, %cst_93 {dimension_numbers = #tpu.dot_dimension_numbers<[2], [1], [1], [2], [0, 0, 0, 1, 1, 2], [0], [0]>} : vector<1x8x8xbf16>, vector<1x8x16xbf16>, vector<1x8x16xf32> -> vector<1x8x16xf32>
    "tpu.trace_stop"() : () -> ()
    %201 = vector.shape_cast %200 : vector<1x8x16xf32> to vector<8x16xf32>
    %202 = vector.extract_strided_slice %178 {offsets = [0, 0], sizes = [16, 32], strides = [1, 1]} : vector<32x32xbf16> to vector<16x32xbf16>
    %203 = arith.truncf %201 : vector<8x16xf32> to vector<8x16xbf16>
    %cst_94 = arith.constant dense<0.000000e+00> : vector<8x32xf32>
    %204 = tpu.matmul %203, %202, %cst_94 {dimension_numbers = #tpu.dot_dimension_numbers<[1], [0], [0], [1], [0, 0, 1, 1], [], []>} : vector<8x16xbf16>, vector<16x32xbf16>, vector<8x32xf32> -> vector<8x32xf32>
    %205 = arith.addf %179, %204 : vector<8x32xf32>
    %206 = vector.extract_strided_slice %175 {offsets = [0, 0, 16], sizes = [1, 8, 16], strides = [1, 1, 1]} : vector<1x8x32xf32> to vector<1x8x16xf32>
    %cst_95 = arith.constant 2.500000e-01 : f32
    %207 = vector.broadcast %cst_95 : f32 to vector<1x8x16xf32>
    %208 = arith.mulf %206, %207 : vector<1x8x16xf32>
    %209 = vector.extract_strided_slice %176 {offsets = [0, 0, 16], sizes = [1, 8, 16], strides = [1, 1, 1]} : vector<1x8x32xf32> to vector<1x8x16xf32>
    %210 = arith.truncf %208 : vector<1x8x16xf32> to vector<1x8x16xbf16>
    %211 = arith.truncf %209 : vector<1x8x16xf32> to vector<1x8x16xbf16>
    "tpu.trace_start"() <{level = 10 : i32, message = "bnd,bmd->bnm"}> : () -> ()
    %cst_96 = arith.constant dense<0.000000e+00> : vector<1x8x8xf32>
    %212 = tpu.matmul %210, %211, %cst_96 {dimension_numbers = #tpu.dot_dimension_numbers<[2], [2], [1], [1], [0, 0, 0, 1, 1, 1], [0], [0]>} : vector<1x8x16xbf16>, vector<1x8x16xbf16>, vector<1x8x8xf32> -> vector<1x8x8xf32>
    "tpu.trace_stop"() : () -> ()
    %cst_97 = arith.constant dense<0xFF800000> : vector<1x8xf32>
    %213 = vector.multi_reduction <maximumf>, %212, %cst_97 [2] : vector<1x8x8xf32> to vector<1x8xf32>
    %214 = vector.shape_cast %213 : vector<1x8xf32> to vector<1x8x1xf32>
    %215 = vector.broadcast %214 : vector<1x8x1xf32> to vector<1x8x8xf32>
    %216 = arith.subf %212, %215 : vector<1x8x8xf32>
    %217 = math.exp %216 : vector<1x8x8xf32>
    %cst_98 = arith.constant dense<0.000000e+00> : vector<1x8xf32>
    %218 = vector.multi_reduction <add>, %217, %cst_98 [2] : vector<1x8x8xf32> to vector<1x8xf32>
    %219 = vector.shape_cast %218 : vector<1x8xf32> to vector<1x8x1xf32>
    %220 = tpu.reciprocal %219 {approx = true} : vector<1x8x1xf32> -> vector<1x8x1xf32>
    %221 = vector.broadcast %220 : vector<1x8x1xf32> to vector<1x8x8xf32>
    %222 = arith.mulf %217, %221 : vector<1x8x8xf32>
    %223 = vector.extract_strided_slice %177 {offsets = [0, 0, 16], sizes = [1, 8, 16], strides = [1, 1, 1]} : vector<1x8x32xf32> to vector<1x8x16xf32>
    %224 = arith.truncf %222 : vector<1x8x8xf32> to vector<1x8x8xbf16>
    %225 = arith.truncf %223 : vector<1x8x16xf32> to vector<1x8x16xbf16>
    "tpu.trace_start"() <{level = 10 : i32, message = "bnm,bmd->bnd"}> : () -> ()
    %cst_99 = arith.constant dense<0.000000e+00> : vector<1x8x16xf32>
    %226 = tpu.matmul %224, %225, %cst_99 {dimension_numbers = #tpu.dot_dimension_numbers<[2], [1], [1], [2], [0, 0, 0, 1, 1, 2], [0], [0]>} : vector<1x8x8xbf16>, vector<1x8x16xbf16>, vector<1x8x16xf32> -> vector<1x8x16xf32>
    "tpu.trace_stop"() : () -> ()
    %227 = vector.shape_cast %226 : vector<1x8x16xf32> to vector<8x16xf32>
    %228 = vector.extract_strided_slice %178 {offsets = [16, 0], sizes = [16, 32], strides = [1, 1]} : vector<32x32xbf16> to vector<16x32xbf16>
    %229 = arith.truncf %227 : vector<8x16xf32> to vector<8x16xbf16>
    %cst_100 = arith.constant dense<0.000000e+00> : vector<8x32xf32>
    %230 = tpu.matmul %229, %228, %cst_100 {dimension_numbers = #tpu.dot_dimension_numbers<[1], [0], [0], [1], [0, 0, 1, 1], [], []>} : vector<8x16xbf16>, vector<16x32xbf16>, vector<8x32xf32> -> vector<8x32xf32>
    %231 = arith.addf %205, %230 : vector<8x32xf32>
    %c0_101 = arith.constant 0 : index
    %c0_102 = arith.constant 0 : index
    %232 = vector.load %arg30[%c0_101, %c0_102] : memref<1x32xf32, #tpu.memory_space<vmem>>, vector<1x32xf32>
    %233 = vector.broadcast %232 : vector<1x32xf32> to vector<8x32xf32>
    %234 = arith.addf %231, %233 : vector<8x32xf32>
    %235 = arith.addf %156, %234 : vector<8x32xf32>
    %c0_103 = arith.constant 0 : index
    %c0_104 = arith.constant 0 : index
    %236 = vector.load %arg31[%c0_103, %c0_104] : memref<1x32xf32, #tpu.memory_space<vmem>>, vector<1x32xf32>
    %c0_105 = arith.constant 0 : index
    %c0_106 = arith.constant 0 : index
    %237 = vector.load %arg32[%c0_105, %c0_106] : memref<1x32xf32, #tpu.memory_space<vmem>>, vector<1x32xf32>
    %cst_107 = arith.constant dense<0.000000e+00> : vector<8xf32>
    %238 = vector.multi_reduction <add>, %235, %cst_107 [1] : vector<8x32xf32> to vector<8xf32>
    %239 = vector.shape_cast %238 : vector<8xf32> to vector<8x1xf32>
    %cst_108 = arith.constant 3.200000e+01 : f32
    %240 = vector.broadcast %cst_108 : f32 to vector<8x1xf32>
    %241 = arith.divf %239, %240 : vector<8x1xf32>
    %242 = vector.broadcast %241 : vector<8x1xf32> to vector<8x32xf32>
    %243 = arith.subf %235, %242 : vector<8x32xf32>
    %244 = arith.mulf %243, %243 : vector<8x32xf32>
    %cst_109 = arith.constant dense<0.000000e+00> : vector<8xf32>
    %245 = vector.multi_reduction <add>, %244, %cst_109 [1] : vector<8x32xf32> to vector<8xf32>
    %246 = vector.shape_cast %245 : vector<8xf32> to vector<8x1xf32>
    %cst_110 = arith.constant 3.200000e+01 : f32
    %247 = vector.broadcast %cst_110 : f32 to vector<8x1xf32>
    %248 = arith.divf %246, %247 : vector<8x1xf32>
    %249 = vector.broadcast %241 : vector<8x1xf32> to vector<8x32xf32>
    %250 = arith.subf %235, %249 : vector<8x32xf32>
    %cst_111 = arith.constant 9.99999974E-6 : f32
    %251 = vector.broadcast %cst_111 : f32 to vector<8x1xf32>
    %252 = arith.addf %248, %251 : vector<8x1xf32>
    %253 = math.rsqrt %252 : vector<8x1xf32>
    %254 = vector.broadcast %253 : vector<8x1xf32> to vector<8x32xf32>
    %255 = arith.mulf %250, %254 : vector<8x32xf32>
    %256 = vector.broadcast %236 : vector<1x32xf32> to vector<8x32xf32>
    %257 = arith.mulf %255, %256 : vector<8x32xf32>
    %258 = vector.broadcast %237 : vector<1x32xf32> to vector<8x32xf32>
    %259 = arith.addf %257, %258 : vector<8x32xf32>
    %c0_112 = arith.constant 0 : index
    %c0_113 = arith.constant 0 : index
    %260 = vector.load %arg33[%c0_112, %c0_113] : memref<32x2048xbf16, #tpu.memory_space<vmem>>, vector<32x2048xbf16>
    %261 = arith.truncf %259 : vector<8x32xf32> to vector<8x32xbf16>
    %cst_114 = arith.constant dense<0.000000e+00> : vector<8x2048xf32>
    %262 = tpu.matmul %261, %260, %cst_114 {dimension_numbers = #tpu.dot_dimension_numbers<[1], [0], [0], [1], [0, 0, 1, 1], [], []>} : vector<8x32xbf16>, vector<32x2048xbf16>, vector<8x2048xf32> -> vector<8x2048xf32>
    %c0_115 = arith.constant 0 : index
    %c0_116 = arith.constant 0 : index
    %263 = vector.load %arg34[%c0_115, %c0_116] : memref<1x2048xf32, #tpu.memory_space<vmem>>, vector<1x2048xf32>
    %264 = vector.broadcast %263 : vector<1x2048xf32> to vector<8x2048xf32>
    %265 = arith.addf %262, %264 : vector<8x2048xf32>
    %cst_117 = arith.constant 0.000000e+00 : f32
    %266 = vector.broadcast %cst_117 : f32 to vector<8x2048xf32>
    %267 = arith.maximumf %265, %266 : vector<8x2048xf32>
    %c0_118 = arith.constant 0 : index
    %c0_119 = arith.constant 0 : index
    %268 = vector.load %arg35[%c0_118, %c0_119] : memref<2048x32xbf16, #tpu.memory_space<vmem>>, vector<2048x32xbf16>
    %269 = arith.truncf %267 : vector<8x2048xf32> to vector<8x2048xbf16>
    %cst_120 = arith.constant dense<0.000000e+00> : vector<8x32xf32>
    %270 = tpu.matmul %269, %268, %cst_120 {dimension_numbers = #tpu.dot_dimension_numbers<[1], [0], [0], [1], [0, 0, 1, 1], [], []>} : vector<8x2048xbf16>, vector<2048x32xbf16>, vector<8x32xf32> -> vector<8x32xf32>
    %c0_121 = arith.constant 0 : index
    %c0_122 = arith.constant 0 : index
    %271 = vector.load %arg36[%c0_121, %c0_122] : memref<1x32xf32, #tpu.memory_space<vmem>>, vector<1x32xf32>
    %272 = vector.broadcast %271 : vector<1x32xf32> to vector<8x32xf32>
    %273 = arith.addf %270, %272 : vector<8x32xf32>
    %274 = arith.addf %259, %273 : vector<8x32xf32>
    %c0_123 = arith.constant 0 : index
    %c0_124 = arith.constant 0 : index
    %275 = vector.load %arg37[%c0_123, %c0_124] : memref<1x32xf32, #tpu.memory_space<vmem>>, vector<1x32xf32>
    %c0_125 = arith.constant 0 : index
    %c0_126 = arith.constant 0 : index
    %276 = vector.load %arg38[%c0_125, %c0_126] : memref<1x32xf32, #tpu.memory_space<vmem>>, vector<1x32xf32>
    %cst_127 = arith.constant dense<0.000000e+00> : vector<8xf32>
    %277 = vector.multi_reduction <add>, %274, %cst_127 [1] : vector<8x32xf32> to vector<8xf32>
    %278 = vector.shape_cast %277 : vector<8xf32> to vector<8x1xf32>
    %cst_128 = arith.constant 3.200000e+01 : f32
    %279 = vector.broadcast %cst_128 : f32 to vector<8x1xf32>
    %280 = arith.divf %278, %279 : vector<8x1xf32>
    %281 = vector.broadcast %280 : vector<8x1xf32> to vector<8x32xf32>
    %282 = arith.subf %274, %281 : vector<8x32xf32>
    %283 = arith.mulf %282, %282 : vector<8x32xf32>
    %cst_129 = arith.constant dense<0.000000e+00> : vector<8xf32>
    %284 = vector.multi_reduction <add>, %283, %cst_129 [1] : vector<8x32xf32> to vector<8xf32>
    %285 = vector.shape_cast %284 : vector<8xf32> to vector<8x1xf32>
    %cst_130 = arith.constant 3.200000e+01 : f32
    %286 = vector.broadcast %cst_130 : f32 to vector<8x1xf32>
    %287 = arith.divf %285, %286 : vector<8x1xf32>
    %288 = vector.broadcast %280 : vector<8x1xf32> to vector<8x32xf32>
    %289 = arith.subf %274, %288 : vector<8x32xf32>
    %cst_131 = arith.constant 9.99999974E-6 : f32
    %290 = vector.broadcast %cst_131 : f32 to vector<8x1xf32>
    %291 = arith.addf %287, %290 : vector<8x1xf32>
    %292 = math.rsqrt %291 : vector<8x1xf32>
    %293 = vector.broadcast %292 : vector<8x1xf32> to vector<8x32xf32>
    %294 = arith.mulf %289, %293 : vector<8x32xf32>
    %295 = vector.broadcast %275 : vector<1x32xf32> to vector<8x32xf32>
    %296 = arith.mulf %294, %295 : vector<8x32xf32>
    %297 = vector.broadcast %276 : vector<1x32xf32> to vector<8x32xf32>
    %298 = arith.addf %296, %297 : vector<8x32xf32>
    %c0_132 = arith.constant 0 : index
    %c0_133 = arith.constant 0 : index
    %c0_134 = arith.constant 0 : index
    %299 = vector.load %arg2[%c0_132, %c0_133, %c0_134] : memref<1x8x16xf32, #tpu.memory_space<vmem>>, vector<1x8x16xf32>
    %300 = vector.shape_cast %299 : vector<1x8x16xf32> to vector<8x16xf32>
    %c0_135 = arith.constant 0 : index
    %c0_136 = arith.constant 0 : index
    %301 = vector.load %arg39[%c0_135, %c0_136] : memref<16x32xbf16, #tpu.memory_space<vmem>>, vector<16x32xbf16>
    %302 = arith.truncf %300 : vector<8x16xf32> to vector<8x16xbf16>
    %cst_137 = arith.constant dense<0.000000e+00> : vector<8x32xf32>
    %303 = tpu.matmul %302, %301, %cst_137 {dimension_numbers = #tpu.dot_dimension_numbers<[1], [0], [0], [1], [0, 0, 1, 1], [], []>} : vector<8x16xbf16>, vector<16x32xbf16>, vector<8x32xf32> -> vector<8x32xf32>
    %c0_138 = arith.constant 0 : index
    %c0_139 = arith.constant 0 : index
    %304 = vector.load %arg40[%c0_138, %c0_139] : memref<1x32xf32, #tpu.memory_space<vmem>>, vector<1x32xf32>
    %305 = vector.broadcast %304 : vector<1x32xf32> to vector<8x32xf32>
    %306 = arith.addf %303, %305 : vector<8x32xf32>
    %cst_140 = arith.constant 0.000000e+00 : f32
    %307 = vector.broadcast %cst_140 : f32 to vector<8x32xf32>
    %308 = arith.maximumf %306, %307 : vector<8x32xf32>
    %309 = arith.addf %298, %308 : vector<8x32xf32>
    %310 = vector.shape_cast %309 : vector<8x32xf32> to vector<1x8x32xf32>
    %c0_141 = arith.constant 0 : index
    %c0_142 = arith.constant 0 : index
    %c0_143 = arith.constant 0 : index
    %311 = vector.load %arg41[%c0_141, %c0_142, %c0_143] : memref<1x8x32xf32, #tpu.memory_space<vmem>>, vector<1x8x32xf32>
    tpu.vector_store %arg41[%c0_141, %c0_142, %c0_143], %310 {strides = array<i32>} : memref<1x8x32xf32, #tpu.memory_space<vmem>>, vector<1x8x32xf32>,
    return
  }
  func.func @transform_0(%arg0: i32) -> (i32, i32, i32) {
    %c0_i32 = arith.constant 0 : i32
    %c0_i32_0 = arith.constant 0 : i32
    %c0_i32_1 = arith.constant 0 : i32
    return %arg0, %c0_i32, %c0_i32_0 : i32, i32, i32
  }
  func.func @transform_1(%arg0: i32) -> (i32, i32, i32) {
    %c0_i32 = arith.constant 0 : i32
    %c0_i32_0 = arith.constant 0 : i32
    %c0_i32_1 = arith.constant 0 : i32
    return %arg0, %c0_i32, %c0_i32_0 : i32, i32, i32
  }
  func.func @transform_2(%arg0: i32) -> (i32, i32) {
    %c0_i32 = arith.constant 0 : i32
    %c0_i32_0 = arith.constant 0 : i32
    %c0_i32_1 = arith.constant 0 : i32
    return %c0_i32, %c0_i32_0 : i32, i32
  }
  func.func @transform_3(%arg0: i32) -> (i32, i32) {
    %c0_i32 = arith.constant 0 : i32
    %c0_i32_0 = arith.constant 0 : i32
    %c0_i32_1 = arith.constant 0 : i32
    return %c0_i32, %c0_i32_0 : i32, i32
  }
  func.func @transform_4(%arg0: i32) -> (i32, i32) {
    %c0_i32 = arith.constant 0 : i32
    %c0_i32_0 = arith.constant 0 : i32
    %c0_i32_1 = arith.constant 0 : i32
    return %c0_i32, %c0_i32_0 : i32, i32
  }
  func.func @transform_5(%arg0: i32) -> (i32, i32) {
    %c0_i32 = arith.constant 0 : i32
    %c0_i32_0 = arith.constant 0 : i32
    %c0_i32_1 = arith.constant 0 : i32
    return %c0_i32, %c0_i32_0 : i32, i32
  }
  func.func @transform_6(%arg0: i32) -> (i32, i32) {
    %c0_i32 = arith.constant 0 : i32
    %c0_i32_0 = arith.constant 0 : i32
    %c0_i32_1 = arith.constant 0 : i32
    return %c0_i32, %c0_i32_0 : i32, i32
  }
  func.func @transform_7(%arg0: i32) -> (i32, i32) {
    %c0_i32 = arith.constant 0 : i32
    %c0_i32_0 = arith.constant 0 : i32
    %c0_i32_1 = arith.constant 0 : i32
    return %c0_i32, %c0_i32_0 : i32, i32
  }
  func.func @transform_8(%arg0: i32) -> (i32, i32) {
    %c0_i32 = arith.constant 0 : i32
    %c0_i32_0 = arith.constant 0 : i32
    %c0_i32_1 = arith.constant 0 : i32
    return %c0_i32, %c0_i32_0 : i32, i32
  }
  func.func @transform_9(%arg0: i32) -> (i32, i32) {
    %c0_i32 = arith.constant 0 : i32
    %c0_i32_0 = arith.constant 0 : i32
    %c0_i32_1 = arith.constant 0 : i32
    return %c0_i32, %c0_i32_0 : i32, i32
  }
  func.func @transform_10(%arg0: i32) -> (i32, i32) {
    %c0_i32 = arith.constant 0 : i32
    %c0_i32_0 = arith.constant 0 : i32
    %c0_i32_1 = arith.constant 0 : i32
    return %c0_i32, %c0_i32_0 : i32, i32
  }
  func.func @transform_11(%arg0: i32) -> (i32, i32) {
    %c0_i32 = arith.constant 0 : i32
    %c0_i32_0 = arith.constant 0 : i32
    %c0_i32_1 = arith.constant 0 : i32
    return %c0_i32, %c0_i32_0 : i32, i32
  }
  func.func @transform_12(%arg0: i32) -> (i32, i32) {
    %c0_i32 = arith.constant 0 : i32
    %c0_i32_0 = arith.constant 0 : i32
    %c0_i32_1 = arith.constant 0 : i32
    return %c0_i32, %c0_i32_0 : i32, i32
  }
  func.func @transform_13(%arg0: i32) -> (i32, i32) {
    %c0_i32 = arith.constant 0 : i32
    %c0_i32_0 = arith.constant 0 : i32
    %c0_i32_1 = arith.constant 0 : i32
    return %c0_i32, %c0_i32_0 : i32, i32
  }
  func.func @transform_14(%arg0: i32) -> (i32, i32) {
    %c0_i32 = arith.constant 0 : i32
    %c0_i32_0 = arith.constant 0 : i32
    %c0_i32_1 = arith.constant 0 : i32
    return %c0_i32, %c0_i32_0 : i32, i32
  }
  func.func @transform_15(%arg0: i32) -> (i32, i32) {
    %c0_i32 = arith.constant 0 : i32
    %c0_i32_0 = arith.constant 0 : i32
    %c0_i32_1 = arith.constant 0 : i32
    return %c0_i32, %c0_i32_0 : i32, i32
  }
  func.func @transform_16(%arg0: i32) -> (i32, i32) {
    %c0_i32 = arith.constant 0 : i32
    %c0_i32_0 = arith.constant 0 : i32
    %c0_i32_1 = arith.constant 0 : i32
    return %c0_i32, %c0_i32_0 : i32, i32
  }
  func.func @transform_17(%arg0: i32) -> (i32, i32) {
    %c0_i32 = arith.constant 0 : i32
    %c0_i32_0 = arith.constant 0 : i32
    %c0_i32_1 = arith.constant 0 : i32
    return %c0_i32, %c0_i32_0 : i32, i32
  }
  func.func @transform_18(%arg0: i32) -> (i32, i32) {
    %c0_i32 = arith.constant 0 : i32
    %c0_i32_0 = arith.constant 0 : i32
    %c0_i32_1 = arith.constant 0 : i32
    return %c0_i32, %c0_i32_0 : i32, i32
  }
  func.func @transform_19(%arg0: i32) -> (i32, i32) {
    %c0_i32 = arith.constant 0 : i32
    %c0_i32_0 = arith.constant 0 : i32
    %c0_i32_1 = arith.constant 0 : i32
    return %c0_i32, %c0_i32_0 : i32, i32
  }
  func.func @transform_20(%arg0: i32) -> (i32, i32) {
    %c0_i32 = arith.constant 0 : i32
    %c0_i32_0 = arith.constant 0 : i32
    %c0_i32_1 = arith.constant 0 : i32
    return %c0_i32, %c0_i32_0 : i32, i32
  }
  func.func @transform_21(%arg0: i32) -> (i32, i32) {
    %c0_i32 = arith.constant 0 : i32
    %c0_i32_0 = arith.constant 0 : i32
    %c0_i32_1 = arith.constant 0 : i32
    return %c0_i32, %c0_i32_0 : i32, i32
  }
  func.func @transform_22(%arg0: i32) -> (i32, i32) {
    %c0_i32 = arith.constant 0 : i32
    %c0_i32_0 = arith.constant 0 : i32
    %c0_i32_1 = arith.constant 0 : i32
    return %c0_i32, %c0_i32_0 : i32, i32
  }
  func.func @transform_23(%arg0: i32) -> (i32, i32) {
    %c0_i32 = arith.constant 0 : i32
    %c0_i32_0 = arith.constant 0 : i32
    %c0_i32_1 = arith.constant 0 : i32
    return %c0_i32, %c0_i32_0 : i32, i32
  }
  func.func @transform_24(%arg0: i32) -> (i32, i32) {
    %c0_i32 = arith.constant 0 : i32
    %c0_i32_0 = arith.constant 0 : i32
    %c0_i32_1 = arith.constant 0 : i32
    return %c0_i32, %c0_i32_0 : i32, i32
  }
  func.func @transform_25(%arg0: i32) -> (i32, i32) {
    %c0_i32 = arith.constant 0 : i32
    %c0_i32_0 = arith.constant 0 : i32
    %c0_i32_1 = arith.constant 0 : i32
    return %c0_i32, %c0_i32_0 : i32, i32
  }
  func.func @transform_26(%arg0: i32) -> (i32, i32) {
    %c0_i32 = arith.constant 0 : i32
    %c0_i32_0 = arith.constant 0 : i32
    %c0_i32_1 = arith.constant 0 : i32
    return %c0_i32, %c0_i32_0 : i32, i32
  }
  func.func @transform_27(%arg0: i32) -> (i32, i32) {
    %c0_i32 = arith.constant 0 : i32
    %c0_i32_0 = arith.constant 0 : i32
    %c0_i32_1 = arith.constant 0 : i32
    return %c0_i32, %c0_i32_0 : i32, i32
  }
  func.func @transform_28(%arg0: i32) -> (i32, i32) {
    %c0_i32 = arith.constant 0 : i32
    %c0_i32_0 = arith.constant 0 : i32
    %c0_i32_1 = arith.constant 0 : i32
    return %c0_i32, %c0_i32_0 : i32, i32
  }
  func.func @transform_29(%arg0: i32) -> (i32, i32) {
    %c0_i32 = arith.constant 0 : i32
    %c0_i32_0 = arith.constant 0 : i32
    %c0_i32_1 = arith.constant 0 : i32
    return %c0_i32, %c0_i32_0 : i32, i32
  }
  func.func @transform_30(%arg0: i32) -> (i32, i32) {
    %c0_i32 = arith.constant 0 : i32
    %c0_i32_0 = arith.constant 0 : i32
    %c0_i32_1 = arith.constant 0 : i32
    return %c0_i32, %c0_i32_0 : i32, i32
  }
  func.func @transform_31(%arg0: i32) -> (i32, i32) {
    %c0_i32 = arith.constant 0 : i32
    %c0_i32_0 = arith.constant 0 : i32
    %c0_i32_1 = arith.constant 0 : i32
    return %c0_i32, %c0_i32_0 : i32, i32
  }
  func.func @transform_32(%arg0: i32) -> (i32, i32) {
    %c0_i32 = arith.constant 0 : i32
    %c0_i32_0 = arith.constant 0 : i32
    %c0_i32_1 = arith.constant 0 : i32
    return %c0_i32, %c0_i32_0 : i32, i32
  }
  func.func @transform_33(%arg0: i32) -> (i32, i32) {
    %c0_i32 = arith.constant 0 : i32
    %c0_i32_0 = arith.constant 0 : i32
    %c0_i32_1 = arith.constant 0 : i32
    return %c0_i32, %c0_i32_0 : i32, i32
  }
  func.func @transform_34(%arg0: i32) -> (i32, i32) {
    %c0_i32 = arith.constant 0 : i32
    %c0_i32_0 = arith.constant 0 : i32
    %c0_i32_1 = arith.constant 0 : i32
    return %c0_i32, %c0_i32_0 : i32, i32
  }
  func.func @transform_35(%arg0: i32) -> (i32, i32) {
    %c0_i32 = arith.constant 0 : i32
    %c0_i32_0 = arith.constant 0 : i32
    %c0_i32_1 = arith.constant 0 : i32
    return %c0_i32, %c0_i32_0 : i32, i32
  }
  func.func @transform_36(%arg0: i32) -> (i32, i32) {
    %c0_i32 = arith.constant 0 : i32
    %c0_i32_0 = arith.constant 0 : i32
    %c0_i32_1 = arith.constant 0 : i32
    return %c0_i32, %c0_i32_0 : i32, i32
  }
  func.func @transform_37(%arg0: i32) -> (i32, i32) {
    %c0_i32 = arith.constant 0 : i32
    %c0_i32_0 = arith.constant 0 : i32
    %c0_i32_1 = arith.constant 0 : i32
    return %c0_i32, %c0_i32_0 : i32, i32
  }
  func.func @transform_38(%arg0: i32) -> (i32, i32) {
    %c0_i32 = arith.constant 0 : i32
    %c0_i32_0 = arith.constant 0 : i32
    %c0_i32_1 = arith.constant 0 : i32
    return %c0_i32, %c0_i32_0 : i32, i32
  }
  func.func @transform_39(%arg0: i32) -> (i32, i32) {
    %c0_i32 = arith.constant 0 : i32
    %c0_i32_0 = arith.constant 0 : i32
    %c0_i32_1 = arith.constant 0 : i32
    return %c0_i32, %c0_i32_0 : i32, i32
  }
  func.func @transform_40(%arg0: i32) -> (i32, i32, i32) {
    %c0_i32 = arith.constant 0 : i32
    %c0_i32_0 = arith.constant 0 : i32
    %c0_i32_1 = arith.constant 0 : i32
    return %arg0, %c0_i32, %c0_i32_0 : i32, i32, i32
  }
}

</mosaic_0001>

<llo_original>
// kernel: iibmil_encoder_forward.5
$region0: #{iibmil_encoder_forward.5}
  #allocation0 [shape = 'u32[]', space=smem, size = 0x4, offset = 0x4, fixed_abs, tag = 'smem constant byte address 0x4 - core index']
  #allocation1 [shape = 'u32[144,128]{1,0:T(1,128)}', space=vmem, size = 0x12000, scoped, tag = 'internal scratch']
  %s0 = inlined_call_operand.vmem [shape: f32[16,32], index: 0, kind: input, shape index: {}]
  %s1 = inlined_call_operand.vmem [shape: f32[1,32], index: 1, kind: input, shape index: {}]
  %s2 = inlined_call_operand.vmem [shape: f32[1,32], index: 2, kind: input, shape index: {}]
  %s3 = inlined_call_operand.vmem [shape: bf16[32,128], index: 3, kind: input, shape index: {}]
  %s4 = inlined_call_operand.vmem [shape: f32[1,128], index: 4, kind: input, shape index: {}]
  %s5 = inlined_call_operand.vmem [shape: f32[16,128], index: 5, kind: output, shape index: {}]
  %s6 = sld [smem:[#allocation0]]
  $region30: #{iibmil_encoder_forward.5} parent=0
    _
  %s8 = ssub.s32 1, %s6
  %s9 = scalar_select 0, %s8, %s6
  // Predicated region
  $region2: #{iibmil_encoder_forward.5} parent=0 // pred_check
    _
  $region3: #{iibmil_encoder_forward.5} parent=0 // pred_check_branch
    %11 = sbr.rel (0) target = $region5
  $region4: #{iibmil_encoder_forward.5} parent=0 // pred_region
    _
  $region5: #{iibmil_encoder_forward.5} parent=0 // pred_fallthru
    _
  // Predicated region
  $region6: #{iibmil_encoder_forward.5} parent=0 // pred_check
    _
  $region7: #{iibmil_encoder_forward.5} parent=0 // pred_check_branch
    %13 = sbr.rel (0) target = $region9
  $region8: #{iibmil_encoder_forward.5} parent=0 // pred_region
    _
  $region9: #{iibmil_encoder_forward.5} parent=0 // pred_fallthru
    _
  // Predicated region
  $region10: #{iibmil_encoder_forward.5} parent=0 // pred_check
    _
  $region11: #{iibmil_encoder_forward.5} parent=0 // pred_check_branch
    %15 = sbr.rel (0) target = $region13
  $region12: #{iibmil_encoder_forward.5} parent=0 // pred_region
    _
  $region13: #{iibmil_encoder_forward.5} parent=0 // pred_fallthru
    _
  // Predicated region
  $region14: #{iibmil_encoder_forward.5} parent=0 // pred_check
    _
  $region15: #{iibmil_encoder_forward.5} parent=0 // pred_check_branch
    %17 = sbr.rel (0) target = $region17
  $region16: #{iibmil_encoder_forward.5} parent=0 // pred_region
    _
  $region17: #{iibmil_encoder_forward.5} parent=0 // pred_fallthru
    _
  // Predicated region
  $region18: #{iibmil_encoder_forward.5} parent=0 // pred_check
    _
  $region19: #{iibmil_encoder_forward.5} parent=0 // pred_check_branch
    %19 = sbr.rel (0) target = $region21
  $region20: #{iibmil_encoder_forward.5} parent=0 // pred_region
    _
  $region21: #{iibmil_encoder_forward.5} parent=0 // pred_fallthru
    _
  %v21 = vld [vmem:[%s0] sm:$0xff]
  %v22 = vld [vmem:[%s0 + $0x8] sm:$0xff]
  %v23 = vld [vmem:[%s1] sm:$0x1]
  %v24 = vld [vmem:[%s2] sm:$0x1]
  %vm25 = vcmask 261120
  %v26 = vsel %vm25, %v21, 0.0
  %27 = vadd.xlane.f32.xlu0 %v26
  %v28 = vpop.xlane.xlu0 %27
  %v29 = vsel %vm25, %v22, 0.0
  %30 = vadd.xlane.f32.xlu0 %v29
  %v31 = vpop.xlane.xlu0 %30
  %v32 = vrcp.pop 32.0
  %v33 = vmul.f32 %v28, %v32
  %v34 = vmul.f32 %v31, %v32
  %v35 = vsub.f32 %v21, %v33
  %v36 = vsub.f32 %v22, %v34
  %v37 = vmul.f32 %v35, %v35
  %v38 = vmul.f32 %v36, %v36
  %v39 = vsel %vm25, %v37, 0.0
  %40 = vadd.xlane.f32.xlu0 %v39
  %v41 = vpop.xlane.xlu0 %40
  %v42 = vsel %vm25, %v38, 0.0
  %43 = vadd.xlane.f32.xlu0 %v42
  %v44 = vpop.xlane.xlu0 %43
  %v45 = vmul.f32 %v41, %v32
  %v46 = vmul.f32 %v44, %v32
  %v47 = vadd.f32 %v45, 1e-05
  %v48 = vadd.f32 %v46, 1e-05
  %v49 = vrsqrt.pop %v47
  %v50 = vrsqrt.pop %v48
  %v51 = vmul.f32 %v35, %v49
  %v52 = vmul.f32 %v36, %v50
  %v54 = vlaneseq
  %v55 = vshrl.u32 %v54, 7
  %v56 = vsub.s32 0, %v55
  %v57 = vrot.slane %v23, %v56
  %v59 = vmul.f32 %v51, %v57
  %v60 = vmul.f32 %v52, %v57
  %v62 = vlaneseq
  %v63 = vshrl.u32 %v62, 7
  %v64 = vsub.s32 0, %v63
  %v65 = vrot.slane %v24, %v64
  %v67 = vadd.f32 %v59, %v65
  %v68 = vadd.f32 %v60, %v65
  %v69 = vld [vmem:[%s3] sm:$0xf]
  %v70 = vld [vmem:[%s3 + $0x4] sm:$0xf]
  %v71 = vld [vmem:[%s3 + $0x8] sm:$0xf]
  %v72 = vld [vmem:[%s3 + $0xc] sm:$0xf]
  %v73 = vpack.c.bf16 %v68, %v67
  %v74 = vld [vmem:[%s4] sm:$0x1]
  %v76 = vlaneseq
  %v77 = vshrl.u32 %v76, 7
  %v78 = vsub.s32 0, %v77
  %v79 = vrot.slane %v74, %v78
  %v85 = vunpack.c.l.b16 %v69
  %v86 = vunpack.c.l.b16 %v70
  %v87 = vunpack.c.l.b16 %v71
  %v88 = vunpack.c.l.b16 %v72
  %v89 = vpack.c.b16 %v86, %v85
  %v90 = vpack.c.b16 %v88, %v87
  %v94 = vsel %vm25, %v73, 0
  %96 = vmatprep.subr.bf16.mxu0 0
  %97 = vmatpush1.bf16.msra.mxu0 0
  %98 = vmatprep.subr.bf16.mxu0 0
  %99 = vmatpush1.bf16.msra.mxu0 0
  %100 = vmatprep.subr.bf16.mxu0 0
  %101 = vmatpush1.bf16.msra.mxu0 0
  %102 = vmatprep.subr.bf16.mxu0 0
  %103 = vmatpush1.bf16.msra.mxu0 0
  %104 = vmatprep.subr.bf16.mxu0 0
  %105 = vmatpush1.bf16.msra.mxu0 0
  %106 = vmatprep.subr.bf16.mxu0 0
  %107 = vmatpush1.bf16.msra.mxu0 0
  %108 = vmatprep.subr.bf16.mxu0 0
  %109 = vmatpush1.bf16.msra.mxu0 %v90
  %110 = vmatprep.subr.bf16.mxu0 0
  %111 = vmatpush1.bf16.msra.mxu0 %v89
  %112 = vmatprep.subr.bf16.mxu0 0
  %113 = vmatpush2.bf16.msra.mxu0 0
  %114 = vmatprep.subr.bf16.mxu0 0
  %115 = vmatpush2.bf16.msra.mxu0 0
  %116 = vmatprep.subr.bf16.mxu0 0
  %117 = vmatpush2.bf16.msra.mxu0 0
  %118 = vmatprep.subr.bf16.mxu0 0
  %119 = vmatpush2.bf16.msra.mxu0 0
  %120 = vmatprep.subr.bf16.mxu0 0
  %121 = vmatpush2.bf16.msra.mxu0 0
  %122 = vmatprep.subr.bf16.mxu0 0
  %123 = vmatpush2.bf16.msra.mxu0 0
  %124 = vmatprep.subr.bf16.mxu0 0
  %125 = vmatpush2.bf16.msra.mxu0 0
  %126 = vmatprep.subr.bf16.mxu0 0
  %127 = vmatpush2.bf16.msra.mxu0 0
  %128 = vmatprep.mubr.bf16.mxu0 0
  %129 = vmatmul.mubr.bf16.gmra.mxu0 %v94
  %v130 = vpop.f32.mrf.mxu0
  %v131 = vadd.f32 %v79, %v130
  %v132 = vpop.f32.mrf.mxu0
  %v133 = vpop.f32.mrf.mxu0
  %v134 = vadd.f32 %v79, %v133
  %v135 = vpop.f32.mrf.mxu0
  %136 = vdwg.mxu0
  %137 = vst [vmem:[%s5] sm:$0xff] %v131
  %138 = vst [vmem:[%s5 + $0x8] sm:$0xff] %v134
  // Predicated region
  $region22: #{iibmil_encoder_forward.5} parent=0 // pred_check
    _
  $region23: #{iibmil_encoder_forward.5} parent=0 // pred_check_branch
    %140 = sbr.rel (0) target = $region25
  $region24: #{iibmil_encoder_forward.5} parent=0 // pred_region
    _
  $region25: #{iibmil_encoder_forward.5} parent=0 // pred_fallthru
    _
  // Predicated region
  $region26: #{iibmil_encoder_forward.5} parent=0 // pred_check
    _
  $region27: #{iibmil_encoder_forward.5} parent=0 // pred_check_branch
    %142 = sbr.rel (0) target = $region29
  $region28: #{iibmil_encoder_forward.5} parent=0 // pred_region
    _
  $region29: #{iibmil_encoder_forward.5} parent=0 // pred_fallthru
    _

// kernel: iibmil_encoder_forward.3
$region0: #{iibmil_encoder_forward.3}
  #allocation0 [shape = 'u32[]', space=smem, size = 0x4, offset = 0x4, fixed_abs, tag = 'smem constant byte address 0x4 - core index']
  #allocation1 [shape = 'u32[144,128]{1,0:T(1,128)}', space=vmem, size = 0x12000, scoped, tag = 'internal scratch']
  %s0 = inlined_call_operand.smem [shape: u32[41], index: -1, kind: input, shape index: {}]
  %s1 = sld [smem:[%s0]]
  %s2 = scalar_lea.smem %s0, 1
  %s3 = sld [smem:[%s2]]
  %s4 = scalar_lea.smem %s0, 2
  %s5 = sld [smem:[%s4]]
  %s6 = scalar_lea.smem %s0, 3
  %s7 = sld [smem:[%s6]]
  %s8 = scalar_lea.smem %s0, 4
  %s9 = sld [smem:[%s8]]
  %s10 = scalar_lea.smem %s0, 5
  %s11 = sld [smem:[%s10]]
  %s12 = scalar_lea.smem %s0, 6
  %s13 = sld [smem:[%s12]]
  %s14 = scalar_lea.smem %s0, 7
  %s15 = sld [smem:[%s14]]
  %s16 = scalar_lea.smem %s0, 8
  %s17 = sld [smem:[%s16]]
  %s18 = scalar_lea.smem %s0, 9
  %s19 = sld [smem:[%s18]]
  %s20 = scalar_lea.smem %s0, 10
  %s21 = sld [smem:[%s20]]
  %s22 = scalar_lea.smem %s0, 11
  %s23 = sld [smem:[%s22]]
  %s24 = scalar_lea.smem %s0, 12
  %s25 = sld [smem:[%s24]]
  %s26 = scalar_lea.smem %s0, 13
  %s27 = sld [smem:[%s26]]
  %s28 = scalar_lea.smem %s0, 14
  %s29 = sld [smem:[%s28]]
  %s30 = scalar_lea.smem %s0, 15
  %s31 = sld [smem:[%s30]]
  %s32 = scalar_lea.smem %s0, 16
  %s33 = sld [smem:[%s32]]
  %s34 = scalar_lea.smem %s0, 17
  %s35 = sld [smem:[%s34]]
  %s36 = scalar_lea.smem %s0, 18
  %s37 = sld [smem:[%s36]]
  %s38 = scalar_lea.smem %s0, 19
  %s39 = sld [smem:[%s38]]
  %s40 = scalar_lea.smem %s0, 20
  %s41 = sld [smem:[%s40]]
  %s42 = scalar_lea.smem %s0, 21
  %s43 = sld [smem:[%s42]]
  %s44 = scalar_lea.smem %s0, 22
  %s45 = sld [smem:[%s44]]
  %s46 = scalar_lea.smem %s0, 23
  %s47 = sld [smem:[%s46]]
  %s48 = scalar_lea.smem %s0, 24
  %s49 = sld [smem:[%s48]]
  %s50 = scalar_lea.smem %s0, 25
  %s51 = sld [smem:[%s50]]
  %s52 = scalar_lea.smem %s0, 26
  %s53 = sld [smem:[%s52]]
  %s54 = scalar_lea.smem %s0, 27
  %s55 = sld [smem:[%s54]]
  %s56 = scalar_lea.smem %s0, 28
  %s57 = sld [smem:[%s56]]
  %s58 = scalar_lea.smem %s0, 29
  %s59 = sld [smem:[%s58]]
  %s60 = scalar_lea.smem %s0, 30
  %s61 = sld [smem:[%s60]]
  %s62 = scalar_lea.smem %s0, 31
  %s63 = sld [smem:[%s62]]
  %s64 = scalar_lea.smem %s0, 32
  %s65 = sld [smem:[%s64]]
  %s66 = scalar_lea.smem %s0, 33
  %s67 = sld [smem:[%s66]]
  %s68 = scalar_lea.smem %s0, 34
  %s69 = sld [smem:[%s68]]
  %s70 = scalar_lea.smem %s0, 35
  %s71 = sld [smem:[%s70]]
  %s72 = scalar_lea.smem %s0, 36
  %s73 = sld [smem:[%s72]]
  %s74 = scalar_lea.smem %s0, 37
  %s75 = sld [smem:[%s74]]
  %s76 = scalar_lea.smem %s0, 38
  %s77 = sld [smem:[%s76]]
  %s78 = scalar_lea.smem %s0, 39
  %s79 = sld [smem:[%s78]]
  %s80 = scalar_lea.smem %s0, 40
  %s81 = sld [smem:[%s80]]
  %s82 = sld [smem:[#allocation0]]
  $region269: #{iibmil_encoder_forward.3} parent=0
    _
  %s84 = ssub.s32 1, %s82
  %s85 = scalar_select 0, %s84, %s82
  $region1: #{iibmil_encoder_forward.3} parent=0
    #allocation2 [shape = 'u8[8192]{0}', space=vmem, size = 0x2000, scoped, tag = 'input window, operand 0']
    #allocation3 [shape = 's32[2]{0}', space=sflag, size = 0x8, scoped, tag = 'scoped memory for iibmil_encoder_forward.3']
    #allocation4 [shape = 'u8[8192]{0}', space=vmem, size = 0x2000, scoped, tag = 'input window, operand 1']
    #allocation5 [shape = 's32[2]{0}', space=sflag, size = 0x8, scoped, tag = 'scoped memory for iibmil_encoder_forward.3']
    #allocation6 [shape = 'u8[4096]{0}', space=vmem, size = 0x1000, scoped, tag = 'input window, operand 2, single buffered']
    #allocation7 [shape = 'u8[512]{0}', space=vmem, size = 0x400, scoped, tag = 'input window, operand 3, single buffered']
    #allocation8 [shape = 's32[1]{0}', space=sflag, size = 0x4, scoped, tag = 'scoped memory for iibmil_encoder_forward.3']
    #allocation9 [shape = 'u8[16384]{0}', space=vmem, size = 0x4000, scoped, tag = 'input window, operand 6, single buffered']
    #allocation10 [shape = 'u8[512]{0}', space=vmem, size = 0x400, scoped, tag = 'input window, operand 7, single buffered']
    #allocation11 [shape = 's32[1]{0}', space=sflag, size = 0x4, scoped, tag = 'scoped memory for iibmil_encoder_forward.3']
    #allocation12 [shape = 'u8[512]{0}', space=vmem, size = 0x400, scoped, tag = 'input window, operand 11, single buffered']
    #allocation13 [shape = 'u8[16384]{0}', space=vmem, size = 0x4000, scoped, tag = 'input window, operand 14, single buffered']
    #allocation14 [shape = 's32[1]{0}', space=sflag, size = 0x4, scoped, tag = 'scoped memory for iibmil_encoder_forward.3']
    #allocation15 [shape = 'u8[512]{0}', space=vmem, size = 0x400, scoped, tag = 'input window, operand 15, single buffered']
    #allocation16 [shape = 'u8[16384]{0}', space=vmem, size = 0x4000, scoped, tag = 'input window, operand 18, single buffered']
    #allocation17 [shape = 's32[1]{0}', space=sflag, size = 0x4, scoped, tag = 'scoped memory for iibmil_encoder_forward.3']
    #allocation18 [shape = 'u8[512]{0}', space=vmem, size = 0x400, scoped, tag = 'input window, operand 19, single buffered']
    #allocation19 [shape = 'u8[8192]{0}', space=vmem, size = 0x2000, scoped, tag = 'input window, operand 22, single buffered']
    #allocation20 [shape = 's32[1]{0}', space=sflag, size = 0x4, scoped, tag = 'scoped memory for iibmil_encoder_forward.3']
    #allocation21 [shape = 'u8[512]{0}', space=vmem, size = 0x400, scoped, tag = 'input window, operand 23, single buffered']
    #allocation22 [shape = 'u8[8192]{0}', space=vmem, size = 0x2000, scoped, tag = 'input window, operand 24, single buffered']
    #allocation23 [shape = 's32[1]{0}', space=sflag, size = 0x4, scoped, tag = 'scoped memory for iibmil_encoder_forward.3']
    #allocation24 [shape = 'u8[512]{0}', space=vmem, size = 0x400, scoped, tag = 'input window, operand 25, single buffered']
    #allocation25 [shape = 'u8[8192]{0}', space=vmem, size = 0x2000, scoped, tag = 'input window, operand 26, single buffered']
    #allocation26 [shape = 's32[1]{0}', space=sflag, size = 0x4, scoped, tag = 'scoped memory for iibmil_encoder_forward.3']
    #allocation27 [shape = 'u8[8192]{0}', space=vmem, size = 0x2000, scoped, tag = 'input window, operand 28, single buffered']
    #allocation28 [shape = 'u8[131072]{0}', space=vmem, size = 0x20000, scoped, tag = 'input window, operand 32, single buffered']
    #allocation29 [shape = 's32[1]{0}', space=sflag, size = 0x4, scoped, tag = 'scoped memory for iibmil_encoder_forward.3']
    #allocation30 [shape = 'u8[524288]{0}', space=vmem, size = 0x80000, scoped, tag = 'input window, operand 34, single buffered']
    %86 = vsyncpa [#allocation3], 0
    %s87 = scalar_lea.sflag [#allocation3], 1
    %88 = vsyncpa %s87, 0
    %89 = vsyncpa [#allocation5], 0
    %s90 = scalar_lea.sflag [#allocation5], 1
    %91 = vsyncpa %s90, 0
    %92 = vsyncpa [#allocation8], 0
    %93 = vsyncpa [#allocation11], 0
    %94 = vsyncpa [#allocation14], 0
    %95 = vsyncpa [#allocation17], 0
    %96 = vsyncpa [#allocation20], 0
    %97 = vsyncpa [#allocation23], 0
    %98 = vsyncpa [#allocation26], 0
    %99 = vsyncpa [#allocation29], 0
    loop: start=0, step=1, limit=4
    $region2: #{iibmil_encoder_forward.3} parent=1 // loop_pre_header
      _
    $region3: #{iibmil_encoder_forward.3} parent=1 // loop_header
      %s101 = sphi 0, %s105
      %p102 = scmp.ge.s32.totalorder %s101, 4
      %s111 = sphi 0, %s113
      %s114 = sphi 0, %s111
      %s115 = sphi 0, %s114
      %s131 = sphi 0, %s115
      %s137 = sphi 0, %s139
      %s140 = sphi 0, %s137
      %s141 = sphi 0, %s140
      %s157 = sphi 0, %s141
      %s161 = sphi 0, %s161
      %s163 = sphi 0, %s161
      %s164 = sphi 0, %s163
      %s178 = sphi 0, %s164
      %s182 = sphi 0, %s182
      %s184 = sphi 0, %s182
      %s185 = sphi 0, %s184
      %s199 = sphi 0, %s185
      %s203 = sphi 0, %s203
      %s205 = sphi 0, %s203
      %s206 = sphi 0, %s205
      %s220 = sphi 0, %s206
      %s224 = sphi 0, %s224
      %s226 = sphi 0, %s224
      %s227 = sphi 0, %s226
      %s241 = sphi 0, %s227
      %s245 = sphi 0, %s245
      %s247 = sphi 0, %s245
      %s248 = sphi 0, %s247
      %s262 = sphi 0, %s248
      %s266 = sphi 0, %s266
      %s268 = sphi 0, %s266
      %s269 = sphi 0, %s268
      %s283 = sphi 0, %s269
      %s287 = sphi 0, %s287
      %s289 = sphi 0, %s287
      %s290 = sphi 0, %s289
      %s304 = sphi 0, %s290
      %s308 = sphi 0, %s308
      %s310 = sphi 0, %s308
      %s311 = sphi 0, %s310
      %s325 = sphi 0, %s311
      %s329 = sphi 0, %s329
      %s331 = sphi 0, %s329
      %s332 = sphi 0, %s331
      %s346 = sphi 0, %s332
      %s350 = sphi 0, %s350
      %s352 = sphi 0, %s350
      %s353 = sphi 0, %s352
      %s367 = sphi 0, %s353
      %s371 = sphi 0, %s371
      %s373 = sphi 0, %s371
      %s374 = sphi 0, %s373
      %s388 = sphi 0, %s374
      %s392 = sphi 0, %s392
      %s394 = sphi 0, %s392
      %s395 = sphi 0, %s394
      %s409 = sphi 0, %s395
      %s413 = sphi 0, %s413
      %s415 = sphi 0, %s413
      %s416 = sphi 0, %s415
      %s430 = sphi 0, %s416
      %s434 = sphi 0, %s434
      %s436 = sphi 0, %s434
      %s437 = sphi 0, %s436
      %s451 = sphi 0, %s437
      %s455 = sphi 0, %s455
      %s457 = sphi 0, %s455
      %s458 = sphi 0, %s457
      %s472 = sphi 0, %s458
      %s476 = sphi 0, %s476
      %s478 = sphi 0, %s476
      %s479 = sphi 0, %s478
      %s493 = sphi 0, %s479
      %s497 = sphi 0, %s497
      %s499 = sphi 0, %s497
      %s500 = sphi 0, %s499
      %s514 = sphi 0, %s500
      %s518 = sphi 0, %s518
      %s520 = sphi 0, %s518
      %s521 = sphi 0, %s520
      %s535 = sphi 0, %s521
      %s539 = sphi 0, %s539
      %s541 = sphi 0, %s539
      %s542 = sphi 0, %s541
      %s556 = sphi 0, %s542
      %s560 = sphi 0, %s560
      %s562 = sphi 0, %s560
      %s563 = sphi 0, %s562
      %s577 = sphi 0, %s563
      %s581 = sphi 0, %s581
      %s583 = sphi 0, %s581
      %s584 = sphi 0, %s583
      %s598 = sphi 0, %s584
      %s602 = sphi 0, %s602
      %s604 = sphi 0, %s602
      %s605 = sphi 0, %s604
      %s619 = sphi 0, %s605
      %s623 = sphi 0, %s623
      %s625 = sphi 0, %s623
      %s626 = sphi 0, %s625
      %s640 = sphi 0, %s626
      %s644 = sphi 0, %s644
      %s646 = sphi 0, %s644
      %s647 = sphi 0, %s646
      %s661 = sphi 0, %s647
      %s665 = sphi 0, %s665
      %s667 = sphi 0, %s665
      %s668 = sphi 0, %s667
      %s682 = sphi 0, %s668
      %s686 = sphi 0, %s686
      %s688 = sphi 0, %s686
      %s689 = sphi 0, %s688
      %s703 = sphi 0, %s689
      %s707 = sphi 0, %s707
      %s709 = sphi 0, %s707
      %s710 = sphi 0, %s709
      %s724 = sphi 0, %s710
      %s728 = sphi 0, %s728
      %s730 = sphi 0, %s728
      %s731 = sphi 0, %s730
      %s745 = sphi 0, %s731
      %s749 = sphi 0, %s749
      %s751 = sphi 0, %s749
      %s752 = sphi 0, %s751
      %s766 = sphi 0, %s752
      %s770 = sphi 0, %s770
      %s772 = sphi 0, %s770
      %s773 = sphi 0, %s772
      %s787 = sphi 0, %s773
      %s791 = sphi 0, %s791
      %s793 = sphi 0, %s791
      %s794 = sphi 0, %s793
      %s808 = sphi 0, %s794
      %s812 = sphi 0, %s812
      %s814 = sphi 0, %s812
      %s815 = sphi 0, %s814
      %s829 = sphi 0, %s815
      %s833 = sphi 0, %s833
      %s835 = sphi 0, %s833
      %s836 = sphi 0, %s835
      %s850 = sphi 0, %s836
      %s854 = sphi 0, %s854
      %s856 = sphi 0, %s854
      %s857 = sphi 0, %s856
      %s871 = sphi 0, %s857
      %s875 = sphi 0, %s875
      %s877 = sphi 0, %s875
      %s878 = sphi 0, %s877
      %s892 = sphi 0, %s878
      %s896 = sphi 0, %s896
      %s898 = sphi 0, %s896
      %s899 = sphi 0, %s898
      %s913 = sphi 0, %s899
      %s917 = sphi 0, %s917
      %s919 = sphi 0, %s917
      %s920 = sphi 0, %s919
      %s934 = sphi 0, %s920
      %s938 = sphi 0, %s938
      %s940 = sphi 0, %s938
      %s941 = sphi 0, %s940
      %s955 = sphi 0, %s941
      %s961 = sphi 0, %s963
      %s964 = sphi 0, %s961
      %s965 = sphi 0, %s964
      %s981 = sphi 0, %s965
    $region4: #{iibmil_encoder_forward.3} parent=1 // loop_header_branch
      %104 = sbr.rel (%p102) target = $region8
    $region5: #{iibmil_encoder_forward.3} parent=1 // loop_body
      %s106 = ssub.s32 %s101, 1
      %s107 = ssub.s32 %s101, 2
      %s108 = sadd.s32 %s101, 1
      %s109 = ssub.s32 %s101, %s108
      %p110 = scmp.eq.s32.totalorder %s109, 0
      %s112 = sadd.s32 %s111, 1
      %s113 = scalar_select %p110, %s111, %s112
      %p116 = pneg %p110
      %p117 = scmp.eq.s32.totalorder %s101, 1
      %p118 = por %p116, %p117
      %p119 = scmp.ne.s32.totalorder %s111, %s114
      %p120 = scmp.eq.s32.totalorder %s101, 0
      %p121 = por %p119, %p120
      %p122 = scmp.ne.s32.totalorder %s111, %s114
      %p123 = scmp.eq.s32.totalorder %s106, 1
      %p124 = por %p122, %p123
      %p125 = scmp.ne.s32.totalorder %s114, %s115
      %p126 = scmp.eq.s32.totalorder %s106, 0
      %p127 = por %p125, %p126
      %p128 = scmp.ne.s32.totalorder %s114, %s115
      %p129 = scmp.eq.s32.totalorder %s107, 1
      %p130 = por %p128, %p129
      %p132 = scmp.ne.s32.totalorder %s115, %s131
      %p133 = scmp.eq.s32.totalorder %s107, 0
      %p134 = por %p132, %p133
      %s135 = ssub.s32 %s101, %s108
      %p136 = scmp.eq.s32.totalorder %s135, 0
      %s138 = sadd.s32 %s137, 1
      %s139 = scalar_select %p136, %s137, %s138
      %p142 = pneg %p136
      %p143 = scmp.eq.s32.totalorder %s101, 1
      %p144 = por %p142, %p143
      %p145 = scmp.ne.s32.totalorder %s137, %s140
      %p146 = scmp.eq.s32.totalorder %s101, 0
      %p147 = por %p145, %p146
      %p148 = scmp.ne.s32.totalorder %s137, %s140
      %p149 = scmp.eq.s32.totalorder %s106, 1
      %p150 = por %p148, %p149
      %p151 = scmp.ne.s32.totalorder %s140, %s141
      %p152 = scmp.eq.s32.totalorder %s106, 0
      %p153 = por %p151, %p152
      %p154 = scmp.ne.s32.totalorder %s140, %s141
      %p155 = scmp.eq.s32.totalorder %s107, 1
      %p156 = por %p154, %p155
      %p158 = scmp.ne.s32.totalorder %s141, %s157
      %p159 = scmp.eq.s32.totalorder %s107, 0
      %p160 = por %p158, %p159
      %s162 = sadd.s32 %s161, 1
      %p165 = scmp.eq.s32.totalorder %s101, 1
      %p166 = scmp.ne.s32.totalorder %s161, %s163
      %p167 = scmp.eq.s32.totalorder %s101, 0
      %p168 = por %p166, %p167
      %p169 = scmp.ne.s32.totalorder %s161, %s163
      %p170 = scmp.eq.s32.totalorder %s106, 1
      %p171 = por %p169, %p170
      %p172 = scmp.ne.s32.totalorder %s163, %s164
      %p173 = scmp.eq.s32.totalorder %s106, 0
      %p174 = por %p172, %p173
      %p175 = scmp.ne.s32.totalorder %s163, %s164
      %p176 = scmp.eq.s32.totalorder %s107, 1
      %p177 = por %p175, %p176
      %p179 = scmp.ne.s32.totalorder %s164, %s178
      %p180 = scmp.eq.s32.totalorder %s107, 0
      %p181 = por %p179, %p180
      %s183 = sadd.s32 %s182, 1
      %p186 = scmp.eq.s32.totalorder %s101, 1
      %p187 = scmp.ne.s32.totalorder %s182, %s184
      %p188 = scmp.eq.s32.totalorder %s101, 0
      %p189 = por %p187, %p188
      %p190 = scmp.ne.s32.totalorder %s182, %s184
      %p191 = scmp.eq.s32.totalorder %s106, 1
      %p192 = por %p190, %p191
      %p193 = scmp.ne.s32.totalorder %s184, %s185
      %p194 = scmp.eq.s32.totalorder %s106, 0
      %p195 = por %p193, %p194
      %p196 = scmp.ne.s32.totalorder %s184, %s185
      %p197 = scmp.eq.s32.totalorder %s107, 1
      %p198 = por %p196, %p197
      %p200 = scmp.ne.s32.totalorder %s185, %s199
      %p201 = scmp.eq.s32.totalorder %s107, 0
      %p202 = por %p200, %p201
      %s204 = sadd.s32 %s203, 1
      %p207 = scmp.eq.s32.totalorder %s101, 1
      %p208 = scmp.ne.s32.totalorder %s203, %s205
      %p209 = scmp.eq.s32.totalorder %s101, 0
      %p210 = por %p208, %p209
      %p211 = scmp.ne.s32.totalorder %s203, %s205
      %p212 = scmp.eq.s32.totalorder %s106, 1
      %p213 = por %p211, %p212
      %p214 = scmp.ne.s32.totalorder %s205, %s206
      %p215 = scmp.eq.s32.totalorder %s106, 0
      %p216 = por %p214, %p215
      %p217 = scmp.ne.s32.totalorder %s205, %s206
      %p218 = scmp.eq.s32.totalorder %s107, 1
      %p219 = por %p217, %p218
      %p221 = scmp.ne.s32.totalorder %s206, %s220
      %p222 = scmp.eq.s32.totalorder %s107, 0
      %p223 = por %p221, %p222
      %s225 = sadd.s32 %s224, 1
      %p228 = scmp.eq.s32.totalorder %s101, 1
      %p229 = scmp.ne.s32.totalorder %s224, %s226
      %p230 = scmp.eq.s32.totalorder %s101, 0
      %p231 = por %p229, %p230
      %p232 = scmp.ne.s32.totalorder %s224, %s226
      %p233 = scmp.eq.s32.totalorder %s106, 1
      %p234 = por %p232, %p233
      %p235 = scmp.ne.s32.totalorder %s226, %s227
      %p236 = scmp.eq.s32.totalorder %s106, 0
      %p237 = por %p235, %p236
      %p238 = scmp.ne.s32.totalorder %s226, %s227
      %p239 = scmp.eq.s32.totalorder %s107, 1
      %p240 = por %p238, %p239
      %p242 = scmp.ne.s32.totalorder %s227, %s241
      %p243 = scmp.eq.s32.totalorder %s107, 0
      %p244 = por %p242, %p243
      %s246 = sadd.s32 %s245, 1
      %p249 = scmp.eq.s32.totalorder %s101, 1
      %p250 = scmp.ne.s32.totalorder %s245, %s247
      %p251 = scmp.eq.s32.totalorder %s101, 0
      %p252 = por %p250, %p251
      %p253 = scmp.ne.s32.totalorder %s245, %s247
      %p254 = scmp.eq.s32.totalorder %s106, 1
      %p255 = por %p253, %p254
      %p256 = scmp.ne.s32.totalorder %s247, %s248
      %p257 = scmp.eq.s32.totalorder %s106, 0
      %p258 = por %p256, %p257
      %p259 = scmp.ne.s32.totalorder %s247, %s248
      %p260 = scmp.eq.s32.totalorder %s107, 1
      %p261 = por %p259, %p260
      %p263 = scmp.ne.s32.totalorder %s248, %s262
      %p264 = scmp.eq.s32.totalorder %s107, 0
      %p265 = por %p263, %p264
      %s267 = sadd.s32 %s266, 1
      %p270 = scmp.eq.s32.totalorder %s101, 1
      %p271 = scmp.ne.s32.totalorder %s266, %s268
      %p272 = scmp.eq.s32.totalorder %s101, 0
      %p273 = por %p271, %p272
      %p274 = scmp.ne.s32.totalorder %s266, %s268
      %p275 = scmp.eq.s32.totalorder %s106, 1
      %p276 = por %p274, %p275
      %p277 = scmp.ne.s32.totalorder %s268, %s269
      %p278 = scmp.eq.s32.totalorder %s106, 0
      %p279 = por %p277, %p278
      %p280 = scmp.ne.s32.totalorder %s268, %s269
      %p281 = scmp.eq.s32.totalorder %s107, 1
      %p282 = por %p280, %p281
      %p284 = scmp.ne.s32.totalorder %s269, %s283
      %p285 = scmp.eq.s32.totalorder %s107, 0
      %p286 = por %p284, %p285
      %s288 = sadd.s32 %s287, 1
      %p291 = scmp.eq.s32.totalorder %s101, 1
      %p292 = scmp.ne.s32.totalorder %s287, %s289
      %p293 = scmp.eq.s32.totalorder %s101, 0
      %p294 = por %p292, %p293
      %p295 = scmp.ne.s32.totalorder %s287, %s289
      %p296 = scmp.eq.s32.totalorder %s106, 1
      %p297 = por %p295, %p296
      %p298 = scmp.ne.s32.totalorder %s289, %s290
      %p299 = scmp.eq.s32.totalorder %s106, 0
      %p300 = por %p298, %p299
      %p301 = scmp.ne.s32.totalorder %s289, %s290
      %p302 = scmp.eq.s32.totalorder %s107, 1
      %p303 = por %p301, %p302
      %p305 = scmp.ne.s32.totalorder %s290, %s304
      %p306 = scmp.eq.s32.totalorder %s107, 0
      %p307 = por %p305, %p306
      %s309 = sadd.s32 %s308, 1
      %p312 = scmp.eq.s32.totalorder %s101, 1
      %p313 = scmp.ne.s32.totalorder %s308, %s310
      %p314 = scmp.eq.s32.totalorder %s101, 0
      %p315 = por %p313, %p314
      %p316 = scmp.ne.s32.totalorder %s308, %s310
      %p317 = scmp.eq.s32.totalorder %s106, 1
      %p318 = por %p316, %p317
      %p319 = scmp.ne.s32.totalorder %s310, %s311
      %p320 = scmp.eq.s32.totalorder %s106, 0
      %p321 = por %p319, %p320
      %p322 = scmp.ne.s32.totalorder %s310, %s311
      %p323 = scmp.eq.s32.totalorder %s107, 1
      %p324 = por %p322, %p323
      %p326 = scmp.ne.s32.totalorder %s311, %s325
      %p327 = scmp.eq.s32.totalorder %s107, 0
      %p328 = por %p326, %p327
      %s330 = sadd.s32 %s329, 1
      %p333 = scmp.eq.s32.totalorder %s101, 1
      %p334 = scmp.ne.s32.totalorder %s329, %s331
      %p335 = scmp.eq.s32.totalorder %s101, 0
      %p336 = por %p334, %p335
      %p337 = scmp.ne.s32.totalorder %s329, %s331
      %p338 = scmp.eq.s32.totalorder %s106, 1
      %p339 = por %p337, %p338
      %p340 = scmp.ne.s32.totalorder %s331, %s332
      %p341 = scmp.eq.s32.totalorder %s106, 0
      %p342 = por %p340, %p341
      %p343 = scmp.ne.s32.totalorder %s331, %s332
      %p344 = scmp.eq.s32.totalorder %s107, 1
      %p345 = por %p343, %p344
      %p347 = scmp.ne.s32.totalorder %s332, %s346
      %p348 = scmp.eq.s32.totalorder %s107, 0
      %p349 = por %p347, %p348
      %s351 = sadd.s32 %s350, 1
      %p354 = scmp.eq.s32.totalorder %s101, 1
      %p355 = scmp.ne.s32.totalorder %s350, %s352
      %p356 = scmp.eq.s32.totalorder %s101, 0
      %p357 = por %p355, %p356
      %p358 = scmp.ne.s32.totalorder %s350, %s352
      %p359 = scmp.eq.s32.totalorder %s106, 1
      %p360 = por %p358, %p359
      %p361 = scmp.ne.s32.totalorder %s352, %s353
      %p362 = scmp.eq.s32.totalorder %s106, 0
      %p363 = por %p361, %p362
      %p364 = scmp.ne.s32.totalorder %s352, %s353
      %p365 = scmp.eq.s32.totalorder %s107, 1
      %p366 = por %p364, %p365
      %p368 = scmp.ne.s32.totalorder %s353, %s367
      %p369 = scmp.eq.s32.totalorder %s107, 0
      %p370 = por %p368, %p369
      %s372 = sadd.s32 %s371, 1
      %p375 = scmp.eq.s32.totalorder %s101, 1
      %p376 = scmp.ne.s32.totalorder %s371, %s373
      %p377 = scmp.eq.s32.totalorder %s101, 0
      %p378 = por %p376, %p377
      %p379 = scmp.ne.s32.totalorder %s371, %s373
      %p380 = scmp.eq.s32.totalorder %s106, 1
      %p381 = por %p379, %p380
      %p382 = scmp.ne.s32.totalorder %s373, %s374
      %p383 = scmp.eq.s32.totalorder %s106, 0
      %p384 = por %p382, %p383
      %p385 = scmp.ne.s32.totalorder %s373, %s374
      %p386 = scmp.eq.s32.totalorder %s107, 1
      %p387 = por %p385, %p386
      %p389 = scmp.ne.s32.totalorder %s374, %s388
      %p390 = scmp.eq.s32.totalorder %s107, 0
      %p391 = por %p389, %p390
      %s393 = sadd.s32 %s392, 1
      %p396 = scmp.eq.s32.totalorder %s101, 1
      %p397 = scmp.ne.s32.totalorder %s392, %s394
      %p398 = scmp.eq.s32.totalorder %s101, 0
      %p399 = por %p397, %p398
      %p400 = scmp.ne.s32.totalorder %s392, %s394
      %p401 = scmp.eq.s32.totalorder %s106, 1
      %p402 = por %p400, %p401
      %p403 = scmp.ne.s32.totalorder %s394, %s395
      %p404 = scmp.eq.s32.totalorder %s106, 0
      %p405 = por %p403, %p404
      %p406 = scmp.ne.s32.totalorder %s394, %s395
      %p407 = scmp.eq.s32.totalorder %s107, 1
      %p408 = por %p406, %p407
      %p410 = scmp.ne.s32.totalorder %s395, %s409
      %p411 = scmp.eq.s32.totalorder %s107, 0
      %p412 = por %p410, %p411
      %s414 = sadd.s32 %s413, 1
      %p417 = scmp.eq.s32.totalorder %s101, 1
      %p418 = scmp.ne.s32.totalorder %s413, %s415
      %p419 = scmp.eq.s32.totalorder %s101, 0
      %p420 = por %p418, %p419
      %p421 = scmp.ne.s32.totalorder %s413, %s415
      %p422 = scmp.eq.s32.totalorder %s106, 1
      %p423 = por %p421, %p422
      %p424 = scmp.ne.s32.totalorder %s415, %s416
      %p425 = scmp.eq.s32.totalorder %s106, 0
      %p426 = por %p424, %p425
      %p427 = scmp.ne.s32.totalorder %s415, %s416
      %p428 = scmp.eq.s32.totalorder %s107, 1
      %p429 = por %p427, %p428
      %p431 = scmp.ne.s32.totalorder %s416, %s430
      %p432 = scmp.eq.s32.totalorder %s107, 0
      %p433 = por %p431, %p432
      %s435 = sadd.s32 %s434, 1
      %p438 = scmp.eq.s32.totalorder %s101, 1
      %p439 = scmp.ne.s32.totalorder %s434, %s436
      %p440 = scmp.eq.s32.totalorder %s101, 0
      %p441 = por %p439, %p440
      %p442 = scmp.ne.s32.totalorder %s434, %s436
      %p443 = scmp.eq.s32.totalorder %s106, 1
      %p444 = por %p442, %p443
      %p445 = scmp.ne.s32.totalorder %s436, %s437
      %p446 = scmp.eq.s32.totalorder %s106, 0
      %p447 = por %p445, %p446
      %p448 = scmp.ne.s32.totalorder %s436, %s437
      %p449 = scmp.eq.s32.totalorder %s107, 1
      %p450 = por %p448, %p449
      %p452 = scmp.ne.s32.totalorder %s437, %s451
      %p453 = scmp.eq.s32.totalorder %s107, 0
      %p454 = por %p452, %p453
      %s456 = sadd.s32 %s455, 1
      %p459 = scmp.eq.s32.totalorder %s101, 1
      %p460 = scmp.ne.s32.totalorder %s455, %s457
      %p461 = scmp.eq.s32.totalorder %s101, 0
      %p462 = por %p460, %p461
      %p463 = scmp.ne.s32.totalorder %s455, %s457
      %p464 = scmp.eq.s32.totalorder %s106, 1
      %p465 = por %p463, %p464
      %p466 = scmp.ne.s32.totalorder %s457, %s458
      %p467 = scmp.eq.s32.totalorder %s106, 0
      %p468 = por %p466, %p467
      %p469 = scmp.ne.s32.totalorder %s457, %s458
      %p470 = scmp.eq.s32.totalorder %s107, 1
      %p471 = por %p469, %p470
      %p473 = scmp.ne.s32.totalorder %s458, %s472
      %p474 = scmp.eq.s32.totalorder %s107, 0
      %p475 = por %p473, %p474
      %s477 = sadd.s32 %s476, 1
      %p480 = scmp.eq.s32.totalorder %s101, 1
      %p481 = scmp.ne.s32.totalorder %s476, %s478
      %p482 = scmp.eq.s32.totalorder %s101, 0
      %p483 = por %p481, %p482
      %p484 = scmp.ne.s32.totalorder %s476, %s478
      %p485 = scmp.eq.s32.totalorder %s106, 1
      %p486 = por %p484, %p485
      %p487 = scmp.ne.s32.totalorder %s478, %s479
      %p488 = scmp.eq.s32.totalorder %s106, 0
      %p489 = por %p487, %p488
      %p490 = scmp.ne.s32.totalorder %s478, %s479
      %p491 = scmp.eq.s32.totalorder %s107, 1
      %p492 = por %p490, %p491
      %p494 = scmp.ne.s32.totalorder %s479, %s493
      %p495 = scmp.eq.s32.totalorder %s107, 0
      %p496 = por %p494, %p495
      %s498 = sadd.s32 %s497, 1
      %p501 = scmp.eq.s32.totalorder %s101, 1
      %p502 = scmp.ne.s32.totalorder %s497, %s499
      %p503 = scmp.eq.s32.totalorder %s101, 0
      %p504 = por %p502, %p503
      %p505 = scmp.ne.s32.totalorder %s497, %s499
      %p506 = scmp.eq.s32.totalorder %s106, 1
      %p507 = por %p505, %p506
      %p508 = scmp.ne.s32.totalorder %s499, %s500
      %p509 = scmp.eq.s32.totalorder %s106, 0
      %p510 = por %p508, %p509
      %p511 = scmp.ne.s32.totalorder %s499, %s500
      %p512 = scmp.eq.s32.totalorder %s107, 1
      %p513 = por %p511, %p512
      %p515 = scmp.ne.s32.totalorder %s500, %s514
      %p516 = scmp.eq.s32.totalorder %s107, 0
      %p517 = por %p515, %p516
      %s519 = sadd.s32 %s518, 1
      %p522 = scmp.eq.s32.totalorder %s101, 1
      %p523 = scmp.ne.s32.totalorder %s518, %s520
      %p524 = scmp.eq.s32.totalorder %s101, 0
      %p525 = por %p523, %p524
      %p526 = scmp.ne.s32.totalorder %s518, %s520
      %p527 = scmp.eq.s32.totalorder %s106, 1
      %p528 = por %p526, %p527
      %p529 = scmp.ne.s32.totalorder %s520, %s521
      %p530 = scmp.eq.s32.totalorder %s106, 0
      %p531 = por %p529, %p530
      %p532 = scmp.ne.s32.totalorder %s520, %s521
      %p533 = scmp.eq.s32.totalorder %s107, 1
      %p534 = por %p532, %p533
      %p536 = scmp.ne.s32.totalorder %s521, %s535
      %p537 = scmp.eq.s32.totalorder %s107, 0
      %p538 = por %p536, %p537
      %s540 = sadd.s32 %s539, 1
      %p543 = scmp.eq.s32.totalorder %s101, 1
      %p544 = scmp.ne.s32.totalorder %s539, %s541
      %p545 = scmp.eq.s32.totalorder %s101, 0
      %p546 = por %p544, %p545
      %p547 = scmp.ne.s32.totalorder %s539, %s541
      %p548 = scmp.eq.s32.totalorder %s106, 1
      %p549 = por %p547, %p548
      %p550 = scmp.ne.s32.totalorder %s541, %s542
      %p551 = scmp.eq.s32.totalorder %s106, 0
      %p552 = por %p550, %p551
      %p553 = scmp.ne.s32.totalorder %s541, %s542
      %p554 = scmp.eq.s32.totalorder %s107, 1
      %p555 = por %p553, %p554
      %p557 = scmp.ne.s32.totalorder %s542, %s556
      %p558 = scmp.eq.s32.totalorder %s107, 0
      %p559 = por %p557, %p558
      %s561 = sadd.s32 %s560, 1
      %p564 = scmp.eq.s32.totalorder %s101, 1
      %p565 = scmp.ne.s32.totalorder %s560, %s562
      %p566 = scmp.eq.s32.totalorder %s101, 0
      %p567 = por %p565, %p566
      %p568 = scmp.ne.s32.totalorder %s560, %s562
      %p569 = scmp.eq.s32.totalorder %s106, 1
      %p570 = por %p568, %p569
      %p571 = scmp.ne.s32.totalorder %s562, %s563
      %p572 = scmp.eq.s32.totalorder %s106, 0
      %p573 = por %p571, %p572
      %p574 = scmp.ne.s32.totalorder %s562, %s563
      %p575 = scmp.eq.s32.totalorder %s107, 1
      %p576 = por %p574, %p575
      %p578 = scmp.ne.s32.totalorder %s563, %s577
      %p579 = scmp.eq.s32.totalorder %s107, 0
      %p580 = por %p578, %p579
      %s582 = sadd.s32 %s581, 1
      %p585 = scmp.eq.s32.totalorder %s101, 1
      %p586 = scmp.ne.s32.totalorder %s581, %s583
      %p587 = scmp.eq.s32.totalorder %s101, 0
      %p588 = por %p586, %p587
      %p589 = scmp.ne.s32.totalorder %s581, %s583
      %p590 = scmp.eq.s32.totalorder %s106, 1
      %p591 = por %p589, %p590
      %p592 = scmp.ne.s32.totalorder %s583, %s584
      %p593 = scmp.eq.s32.totalorder %s106, 0
      %p594 = por %p592, %p593
      %p595 = scmp.ne.s32.totalorder %s583, %s584
      %p596 = scmp.eq.s32.totalorder %s107, 1
      %p597 = por %p595, %p596
      %p599 = scmp.ne.s32.totalorder %s584, %s598
      %p600 = scmp.eq.s32.totalorder %s107, 0
      %p601 = por %p599, %p600
      %s603 = sadd.s32 %s602, 1
      %p606 = scmp.eq.s32.totalorder %s101, 1
      %p607 = scmp.ne.s32.totalorder %s602, %s604
      %p608 = scmp.eq.s32.totalorder %s101, 0
      %p609 = por %p607, %p608
      %p610 = scmp.ne.s32.totalorder %s602, %s604
      %p611 = scmp.eq.s32.totalorder %s106, 1
      %p612 = por %p610, %p611
      %p613 = scmp.ne.s32.totalorder %s604, %s605
      %p614 = scmp.eq.s32.totalorder %s106, 0
      %p615 = por %p613, %p614
      %p616 = scmp.ne.s32.totalorder %s604, %s605
      %p617 = scmp.eq.s32.totalorder %s107, 1
      %p618 = por %p616, %p617
      %p620 = scmp.ne.s32.totalorder %s605, %s619
      %p621 = scmp.eq.s32.totalorder %s107, 0
      %p622 = por %p620, %p621
      %s624 = sadd.s32 %s623, 1
      %p627 = scmp.eq.s32.totalorder %s101, 1
      %p628 = scmp.ne.s32.totalorder %s623, %s625
      %p629 = scmp.eq.s32.totalorder %s101, 0
      %p630 = por %p628, %p629
      %p631 = scmp.ne.s32.totalorder %s623, %s625
      %p632 = scmp.eq.s32.totalorder %s106, 1
      %p633 = por %p631, %p632
      %p634 = scmp.ne.s32.totalorder %s625, %s626
      %p635 = scmp.eq.s32.totalorder %s106, 0
      %p636 = por %p634, %p635
      %p637 = scmp.ne.s32.totalorder %s625, %s626
      %p638 = scmp.eq.s32.totalorder %s107, 1
      %p639 = por %p637, %p638
      %p641 = scmp.ne.s32.totalorder %s626, %s640
      %p642 = scmp.eq.s32.totalorder %s107, 0
      %p643 = por %p641, %p642
      %s645 = sadd.s32 %s644, 1
      %p648 = scmp.eq.s32.totalorder %s101, 1
      %p649 = scmp.ne.s32.totalorder %s644, %s646
      %p650 = scmp.eq.s32.totalorder %s101, 0
      %p651 = por %p649, %p650
      %p652 = scmp.ne.s32.totalorder %s644, %s646
      %p653 = scmp.eq.s32.totalorder %s106, 1
      %p654 = por %p652, %p653
      %p655 = scmp.ne.s32.totalorder %s646, %s647
      %p656 = scmp.eq.s32.totalorder %s106, 0
      %p657 = por %p655, %p656
      %p658 = scmp.ne.s32.totalorder %s646, %s647
      %p659 = scmp.eq.s32.totalorder %s107, 1
      %p660 = por %p658, %p659
      %p662 = scmp.ne.s32.totalorder %s647, %s661
      %p663 = scmp.eq.s32.totalorder %s107, 0
      %p664 = por %p662, %p663
      %s666 = sadd.s32 %s665, 1
      %p669 = scmp.eq.s32.totalorder %s101, 1
      %p670 = scmp.ne.s32.totalorder %s665, %s667
      %p671 = scmp.eq.s32.totalorder %s101, 0
      %p672 = por %p670, %p671
      %p673 = scmp.ne.s32.totalorder %s665, %s667
      %p674 = scmp.eq.s32.totalorder %s106, 1
      %p675 = por %p673, %p674
      %p676 = scmp.ne.s32.totalorder %s667, %s668
      %p677 = scmp.eq.s32.totalorder %s106, 0
      %p678 = por %p676, %p677
      %p679 = scmp.ne.s32.totalorder %s667, %s668
      %p680 = scmp.eq.s32.totalorder %s107, 1
      %p681 = por %p679, %p680
      %p683 = scmp.ne.s32.totalorder %s668, %s682
      %p684 = scmp.eq.s32.totalorder %s107, 0
      %p685 = por %p683, %p684
      %s687 = sadd.s32 %s686, 1
      %p690 = scmp.eq.s32.totalorder %s101, 1
      %p691 = scmp.ne.s32.totalorder %s686, %s688
      %p692 = scmp.eq.s32.totalorder %s101, 0
      %p693 = por %p691, %p692
      %p694 = scmp.ne.s32.totalorder %s686, %s688
      %p695 = scmp.eq.s32.totalorder %s106, 1
      %p696 = por %p694, %p695
      %p697 = scmp.ne.s32.totalorder %s688, %s689
      %p698 = scmp.eq.s32.totalorder %s106, 0
      %p699 = por %p697, %p698
      %p700 = scmp.ne.s32.totalorder %s688, %s689
      %p701 = scmp.eq.s32.totalorder %s107, 1
      %p702 = por %p700, %p701
      %p704 = scmp.ne.s32.totalorder %s689, %s703
      %p705 = scmp.eq.s32.totalorder %s107, 0
      %p706 = por %p704, %p705
      %s708 = sadd.s32 %s707, 1
      %p711 = scmp.eq.s32.totalorder %s101, 1
      %p712 = scmp.ne.s32.totalorder %s707, %s709
      %p713 = scmp.eq.s32.totalorder %s101, 0
      %p714 = por %p712, %p713
      %p715 = scmp.ne.s32.totalorder %s707, %s709
      %p716 = scmp.eq.s32.totalorder %s106, 1
      %p717 = por %p715, %p716
      %p718 = scmp.ne.s32.totalorder %s709, %s710
      %p719 = scmp.eq.s32.totalorder %s106, 0
      %p720 = por %p718, %p719
      %p721 = scmp.ne.s32.totalorder %s709, %s710
      %p722 = scmp.eq.s32.totalorder %s107, 1
      %p723 = por %p721, %p722
      %p725 = scmp.ne.s32.totalorder %s710, %s724
      %p726 = scmp.eq.s32.totalorder %s107, 0
      %p727 = por %p725, %p726
      %s729 = sadd.s32 %s728, 1
      %p732 = scmp.eq.s32.totalorder %s101, 1
      %p733 = scmp.ne.s32.totalorder %s728, %s730
      %p734 = scmp.eq.s32.totalorder %s101, 0
      %p735 = por %p733, %p734
      %p736 = scmp.ne.s32.totalorder %s728, %s730
      %p737 = scmp.eq.s32.totalorder %s106, 1
      %p738 = por %p736, %p737
      %p739 = scmp.ne.s32.totalorder %s730, %s731
      %p740 = scmp.eq.s32.totalorder %s106, 0
      %p741 = por %p739, %p740
      %p742 = scmp.ne.s32.totalorder %s730, %s731
      %p743 = scmp.eq.s32.totalorder %s107, 1
      %p744 = por %p742, %p743
      %p746 = scmp.ne.s32.totalorder %s731, %s745
      %p747 = scmp.eq.s32.totalorder %s107, 0
      %p748 = por %p746, %p747
      %s750 = sadd.s32 %s749, 1
      %p753 = scmp.eq.s32.totalorder %s101, 1
      %p754 = scmp.ne.s32.totalorder %s749, %s751
      %p755 = scmp.eq.s32.totalorder %s101, 0
      %p756 = por %p754, %p755
      %p757 = scmp.ne.s32.totalorder %s749, %s751
      %p758 = scmp.eq.s32.totalorder %s106, 1
      %p759 = por %p757, %p758
      %p760 = scmp.ne.s32.totalorder %s751, %s752
      %p761 = scmp.eq.s32.totalorder %s106, 0
      %p762 = por %p760, %p761
      %p763 = scmp.ne.s32.totalorder %s751, %s752
      %p764 = scmp.eq.s32.totalorder %s107, 1
      %p765 = por %p763, %p764
      %p767 = scmp.ne.s32.totalorder %s752, %s766
      %p768 = scmp.eq.s32.totalorder %s107, 0
      %p769 = por %p767, %p768
      %s771 = sadd.s32 %s770, 1
      %p774 = scmp.eq.s32.totalorder %s101, 1
      %p775 = scmp.ne.s32.totalorder %s770, %s772
      %p776 = scmp.eq.s32.totalorder %s101, 0
      %p777 = por %p775, %p776
      %p778 = scmp.ne.s32.totalorder %s770, %s772
      %p779 = scmp.eq.s32.totalorder %s106, 1
      %p780 = por %p778, %p779
      %p781 = scmp.ne.s32.totalorder %s772, %s773
      %p782 = scmp.eq.s32.totalorder %s106, 0
      %p783 = por %p781, %p782
      %p784 = scmp.ne.s32.totalorder %s772, %s773
      %p785 = scmp.eq.s32.totalorder %s107, 1
      %p786 = por %p784, %p785
      %p788 = scmp.ne.s32.totalorder %s773, %s787
      %p789 = scmp.eq.s32.totalorder %s107, 0
      %p790 = por %p788, %p789
      %s792 = sadd.s32 %s791, 1
      %p795 = scmp.eq.s32.totalorder %s101, 1
      %p796 = scmp.ne.s32.totalorder %s791, %s793
      %p797 = scmp.eq.s32.totalorder %s101, 0
      %p798 = por %p796, %p797
      %p799 = scmp.ne.s32.totalorder %s791, %s793
      %p800 = scmp.eq.s32.totalorder %s106, 1
      %p801 = por %p799, %p800
      %p802 = scmp.ne.s32.totalorder %s793, %s794
      %p803 = scmp.eq.s32.totalorder %s106, 0
      %p804 = por %p802, %p803
      %p805 = scmp.ne.s32.totalorder %s793, %s794
      %p806 = scmp.eq.s32.totalorder %s107, 1
      %p807 = por %p805, %p806
      %p809 = scmp.ne.s32.totalorder %s794, %s808
      %p810 = scmp.eq.s32.totalorder %s107, 0
      %p811 = por %p809, %p810
      %s813 = sadd.s32 %s812, 1
      %p816 = scmp.eq.s32.totalorder %s101, 1
      %p817 = scmp.ne.s32.totalorder %s812, %s814
      %p818 = scmp.eq.s32.totalorder %s101, 0
      %p819 = por %p817, %p818
      %p820 = scmp.ne.s32.totalorder %s812, %s814
      %p821 = scmp.eq.s32.totalorder %s106, 1
      %p822 = por %p820, %p821
      %p823 = scmp.ne.s32.totalorder %s814, %s815
      %p824 = scmp.eq.s32.totalorder %s106, 0
      %p825 = por %p823, %p824
      %p826 = scmp.ne.s32.totalorder %s814, %s815
      %p827 = scmp.eq.s32.totalorder %s107, 1
      %p828 = por %p826, %p827
      %p830 = scmp.ne.s32.totalorder %s815, %s829
      %p831 = scmp.eq.s32.totalorder %s107, 0
      %p832 = por %p830, %p831
      %s834 = sadd.s32 %s833, 1
      %p837 = scmp.eq.s32.totalorder %s101, 1
      %p838 = scmp.ne.s32.totalorder %s833, %s835
      %p839 = scmp.eq.s32.totalorder %s101, 0
      %p840 = por %p838, %p839
      %p841 = scmp.ne.s32.totalorder %s833, %s835
      %p842 = scmp.eq.s32.totalorder %s106, 1
      %p843 = por %p841, %p842
      %p844 = scmp.ne.s32.totalorder %s835, %s836
      %p845 = scmp.eq.s32.totalorder %s106, 0
      %p846 = por %p844, %p845
      %p847 = scmp.ne.s32.totalorder %s835, %s836
      %p848 = scmp.eq.s32.totalorder %s107, 1
      %p849 = por %p847, %p848
      %p851 = scmp.ne.s32.totalorder %s836, %s850
      %p852 = scmp.eq.s32.totalorder %s107, 0
      %p853 = por %p851, %p852
      %s855 = sadd.s32 %s854, 1
      %p858 = scmp.eq.s32.totalorder %s101, 1
      %p859 = scmp.ne.s32.totalorder %s854, %s856
      %p860 = scmp.eq.s32.totalorder %s101, 0
      %p861 = por %p859, %p860
      %p862 = scmp.ne.s32.totalorder %s854, %s856
      %p863 = scmp.eq.s32.totalorder %s106, 1
      %p864 = por %p862, %p863
      %p865 = scmp.ne.s32.totalorder %s856, %s857
      %p866 = scmp.eq.s32.totalorder %s106, 0
      %p867 = por %p865, %p866
      %p868 = scmp.ne.s32.totalorder %s856, %s857
      %p869 = scmp.eq.s32.totalorder %s107, 1
      %p870 = por %p868, %p869
      %p872 = scmp.ne.s32.totalorder %s857, %s871
      %p873 = scmp.eq.s32.totalorder %s107, 0
      %p874 = por %p872, %p873
      %s876 = sadd.s32 %s875, 1
      %p879 = scmp.eq.s32.totalorder %s101, 1
      %p880 = scmp.ne.s32.totalorder %s875, %s877
      %p881 = scmp.eq.s32.totalorder %s101, 0
      %p882 = por %p880, %p881
      %p883 = scmp.ne.s32.totalorder %s875, %s877
      %p884 = scmp.eq.s32.totalorder %s106, 1
      %p885 = por %p883, %p884
      %p886 = scmp.ne.s32.totalorder %s877, %s878
      %p887 = scmp.eq.s32.totalorder %s106, 0
      %p888 = por %p886, %p887
      %p889 = scmp.ne.s32.totalorder %s877, %s878
      %p890 = scmp.eq.s32.totalorder %s107, 1
      %p891 = por %p889, %p890
      %p893 = scmp.ne.s32.totalorder %s878, %s892
      %p894 = scmp.eq.s32.totalorder %s107, 0
      %p895 = por %p893, %p894
      %s897 = sadd.s32 %s896, 1
      %p900 = scmp.eq.s32.totalorder %s101, 1
      %p901 = scmp.ne.s32.totalorder %s896, %s898
      %p902 = scmp.eq.s32.totalorder %s101, 0
      %p903 = por %p901, %p902
      %p904 = scmp.ne.s32.totalorder %s896, %s898
      %p905 = scmp.eq.s32.totalorder %s106, 1
      %p906 = por %p904, %p905
      %p907 = scmp.ne.s32.totalorder %s898, %s899
      %p908 = scmp.eq.s32.totalorder %s106, 0
      %p909 = por %p907, %p908
      %p910 = scmp.ne.s32.totalorder %s898, %s899
      %p911 = scmp.eq.s32.totalorder %s107, 1
      %p912 = por %p910, %p911
      %p914 = scmp.ne.s32.totalorder %s899, %s913
      %p915 = scmp.eq.s32.totalorder %s107, 0
      %p916 = por %p914, %p915
      %s918 = sadd.s32 %s917, 1
      %p921 = scmp.eq.s32.totalorder %s101, 1
      %p922 = scmp.ne.s32.totalorder %s917, %s919
      %p923 = scmp.eq.s32.totalorder %s101, 0
      %p924 = por %p922, %p923
      %p925 = scmp.ne.s32.totalorder %s917, %s919
      %p926 = scmp.eq.s32.totalorder %s106, 1
      %p927 = por %p925, %p926
      %p928 = scmp.ne.s32.totalorder %s919, %s920
      %p929 = scmp.eq.s32.totalorder %s106, 0
      %p930 = por %p928, %p929
      %p931 = scmp.ne.s32.totalorder %s919, %s920
      %p932 = scmp.eq.s32.totalorder %s107, 1
      %p933 = por %p931, %p932
      %p935 = scmp.ne.s32.totalorder %s920, %s934
      %p936 = scmp.eq.s32.totalorder %s107, 0
      %p937 = por %p935, %p936
      %s939 = sadd.s32 %s938, 1
      %p942 = scmp.eq.s32.totalorder %s101, 1
      %p943 = scmp.ne.s32.totalorder %s938, %s940
      %p944 = scmp.eq.s32.totalorder %s101, 0
      %p945 = por %p943, %p944
      %p946 = scmp.ne.s32.totalorder %s938, %s940
      %p947 = scmp.eq.s32.totalorder %s106, 1
      %p948 = por %p946, %p947
      %p949 = scmp.ne.s32.totalorder %s940, %s941
      %p950 = scmp.eq.s32.totalorder %s106, 0
      %p951 = por %p949, %p950
      %p952 = scmp.ne.s32.totalorder %s940, %s941
      %p953 = scmp.eq.s32.totalorder %s107, 1
      %p954 = por %p952, %p953
      %p956 = scmp.ne.s32.totalorder %s941, %s955
      %p957 = scmp.eq.s32.totalorder %s107, 0
      %p958 = por %p956, %p957
      %s959 = ssub.s32 %s101, %s108
      %p960 = scmp.eq.s32.totalorder %s959, 0
      %s962 = sadd.s32 %s961, 1
      %s963 = scalar_select %p960, %s961, %s962
      %p966 = pneg %p960
      %p967 = scmp.eq.s32.totalorder %s101, 1
      %p968 = por %p966, %p967
      %p969 = scmp.ne.s32.totalorder %s961, %s964
      %p970 = scmp.eq.s32.totalorder %s101, 0
      %p971 = por %p969, %p970
      %p972 = scmp.ne.s32.totalorder %s961, %s964
      %p973 = scmp.eq.s32.totalorder %s106, 1
      %p974 = por %p972, %p973
      %p975 = scmp.ne.s32.totalorder %s964, %s965
      %p976 = scmp.eq.s32.totalorder %s106, 0
      %p977 = por %p975, %p976
      %p978 = scmp.ne.s32.totalorder %s964, %s965
      %p979 = scmp.eq.s32.totalorder %s107, 1
      %p980 = por %p978, %p979
      %p982 = scmp.ne.s32.totalorder %s965, %s981
      %p983 = scmp.eq.s32.totalorder %s107, 0
      %p984 = por %p982, %p983
      %p985 = scmp.le.s32.totalorder 1, %s101
      %p986 = scmp.lt.s32.totalorder %s101, 3
      %p987 = pnand %p985, %p986
      %p988 = pneg %p987
      // Predicated region
      $region9: #{iibmil_encoder_forward.3} parent=5 // pred_check
        _
      $region10: #{iibmil_encoder_forward.3} parent=5 // pred_check_branch
        %990 = sbr.rel (%p987) target = $region12
      $region11: #{iibmil_encoder_forward.3} parent=5 // pred_region
        %s991 = ssub.s32 %s101, 1
        // Predicated region
        $region13: #{iibmil_encoder_forward.3} parent=11 // pred_check
          %p992 = pneg %p174
        $region14: #{iibmil_encoder_forward.3} parent=11 // pred_check_branch
          %994 = sbr.rel (%p992) target = $region16
        $region15: #{iibmil_encoder_forward.3} parent=11 // pred_region
          %s996 = ssub.s32 128, 128
          %997 = vsyncadd [#allocation5], %s996
          %s998 = sshll.u32 [#allocation6], 4
          %s999 = int_to_ptr.vmem [resolvable:$true] %s998
          %1004 = dma.hbm_to_vmem [thread:$0]  %s5, 128, %s999, [#allocation5], 64, 64, 4
        $region16: #{iibmil_encoder_forward.3} parent=11 // pred_fallthru
          _
        // Predicated region
        $region17: #{iibmil_encoder_forward.3} parent=11 // pred_check
          %p1005 = pneg %p195
        $region18: #{iibmil_encoder_forward.3} parent=11 // pred_check_branch
          %1007 = sbr.rel (%p1005) target = $region20
        $region19: #{iibmil_encoder_forward.3} parent=11 // pred_region
          %s1009 = ssub.s32 16, 16
          %1010 = vsyncadd [#allocation8], %s1009
          %s1012 = sshll.u32 [#allocation7], 4
          %s1013 = int_to_ptr.vmem [resolvable:$true] %s1012
          %1015 = dma.hbm_to_vmem [thread:$0]  %s7, 16, %s1013, [#allocation8]
        $region20: #{iibmil_encoder_forward.3} parent=11 // pred_fallthru
          _
        // Predicated region
        $region21: #{iibmil_encoder_forward.3} parent=11 // pred_check
          %p1016 = pneg %p216
        $region22: #{iibmil_encoder_forward.3} parent=11 // pred_check_branch
          %1018 = sbr.rel (%p1016) target = $region24
        $region23: #{iibmil_encoder_forward.3} parent=11 // pred_region
          _
        $region24: #{iibmil_encoder_forward.3} parent=11 // pred_fallthru
          _
        // Predicated region
        $region25: #{iibmil_encoder_forward.3} parent=11 // pred_check
          %p1019 = pneg %p237
        $region26: #{iibmil_encoder_forward.3} parent=11 // pred_check_branch
          %1021 = sbr.rel (%p1019) target = $region28
        $region27: #{iibmil_encoder_forward.3} parent=11 // pred_region
          _
        $region28: #{iibmil_encoder_forward.3} parent=11 // pred_fallthru
          _
        // Predicated region
        $region29: #{iibmil_encoder_forward.3} parent=11 // pred_check
          %p1022 = pneg %p258
        $region30: #{iibmil_encoder_forward.3} parent=11 // pred_check_branch
          %1024 = sbr.rel (%p1022) target = $region32
        $region31: #{iibmil_encoder_forward.3} parent=11 // pred_region
          %s1026 = ssub.s32 512, 512
          %1027 = vsyncadd [#allocation8], %s1026
          %s1028 = sshll.u32 [#allocation9], 4
          %s1029 = int_to_ptr.vmem [resolvable:$true] %s1028
          %1034 = dma.hbm_to_vmem [thread:$0]  %s13, 512, %s1029, [#allocation8], 64, 64, 4
        $region32: #{iibmil_encoder_forward.3} parent=11 // pred_fallthru
          _
        // Predicated region
        $region33: #{iibmil_encoder_forward.3} parent=11 // pred_check
          %p1035 = pneg %p279
        $region34: #{iibmil_encoder_forward.3} parent=11 // pred_check_branch
          %1037 = sbr.rel (%p1035) target = $region36
        $region35: #{iibmil_encoder_forward.3} parent=11 // pred_region
          %s1039 = ssub.s32 16, 16
          %1040 = vsyncadd [#allocation11], %s1039
          %s1042 = sshll.u32 [#allocation10], 4
          %s1043 = int_to_ptr.vmem [resolvable:$true] %s1042
          %1045 = dma.hbm_to_vmem [thread:$0]  %s15, 16, %s1043, [#allocation11]
        $region36: #{iibmil_encoder_forward.3} parent=11 // pred_fallthru
          _
        // Predicated region
        $region37: #{iibmil_encoder_forward.3} parent=11 // pred_check
          %p1046 = pneg %p300
        $region38: #{iibmil_encoder_forward.3} parent=11 // pred_check_branch
          %1048 = sbr.rel (%p1046) target = $region40
        $region39: #{iibmil_encoder_forward.3} parent=11 // pred_region
          _
        $region40: #{iibmil_encoder_forward.3} parent=11 // pred_fallthru
          _
        // Predicated region
        $region41: #{iibmil_encoder_forward.3} parent=11 // pred_check
          %p1049 = pneg %p321
        $region42: #{iibmil_encoder_forward.3} parent=11 // pred_check_branch
          %1051 = sbr.rel (%p1049) target = $region44
        $region43: #{iibmil_encoder_forward.3} parent=11 // pred_region
          _
        $region44: #{iibmil_encoder_forward.3} parent=11 // pred_fallthru
          _
        // Predicated region
        $region45: #{iibmil_encoder_forward.3} parent=11 // pred_check
          %p1052 = pneg %p342
        $region46: #{iibmil_encoder_forward.3} parent=11 // pred_check_branch
          %1054 = sbr.rel (%p1052) target = $region48
        $region47: #{iibmil_encoder_forward.3} parent=11 // pred_region
          _
        $region48: #{iibmil_encoder_forward.3} parent=11 // pred_fallthru
          _
        // Predicated region
        $region49: #{iibmil_encoder_forward.3} parent=11 // pred_check
          %p1055 = pneg %p363
        $region50: #{iibmil_encoder_forward.3} parent=11 // pred_check_branch
          %1057 = sbr.rel (%p1055) target = $region52
        $region51: #{iibmil_encoder_forward.3} parent=11 // pred_region
          %s1059 = ssub.s32 16, 16
          %1060 = vsyncadd [#allocation11], %s1059
          %s1062 = sshll.u32 [#allocation12], 4
          %s1063 = int_to_ptr.vmem [resolvable:$true] %s1062
          %1065 = dma.hbm_to_vmem [thread:$0]  %s23, 16, %s1063, [#allocation11]
        $region52: #{iibmil_encoder_forward.3} parent=11 // pred_fallthru
          _
        // Predicated region
        $region53: #{iibmil_encoder_forward.3} parent=11 // pred_check
          %p1066 = pneg %p384
        $region54: #{iibmil_encoder_forward.3} parent=11 // pred_check_branch
          %1068 = sbr.rel (%p1066) target = $region56
        $region55: #{iibmil_encoder_forward.3} parent=11 // pred_region
          _
        $region56: #{iibmil_encoder_forward.3} parent=11 // pred_fallthru
          _
        // Predicated region
        $region57: #{iibmil_encoder_forward.3} parent=11 // pred_check
          %p1069 = pneg %p405
        $region58: #{iibmil_encoder_forward.3} parent=11 // pred_check_branch
          %1071 = sbr.rel (%p1069) target = $region60
        $region59: #{iibmil_encoder_forward.3} parent=11 // pred_region
          _
        $region60: #{iibmil_encoder_forward.3} parent=11 // pred_fallthru
          _
        // Predicated region
        $region61: #{iibmil_encoder_forward.3} parent=11 // pred_check
          %p1072 = pneg %p426
        $region62: #{iibmil_encoder_forward.3} parent=11 // pred_check_branch
          %1074 = sbr.rel (%p1072) target = $region64
        $region63: #{iibmil_encoder_forward.3} parent=11 // pred_region
          %s1076 = ssub.s32 512, 512
          %1077 = vsyncadd [#allocation14], %s1076
          %s1078 = sshll.u32 [#allocation13], 4
          %s1079 = int_to_ptr.vmem [resolvable:$true] %s1078
          %1084 = dma.hbm_to_vmem [thread:$0]  %s29, 512, %s1079, [#allocation14], 64, 64, 4
        $region64: #{iibmil_encoder_forward.3} parent=11 // pred_fallthru
          _
        // Predicated region
        $region65: #{iibmil_encoder_forward.3} parent=11 // pred_check
          %p1085 = pneg %p447
        $region66: #{iibmil_encoder_forward.3} parent=11 // pred_check_branch
          %1087 = sbr.rel (%p1085) target = $region68
        $region67: #{iibmil_encoder_forward.3} parent=11 // pred_region
          %s1089 = ssub.s32 16, 16
          %1090 = vsyncadd [#allocation14], %s1089
          %s1092 = sshll.u32 [#allocation15], 4
          %s1093 = int_to_ptr.vmem [resolvable:$true] %s1092
          %1095 = dma.hbm_to_vmem [thread:$0]  %s31, 16, %s1093, [#allocation14]
        $region68: #{iibmil_encoder_forward.3} parent=11 // pred_fallthru
          _
        // Predicated region
        $region69: #{iibmil_encoder_forward.3} parent=11 // pred_check
          %p1096 = pneg %p468
        $region70: #{iibmil_encoder_forward.3} parent=11 // pred_check_branch
          %1098 = sbr.rel (%p1096) target = $region72
        $region71: #{iibmil_encoder_forward.3} parent=11 // pred_region
          _
        $region72: #{iibmil_encoder_forward.3} parent=11 // pred_fallthru
          _
        // Predicated region
        $region73: #{iibmil_encoder_forward.3} parent=11 // pred_check
          %p1099 = pneg %p489
        $region74: #{iibmil_encoder_forward.3} parent=11 // pred_check_branch
          %1101 = sbr.rel (%p1099) target = $region76
        $region75: #{iibmil_encoder_forward.3} parent=11 // pred_region
          _
        $region76: #{iibmil_encoder_forward.3} parent=11 // pred_fallthru
          _
        // Predicated region
        $region77: #{iibmil_encoder_forward.3} parent=11 // pred_check
          %p1102 = pneg %p510
        $region78: #{iibmil_encoder_forward.3} parent=11 // pred_check_branch
          %1104 = sbr.rel (%p1102) target = $region80
        $region79: #{iibmil_encoder_forward.3} parent=11 // pred_region
          %s1106 = ssub.s32 512, 512
          %1107 = vsyncadd [#allocation17], %s1106
          %s1108 = sshll.u32 [#allocation16], 4
          %s1109 = int_to_ptr.vmem [resolvable:$true] %s1108
          %1114 = dma.hbm_to_vmem [thread:$0]  %s37, 512, %s1109, [#allocation17], 64, 64, 4
        $region80: #{iibmil_encoder_forward.3} parent=11 // pred_fallthru
          _
        // Predicated region
        $region81: #{iibmil_encoder_forward.3} parent=11 // pred_check
          %p1115 = pneg %p531
        $region82: #{iibmil_encoder_forward.3} parent=11 // pred_check_branch
          %1117 = sbr.rel (%p1115) target = $region84
        $region83: #{iibmil_encoder_forward.3} parent=11 // pred_region
          %s1119 = ssub.s32 16, 16
          %1120 = vsyncadd [#allocation17], %s1119
          %s1122 = sshll.u32 [#allocation18], 4
          %s1123 = int_to_ptr.vmem [resolvable:$true] %s1122
          %1125 = dma.hbm_to_vmem [thread:$0]  %s39, 16, %s1123, [#allocation17]
        $region84: #{iibmil_encoder_forward.3} parent=11 // pred_fallthru
          _
        // Predicated region
        $region85: #{iibmil_encoder_forward.3} parent=11 // pred_check
          %p1126 = pneg %p552
        $region86: #{iibmil_encoder_forward.3} parent=11 // pred_check_branch
          %1128 = sbr.rel (%p1126) target = $region88
        $region87: #{iibmil_encoder_forward.3} parent=11 // pred_region
          _
        $region88: #{iibmil_encoder_forward.3} parent=11 // pred_fallthru
          _
        // Predicated region
        $region89: #{iibmil_encoder_forward.3} parent=11 // pred_check
          %p1129 = pneg %p573
        $region90: #{iibmil_encoder_forward.3} parent=11 // pred_check_branch
          %1131 = sbr.rel (%p1129) target = $region92
        $region91: #{iibmil_encoder_forward.3} parent=11 // pred_region
          _
        $region92: #{iibmil_encoder_forward.3} parent=11 // pred_fallthru
          _
        // Predicated region
        $region93: #{iibmil_encoder_forward.3} parent=11 // pred_check
          %p1132 = pneg %p594
        $region94: #{iibmil_encoder_forward.3} parent=11 // pred_check_branch
          %1134 = sbr.rel (%p1132) target = $region96
        $region95: #{iibmil_encoder_forward.3} parent=11 // pred_region
          %s1136 = ssub.s32 256, 256
          %1137 = vsyncadd [#allocation20], %s1136
          %s1138 = sshll.u32 [#allocation19], 4
          %s1139 = int_to_ptr.vmem [resolvable:$true] %s1138
          %1144 = dma.hbm_to_vmem [thread:$0]  %s45, 256, %s1139, [#allocation20], 64, 64, 4
        $region96: #{iibmil_encoder_forward.3} parent=11 // pred_fallthru
          _
        // Predicated region
        $region97: #{iibmil_encoder_forward.3} parent=11 // pred_check
          %p1145 = pneg %p615
        $region98: #{iibmil_encoder_forward.3} parent=11 // pred_check_branch
          %1147 = sbr.rel (%p1145) target = $region100
        $region99: #{iibmil_encoder_forward.3} parent=11 // pred_region
          %s1149 = ssub.s32 16, 16
          %1150 = vsyncadd [#allocation20], %s1149
          %s1152 = sshll.u32 [#allocation21], 4
          %s1153 = int_to_ptr.vmem [resolvable:$true] %s1152
          %1155 = dma.hbm_to_vmem [thread:$0]  %s47, 16, %s1153, [#allocation20]
        $region100: #{iibmil_encoder_forward.3} parent=11 // pred_fallthru
          _
        // Predicated region
        $region101: #{iibmil_encoder_forward.3} parent=11 // pred_check
          %p1156 = pneg %p636
        $region102: #{iibmil_encoder_forward.3} parent=11 // pred_check_branch
          %1158 = sbr.rel (%p1156) target = $region104
        $region103: #{iibmil_encoder_forward.3} parent=11 // pred_region
          %s1160 = ssub.s32 256, 256
          %1161 = vsyncadd [#allocation23], %s1160
          %s1162 = sshll.u32 [#allocation22], 4
          %s1163 = int_to_ptr.vmem [resolvable:$true] %s1162
          %1168 = dma.hbm_to_vmem [thread:$0]  %s49, 256, %s1163, [#allocation23], 64, 64, 4
        $region104: #{iibmil_encoder_forward.3} parent=11 // pred_fallthru
          _
        // Predicated region
        $region105: #{iibmil_encoder_forward.3} parent=11 // pred_check
          %p1169 = pneg %p657
        $region106: #{iibmil_encoder_forward.3} parent=11 // pred_check_branch
          %1171 = sbr.rel (%p1169) target = $region108
        $region107: #{iibmil_encoder_forward.3} parent=11 // pred_region
          %s1173 = ssub.s32 16, 16
          %1174 = vsyncadd [#allocation23], %s1173
          %s1176 = sshll.u32 [#allocation24], 4
          %s1177 = int_to_ptr.vmem [resolvable:$true] %s1176
          %1179 = dma.hbm_to_vmem [thread:$0]  %s51, 16, %s1177, [#allocation23]
        $region108: #{iibmil_encoder_forward.3} parent=11 // pred_fallthru
          _
        // Predicated region
        $region109: #{iibmil_encoder_forward.3} parent=11 // pred_check
          %p1180 = pneg %p678
        $region110: #{iibmil_encoder_forward.3} parent=11 // pred_check_branch
          %1182 = sbr.rel (%p1180) target = $region112
        $region111: #{iibmil_encoder_forward.3} parent=11 // pred_region
          %s1184 = ssub.s32 256, 256
          %1185 = vsyncadd [#allocation26], %s1184
          %s1186 = sshll.u32 [#allocation25], 4
          %s1187 = int_to_ptr.vmem [resolvable:$true] %s1186
          %1192 = dma.hbm_to_vmem [thread:$0]  %s53, 256, %s1187, [#allocation26], 64, 64, 4
        $region112: #{iibmil_encoder_forward.3} parent=11 // pred_fallthru
          _
        // Predicated region
        $region113: #{iibmil_encoder_forward.3} parent=11 // pred_check
          %p1193 = pneg %p699
        $region114: #{iibmil_encoder_forward.3} parent=11 // pred_check_branch
          %1195 = sbr.rel (%p1193) target = $region116
        $region115: #{iibmil_encoder_forward.3} parent=11 // pred_region
          _
        $region116: #{iibmil_encoder_forward.3} parent=11 // pred_fallthru
          _
        // Predicated region
        $region117: #{iibmil_encoder_forward.3} parent=11 // pred_check
          %p1196 = pneg %p720
        $region118: #{iibmil_encoder_forward.3} parent=11 // pred_check_branch
          %1198 = sbr.rel (%p1196) target = $region120
        $region119: #{iibmil_encoder_forward.3} parent=11 // pred_region
          %s1200 = ssub.s32 256, 256
          %1201 = vsyncadd [#allocation26], %s1200
          %s1202 = sshll.u32 [#allocation27], 4
          %s1203 = int_to_ptr.vmem [resolvable:$true] %s1202
          %1208 = dma.hbm_to_vmem [thread:$0]  %s57, 256, %s1203, [#allocation26], 64, 64, 4
        $region120: #{iibmil_encoder_forward.3} parent=11 // pred_fallthru
          _
        // Predicated region
        $region121: #{iibmil_encoder_forward.3} parent=11 // pred_check
          %p1209 = pneg %p741
        $region122: #{iibmil_encoder_forward.3} parent=11 // pred_check_branch
          %1211 = sbr.rel (%p1209) target = $region124
        $region123: #{iibmil_encoder_forward.3} parent=11 // pred_region
          _
        $region124: #{iibmil_encoder_forward.3} parent=11 // pred_fallthru
          _
        // Predicated region
        $region125: #{iibmil_encoder_forward.3} parent=11 // pred_check
          %p1212 = pneg %p762
        $region126: #{iibmil_encoder_forward.3} parent=11 // pred_check_branch
          %1214 = sbr.rel (%p1212) target = $region128
        $region127: #{iibmil_encoder_forward.3} parent=11 // pred_region
          _
        $region128: #{iibmil_encoder_forward.3} parent=11 // pred_fallthru
          _
        // Predicated region
        $region129: #{iibmil_encoder_forward.3} parent=11 // pred_check
          %p1215 = pneg %p783
        $region130: #{iibmil_encoder_forward.3} parent=11 // pred_check_branch
          %1217 = sbr.rel (%p1215) target = $region132
        $region131: #{iibmil_encoder_forward.3} parent=11 // pred_region
          _
        $region132: #{iibmil_encoder_forward.3} parent=11 // pred_fallthru
          _
        // Predicated region
        $region133: #{iibmil_encoder_forward.3} parent=11 // pred_check
          %p1218 = pneg %p804
        $region134: #{iibmil_encoder_forward.3} parent=11 // pred_check_branch
          %1220 = sbr.rel (%p1218) target = $region136
        $region135: #{iibmil_encoder_forward.3} parent=11 // pred_region
          %s1222 = ssub.s32 4096, 4096
          %1223 = vsyncadd [#allocation29], %s1222
          %s1224 = sshll.u32 [#allocation28], 4
          %s1225 = int_to_ptr.vmem [resolvable:$true] %s1224
          %1230 = dma.hbm_to_vmem [thread:$0]  %s65, 4096, %s1225, [#allocation29], 1024, 1024, 64
        $region136: #{iibmil_encoder_forward.3} parent=11 // pred_fallthru
          _
        // Predicated region
        $region137: #{iibmil_encoder_forward.3} parent=11 // pred_check
          %p1231 = pneg %p825
        $region138: #{iibmil_encoder_forward.3} parent=11 // pred_check_branch
          %1233 = sbr.rel (%p1231) target = $region140
        $region139: #{iibmil_encoder_forward.3} parent=11 // pred_region
          _
        $region140: #{iibmil_encoder_forward.3} parent=11 // pred_fallthru
          _
        // Predicated region
        $region141: #{iibmil_encoder_forward.3} parent=11 // pred_check
          %p1234 = pneg %p846
        $region142: #{iibmil_encoder_forward.3} parent=11 // pred_check_branch
          %1236 = sbr.rel (%p1234) target = $region144
        $region143: #{iibmil_encoder_forward.3} parent=11 // pred_region
          %s1238 = ssub.s32 16384, 16384
          %1239 = vsyncadd [#allocation29], %s1238
          %s1240 = sshll.u32 [#allocation30], 4
          %s1241 = int_to_ptr.vmem [resolvable:$true] %s1240
          %1246 = dma.hbm_to_vmem [thread:$0]  %s69, 16384, %s1241, [#allocation29], 64, 64, 4
        $region144: #{iibmil_encoder_forward.3} parent=11 // pred_fallthru
          _
        // Predicated region
        $region145: #{iibmil_encoder_forward.3} parent=11 // pred_check
          %p1247 = pneg %p867
        $region146: #{iibmil_encoder_forward.3} parent=11 // pred_check_branch
          %1249 = sbr.rel (%p1247) target = $region148
        $region147: #{iibmil_encoder_forward.3} parent=11 // pred_region
          _
        $region148: #{iibmil_encoder_forward.3} parent=11 // pred_fallthru
          _
        // Predicated region
        $region149: #{iibmil_encoder_forward.3} parent=11 // pred_check
          %p1250 = pneg %p888
        $region150: #{iibmil_encoder_forward.3} parent=11 // pred_check_branch
          %1252 = sbr.rel (%p1250) target = $region152
        $region151: #{iibmil_encoder_forward.3} parent=11 // pred_region
          _
        $region152: #{iibmil_encoder_forward.3} parent=11 // pred_fallthru
          _
        // Predicated region
        $region153: #{iibmil_encoder_forward.3} parent=11 // pred_check
          %p1253 = pneg %p909
        $region154: #{iibmil_encoder_forward.3} parent=11 // pred_check_branch
          %1255 = sbr.rel (%p1253) target = $region156
        $region155: #{iibmil_encoder_forward.3} parent=11 // pred_region
          _
        $region156: #{iibmil_encoder_forward.3} parent=11 // pred_fallthru
          _
        // Predicated region
        $region157: #{iibmil_encoder_forward.3} parent=11 // pred_check
          %p1256 = pneg %p930
        $region158: #{iibmil_encoder_forward.3} parent=11 // pred_check_branch
          %1258 = sbr.rel (%p1256) target = $region160
        $region159: #{iibmil_encoder_forward.3} parent=11 // pred_region
          _
        $region160: #{iibmil_encoder_forward.3} parent=11 // pred_fallthru
          _
        // Predicated region
        $region161: #{iibmil_encoder_forward.3} parent=11 // pred_check
          %p1259 = pneg %p951
        $region162: #{iibmil_encoder_forward.3} parent=11 // pred_check_branch
          %1261 = sbr.rel (%p1259) target = $region164
        $region163: #{iibmil_encoder_forward.3} parent=11 // pred_region
          _
        $region164: #{iibmil_encoder_forward.3} parent=11 // pred_fallthru
          _
      $region12: #{iibmil_encoder_forward.3} parent=5 // pred_fallthru
        _
      %p1262 = scmp.lt.s32.totalorder %s101, 2
      // Predicated region
      $region165: #{iibmil_encoder_forward.3} parent=5 // pred_check
        %p1263 = pneg %p1262
      $region166: #{iibmil_encoder_forward.3} parent=5 // pred_check_branch
        %1265 = sbr.rel (%p1263) target = $region168
      $region167: #{iibmil_encoder_forward.3} parent=5 // pred_region
        // Predicated region
        $region169: #{iibmil_encoder_forward.3} parent=167 // pred_check
          %p1266 = pneg %p121
        $region170: #{iibmil_encoder_forward.3} parent=167 // pred_check_branch
          %1268 = sbr.rel (%p1266) target = $region172
        $region171: #{iibmil_encoder_forward.3} parent=167 // pred_region
          %s1269 = sand.u32 %s111, 1
          %s1270 = scalar_lea.sflag [#allocation3], %s1269
          %s1271 = sand.u32 %s111, 1
          %s1272 = smul.addr %s1271, 8
          %s1273 = scalar_lea.vmem [#allocation2], %s1272
          %s1275 = ssub.s32 128, 128
          %1276 = vsyncadd %s1270, %s1275
          %s1277 = smul.addr %s101, 128
          %s1278 = scalar_lea.hbm %s1, %s1277
          %s1280 = sshll.u32 %s1273, 4
          %s1281 = int_to_ptr.vmem [resolvable:$true] %s1280
          %1283 = dma.hbm_to_vmem [thread:$0]  %s1278, 128, %s1281, %s1270
        $region172: #{iibmil_encoder_forward.3} parent=167 // pred_fallthru
          _
        // Predicated region
        $region173: #{iibmil_encoder_forward.3} parent=167 // pred_check
          %p1284 = pneg %p147
        $region174: #{iibmil_encoder_forward.3} parent=167 // pred_check_branch
          %1286 = sbr.rel (%p1284) target = $region176
        $region175: #{iibmil_encoder_forward.3} parent=167 // pred_region
          %s1287 = sand.u32 %s101, 1
          %s1288 = scalar_lea.sflag [#allocation5], %s1287
          %s1289 = sand.u32 %s137, 1
          %s1290 = smul.addr %s1289, 8
          %s1291 = scalar_lea.vmem [#allocation4], %s1290
          %s1293 = ssub.s32 128, 128
          %1294 = vsyncadd %s1288, %s1293
          %s1295 = smul.addr %s101, 128
          %s1296 = scalar_lea.hbm %s3, %s1295
          %s1298 = sshll.u32 %s1291, 4
          %s1299 = int_to_ptr.vmem [resolvable:$true] %s1298
          %1301 = dma.hbm_to_vmem [thread:$0]  %s1296, 128, %s1299, %s1288
        $region176: #{iibmil_encoder_forward.3} parent=167 // pred_fallthru
          _
      $region168: #{iibmil_encoder_forward.3} parent=5 // pred_fallthru
        _
      %p1302 = scmp.le.s32.totalorder 1, %s101
      %p1303 = scmp.lt.s32.totalorder %s101, 3
      %p1304 = pnand %p1302, %p1303
      %p1305 = pneg %p1304
      // Predicated region
      $region177: #{iibmil_encoder_forward.3} parent=5 // pred_check
        _
      $region178: #{iibmil_encoder_forward.3} parent=5 // pred_check_branch
        %1307 = sbr.rel (%p1304) target = $region180
      $region179: #{iibmil_encoder_forward.3} parent=5 // pred_region
        %s1308 = ssub.s32 %s101, 1
        %s1309 = sand.u32 %s114, 1
        %s1310 = scalar_lea.sflag [#allocation3], %s1309
        %s1311 = sand.u32 %s114, 1
        %s1312 = smul.addr %s1311, 8
        %s1313 = scalar_lea.vmem [#allocation2], %s1312
        // Predicated region
        $region181: #{iibmil_encoder_forward.3} parent=179 // pred_check
          %p1314 = pneg %p127
        $region182: #{iibmil_encoder_forward.3} parent=179 // pred_check_branch
          %1316 = sbr.rel (%p1314) target = $region184
        $region183: #{iibmil_encoder_forward.3} parent=179 // pred_region
          %1317 = dma.done %s1310, 128
        $region184: #{iibmil_encoder_forward.3} parent=179 // pred_fallthru
          _
        %s1318 = sand.u32 %s106, 1
        %s1319 = scalar_lea.sflag [#allocation5], %s1318
        %s1320 = sand.u32 %s140, 1
        %s1321 = smul.addr %s1320, 8
        %s1322 = scalar_lea.vmem [#allocation4], %s1321
        // Predicated region
        $region185: #{iibmil_encoder_forward.3} parent=179 // pred_check
          %p1323 = pneg %p153
        $region186: #{iibmil_encoder_forward.3} parent=179 // pred_check_branch
          %1325 = sbr.rel (%p1323) target = $region188
        $region187: #{iibmil_encoder_forward.3} parent=179 // pred_region
          %1326 = dma.done %s1319, 128
        $region188: #{iibmil_encoder_forward.3} parent=179 // pred_fallthru
          _
        // Predicated region
        $region189: #{iibmil_encoder_forward.3} parent=179 // pred_check
          %p1327 = pneg %p174
        $region190: #{iibmil_encoder_forward.3} parent=179 // pred_check_branch
          %1329 = sbr.rel (%p1327) target = $region192
        $region191: #{iibmil_encoder_forward.3} parent=179 // pred_region
          %1330 = dma.done [#allocation5], 128
        $region192: #{iibmil_encoder_forward.3} parent=179 // pred_fallthru
          _
        // Predicated region
        $region193: #{iibmil_encoder_forward.3} parent=179 // pred_check
          %p1331 = pneg %p195
        $region194: #{iibmil_encoder_forward.3} parent=179 // pred_check_branch
          %1333 = sbr.rel (%p1331) target = $region196
        $region195: #{iibmil_encoder_forward.3} parent=179 // pred_region
          %1334 = dma.done [#allocation8], 16
        $region196: #{iibmil_encoder_forward.3} parent=179 // pred_fallthru
          _
        // Predicated region
        $region197: #{iibmil_encoder_forward.3} parent=179 // pred_check
          %p1335 = pneg %p258
        $region198: #{iibmil_encoder_forward.3} parent=179 // pred_check_branch
          %1337 = sbr.rel (%p1335) target = $region200
        $region199: #{iibmil_encoder_forward.3} parent=179 // pred_region
          %1338 = dma.done [#allocation8], 512
        $region200: #{iibmil_encoder_forward.3} parent=179 // pred_fallthru
          _
        // Predicated region
        $region201: #{iibmil_encoder_forward.3} parent=179 // pred_check
          %p1339 = pneg %p279
        $region202: #{iibmil_encoder_forward.3} parent=179 // pred_check_branch
          %1341 = sbr.rel (%p1339) target = $region204
        $region203: #{iibmil_encoder_forward.3} parent=179 // pred_region
          %1342 = dma.done [#allocation11], 16
        $region204: #{iibmil_encoder_forward.3} parent=179 // pred_fallthru
          _
        // Predicated region
        $region205: #{iibmil_encoder_forward.3} parent=179 // pred_check
          %p1343 = pneg %p363
        $region206: #{iibmil_encoder_forward.3} parent=179 // pred_check_branch
          %1345 = sbr.rel (%p1343) target = $region208
        $region207: #{iibmil_encoder_forward.3} parent=179 // pred_region
          %1346 = dma.done [#allocation11], 16
        $region208: #{iibmil_encoder_forward.3} parent=179 // pred_fallthru
          _
        // Predicated region
        $region209: #{iibmil_encoder_forward.3} parent=179 // pred_check
          %p1347 = pneg %p426
        $region210: #{iibmil_encoder_forward.3} parent=179 // pred_check_branch
          %1349 = sbr.rel (%p1347) target = $region212
        $region211: #{iibmil_encoder_forward.3} parent=179 // pred_region
          %1350 = dma.done [#allocation14], 512
        $region212: #{iibmil_encoder_forward.3} parent=179 // pred_fallthru
          _
        // Predicated region
        $region213: #{iibmil_encoder_forward.3} parent=179 // pred_check
          %p1351 = pneg %p447
        $region214: #{iibmil_encoder_forward.3} parent=179 // pred_check_branch
          %1353 = sbr.rel (%p1351) target = $region216
        $region215: #{iibmil_encoder_forward.3} parent=179 // pred_region
          %1354 = dma.done [#allocation14], 16
        $region216: #{iibmil_encoder_forward.3} parent=179 // pred_fallthru
          _
        // Predicated region
        $region217: #{iibmil_encoder_forward.3} parent=179 // pred_check
          %p1355 = pneg %p510
        $region218: #{iibmil_encoder_forward.3} parent=179 // pred_check_branch
          %1357 = sbr.rel (%p1355) target = $region220
        $region219: #{iibmil_encoder_forward.3} parent=179 // pred_region
          %1358 = dma.done [#allocation17], 512
        $region220: #{iibmil_encoder_forward.3} parent=179 // pred_fallthru
          _
        // Predicated region
        $region221: #{iibmil_encoder_forward.3} parent=179 // pred_check
          %p1359 = pneg %p531
        $region222: #{iibmil_encoder_forward.3} parent=179 // pred_check_branch
          %1361 = sbr.rel (%p1359) target = $region224
        $region223: #{iibmil_encoder_forward.3} parent=179 // pred_region
          %1362 = dma.done [#allocation17], 16
        $region224: #{iibmil_encoder_forward.3} parent=179 // pred_fallthru
          _
        // Predicated region
        $region225: #{iibmil_encoder_forward.3} parent=179 // pred_check
          %p1363 = pneg %p594
        $region226: #{iibmil_encoder_forward.3} parent=179 // pred_check_branch
          %1365 = sbr.rel (%p1363) target = $region228
        $region227: #{iibmil_encoder_forward.3} parent=179 // pred_region
          %1366 = dma.done [#allocation20], 256
        $region228: #{iibmil_encoder_forward.3} parent=179 // pred_fallthru
          _
        // Predicated region
        $region229: #{iibmil_encoder_forward.3} parent=179 // pred_check
          %p1367 = pneg %p615
        $region230: #{iibmil_encoder_forward.3} parent=179 // pred_check_branch
          %1369 = sbr.rel (%p1367) target = $region232
        $region231: #{iibmil_encoder_forward.3} parent=179 // pred_region
          %1370 = dma.done [#allocation20], 16
        $region232: #{iibmil_encoder_forward.3} parent=179 // pred_fallthru
          _
        // Predicated region
        $region233: #{iibmil_encoder_forward.3} parent=179 // pred_check
          %p1371 = pneg %p636
        $region234: #{iibmil_encoder_forward.3} parent=179 // pred_check_branch
          %1373 = sbr.rel (%p1371) target = $region236
        $region235: #{iibmil_encoder_forward.3} parent=179 // pred_region
          %1374 = dma.done [#allocation23], 256
        $region236: #{iibmil_encoder_forward.3} parent=179 // pred_fallthru
          _
        // Predicated region
        $region237: #{iibmil_encoder_forward.3} parent=179 // pred_check
          %p1375 = pneg %p657
        $region238: #{iibmil_encoder_forward.3} parent=179 // pred_check_branch
          %1377 = sbr.rel (%p1375) target = $region240
        $region239: #{iibmil_encoder_forward.3} parent=179 // pred_region
          %1378 = dma.done [#allocation23], 16
        $region240: #{iibmil_encoder_forward.3} parent=179 // pred_fallthru
          _
        // Predicated region
        $region241: #{iibmil_encoder_forward.3} parent=179 // pred_check
          %p1379 = pneg %p678
        $region242: #{iibmil_encoder_forward.3} parent=179 // pred_check_branch
          %1381 = sbr.rel (%p1379) target = $region244
        $region243: #{iibmil_encoder_forward.3} parent=179 // pred_region
          %1382 = dma.done [#allocation26], 256
        $region244: #{iibmil_encoder_forward.3} parent=179 // pred_fallthru
          _
        // Predicated region
        $region245: #{iibmil_encoder_forward.3} parent=179 // pred_check
          %p1383 = pneg %p720
        $region246: #{iibmil_encoder_forward.3} parent=179 // pred_check_branch
          %1385 = sbr.rel (%p1383) target = $region248
        $region247: #{iibmil_encoder_forward.3} parent=179 // pred_region
          %1386 = dma.done [#allocation26], 256
        $region248: #{iibmil_encoder_forward.3} parent=179 // pred_fallthru
          _
        // Predicated region
        $region249: #{iibmil_encoder_forward.3} parent=179 // pred_check
          %p1387 = pneg %p804
        $region250: #{iibmil_encoder_forward.3} parent=179 // pred_check_branch
          %1389 = sbr.rel (%p1387) target = $region252
        $region251: #{iibmil_encoder_forward.3} parent=179 // pred_region
          %1390 = dma.done [#allocation29], 4096
        $region252: #{iibmil_encoder_forward.3} parent=179 // pred_fallthru
          _
        // Predicated region
        $region253: #{iibmil_encoder_forward.3} parent=179 // pred_check
          %p1391 = pneg %p846
        $region254: #{iibmil_encoder_forward.3} parent=179 // pred_check_branch
          %1393 = sbr.rel (%p1391) target = $region256
        $region255: #{iibmil_encoder_forward.3} parent=179 // pred_region
          %1394 = dma.done [#allocation29], 16384
        $region256: #{iibmil_encoder_forward.3} parent=179 // pred_fallthru
          _
        %s1395 = sand.u32 %s114, 1
        %s1396 = scalar_lea.sflag [#allocation3], %s1395
        %s1397 = sand.u32 %s114, 1
        %s1398 = smul.addr %s1397, 8
        %s1399 = scalar_lea.vmem [#allocation2], %s1398
        %p1400 = pneg %p127
        %p1401 = pneg %p124
        %s1402 = sand.u32 %s106, 1
        %s1403 = scalar_lea.sflag [#allocation5], %s1402
        %s1404 = sand.u32 %s140, 1
        %s1405 = smul.addr %s1404, 8
        %s1406 = scalar_lea.vmem [#allocation4], %s1405
        %p1407 = pneg %p153
        %p1408 = pneg %p150
        %p1409 = pneg %p174
        %p1410 = pneg %p171
        %p1411 = pneg %p195
        %p1412 = pneg %p192
        %p1413 = pneg %p216
        %p1414 = pneg %p213
        %p1415 = pneg %p237
        %p1416 = pneg %p234
        %p1417 = pneg %p258
        %p1418 = pneg %p255
        %p1419 = pneg %p279
        %p1420 = pneg %p276
        %p1421 = pneg %p300
        %p1422 = pneg %p297
        %p1423 = pneg %p321
        %p1424 = pneg %p318
        %p1425 = pneg %p342
        %p1426 = pneg %p339
        %p1427 = pneg %p363
        %p1428 = pneg %p360
        %p1429 = pneg %p384
        %p1430 = pneg %p381
        %p1431 = pneg %p405
        %p1432 = pneg %p402
        %p1433 = pneg %p426
        %p1434 = pneg %p423
        %p1435 = pneg %p447
        %p1436 = pneg %p444
        %p1437 = pneg %p468
        %p1438 = pneg %p465
        %p1439 = pneg %p489
        %p1440 = pneg %p486
        %p1441 = pneg %p510
        %p1442 = pneg %p507
        %p1443 = pneg %p531
        %p1444 = pneg %p528
        %p1445 = pneg %p552
        %p1446 = pneg %p549
        %p1447 = pneg %p573
        %p1448 = pneg %p570
        %p1449 = pneg %p594
        %p1450 = pneg %p591
        %p1451 = pneg %p615
        %p1452 = pneg %p612
        %p1453 = pneg %p636
        %p1454 = pneg %p633
        %p1455 = pneg %p657
        %p1456 = pneg %p654
        %p1457 = pneg %p678
        %p1458 = pneg %p675
        %p1459 = pneg %p699
        %p1460 = pneg %p696
        %p1461 = pneg %p720
        %p1462 = pneg %p717
        %p1463 = pneg %p741
        %p1464 = pneg %p738
        %p1465 = pneg %p762
        %p1466 = pneg %p759
        %p1467 = pneg %p783
        %p1468 = pneg %p780
        %p1469 = pneg %p804
        %p1470 = pneg %p801
        %p1471 = pneg %p825
        %p1472 = pneg %p822
        %p1473 = pneg %p846
        %p1474 = pneg %p843
        %p1475 = pneg %p867
        %p1476 = pneg %p864
        %p1477 = pneg %p888
        %p1478 = pneg %p885
        %p1479 = pneg %p909
        %p1480 = pneg %p906
        %p1481 = pneg %p930
        %p1482 = pneg %p927
        %p1483 = pneg %p951
        %p1484 = pneg %p948
        %p1485 = pneg %p977
        %p1486 = pneg %p974
        %p1487 = scmp.lt.s32.totalorder %s106, 1
        %s1488 = scalar_select %p1487, %s106, 1
        %s1489 = smul.addr %s1488, 8
        %s1490 = scalar_lea.vmem %s81, %s1489
        %p1491 = scmp.lt.s32.totalorder %s106, 1
        %s1492 = scalar_select %p1491, %s106, 1
        %s1493 = smul.addr %s1492, 8
        %s1494 = scalar_lea.vmem %s81, %s1493
        %v1496 = vld [vmem:[%s1313] sm:$0xff]
        %v1497 = vld [vmem:[#allocation6] sm:$0xf]
        %v1498 = vld [vmem:[#allocation6 + $0x4] sm:$0xf]
        %v1499 = vpack.c.bf16 %v1496, %v1496
        %v1500 = vld [vmem:[#allocation7] sm:$0x1]
        %v1502 = vlaneseq
        %v1503 = vshrl.u32 %v1502, 7
        %v1504 = vsub.s32 0, %v1503
        %v1505 = vrot.slane %v1500, %v1504
        %v1509 = vunpack.c.l.b16 %v1497
        %v1510 = vunpack.c.l.b16 %v1498
        %v1511 = vpack.c.b16 %v1510, %v1509
        %vm1513 = vcmask 130048
        %v1515 = vsel %vm1513, %v1499, 0
        %1517 = vmatprep.subr.bf16.mxu0 0
        %1518 = vmatpush1.bf16.msra.mxu0 0
        %1519 = vmatprep.subr.bf16.mxu0 0
        %1520 = vmatpush1.bf16.msra.mxu0 0
        %1521 = vmatprep.subr.bf16.mxu0 0
        %1522 = vmatpush1.bf16.msra.mxu0 0
        %1523 = vmatprep.subr.bf16.mxu0 0
        %1524 = vmatpush1.bf16.msra.mxu0 0
        %1525 = vmatprep.subr.bf16.mxu0 0
        %1526 = vmatpush1.bf16.msra.mxu0 0
        %1527 = vmatprep.subr.bf16.mxu0 0
        %1528 = vmatpush1.bf16.msra.mxu0 0
        %1529 = vmatprep.subr.bf16.mxu0 0
        %1530 = vmatpush1.bf16.msra.mxu0 0
        %1531 = vmatprep.subr.bf16.mxu0 0
        %1532 = vmatpush1.bf16.msra.mxu0 %v1511
        %1533 = vmatprep.subr.bf16.mxu0 0
        %1534 = vmatpush2.bf16.msra.mxu0 0
        %1535 = vmatprep.subr.bf16.mxu0 0
        %1536 = vmatpush2.bf16.msra.mxu0 0
        %1537 = vmatprep.subr.bf16.mxu0 0
        %1538 = vmatpush2.bf16.msra.mxu0 0
        %1539 = vmatprep.subr.bf16.mxu0 0
        %1540 = vmatpush2.bf16.msra.mxu0 0
        %1541 = vmatprep.subr.bf16.mxu0 0
        %1542 = vmatpush2.bf16.msra.mxu0 0
        %1543 = vmatprep.subr.bf16.mxu0 0
        %1544 = vmatpush2.bf16.msra.mxu0 0
        %1545 = vmatprep.subr.bf16.mxu0 0
        %1546 = vmatpush2.bf16.msra.mxu0 0
        %1547 = vmatprep.subr.bf16.mxu0 0
        %1548 = vmatpush2.bf16.msra.mxu0 0
        %1549 = vmatprep.mubr.bf16.mxu0 0
        %1550 = vmatmul.mubr.bf16.gmra.mxu0 %v1515
        %v1551 = vpop.f32.mrf.mxu0
        %v1552 = vadd.f32 %v1505, %v1551
        %v1553 = vpop.f32.mrf.mxu0
        %v1554 = vpop.f32.mrf.mxu0
        %v1555 = vpop.f32.mrf.mxu0
        %1556 = vdwg.mxu0
        %v1557 = vtanh.pop %v1552
        %v1558 = vld [vmem:[%s9] sm:$0x1]
        %v1559 = vld [vmem:[%s11] sm:$0x1]
        %vm1560 = vcmask 523264
        %v1561 = vsel %vm1560, %v1557, 0.0
        %1562 = vadd.xlane.f32.xlu0 %v1561
        %v1563 = vpop.xlane.xlu0 %1562
        %v1564 = vrcp.pop 64.0
        %v1565 = vmul.f32 %v1563, %v1564
        %v1566 = vsub.f32 %v1557, %v1565
        %v1567 = vmul.f32 %v1566, %v1566
        %v1568 = vsel %vm1560, %v1567, 0.0
        %1569 = vadd.xlane.f32.xlu0 %v1568
        %v1570 = vpop.xlane.xlu0 %1569
        %v1571 = vmul.f32 %v1570, %v1564
        %v1572 = vadd.f32 %v1571, 1e-05
        %v1573 = vrsqrt.pop %v1572
        %v1574 = vmul.f32 %v1566, %v1573
        %v1576 = vlaneseq
        %v1577 = vshrl.u32 %v1576, 7
        %v1578 = vsub.s32 0, %v1577
        %v1579 = vrot.slane %v1558, %v1578
        %v1581 = vmul.f32 %v1574, %v1579
        %v1583 = vlaneseq
        %v1584 = vshrl.u32 %v1583, 7
        %v1585 = vsub.s32 0, %v1584
        %v1586 = vrot.slane %v1559, %v1585
        %v1588 = vadd.f32 %v1581, %v1586
        %v1589 = vld [vmem:[#allocation9] sm:$0xf]
        %v1590 = vld [vmem:[#allocation9 + $0x4] sm:$0xf]
        %v1591 = vld [vmem:[#allocation9 + $0x8] sm:$0xf]
        %v1592 = vld [vmem:[#allocation9 + $0xc] sm:$0xf]
        %v1593 = vld [vmem:[#allocation9 + $0x10] sm:$0xf]
        %v1594 = vld [vmem:[#allocation9 + $0x14] sm:$0xf]
        %v1595 = vld [vmem:[#allocation9 + $0x18] sm:$0xf]
        %v1596 = vld [vmem:[#allocation9 + $0x1c] sm:$0xf]
        %v1597 = vpack.c.bf16 %v1588, %v1588
        %v1598 = vld [vmem:[#allocation10] sm:$0x1]
        %v1600 = vlaneseq
        %v1601 = vshrl.u32 %v1600, 7
        %v1602 = vsub.s32 0, %v1601
        %v1603 = vrot.slane %v1598, %v1602
        %v1613 = vunpack.c.l.b16 %v1589
        %v1614 = vunpack.c.l.b16 %v1590
        %v1615 = vunpack.c.l.b16 %v1591
        %v1616 = vunpack.c.l.b16 %v1592
        %v1617 = vunpack.c.l.b16 %v1593
        %v1618 = vunpack.c.l.b16 %v1594
        %v1619 = vunpack.c.l.b16 %v1595
        %v1620 = vunpack.c.l.b16 %v1596
        %v1621 = vpack.c.b16 %v1614, %v1613
        %v1622 = vpack.c.b16 %v1616, %v1615
        %v1623 = vpack.c.b16 %v1618, %v1617
        %v1624 = vpack.c.b16 %v1620, %v1619
        %v1630 = vsel %vm1560, %v1597, 0
        %1632 = vmatprep.subr.bf16.mxu0 0
        %1633 = vmatpush1.bf16.msra.mxu0 0
        %1634 = vmatprep.subr.bf16.mxu0 0
        %1635 = vmatpush1.bf16.msra.mxu0 0
        %1636 = vmatprep.subr.bf16.mxu0 0
        %1637 = vmatpush1.bf16.msra.mxu0 0
        %1638 = vmatprep.subr.bf16.mxu0 0
        %1639 = vmatpush1.bf16.msra.mxu0 0
        %1640 = vmatprep.subr.bf16.mxu0 0
        %1641 = vmatpush1.bf16.msra.mxu0 %v1624
        %1642 = vmatprep.subr.bf16.mxu0 0
        %1643 = vmatpush1.bf16.msra.mxu0 %v1623
        %1644 = vmatprep.subr.bf16.mxu0 0
        %1645 = vmatpush1.bf16.msra.mxu0 %v1622
        %1646 = vmatprep.subr.bf16.mxu0 0
        %1647 = vmatpush1.bf16.msra.mxu0 %v1621
        %1648 = vmatprep.subr.bf16.mxu0 0
        %1649 = vmatpush2.bf16.msra.mxu0 0
        %1650 = vmatprep.subr.bf16.mxu0 0
        %1651 = vmatpush2.bf16.msra.mxu0 0
        %1652 = vmatprep.subr.bf16.mxu0 0
        %1653 = vmatpush2.bf16.msra.mxu0 0
        %1654 = vmatprep.subr.bf16.mxu0 0
        %1655 = vmatpush2.bf16.msra.mxu0 0
        %1656 = vmatprep.subr.bf16.mxu0 0
        %1657 = vmatpush2.bf16.msra.mxu0 0
        %1658 = vmatprep.subr.bf16.mxu0 0
        %1659 = vmatpush2.bf16.msra.mxu0 0
        %1660 = vmatprep.subr.bf16.mxu0 0
        %1661 = vmatpush2.bf16.msra.mxu0 0
        %1662 = vmatprep.subr.bf16.mxu0 0
        %1663 = vmatpush2.bf16.msra.mxu0 0
        %1664 = vmatprep.mubr.bf16.mxu0 0
        %1665 = vmatmul.mubr.bf16.gmra.mxu0 %v1630
        %v1666 = vpop.f32.mrf.mxu0
        %v1667 = vadd.f32 %v1603, %v1666
        %v1668 = vpop.f32.mrf.mxu0
        %v1669 = vpop.f32.mrf.mxu0
        %v1670 = vpop.f32.mrf.mxu0
        %1671 = vdwg.mxu0
        %v1672 = vtanh.pop %v1667
        %v1673 = vld [vmem:[%s17] sm:$0x1]
        %v1674 = vld [vmem:[%s19] sm:$0x1]
        %1675 = vadd.xlane.f32.xlu0 %v1672
        %v1676 = vpop.xlane.xlu0 %1675
        %v1677 = vrcp.pop 128.0
        %v1678 = vmul.f32 %v1676, %v1677
        %v1679 = vsub.f32 %v1672, %v1678
        %v1680 = vmul.f32 %v1679, %v1679
        %1681 = vadd.xlane.f32.xlu0 %v1680
        %v1682 = vpop.xlane.xlu0 %1681
        %v1683 = vmul.f32 %v1682, %v1677
        %v1684 = vadd.f32 %v1683, 1e-05
        %v1685 = vrsqrt.pop %v1684
        %v1686 = vmul.f32 %v1679, %v1685
        %v1688 = vlaneseq
        %v1689 = vshrl.u32 %v1688, 7
        %v1690 = vsub.s32 0, %v1689
        %v1691 = vrot.slane %v1673, %v1690
        %v1693 = vmul.f32 %v1686, %v1691
        %v1695 = vlaneseq
        %v1696 = vshrl.u32 %v1695, 7
        %v1697 = vsub.s32 0, %v1696
        %v1698 = vrot.slane %v1674, %v1697
        %v1700 = vadd.f32 %v1693, %v1698
        %v1701 = vld [vmem:[%s21] sm:$0xf]
        %v1702 = vld [vmem:[%s21 + $0x4] sm:$0xf]
        %v1703 = vld [vmem:[%s21 + $0x8] sm:$0xf]
        %v1704 = vld [vmem:[%s21 + $0xc] sm:$0xf]
        %v1705 = vld [vmem:[%s21 + $0x10] sm:$0xf]
        %v1706 = vld [vmem:[%s21 + $0x14] sm:$0xf]
        %v1707 = vld [vmem:[%s21 + $0x18] sm:$0xf]
        %v1708 = vld [vmem:[%s21 + $0x1c] sm:$0xf]
        %v1709 = vld [vmem:[%s21 + $0x20] sm:$0xf]
        %v1710 = vld [vmem:[%s21 + $0x24] sm:$0xf]
        %v1711 = vld [vmem:[%s21 + $0x28] sm:$0xf]
        %v1712 = vld [vmem:[%s21 + $0x2c] sm:$0xf]
        %v1713 = vld [vmem:[%s21 + $0x30] sm:$0xf]
        %v1714 = vld [vmem:[%s21 + $0x34] sm:$0xf]
        %v1715 = vld [vmem:[%s21 + $0x38] sm:$0xf]
        %v1716 = vld [vmem:[%s21 + $0x3c] sm:$0xf]
        %v1717 = vpack.c.bf16 %v1700, %v1700
        %v1718 = vld [vmem:[#allocation12] sm:$0x1]
        %v1720 = vlaneseq
        %v1721 = vshrl.u32 %v1720, 7
        %v1722 = vsub.s32 0, %v1721
        %v1723 = vrot.slane %v1718, %v1722
        %v1741 = vunpack.c.l.b16 %v1701
        %v1742 = vunpack.c.l.b16 %v1702
        %v1743 = vunpack.c.l.b16 %v1703
        %v1744 = vunpack.c.l.b16 %v1704
        %v1745 = vunpack.c.l.b16 %v1705
        %v1746 = vunpack.c.l.b16 %v1706
        %v1747 = vunpack.c.l.b16 %v1707
        %v1748 = vunpack.c.l.b16 %v1708
        %v1749 = vunpack.c.l.b16 %v1709
        %v1750 = vunpack.c.l.b16 %v1710
        %v1751 = vunpack.c.l.b16 %v1711
        %v1752 = vunpack.c.l.b16 %v1712
        %v1753 = vunpack.c.l.b16 %v1713
        %v1754 = vunpack.c.l.b16 %v1714
        %v1755 = vunpack.c.l.b16 %v1715
        %v1756 = vunpack.c.l.b16 %v1716
        %v1757 = vpack.c.b16 %v1742, %v1741
        %v1758 = vpack.c.b16 %v1744, %v1743
        %v1759 = vpack.c.b16 %v1746, %v1745
        %v1760 = vpack.c.b16 %v1748, %v1747
        %v1761 = vpack.c.b16 %v1750, %v1749
        %v1762 = vpack.c.b16 %v1752, %v1751
        %v1763 = vpack.c.b16 %v1754, %v1753
        %v1764 = vpack.c.b16 %v1756, %v1755
        %1773 = vmatprep.subr.bf16.mxu0 0
        %1774 = vmatpush1.bf16.msra.mxu0 %v1764
        %1775 = vmatprep.subr.bf16.mxu0 0
        %1776 = vmatpush1.bf16.msra.mxu0 %v1763
        %1777 = vmatprep.subr.bf16.mxu0 0
        %1778 = vmatpush1.bf16.msra.mxu0 %v1762
        %1779 = vmatprep.subr.bf16.mxu0 0
        %1780 = vmatpush1.bf16.msra.mxu0 %v1761
        %1781 = vmatprep.subr.bf16.mxu0 0
        %1782 = vmatpush1.bf16.msra.mxu0 %v1760
        %1783 = vmatprep.subr.bf16.mxu0 0
        %1784 = vmatpush1.bf16.msra.mxu0 %v1759
        %1785 = vmatprep.subr.bf16.mxu0 0
        %1786 = vmatpush1.bf16.msra.mxu0 %v1758
        %1787 = vmatprep.subr.bf16.mxu0 0
        %1788 = vmatpush1.bf16.msra.mxu0 %v1757
        %1789 = vmatprep.subr.bf16.mxu0 0
        %1790 = vmatpush2.bf16.msra.mxu0 0
        %1791 = vmatprep.subr.bf16.mxu0 0
        %1792 = vmatpush2.bf16.msra.mxu0 0
        %1793 = vmatprep.subr.bf16.mxu0 0
        %1794 = vmatpush2.bf16.msra.mxu0 0
        %1795 = vmatprep.subr.bf16.mxu0 0
        %1796 = vmatpush2.bf16.msra.mxu0 0
        %1797 = vmatprep.subr.bf16.mxu0 0
        %1798 = vmatpush2.bf16.msra.mxu0 0
        %1799 = vmatprep.subr.bf16.mxu0 0
        %1800 = vmatpush2.bf16.msra.mxu0 0
        %1801 = vmatprep.subr.bf16.mxu0 0
        %1802 = vmatpush2.bf16.msra.mxu0 0
        %1803 = vmatprep.subr.bf16.mxu0 0
        %1804 = vmatpush2.bf16.msra.mxu0 0
        %1805 = vmatprep.mubr.bf16.mxu0 0
        %1806 = vmatmul.mubr.bf16.gmra.mxu0 %v1717
        %v1807 = vpop.f32.mrf.mxu0
        %v1808 = vadd.f32 %v1723, %v1807
        %v1809 = vpop.f32.mrf.mxu0
        %v1810 = vpop.f32.mrf.mxu0
        %v1811 = vpop.f32.mrf.mxu0
        %1812 = vdwg.mxu0
        %v1813 = vtanh.pop %v1808
        %v1814 = vld [vmem:[%s25] sm:$0x1]
        %v1815 = vld [vmem:[%s27] sm:$0x1]
        %v1816 = vsel %vm1560, %v1813, 0.0
        %1817 = vadd.xlane.f32.xlu0 %v1816
        %v1818 = vpop.xlane.xlu0 %1817
        %v1819 = vmul.f32 %v1818, %v1564
        %v1820 = vsub.f32 %v1813, %v1819
        %v1821 = vmul.f32 %v1820, %v1820
        %v1822 = vsel %vm1560, %v1821, 0.0
        %1823 = vadd.xlane.f32.xlu0 %v1822
        %v1824 = vpop.xlane.xlu0 %1823
        %v1825 = vmul.f32 %v1824, %v1564
        %v1826 = vadd.f32 %v1825, 1e-05
        %v1827 = vrsqrt.pop %v1826
        %v1828 = vmul.f32 %v1820, %v1827
        %v1830 = vlaneseq
        %v1831 = vshrl.u32 %v1830, 7
        %v1832 = vsub.s32 0, %v1831
        %v1833 = vrot.slane %v1814, %v1832
        %v1835 = vmul.f32 %v1828, %v1833
        %v1837 = vlaneseq
        %v1838 = vshrl.u32 %v1837, 7
        %v1839 = vsub.s32 0, %v1838
        %v1840 = vrot.slane %v1815, %v1839
        %v1842 = vadd.f32 %v1835, %v1840
        %v1843 = vld [vmem:[#allocation13] sm:$0xf]
        %v1844 = vld [vmem:[#allocation13 + $0x4] sm:$0xf]
        %v1845 = vld [vmem:[#allocation13 + $0x8] sm:$0xf]
        %v1846 = vld [vmem:[#allocation13 + $0xc] sm:$0xf]
        %v1847 = vld [vmem:[#allocation13 + $0x10] sm:$0xf]
        %v1848 = vld [vmem:[#allocation13 + $0x14] sm:$0xf]
        %v1849 = vld [vmem:[#allocation13 + $0x18] sm:$0xf]
        %v1850 = vld [vmem:[#allocation13 + $0x1c] sm:$0xf]
        %v1851 = vpack.c.bf16 %v1842, %v1842
        %v1852 = vld [vmem:[#allocation15] sm:$0x1]
        %v1854 = vlaneseq
        %v1855 = vshrl.u32 %v1854, 7
        %v1856 = vsub.s32 0, %v1855
        %v1857 = vrot.slane %v1852, %v1856
        %v1867 = vunpack.c.l.b16 %v1843
        %v1868 = vunpack.c.l.b16 %v1844
        %v1869 = vunpack.c.l.b16 %v1845
        %v1870 = vunpack.c.l.b16 %v1846
        %v1871 = vunpack.c.l.b16 %v1847
        %v1872 = vunpack.c.l.b16 %v1848
        %v1873 = vunpack.c.l.b16 %v1849
        %v1874 = vunpack.c.l.b16 %v1850
        %v1875 = vpack.c.b16 %v1868, %v1867
        %v1876 = vpack.c.b16 %v1870, %v1869
        %v1877 = vpack.c.b16 %v1872, %v1871
        %v1878 = vpack.c.b16 %v1874, %v1873
        %v1884 = vsel %vm1560, %v1851, 0
        %1886 = vmatprep.subr.bf16.mxu0 0
        %1887 = vmatpush1.bf16.msra.mxu0 0
        %1888 = vmatprep.subr.bf16.mxu0 0
        %1889 = vmatpush1.bf16.msra.mxu0 0
        %1890 = vmatprep.subr.bf16.mxu0 0
        %1891 = vmatpush1.bf16.msra.mxu0 0
        %1892 = vmatprep.subr.bf16.mxu0 0
        %1893 = vmatpush1.bf16.msra.mxu0 0
        %1894 = vmatprep.subr.bf16.mxu0 0
        %1895 = vmatpush1.bf16.msra.mxu0 %v1878
        %1896 = vmatprep.subr.bf16.mxu0 0
        %1897 = vmatpush1.bf16.msra.mxu0 %v1877
        %1898 = vmatprep.subr.bf16.mxu0 0
        %1899 = vmatpush1.bf16.msra.mxu0 %v1876
        %1900 = vmatprep.subr.bf16.mxu0 0
        %1901 = vmatpush1.bf16.msra.mxu0 %v1875
        %1902 = vmatprep.subr.bf16.mxu0 0
        %1903 = vmatpush2.bf16.msra.mxu0 0
        %1904 = vmatprep.subr.bf16.mxu0 0
        %1905 = vmatpush2.bf16.msra.mxu0 0
        %1906 = vmatprep.subr.bf16.mxu0 0
        %1907 = vmatpush2.bf16.msra.mxu0 0
        %1908 = vmatprep.subr.bf16.mxu0 0
        %1909 = vmatpush2.bf16.msra.mxu0 0
        %1910 = vmatprep.subr.bf16.mxu0 0
        %1911 = vmatpush2.bf16.msra.mxu0 0
        %1912 = vmatprep.subr.bf16.mxu0 0
        %1913 = vmatpush2.bf16.msra.mxu0 0
        %1914 = vmatprep.subr.bf16.mxu0 0
        %1915 = vmatpush2.bf16.msra.mxu0 0
        %1916 = vmatprep.subr.bf16.mxu0 0
        %1917 = vmatpush2.bf16.msra.mxu0 0
        %1918 = vmatprep.mubr.bf16.mxu0 0
        %1919 = vmatmul.mubr.bf16.gmra.mxu0 %v1884
        %v1920 = vpop.f32.mrf.mxu0
        %v1921 = vadd.f32 %v1857, %v1920
        %v1922 = vpop.f32.mrf.mxu0
        %v1923 = vpop.f32.mrf.mxu0
        %v1924 = vpop.f32.mrf.mxu0
        %1925 = vdwg.mxu0
        %v1926 = vtanh.pop %v1921
        %v1927 = vld [vmem:[%s33] sm:$0x1]
        %v1928 = vld [vmem:[%s35] sm:$0x1]
        %v1929 = vsel %vm1560, %v1926, 0.0
        %1930 = vadd.xlane.f32.xlu0 %v1929
        %v1931 = vpop.xlane.xlu0 %1930
        %v1932 = vmul.f32 %v1931, %v1564
        %v1933 = vsub.f32 %v1926, %v1932
        %v1934 = vmul.f32 %v1933, %v1933
        %v1935 = vsel %vm1560, %v1934, 0.0
        %1936 = vadd.xlane.f32.xlu0 %v1935
        %v1937 = vpop.xlane.xlu0 %1936
        %v1938 = vmul.f32 %v1937, %v1564
        %v1939 = vadd.f32 %v1938, 1e-05
        %v1940 = vrsqrt.pop %v1939
        %v1941 = vmul.f32 %v1933, %v1940
        %v1943 = vlaneseq
        %v1944 = vshrl.u32 %v1943, 7
        %v1945 = vsub.s32 0, %v1944
        %v1946 = vrot.slane %v1927, %v1945
        %v1948 = vmul.f32 %v1941, %v1946
        %v1950 = vlaneseq
        %v1951 = vshrl.u32 %v1950, 7
        %v1952 = vsub.s32 0, %v1951
        %v1953 = vrot.slane %v1928, %v1952
        %v1955 = vadd.f32 %v1948, %v1953
        %v1956 = vld [vmem:[#allocation16] sm:$0xf]
        %v1957 = vld [vmem:[#allocation16 + $0x4] sm:$0xf]
        %v1958 = vld [vmem:[#allocation16 + $0x8] sm:$0xf]
        %v1959 = vld [vmem:[#allocation16 + $0xc] sm:$0xf]
        %v1960 = vld [vmem:[#allocation16 + $0x10] sm:$0xf]
        %v1961 = vld [vmem:[#allocation16 + $0x14] sm:$0xf]
        %v1962 = vld [vmem:[#allocation16 + $0x18] sm:$0xf]
        %v1963 = vld [vmem:[#allocation16 + $0x1c] sm:$0xf]
        %v1964 = vpack.c.bf16 %v1955, %v1955
        %v1965 = vld [vmem:[#allocation18] sm:$0x1]
        %v1967 = vlaneseq
        %v1968 = vshrl.u32 %v1967, 7
        %v1969 = vsub.s32 0, %v1968
        %v1970 = vrot.slane %v1965, %v1969
        %v1980 = vunpack.c.l.b16 %v1956
        %v1981 = vunpack.c.l.b16 %v1957
        %v1982 = vunpack.c.l.b16 %v1958
        %v1983 = vunpack.c.l.b16 %v1959
        %v1984 = vunpack.c.l.b16 %v1960
        %v1985 = vunpack.c.l.b16 %v1961
        %v1986 = vunpack.c.l.b16 %v1962
        %v1987 = vunpack.c.l.b16 %v1963
        %v1988 = vpack.c.b16 %v1981, %v1980
        %v1989 = vpack.c.b16 %v1983, %v1982
        %v1990 = vpack.c.b16 %v1985, %v1984
        %v1991 = vpack.c.b16 %v1987, %v1986
        %v1997 = vsel %vm1560, %v1964, 0
        %1999 = vmatprep.subr.bf16.mxu0 0
        %2000 = vmatpush1.bf16.msra.mxu0 0
        %2001 = vmatprep.subr.bf16.mxu0 0
        %2002 = vmatpush1.bf16.msra.mxu0 0
        %2003 = vmatprep.subr.bf16.mxu0 0
        %2004 = vmatpush1.bf16.msra.mxu0 0
        %2005 = vmatprep.subr.bf16.mxu0 0
        %2006 = vmatpush1.bf16.msra.mxu0 0
        %2007 = vmatprep.subr.bf16.mxu0 0
        %2008 = vmatpush1.bf16.msra.mxu0 %v1991
        %2009 = vmatprep.subr.bf16.mxu0 0
        %2010 = vmatpush1.bf16.msra.mxu0 %v1990
        %2011 = vmatprep.subr.bf16.mxu0 0
        %2012 = vmatpush1.bf16.msra.mxu0 %v1989
        %2013 = vmatprep.subr.bf16.mxu0 0
        %2014 = vmatpush1.bf16.msra.mxu0 %v1988
        %2015 = vmatprep.subr.bf16.mxu0 0
        %2016 = vmatpush2.bf16.msra.mxu0 0
        %2017 = vmatprep.subr.bf16.mxu0 0
        %2018 = vmatpush2.bf16.msra.mxu0 0
        %2019 = vmatprep.subr.bf16.mxu0 0
        %2020 = vmatpush2.bf16.msra.mxu0 0
        %2021 = vmatprep.subr.bf16.mxu0 0
        %2022 = vmatpush2.bf16.msra.mxu0 0
        %2023 = vmatprep.subr.bf16.mxu0 0
        %2024 = vmatpush2.bf16.msra.mxu0 0
        %2025 = vmatprep.subr.bf16.mxu0 0
        %2026 = vmatpush2.bf16.msra.mxu0 0
        %2027 = vmatprep.subr.bf16.mxu0 0
        %2028 = vmatpush2.bf16.msra.mxu0 0
        %2029 = vmatprep.subr.bf16.mxu0 0
        %2030 = vmatpush2.bf16.msra.mxu0 0
        %2031 = vmatprep.mubr.bf16.mxu0 0
        %2032 = vmatmul.mubr.bf16.gmra.mxu0 %v1997
        %v2033 = vpop.f32.mrf.mxu0
        %v2034 = vadd.f32 %v1970, %v2033
        %v2035 = vpop.f32.mrf.mxu0
        %v2036 = vpop.f32.mrf.mxu0
        %v2037 = vpop.f32.mrf.mxu0
        %2038 = vdwg.mxu0
        %v2039 = vtanh.pop %v2034
        %v2040 = vld [vmem:[%s41] sm:$0x1]
        %v2041 = vld [vmem:[%s43] sm:$0x1]
        %vm2042 = vcmask 261120
        %v2043 = vsel %vm2042, %v2039, 0.0
        %2044 = vadd.xlane.f32.xlu0 %v2043
        %v2045 = vpop.xlane.xlu0 %2044
        %v2046 = vrcp.pop 32.0
        %v2047 = vmul.f32 %v2045, %v2046
        %v2048 = vsub.f32 %v2039, %v2047
        %v2049 = vmul.f32 %v2048, %v2048
        %v2050 = vsel %vm2042, %v2049, 0.0
        %2051 = vadd.xlane.f32.xlu0 %v2050
        %v2052 = vpop.xlane.xlu0 %2051
        %v2053 = vmul.f32 %v2052, %v2046
        %v2054 = vadd.f32 %v2053, 1e-05
        %v2055 = vrsqrt.pop %v2054
        %v2056 = vmul.f32 %v2048, %v2055
        %v2058 = vlaneseq
        %v2059 = vshrl.u32 %v2058, 7
        %v2060 = vsub.s32 0, %v2059
        %v2061 = vrot.slane %v2040, %v2060
        %v2063 = vmul.f32 %v2056, %v2061
        %v2065 = vlaneseq
        %v2066 = vshrl.u32 %v2065, 7
        %v2067 = vsub.s32 0, %v2066
        %v2068 = vrot.slane %v2041, %v2067
        %v2070 = vadd.f32 %v2063, %v2068
        %v2071 = vld [vmem:[#allocation19] sm:$0xf]
        %v2072 = vld [vmem:[#allocation19 + $0x4] sm:$0xf]
        %v2073 = vld [vmem:[#allocation19 + $0x8] sm:$0xf]
        %v2074 = vld [vmem:[#allocation19 + $0xc] sm:$0xf]
        %v2075 = vpack.c.bf16 %v2070, %v2070
        %v2076 = vld [vmem:[#allocation21] sm:$0x1]
        %v2078 = vlaneseq
        %v2079 = vshrl.u32 %v2078, 7
        %v2080 = vsub.s32 0, %v2079
        %v2081 = vrot.slane %v2076, %v2080
        %v2087 = vunpack.c.l.b16 %v2071
        %v2088 = vunpack.c.l.b16 %v2072
        %v2089 = vunpack.c.l.b16 %v2073
        %v2090 = vunpack.c.l.b16 %v2074
        %v2091 = vpack.c.b16 %v2088, %v2087
        %v2092 = vpack.c.b16 %v2090, %v2089
        %v2096 = vsel %vm2042, %v2075, 0
        %2098 = vmatprep.subr.bf16.mxu0 0
        %2099 = vmatpush1.bf16.msra.mxu0 0
        %2100 = vmatprep.subr.bf16.mxu0 0
        %2101 = vmatpush1.bf16.msra.mxu0 0
        %2102 = vmatprep.subr.bf16.mxu0 0
        %2103 = vmatpush1.bf16.msra.mxu0 0
        %2104 = vmatprep.subr.bf16.mxu0 0
        %2105 = vmatpush1.bf16.msra.mxu0 0
        %2106 = vmatprep.subr.bf16.mxu0 0
        %2107 = vmatpush1.bf16.msra.mxu0 0
        %2108 = vmatprep.subr.bf16.mxu0 0
        %2109 = vmatpush1.bf16.msra.mxu0 0
        %2110 = vmatprep.subr.bf16.mxu0 0
        %2111 = vmatpush1.bf16.msra.mxu0 %v2092
        %2112 = vmatprep.subr.bf16.mxu0 0
        %2113 = vmatpush1.bf16.msra.mxu0 %v2091
        %2114 = vmatprep.subr.bf16.mxu0 0
        %2115 = vmatpush2.bf16.msra.mxu0 0
        %2116 = vmatprep.subr.bf16.mxu0 0
        %2117 = vmatpush2.bf16.msra.mxu0 0
        %2118 = vmatprep.subr.bf16.mxu0 0
        %2119 = vmatpush2.bf16.msra.mxu0 0
        %2120 = vmatprep.subr.bf16.mxu0 0
        %2121 = vmatpush2.bf16.msra.mxu0 0
        %2122 = vmatprep.subr.bf16.mxu0 0
        %2123 = vmatpush2.bf16.msra.mxu0 0
        %2124 = vmatprep.subr.bf16.mxu0 0
        %2125 = vmatpush2.bf16.msra.mxu0 0
        %2126 = vmatprep.subr.bf16.mxu0 0
        %2127 = vmatpush2.bf16.msra.mxu0 0
        %2128 = vmatprep.subr.bf16.mxu0 0
        %2129 = vmatpush2.bf16.msra.mxu0 0
        %2130 = vmatprep.mubr.bf16.mxu0 0
        %2131 = vmatmul.mubr.bf16.gmra.mxu0 %v2096
        %v2132 = vpop.f32.mrf.mxu0
        %v2133 = vadd.f32 %v2081, %v2132
        %v2134 = vpop.f32.mrf.mxu0
        %v2135 = vpop.f32.mrf.mxu0
        %v2136 = vpop.f32.mrf.mxu0
        %2137 = vdwg.mxu0
        %v2138 = vld [vmem:[#allocation22] sm:$0xf]
        %v2139 = vld [vmem:[#allocation22 + $0x4] sm:$0xf]
        %v2140 = vld [vmem:[#allocation22 + $0x8] sm:$0xf]
        %v2141 = vld [vmem:[#allocation22 + $0xc] sm:$0xf]
        %v2142 = vld [vmem:[#allocation24] sm:$0x1]
        %v2144 = vlaneseq
        %v2145 = vshrl.u32 %v2144, 7
        %v2146 = vsub.s32 0, %v2145
        %v2147 = vrot.slane %v2142, %v2146
        %v2153 = vunpack.c.l.b16 %v2138
        %v2154 = vunpack.c.l.b16 %v2139
        %v2155 = vunpack.c.l.b16 %v2140
        %v2156 = vunpack.c.l.b16 %v2141
        %v2157 = vpack.c.b16 %v2154, %v2153
        %v2158 = vpack.c.b16 %v2156, %v2155
        %2161 = vmatprep.subr.bf16.mxu0 0
        %2162 = vmatpush1.bf16.msra.mxu0 0
        %2163 = vmatprep.subr.bf16.mxu0 0
        %2164 = vmatpush1.bf16.msra.mxu0 0
        %2165 = vmatprep.subr.bf16.mxu0 0
        %2166 = vmatpush1.bf16.msra.mxu0 0
        %2167 = vmatprep.subr.bf16.mxu0 0
        %2168 = vmatpush1.bf16.msra.mxu0 0
        %2169 = vmatprep.subr.bf16.mxu0 0
        %2170 = vmatpush1.bf16.msra.mxu0 0
        %2171 = vmatprep.subr.bf16.mxu0 0
        %2172 = vmatpush1.bf16.msra.mxu0 0
        %2173 = vmatprep.subr.bf16.mxu0 0
        %2174 = vmatpush1.bf16.msra.mxu0 %v2158
        %2175 = vmatprep.subr.bf16.mxu0 0
        %2176 = vmatpush1.bf16.msra.mxu0 %v2157
        %2177 = vmatprep.subr.bf16.mxu0 0
        %2178 = vmatpush2.bf16.msra.mxu0 0
        %2179 = vmatprep.subr.bf16.mxu0 0
        %2180 = vmatpush2.bf16.msra.mxu0 0
        %2181 = vmatprep.subr.bf16.mxu0 0
        %2182 = vmatpush2.bf16.msra.mxu0 0
        %2183 = vmatprep.subr.bf16.mxu0 0
        %2184 = vmatpush2.bf16.msra.mxu0 0
        %2185 = vmatprep.subr.bf16.mxu0 0
        %2186 = vmatpush2.bf16.msra.mxu0 0
        %2187 = vmatprep.subr.bf16.mxu0 0
        %2188 = vmatpush2.bf16.msra.mxu0 0
        %2189 = vmatprep.subr.bf16.mxu0 0
        %2190 = vmatpush2.bf16.msra.mxu0 0
        %2191 = vmatprep.subr.bf16.mxu0 0
        %2192 = vmatpush2.bf16.msra.mxu0 0
        %2193 = vmatprep.mubr.bf16.mxu0 0
        %2194 = vmatmul.mubr.bf16.gmra.mxu0 %v2096
        %v2195 = vpop.f32.mrf.mxu0
        %v2196 = vadd.f32 %v2147, %v2195
        %v2197 = vpop.f32.mrf.mxu0
        %v2198 = vpop.f32.mrf.mxu0
        %v2199 = vpop.f32.mrf.mxu0
        %2200 = vdwg.mxu0
        %v2201 = vld [vmem:[#allocation25] sm:$0xf]
        %v2202 = vld [vmem:[#allocation25 + $0x4] sm:$0xf]
        %v2203 = vld [vmem:[#allocation25 + $0x8] sm:$0xf]
        %v2204 = vld [vmem:[#allocation25 + $0xc] sm:$0xf]
        %v2205 = vld [vmem:[%s55] sm:$0x1]
        %v2207 = vlaneseq
        %v2208 = vshrl.u32 %v2207, 7
        %v2209 = vsub.s32 0, %v2208
        %v2210 = vrot.slane %v2205, %v2209
        %v2216 = vunpack.c.l.b16 %v2201
        %v2217 = vunpack.c.l.b16 %v2202
        %v2218 = vunpack.c.l.b16 %v2203
        %v2219 = vunpack.c.l.b16 %v2204
        %v2220 = vpack.c.b16 %v2217, %v2216
        %v2221 = vpack.c.b16 %v2219, %v2218
        %2224 = vmatprep.subr.bf16.mxu0 0
        %2225 = vmatpush1.bf16.msra.mxu0 0
        %2226 = vmatprep.subr.bf16.mxu0 0
        %2227 = vmatpush1.bf16.msra.mxu0 0
        %2228 = vmatprep.subr.bf16.mxu0 0
        %2229 = vmatpush1.bf16.msra.mxu0 0
        %2230 = vmatprep.subr.bf16.mxu0 0
        %2231 = vmatpush1.bf16.msra.mxu0 0
        %2232 = vmatprep.subr.bf16.mxu0 0
        %2233 = vmatpush1.bf16.msra.mxu0 0
        %2234 = vmatprep.subr.bf16.mxu0 0
        %2235 = vmatpush1.bf16.msra.mxu0 0
        %2236 = vmatprep.subr.bf16.mxu0 0
        %2237 = vmatpush1.bf16.msra.mxu0 %v2221
        %2238 = vmatprep.subr.bf16.mxu0 0
        %2239 = vmatpush1.bf16.msra.mxu0 %v2220
        %2240 = vmatprep.subr.bf16.mxu0 0
        %2241 = vmatpush2.bf16.msra.mxu0 0
        %2242 = vmatprep.subr.bf16.mxu0 0
        %2243 = vmatpush2.bf16.msra.mxu0 0
        %2244 = vmatprep.subr.bf16.mxu0 0
        %2245 = vmatpush2.bf16.msra.mxu0 0
        %2246 = vmatprep.subr.bf16.mxu0 0
        %2247 = vmatpush2.bf16.msra.mxu0 0
        %2248 = vmatprep.subr.bf16.mxu0 0
        %2249 = vmatpush2.bf16.msra.mxu0 0
        %2250 = vmatprep.subr.bf16.mxu0 0
        %2251 = vmatpush2.bf16.msra.mxu0 0
        %2252 = vmatprep.subr.bf16.mxu0 0
        %2253 = vmatpush2.bf16.msra.mxu0 0
        %2254 = vmatprep.subr.bf16.mxu0 0
        %2255 = vmatpush2.bf16.msra.mxu0 0
        %2256 = vmatprep.mubr.bf16.mxu0 0
        %2257 = vmatmul.mubr.bf16.gmra.mxu0 %v2096
        %v2258 = vpop.f32.mrf.mxu0
        %v2259 = vadd.f32 %v2210, %v2258
        %v2260 = vpop.f32.mrf.mxu0
        %v2261 = vpop.f32.mrf.mxu0
        %v2262 = vpop.f32.mrf.mxu0
        %2263 = vdwg.mxu0
        %v2264 = vld [vmem:[#allocation27] sm:$0xf]
        %v2265 = vld [vmem:[#allocation27 + $0x4] sm:$0xf]
        %v2266 = vld [vmem:[#allocation27 + $0x8] sm:$0xf]
        %v2267 = vld [vmem:[#allocation27 + $0xc] sm:$0xf]
        %v2268 = vmul.f32 %v2133, 0.25
        %v2269 = vpack.c.bf16 %v2268, %v2268
        %v2270 = vpack.c.bf16 %v2196, %v2196
        %v2272 = vsel %vm1513, %v2269, 0
        %v2275 = vsel %vm1513, %v2270, 0
        %2277 = vmatprep.subr.bf16.mxu0 0
        %2278 = vmatpush1.bf16.xpose.msra.mxu0 0
        %2279 = vmatprep.subr.bf16.mxu0 0
        %2280 = vmatpush1.bf16.xpose.msra.mxu0 0
        %2281 = vmatprep.subr.bf16.mxu0 0
        %2282 = vmatpush1.bf16.xpose.msra.mxu0 0
        %2283 = vmatprep.subr.bf16.mxu0 0
        %2284 = vmatpush1.bf16.xpose.msra.mxu0 0
        %2285 = vmatprep.subr.bf16.mxu0 0
        %2286 = vmatpush1.bf16.xpose.msra.mxu0 0
        %2287 = vmatprep.subr.bf16.mxu0 0
        %2288 = vmatpush1.bf16.xpose.msra.mxu0 0
        %2289 = vmatprep.subr.bf16.mxu0 0
        %2290 = vmatpush1.bf16.xpose.msra.mxu0 0
        %2291 = vmatprep.subr.bf16.mxu0 0
        %2292 = vmatpush1.bf16.xpose.msra.mxu0 %v2275
        %2293 = vmatprep.subr.bf16.mxu0 0
        %2294 = vmatpush2.bf16.xpose.msra.mxu0 0
        %2295 = vmatprep.subr.bf16.mxu0 0
        %2296 = vmatpush2.bf16.xpose.msra.mxu0 0
        %2297 = vmatprep.subr.bf16.mxu0 0
        %2298 = vmatpush2.bf16.xpose.msra.mxu0 0
        %2299 = vmatprep.subr.bf16.mxu0 0
        %2300 = vmatpush2.bf16.xpose.msra.mxu0 0
        %2301 = vmatprep.subr.bf16.mxu0 0
        %2302 = vmatpush2.bf16.xpose.msra.mxu0 0
        %2303 = vmatprep.subr.bf16.mxu0 0
        %2304 = vmatpush2.bf16.xpose.msra.mxu0 0
        %2305 = vmatprep.subr.bf16.mxu0 0
        %2306 = vmatpush2.bf16.xpose.msra.mxu0 0
        %2307 = vmatprep.subr.bf16.mxu0 0
        %2308 = vmatpush2.bf16.xpose.msra.mxu0 0
        %2309 = vmatprep.mubr.bf16.mxu0 0
        %2310 = vmatmul.mubr.bf16.gmra.mxu0 %v2272
        %v2311 = vpop.f32.mrf.mxu0
        %v2312 = vadd.f32 0.0, %v2311
        %v2313 = vpop.f32.mrf.mxu0
        %v2314 = vpop.f32.mrf.mxu0
        %v2315 = vpop.f32.mrf.mxu0
        %2316 = vdwg.mxu0
        %vm2317 = vcmask 64512
        %v2318 = vsel %vm2317, %v2312, -inf
        %2319 = vmax.xlane.f32.xlu0 %v2318
        %v2320 = vpop.xlane.xlu0 %2319
        %v2321 = vsub.f32 %v2312, %v2320
        %v2322 = vmul.f32 %v2321, 1.442695
        %v2323 = vpow.pop %v2322
        %v2324 = vsel %vm2317, %v2323, 0.0
        %2325 = vadd.xlane.f32.xlu0 %v2324
        %v2326 = vpop.xlane.xlu0 %2325
        %v2327 = vrcp.pop %v2326
        %v2328 = vmul.f32 %v2323, %v2327
        %v2329 = vpack.c.bf16 %v2328, %v2328
        %v2330 = vpack.c.bf16 %v2259, %v2259
        %v2332 = vsel %vm2317, %v2329, 0
        %vm2334 = vcmask 1043456
        %v2336 = vsel %vm2334, %v2330, 0
        %2338 = vmatprep.subr.bf16.mxu0 0
        %2339 = vmatpush1.bf16.msra.mxu0 0
        %2340 = vmatprep.subr.bf16.mxu0 0
        %2341 = vmatpush1.bf16.msra.mxu0 0
        %2342 = vmatprep.subr.bf16.mxu0 0
        %2343 = vmatpush1.bf16.msra.mxu0 0
        %2344 = vmatprep.subr.bf16.mxu0 0
        %2345 = vmatpush1.bf16.msra.mxu0 0
        %2346 = vmatprep.subr.bf16.mxu0 0
        %2347 = vmatpush1.bf16.msra.mxu0 0
        %2348 = vmatprep.subr.bf16.mxu0 0
        %2349 = vmatpush1.bf16.msra.mxu0 0
        %2350 = vmatprep.subr.bf16.mxu0 0
        %2351 = vmatpush1.bf16.msra.mxu0 0
        %2352 = vmatprep.subr.bf16.mxu0 0
        %2353 = vmatpush1.bf16.msra.mxu0 %v2336
        %2354 = vmatprep.subr.bf16.mxu0 0
        %2355 = vmatpush2.bf16.msra.mxu0 0
        %2356 = vmatprep.subr.bf16.mxu0 0
        %2357 = vmatpush2.bf16.msra.mxu0 0
        %2358 = vmatprep.subr.bf16.mxu0 0
        %2359 = vmatpush2.bf16.msra.mxu0 0
        %2360 = vmatprep.subr.bf16.mxu0 0
        %2361 = vmatpush2.bf16.msra.mxu0 0
        %2362 = vmatprep.subr.bf16.mxu0 0
        %2363 = vmatpush2.bf16.msra.mxu0 0
        %2364 = vmatprep.subr.bf16.mxu0 0
        %2365 = vmatpush2.bf16.msra.mxu0 0
        %2366 = vmatprep.subr.bf16.mxu0 0
        %2367 = vmatpush2.bf16.msra.mxu0 0
        %2368 = vmatprep.subr.bf16.mxu0 0
        %2369 = vmatpush2.bf16.msra.mxu0 0
        %2370 = vmatprep.mubr.bf16.mxu0 0
        %2371 = vmatmul.mubr.bf16.gmra.mxu0 %v2332
        %v2372 = vpop.f32.mrf.mxu0
        %v2373 = vadd.f32 0.0, %v2372
        %v2374 = vpop.f32.mrf.mxu0
        %v2375 = vpop.f32.mrf.mxu0
        %v2376 = vpop.f32.mrf.mxu0
        %2377 = vdwg.mxu0
        %v2378 = vpack.c.bf16 %v2373, %v2373
        %2380 = vrot.lane.b32.xlu0 %v2269, 112
        %v2381 = vpop.permute.xlu0 %2380
        %2383 = vrot.lane.b32.xlu0 %v2270, 112
        %v2384 = vpop.permute.xlu0 %2383
        %v2386 = vsel %vm1513, %v2381, 0
        %v2389 = vsel %vm1513, %v2384, 0
        %2391 = vmatprep.subr.bf16.mxu0 0
        %2392 = vmatpush1.bf16.xpose.msra.mxu0 0
        %2393 = vmatprep.subr.bf16.mxu0 0
        %2394 = vmatpush1.bf16.xpose.msra.mxu0 0
        %2395 = vmatprep.subr.bf16.mxu0 0
        %2396 = vmatpush1.bf16.xpose.msra.mxu0 0
        %2397 = vmatprep.subr.bf16.mxu0 0
        %2398 = vmatpush1.bf16.xpose.msra.mxu0 0
        %2399 = vmatprep.subr.bf16.mxu0 0
        %2400 = vmatpush1.bf16.xpose.msra.mxu0 0
        %2401 = vmatprep.subr.bf16.mxu0 0
        %2402 = vmatpush1.bf16.xpose.msra.mxu0 0
        %2403 = vmatprep.subr.bf16.mxu0 0
        %2404 = vmatpush1.bf16.xpose.msra.mxu0 0
        %2405 = vmatprep.subr.bf16.mxu0 0
        %2406 = vmatpush1.bf16.xpose.msra.mxu0 %v2389
        %2407 = vmatprep.subr.bf16.mxu0 0
        %2408 = vmatpush2.bf16.xpose.msra.mxu0 0
        %2409 = vmatprep.subr.bf16.mxu0 0
        %2410 = vmatpush2.bf16.xpose.msra.mxu0 0
        %2411 = vmatprep.subr.bf16.mxu0 0
        %2412 = vmatpush2.bf16.xpose.msra.mxu0 0
        %2413 = vmatprep.subr.bf16.mxu0 0
        %2414 = vmatpush2.bf16.xpose.msra.mxu0 0
        %2415 = vmatprep.subr.bf16.mxu0 0
        %2416 = vmatpush2.bf16.xpose.msra.mxu0 0
        %2417 = vmatprep.subr.bf16.mxu0 0
        %2418 = vmatpush2.bf16.xpose.msra.mxu0 0
        %2419 = vmatprep.subr.bf16.mxu0 0
        %2420 = vmatpush2.bf16.xpose.msra.mxu0 0
        %2421 = vmatprep.subr.bf16.mxu0 0
        %2422 = vmatpush2.bf16.xpose.msra.mxu0 0
        %2423 = vmatprep.mubr.bf16.mxu0 0
        %2424 = vmatmul.mubr.bf16.gmra.mxu0 %v2386
        %v2425 = vpop.f32.mrf.mxu0
        %v2426 = vadd.f32 0.0, %v2425
        %v2427 = vpop.f32.mrf.mxu0
        %v2428 = vpop.f32.mrf.mxu0
        %v2429 = vpop.f32.mrf.mxu0
        %2430 = vdwg.mxu0
        %v2431 = vsel %vm2317, %v2426, -inf
        %2432 = vmax.xlane.f32.xlu0 %v2431
        %v2433 = vpop.xlane.xlu0 %2432
        %v2434 = vsub.f32 %v2426, %v2433
        %v2435 = vmul.f32 %v2434, 1.442695
        %v2436 = vpow.pop %v2435
        %v2437 = vsel %vm2317, %v2436, 0.0
        %2438 = vadd.xlane.f32.xlu0 %v2437
        %v2439 = vpop.xlane.xlu0 %2438
        %v2440 = vrcp.pop %v2439
        %v2441 = vmul.f32 %v2436, %v2440
        %v2442 = vpack.c.bf16 %v2441, %v2441
        %2444 = vrot.lane.b32.xlu0 %v2330, 112
        %v2445 = vpop.permute.xlu0 %2444
        %v2447 = vsel %vm2317, %v2442, 0
        %v2450 = vsel %vm2334, %v2445, 0
        %2452 = vmatprep.subr.bf16.mxu0 0
        %2453 = vmatpush1.bf16.msra.mxu0 0
        %2454 = vmatprep.subr.bf16.mxu0 0
        %2455 = vmatpush1.bf16.msra.mxu0 0
        %2456 = vmatprep.subr.bf16.mxu0 0
        %2457 = vmatpush1.bf16.msra.mxu0 0
        %2458 = vmatprep.subr.bf16.mxu0 0
        %2459 = vmatpush1.bf16.msra.mxu0 0
        %2460 = vmatprep.subr.bf16.mxu0 0
        %2461 = vmatpush1.bf16.msra.mxu0 0
        %2462 = vmatprep.subr.bf16.mxu0 0
        %2463 = vmatpush1.bf16.msra.mxu0 0
        %2464 = vmatprep.subr.bf16.mxu0 0
        %2465 = vmatpush1.bf16.msra.mxu0 0
        %2466 = vmatprep.subr.bf16.mxu0 0
        %2467 = vmatpush1.bf16.msra.mxu0 %v2450
        %2468 = vmatprep.subr.bf16.mxu0 0
        %2469 = vmatpush2.bf16.msra.mxu0 0
        %2470 = vmatprep.subr.bf16.mxu0 0
        %2471 = vmatpush2.bf16.msra.mxu0 0
        %2472 = vmatprep.subr.bf16.mxu0 0
        %2473 = vmatpush2.bf16.msra.mxu0 0
        %2474 = vmatprep.subr.bf16.mxu0 0
        %2475 = vmatpush2.bf16.msra.mxu0 0
        %2476 = vmatprep.subr.bf16.mxu0 0
        %2477 = vmatpush2.bf16.msra.mxu0 0
        %2478 = vmatprep.subr.bf16.mxu0 0
        %2479 = vmatpush2.bf16.msra.mxu0 0
        %2480 = vmatprep.subr.bf16.mxu0 0
        %2481 = vmatpush2.bf16.msra.mxu0 0
        %2482 = vmatprep.subr.bf16.mxu0 0
        %2483 = vmatpush2.bf16.msra.mxu0 0
        %2484 = vmatprep.mubr.bf16.mxu0 0
        %2485 = vmatmul.mubr.bf16.gmra.mxu0 %v2447
        %v2486 = vpop.f32.mrf.mxu0
        %v2487 = vadd.f32 0.0, %v2486
        %v2488 = vpop.f32.mrf.mxu0
        %v2489 = vpop.f32.mrf.mxu0
        %v2490 = vpop.f32.mrf.mxu0
        %2491 = vdwg.mxu0
        %v2492 = vpack.c.bf16 %v2487, %v2487
        %v2495 = vunpack.c.l.b16 %v2266
        %v2496 = vunpack.c.l.b16 %v2267
        %v2497 = vpack.c.b16 %v2496, %v2495
        %v2500 = vsel %vm1513, %v2492, 0
        %2502 = vmatprep.subr.bf16.mxu0 0
        %2503 = vmatpush1.bf16.msra.mxu0 0
        %2504 = vmatprep.subr.bf16.mxu0 0
        %2505 = vmatpush1.bf16.msra.mxu0 0
        %2506 = vmatprep.subr.bf16.mxu0 0
        %2507 = vmatpush1.bf16.msra.mxu0 0
        %2508 = vmatprep.subr.bf16.mxu0 0
        %2509 = vmatpush1.bf16.msra.mxu0 0
        %2510 = vmatprep.subr.bf16.mxu0 0
        %2511 = vmatpush1.bf16.msra.mxu0 0
        %2512 = vmatprep.subr.bf16.mxu0 0
        %2513 = vmatpush1.bf16.msra.mxu0 0
        %2514 = vmatprep.subr.bf16.mxu0 0
        %2515 = vmatpush1.bf16.msra.mxu0 0
        %2516 = vmatprep.subr.bf16.mxu0 0
        %2517 = vmatpush1.bf16.msra.mxu0 %v2497
        %2518 = vmatprep.subr.bf16.mxu0 0
        %2519 = vmatpush2.bf16.msra.mxu0 0
        %2520 = vmatprep.subr.bf16.mxu0 0
        %2521 = vmatpush2.bf16.msra.mxu0 0
        %2522 = vmatprep.subr.bf16.mxu0 0
        %2523 = vmatpush2.bf16.msra.mxu0 0
        %2524 = vmatprep.subr.bf16.mxu0 0
        %2525 = vmatpush2.bf16.msra.mxu0 0
        %2526 = vmatprep.subr.bf16.mxu0 0
        %2527 = vmatpush2.bf16.msra.mxu0 0
        %2528 = vmatprep.subr.bf16.mxu0 0
        %2529 = vmatpush2.bf16.msra.mxu0 0
        %2530 = vmatprep.subr.bf16.mxu0 0
        %2531 = vmatpush2.bf16.msra.mxu0 0
        %2532 = vmatprep.subr.bf16.mxu0 0
        %2533 = vmatpush2.bf16.msra.mxu0 0
        %2534 = vmatprep.mubr.bf16.mxu0 0
        %2535 = vmatmul.mubr.bf16.gmra.mxu0 %v2500
        %v2536 = vpop.f32.mrf.mxu0
        %v2537 = vadd.f32 0.0, %v2536
        %v2538 = vpop.f32.mrf.mxu0
        %v2539 = vpop.f32.mrf.mxu0
        %v2540 = vpop.f32.mrf.mxu0
        %2541 = vdwg.mxu0
        %v2544 = vunpack.c.l.b16 %v2264
        %v2545 = vunpack.c.l.b16 %v2265
        %v2546 = vpack.c.b16 %v2545, %v2544
        %v2549 = vsel %vm1513, %v2378, 0
        %2551 = vmatprep.subr.bf16.mxu0 0
        %2552 = vmatpush1.bf16.msra.mxu0 0
        %2553 = vmatprep.subr.bf16.mxu0 0
        %2554 = vmatpush1.bf16.msra.mxu0 0
        %2555 = vmatprep.subr.bf16.mxu0 0
        %2556 = vmatpush1.bf16.msra.mxu0 0
        %2557 = vmatprep.subr.bf16.mxu0 0
        %2558 = vmatpush1.bf16.msra.mxu0 0
        %2559 = vmatprep.subr.bf16.mxu0 0
        %2560 = vmatpush1.bf16.msra.mxu0 0
        %2561 = vmatprep.subr.bf16.mxu0 0
        %2562 = vmatpush1.bf16.msra.mxu0 0
        %2563 = vmatprep.subr.bf16.mxu0 0
        %2564 = vmatpush1.bf16.msra.mxu0 0
        %2565 = vmatprep.subr.bf16.mxu0 0
        %2566 = vmatpush1.bf16.msra.mxu0 %v2546
        %2567 = vmatprep.subr.bf16.mxu0 0
        %2568 = vmatpush2.bf16.msra.mxu0 0
        %2569 = vmatprep.subr.bf16.mxu0 0
        %2570 = vmatpush2.bf16.msra.mxu0 0
        %2571 = vmatprep.subr.bf16.mxu0 0
        %2572 = vmatpush2.bf16.msra.mxu0 0
        %2573 = vmatprep.subr.bf16.mxu0 0
        %2574 = vmatpush2.bf16.msra.mxu0 0
        %2575 = vmatprep.subr.bf16.mxu0 0
        %2576 = vmatpush2.bf16.msra.mxu0 0
        %2577 = vmatprep.subr.bf16.mxu0 0
        %2578 = vmatpush2.bf16.msra.mxu0 0
        %2579 = vmatprep.subr.bf16.mxu0 0
        %2580 = vmatpush2.bf16.msra.mxu0 0
        %2581 = vmatprep.subr.bf16.mxu0 0
        %2582 = vmatpush2.bf16.msra.mxu0 0
        %2583 = vmatprep.mubr.bf16.mxu0 0
        %2584 = vmatmul.mubr.bf16.gmra.mxu0 %v2549
        %v2585 = vpop.f32.mrf.mxu0
        %v2586 = vadd.f32 %v2537, %v2585
        %v2587 = vpop.f32.mrf.mxu0
        %v2588 = vpop.f32.mrf.mxu0
        %v2589 = vpop.f32.mrf.mxu0
        %2590 = vdwg.mxu0
        %v2591 = vld [vmem:[%s59] sm:$0x1]
        %v2593 = vlaneseq
        %v2594 = vshrl.u32 %v2593, 7
        %v2595 = vsub.s32 0, %v2594
        %v2596 = vrot.slane %v2591, %v2595
        %v2598 = vadd.f32 %v2586, %v2596
        %v2599 = vadd.f32 %v2070, %v2598
        %v2600 = vld [vmem:[%s61] sm:$0x1]
        %v2601 = vld [vmem:[%s63] sm:$0x1]
        %v2602 = vsel %vm2042, %v2599, 0.0
        %2603 = vadd.xlane.f32.xlu0 %v2602
        %v2604 = vpop.xlane.xlu0 %2603
        %v2605 = vmul.f32 %v2604, %v2046
        %v2606 = vsub.f32 %v2599, %v2605
        %v2607 = vmul.f32 %v2606, %v2606
        %v2608 = vsel %vm2042, %v2607, 0.0
        %2609 = vadd.xlane.f32.xlu0 %v2608
        %v2610 = vpop.xlane.xlu0 %2609
        %v2611 = vmul.f32 %v2610, %v2046
        %v2612 = vadd.f32 %v2611, 1e-05
        %v2613 = vrsqrt.pop %v2612
        %v2614 = vmul.f32 %v2606, %v2613
        %v2616 = vlaneseq
        %v2617 = vshrl.u32 %v2616, 7
        %v2618 = vsub.s32 0, %v2617
        %v2619 = vrot.slane %v2600, %v2618
        %v2621 = vmul.f32 %v2614, %v2619
        %v2623 = vlaneseq
        %v2624 = vshrl.u32 %v2623, 7
        %v2625 = vsub.s32 0, %v2624
        %v2626 = vrot.slane %v2601, %v2625
        %v2628 = vadd.f32 %v2621, %v2626
        %v2629 = vld [vmem:[#allocation28] sm:$0xff]
        %v2630 = vld [vmem:[#allocation28 + $0x8] sm:$0xff]
        %v2631 = vld [vmem:[#allocation28 + $0x10] sm:$0xff]
        %v2632 = vld [vmem:[#allocation28 + $0x18] sm:$0xff]
        %v2633 = vld [vmem:[#allocation28 + $0x20] sm:$0xff]
        %v2634 = vld [vmem:[#allocation28 + $0x28] sm:$0xff]
        %v2635 = vld [vmem:[#allocation28 + $0x30] sm:$0xff]
        %v2636 = vld [vmem:[#allocation28 + $0x38] sm:$0xff]
        %v2637 = vld [vmem:[#allocation28 + $0x40] sm:$0xff]
        %v2638 = vld [vmem:[#allocation28 + $0x48] sm:$0xff]
        %v2639 = vld [vmem:[#allocation28 + $0x50] sm:$0xff]
        %v2640 = vld [vmem:[#allocation28 + $0x58] sm:$0xff]
        %v2641 = vld [vmem:[#allocation28 + $0x60] sm:$0xff]
        %v2642 = vld [vmem:[#allocation28 + $0x68] sm:$0xff]
        %v2643 = vld [vmem:[#allocation28 + $0x70] sm:$0xff]
        %v2644 = vld [vmem:[#allocation28 + $0x78] sm:$0xff]
        %v2645 = vld [vmem:[#allocation28 + $0x80] sm:$0xff]
        %v2646 = vld [vmem:[#allocation28 + $0x88] sm:$0xff]
        %v2647 = vld [vmem:[#allocation28 + $0x90] sm:$0xff]
        %v2648 = vld [vmem:[#allocation28 + $0x98] sm:$0xff]
        %v2649 = vld [vmem:[#allocation28 + $0xa0] sm:$0xff]
        %v2650 = vld [vmem:[#allocation28 + $0xa8] sm:$0xff]
        %v2651 = vld [vmem:[#allocation28 + $0xb0] sm:$0xff]
        %v2652 = vld [vmem:[#allocation28 + $0xb8] sm:$0xff]
        %v2653 = vld [vmem:[#allocation28 + $0xc0] sm:$0xff]
        %v2654 = vld [vmem:[#allocation28 + $0xc8] sm:$0xff]
        %v2655 = vld [vmem:[#allocation28 + $0xd0] sm:$0xff]
        %v2656 = vld [vmem:[#allocation28 + $0xd8] sm:$0xff]
        %v2657 = vld [vmem:[#allocation28 + $0xe0] sm:$0xff]
        %v2658 = vld [vmem:[#allocation28 + $0xe8] sm:$0xff]
        %v2659 = vld [vmem:[#allocation28 + $0xf0] sm:$0xff]
        %v2660 = vld [vmem:[#allocation28 + $0xf8] sm:$0xff]
        %v2661 = vpack.c.bf16 %v2628, %v2628
        %v2662 = vld [vmem:[%s67] sm:$0xff]
        %v2663 = vld [vmem:[%s67 + $0x8] sm:$0xff]
        %v2666 = vlaneseq
        %v2667 = vshrl.u32 %v2666, 7
        %v2668 = vsub.s32 0, %v2667
        %v2669 = vrot.slane %v2662, %v2668
        %v2670 = vlaneseq
        %v2671 = vshrl.u32 %v2670, 7
        %v2672 = vsub.s32 1, %v2671
        %v2673 = vrot.slane %v2662, %v2672
        %v2674 = vlaneseq
        %v2675 = vshrl.u32 %v2674, 7
        %v2676 = vsub.s32 2, %v2675
        %v2677 = vrot.slane %v2662, %v2676
        %v2678 = vlaneseq
        %v2679 = vshrl.u32 %v2678, 7
        %v2680 = vsub.s32 3, %v2679
        %v2681 = vrot.slane %v2662, %v2680
        %v2682 = vlaneseq
        %v2683 = vshrl.u32 %v2682, 7
        %v2684 = vsub.s32 4, %v2683
        %v2685 = vrot.slane %v2662, %v2684
        %v2686 = vlaneseq
        %v2687 = vshrl.u32 %v2686, 7
        %v2688 = vsub.s32 5, %v2687
        %v2689 = vrot.slane %v2662, %v2688
        %v2690 = vlaneseq
        %v2691 = vshrl.u32 %v2690, 7
        %v2692 = vsub.s32 6, %v2691
        %v2693 = vrot.slane %v2662, %v2692
        %v2694 = vlaneseq
        %v2695 = vshrl.u32 %v2694, 7
        %v2696 = vsub.s32 7, %v2695
        %v2697 = vrot.slane %v2662, %v2696
        %v2698 = vlaneseq
        %v2699 = vshrl.u32 %v2698, 7
        %v2700 = vsub.s32 0, %v2699
        %v2701 = vrot.slane %v2663, %v2700
        %v2702 = vlaneseq
        %v2703 = vshrl.u32 %v2702, 7
        %v2704 = vsub.s32 1, %v2703
        %v2705 = vrot.slane %v2663, %v2704
        %v2706 = vlaneseq
        %v2707 = vshrl.u32 %v2706, 7
        %v2708 = vsub.s32 2, %v2707
        %v2709 = vrot.slane %v2663, %v2708
        %v2710 = vlaneseq
        %v2711 = vshrl.u32 %v2710, 7
        %v2712 = vsub.s32 3, %v2711
        %v2713 = vrot.slane %v2663, %v2712
        %v2714 = vlaneseq
        %v2715 = vshrl.u32 %v2714, 7
        %v2716 = vsub.s32 4, %v2715
        %v2717 = vrot.slane %v2663, %v2716
        %v2718 = vlaneseq
        %v2719 = vshrl.u32 %v2718, 7
        %v2720 = vsub.s32 5, %v2719
        %v2721 = vrot.slane %v2663, %v2720
        %v2722 = vlaneseq
        %v2723 = vshrl.u32 %v2722, 7
        %v2724 = vsub.s32 6, %v2723
        %v2725 = vrot.slane %v2663, %v2724
        %v2726 = vlaneseq
        %v2727 = vshrl.u32 %v2726, 7
        %v2728 = vsub.s32 7, %v2727
        %v2729 = vrot.slane %v2663, %v2728
        %v2778 = vunpack.c.l.b16 %v2629
        %v2779 = vunpack.c.h.b16 %v2629
        %v2780 = vunpack.c.l.b16 %v2630
        %v2781 = vunpack.c.h.b16 %v2630
        %v2782 = vunpack.c.l.b16 %v2631
        %v2783 = vunpack.c.h.b16 %v2631
        %v2784 = vunpack.c.l.b16 %v2632
        %v2785 = vunpack.c.h.b16 %v2632
        %v2786 = vunpack.c.l.b16 %v2633
        %v2787 = vunpack.c.h.b16 %v2633
        %v2788 = vunpack.c.l.b16 %v2634
        %v2789 = vunpack.c.h.b16 %v2634
        %v2790 = vunpack.c.l.b16 %v2635
        %v2791 = vunpack.c.h.b16 %v2635
        %v2792 = vunpack.c.l.b16 %v2636
        %v2793 = vunpack.c.h.b16 %v2636
        %v2794 = vunpack.c.l.b16 %v2637
        %v2795 = vunpack.c.h.b16 %v2637
        %v2796 = vunpack.c.l.b16 %v2638
        %v2797 = vunpack.c.h.b16 %v2638
        %v2798 = vunpack.c.l.b16 %v2639
        %v2799 = vunpack.c.h.b16 %v2639
        %v2800 = vunpack.c.l.b16 %v2640
        %v2801 = vunpack.c.h.b16 %v2640
        %v2802 = vunpack.c.l.b16 %v2641
        %v2803 = vunpack.c.h.b16 %v2641
        %v2804 = vunpack.c.l.b16 %v2642
        %v2805 = vunpack.c.h.b16 %v2642
        %v2806 = vunpack.c.l.b16 %v2643
        %v2807 = vunpack.c.h.b16 %v2643
        %v2808 = vunpack.c.l.b16 %v2644
        %v2809 = vunpack.c.h.b16 %v2644
        %v2810 = vunpack.c.l.b16 %v2645
        %v2811 = vunpack.c.h.b16 %v2645
        %v2812 = vunpack.c.l.b16 %v2646
        %v2813 = vunpack.c.h.b16 %v2646
        %v2814 = vunpack.c.l.b16 %v2647
        %v2815 = vunpack.c.h.b16 %v2647
        %v2816 = vunpack.c.l.b16 %v2648
        %v2817 = vunpack.c.h.b16 %v2648
        %v2818 = vunpack.c.l.b16 %v2649
        %v2819 = vunpack.c.h.b16 %v2649
        %v2820 = vunpack.c.l.b16 %v2650
        %v2821 = vunpack.c.h.b16 %v2650
        %v2822 = vunpack.c.l.b16 %v2651
        %v2823 = vunpack.c.h.b16 %v2651
        %v2824 = vunpack.c.l.b16 %v2652
        %v2825 = vunpack.c.h.b16 %v2652
        %v2826 = vunpack.c.l.b16 %v2653
        %v2827 = vunpack.c.h.b16 %v2653
        %v2828 = vunpack.c.l.b16 %v2654
        %v2829 = vunpack.c.h.b16 %v2654
        %v2830 = vunpack.c.l.b16 %v2655
        %v2831 = vunpack.c.h.b16 %v2655
        %v2832 = vunpack.c.l.b16 %v2656
        %v2833 = vunpack.c.h.b16 %v2656
        %v2834 = vunpack.c.l.b16 %v2657
        %v2835 = vunpack.c.h.b16 %v2657
        %v2836 = vunpack.c.l.b16 %v2658
        %v2837 = vunpack.c.h.b16 %v2658
        %v2838 = vunpack.c.l.b16 %v2659
        %v2839 = vunpack.c.h.b16 %v2659
        %v2840 = vunpack.c.l.b16 %v2660
        %v2841 = vunpack.c.h.b16 %v2660
        %v2842 = vpack.c.b16 %v2794, %v2778
        %v2843 = vpack.c.b16 %v2795, %v2779
        %v2844 = vpack.c.b16 %v2796, %v2780
        %v2845 = vpack.c.b16 %v2797, %v2781
        %v2846 = vpack.c.b16 %v2798, %v2782
        %v2847 = vpack.c.b16 %v2799, %v2783
        %v2848 = vpack.c.b16 %v2800, %v2784
        %v2849 = vpack.c.b16 %v2801, %v2785
        %v2850 = vpack.c.b16 %v2802, %v2786
        %v2851 = vpack.c.b16 %v2803, %v2787
        %v2852 = vpack.c.b16 %v2804, %v2788
        %v2853 = vpack.c.b16 %v2805, %v2789
        %v2854 = vpack.c.b16 %v2806, %v2790
        %v2855 = vpack.c.b16 %v2807, %v2791
        %v2856 = vpack.c.b16 %v2808, %v2792
        %v2857 = vpack.c.b16 %v2809, %v2793
        %v2858 = vpack.c.b16 %v2826, %v2810
        %v2859 = vpack.c.b16 %v2827, %v2811
        %v2860 = vpack.c.b16 %v2828, %v2812
        %v2861 = vpack.c.b16 %v2829, %v2813
        %v2862 = vpack.c.b16 %v2830, %v2814
        %v2863 = vpack.c.b16 %v2831, %v2815
        %v2864 = vpack.c.b16 %v2832, %v2816
        %v2865 = vpack.c.b16 %v2833, %v2817
        %v2866 = vpack.c.b16 %v2834, %v2818
        %v2867 = vpack.c.b16 %v2835, %v2819
        %v2868 = vpack.c.b16 %v2836, %v2820
        %v2869 = vpack.c.b16 %v2837, %v2821
        %v2870 = vpack.c.b16 %v2838, %v2822
        %v2871 = vpack.c.b16 %v2839, %v2823
        %v2872 = vpack.c.b16 %v2840, %v2824
        %v2873 = vpack.c.b16 %v2841, %v2825
        %v2907 = vsel %vm2042, %v2661, 0
        %2909 = vmatprep.subr.bf16.mxu0 0
        %2910 = vmatpush1.bf16.msra.mxu0 0
        %2911 = vmatprep.subr.bf16.mxu0 0
        %2912 = vmatpush1.bf16.msra.mxu0 0
        %2913 = vmatprep.subr.bf16.mxu0 0
        %2914 = vmatpush1.bf16.msra.mxu0 0
        %2915 = vmatprep.subr.bf16.mxu0 0
        %2916 = vmatpush1.bf16.msra.mxu0 0
        %2917 = vmatprep.subr.bf16.mxu0 0
        %2918 = vmatpush1.bf16.msra.mxu0 0
        %2919 = vmatprep.subr.bf16.mxu0 0
        %2920 = vmatpush1.bf16.msra.mxu0 0
        %2921 = vmatprep.subr.bf16.mxu0 %v2859
        %2922 = vmatpush1.bf16.msra.mxu0 %v2858
        %2923 = vmatprep.subr.bf16.mxu0 %v2843
        %2924 = vmatpush1.bf16.msra.mxu0 %v2842
        %2925 = vmatprep.subr.bf16.mxu0 0
        %2926 = vmatpush2.bf16.msra.mxu0 0
        %2927 = vmatprep.subr.bf16.mxu0 0
        %2928 = vmatpush2.bf16.msra.mxu0 0
        %2929 = vmatprep.subr.bf16.mxu0 0
        %2930 = vmatpush2.bf16.msra.mxu0 0
        %2931 = vmatprep.subr.bf16.mxu0 0
        %2932 = vmatpush2.bf16.msra.mxu0 0
        %2933 = vmatprep.subr.bf16.mxu0 0
        %2934 = vmatpush2.bf16.msra.mxu0 0
        %2935 = vmatprep.subr.bf16.mxu0 0
        %2936 = vmatpush2.bf16.msra.mxu0 0
        %2937 = vmatprep.subr.bf16.mxu0 0
        %2938 = vmatpush2.bf16.msra.mxu0 0
        %2939 = vmatprep.subr.bf16.mxu0 0
        %2940 = vmatpush2.bf16.msra.mxu0 0
        %2941 = vmatprep.mubr.bf16.mxu0 0
        %2942 = vmatmul.mubr.bf16.gmra.mxu0 %v2907
        %v2943 = vpop.f32.mrf.mxu0
        %v2944 = vadd.f32 %v2669, %v2943
        %v2945 = vpop.f32.mrf.mxu0
        %v2946 = vadd.f32 %v2673, %v2945
        %v2947 = vpop.f32.mrf.mxu0
        %v2948 = vpop.f32.mrf.mxu0
        %2949 = vdwg.mxu0
        %2950 = vmatprep.subr.bf16.mxu0 0
        %2951 = vmatpush1.bf16.msra.mxu0 0
        %2952 = vmatprep.subr.bf16.mxu0 0
        %2953 = vmatpush1.bf16.msra.mxu0 0
        %2954 = vmatprep.subr.bf16.mxu0 0
        %2955 = vmatpush1.bf16.msra.mxu0 0
        %2956 = vmatprep.subr.bf16.mxu0 0
        %2957 = vmatpush1.bf16.msra.mxu0 0
        %2958 = vmatprep.subr.bf16.mxu0 0
        %2959 = vmatpush1.bf16.msra.mxu0 0
        %2960 = vmatprep.subr.bf16.mxu0 0
        %2961 = vmatpush1.bf16.msra.mxu0 0
        %2962 = vmatprep.subr.bf16.mxu0 %v2861
        %2963 = vmatpush1.bf16.msra.mxu0 %v2860
        %2964 = vmatprep.subr.bf16.mxu0 %v2845
        %2965 = vmatpush1.bf16.msra.mxu0 %v2844
        %2966 = vmatprep.subr.bf16.mxu0 0
        %2967 = vmatpush2.bf16.msra.mxu0 0
        %2968 = vmatprep.subr.bf16.mxu0 0
        %2969 = vmatpush2.bf16.msra.mxu0 0
        %2970 = vmatprep.subr.bf16.mxu0 0
        %2971 = vmatpush2.bf16.msra.mxu0 0
        %2972 = vmatprep.subr.bf16.mxu0 0
        %2973 = vmatpush2.bf16.msra.mxu0 0
        %2974 = vmatprep.subr.bf16.mxu0 0
        %2975 = vmatpush2.bf16.msra.mxu0 0
        %2976 = vmatprep.subr.bf16.mxu0 0
        %2977 = vmatpush2.bf16.msra.mxu0 0
        %2978 = vmatprep.subr.bf16.mxu0 0
        %2979 = vmatpush2.bf16.msra.mxu0 0
        %2980 = vmatprep.subr.bf16.mxu0 0
        %2981 = vmatpush2.bf16.msra.mxu0 0
        %2982 = vmatprep.mubr.bf16.mxu0 0
        %2983 = vmatmul.mubr.bf16.gmra.mxu0 %v2907
        %v2984 = vpop.f32.mrf.mxu0
        %v2985 = vadd.f32 %v2677, %v2984
        %v2986 = vpop.f32.mrf.mxu0
        %v2987 = vadd.f32 %v2681, %v2986
        %v2988 = vpop.f32.mrf.mxu0
        %v2989 = vpop.f32.mrf.mxu0
        %2990 = vdwg.mxu0
        %2991 = vmatprep.subr.bf16.mxu0 0
        %2992 = vmatpush1.bf16.msra.mxu0 0
        %2993 = vmatprep.subr.bf16.mxu0 0
        %2994 = vmatpush1.bf16.msra.mxu0 0
        %2995 = vmatprep.subr.bf16.mxu0 0
        %2996 = vmatpush1.bf16.msra.mxu0 0
        %2997 = vmatprep.subr.bf16.mxu0 0
        %2998 = vmatpush1.bf16.msra.mxu0 0
        %2999 = vmatprep.subr.bf16.mxu0 0
        %3000 = vmatpush1.bf16.msra.mxu0 0
        %3001 = vmatprep.subr.bf16.mxu0 0
        %3002 = vmatpush1.bf16.msra.mxu0 0
        %3003 = vmatprep.subr.bf16.mxu0 %v2863
        %3004 = vmatpush1.bf16.msra.mxu0 %v2862
        %3005 = vmatprep.subr.bf16.mxu0 %v2847
        %3006 = vmatpush1.bf16.msra.mxu0 %v2846
        %3007 = vmatprep.subr.bf16.mxu0 0
        %3008 = vmatpush2.bf16.msra.mxu0 0
        %3009 = vmatprep.subr.bf16.mxu0 0
        %3010 = vmatpush2.bf16.msra.mxu0 0
        %3011 = vmatprep.subr.bf16.mxu0 0
        %3012 = vmatpush2.bf16.msra.mxu0 0
        %3013 = vmatprep.subr.bf16.mxu0 0
        %3014 = vmatpush2.bf16.msra.mxu0 0
        %3015 = vmatprep.subr.bf16.mxu0 0
        %3016 = vmatpush2.bf16.msra.mxu0 0
        %3017 = vmatprep.subr.bf16.mxu0 0
        %3018 = vmatpush2.bf16.msra.mxu0 0
        %3019 = vmatprep.subr.bf16.mxu0 0
        %3020 = vmatpush2.bf16.msra.mxu0 0
        %3021 = vmatprep.subr.bf16.mxu0 0
        %3022 = vmatpush2.bf16.msra.mxu0 0
        %3023 = vmatprep.mubr.bf16.mxu0 0
        %3024 = vmatmul.mubr.bf16.gmra.mxu0 %v2907
        %v3025 = vpop.f32.mrf.mxu0
        %v3026 = vadd.f32 %v2685, %v3025
        %v3027 = vpop.f32.mrf.mxu0
        %v3028 = vadd.f32 %v2689, %v3027
        %v3029 = vpop.f32.mrf.mxu0
        %v3030 = vpop.f32.mrf.mxu0
        %3031 = vdwg.mxu0
        %3032 = vmatprep.subr.bf16.mxu0 0
        %3033 = vmatpush1.bf16.msra.mxu0 0
        %3034 = vmatprep.subr.bf16.mxu0 0
        %3035 = vmatpush1.bf16.msra.mxu0 0
        %3036 = vmatprep.subr.bf16.mxu0 0
        %3037 = vmatpush1.bf16.msra.mxu0 0
        %3038 = vmatprep.subr.bf16.mxu0 0
        %3039 = vmatpush1.bf16.msra.mxu0 0
        %3040 = vmatprep.subr.bf16.mxu0 0
        %3041 = vmatpush1.bf16.msra.mxu0 0
        %3042 = vmatprep.subr.bf16.mxu0 0
        %3043 = vmatpush1.bf16.msra.mxu0 0
        %3044 = vmatprep.subr.bf16.mxu0 %v2865
        %3045 = vmatpush1.bf16.msra.mxu0 %v2864
        %3046 = vmatprep.subr.bf16.mxu0 %v2849
        %3047 = vmatpush1.bf16.msra.mxu0 %v2848
        %3048 = vmatprep.subr.bf16.mxu0 0
        %3049 = vmatpush2.bf16.msra.mxu0 0
        %3050 = vmatprep.subr.bf16.mxu0 0
        %3051 = vmatpush2.bf16.msra.mxu0 0
        %3052 = vmatprep.subr.bf16.mxu0 0
        %3053 = vmatpush2.bf16.msra.mxu0 0
        %3054 = vmatprep.subr.bf16.mxu0 0
        %3055 = vmatpush2.bf16.msra.mxu0 0
        %3056 = vmatprep.subr.bf16.mxu0 0
        %3057 = vmatpush2.bf16.msra.mxu0 0
        %3058 = vmatprep.subr.bf16.mxu0 0
        %3059 = vmatpush2.bf16.msra.mxu0 0
        %3060 = vmatprep.subr.bf16.mxu0 0
        %3061 = vmatpush2.bf16.msra.mxu0 0
        %3062 = vmatprep.subr.bf16.mxu0 0
        %3063 = vmatpush2.bf16.msra.mxu0 0
        %3064 = vmatprep.mubr.bf16.mxu0 0
        %3065 = vmatmul.mubr.bf16.gmra.mxu0 %v2907
        %v3066 = vpop.f32.mrf.mxu0
        %v3067 = vadd.f32 %v2693, %v3066
        %v3068 = vpop.f32.mrf.mxu0
        %v3069 = vadd.f32 %v2697, %v3068
        %v3070 = vpop.f32.mrf.mxu0
        %v3071 = vpop.f32.mrf.mxu0
        %3072 = vdwg.mxu0
        %3073 = vmatprep.subr.bf16.mxu0 0
        %3074 = vmatpush1.bf16.msra.mxu0 0
        %3075 = vmatprep.subr.bf16.mxu0 0
        %3076 = vmatpush1.bf16.msra.mxu0 0
        %3077 = vmatprep.subr.bf16.mxu0 0
        %3078 = vmatpush1.bf16.msra.mxu0 0
        %3079 = vmatprep.subr.bf16.mxu0 0
        %3080 = vmatpush1.bf16.msra.mxu0 0
        %3081 = vmatprep.subr.bf16.mxu0 0
        %3082 = vmatpush1.bf16.msra.mxu0 0
        %3083 = vmatprep.subr.bf16.mxu0 0
        %3084 = vmatpush1.bf16.msra.mxu0 0
        %3085 = vmatprep.subr.bf16.mxu0 %v2867
        %3086 = vmatpush1.bf16.msra.mxu0 %v2866
        %3087 = vmatprep.subr.bf16.mxu0 %v2851
        %3088 = vmatpush1.bf16.msra.mxu0 %v2850
        %3089 = vmatprep.subr.bf16.mxu0 0
        %3090 = vmatpush2.bf16.msra.mxu0 0
        %3091 = vmatprep.subr.bf16.mxu0 0
        %3092 = vmatpush2.bf16.msra.mxu0 0
        %3093 = vmatprep.subr.bf16.mxu0 0
        %3094 = vmatpush2.bf16.msra.mxu0 0
        %3095 = vmatprep.subr.bf16.mxu0 0
        %3096 = vmatpush2.bf16.msra.mxu0 0
        %3097 = vmatprep.subr.bf16.mxu0 0
        %3098 = vmatpush2.bf16.msra.mxu0 0
        %3099 = vmatprep.subr.bf16.mxu0 0
        %3100 = vmatpush2.bf16.msra.mxu0 0
        %3101 = vmatprep.subr.bf16.mxu0 0
        %3102 = vmatpush2.bf16.msra.mxu0 0
        %3103 = vmatprep.subr.bf16.mxu0 0
        %3104 = vmatpush2.bf16.msra.mxu0 0
        %3105 = vmatprep.mubr.bf16.mxu0 0
        %3106 = vmatmul.mubr.bf16.gmra.mxu0 %v2907
        %v3107 = vpop.f32.mrf.mxu0
        %v3108 = vadd.f32 %v2701, %v3107
        %v3109 = vpop.f32.mrf.mxu0
        %v3110 = vadd.f32 %v2705, %v3109
        %v3111 = vpop.f32.mrf.mxu0
        %v3112 = vpop.f32.mrf.mxu0
        %3113 = vdwg.mxu0
        %3114 = vmatprep.subr.bf16.mxu0 0
        %3115 = vmatpush1.bf16.msra.mxu0 0
        %3116 = vmatprep.subr.bf16.mxu0 0
        %3117 = vmatpush1.bf16.msra.mxu0 0
        %3118 = vmatprep.subr.bf16.mxu0 0
        %3119 = vmatpush1.bf16.msra.mxu0 0
        %3120 = vmatprep.subr.bf16.mxu0 0
        %3121 = vmatpush1.bf16.msra.mxu0 0
        %3122 = vmatprep.subr.bf16.mxu0 0
        %3123 = vmatpush1.bf16.msra.mxu0 0
        %3124 = vmatprep.subr.bf16.mxu0 0
        %3125 = vmatpush1.bf16.msra.mxu0 0
        %3126 = vmatprep.subr.bf16.mxu0 %v2869
        %3127 = vmatpush1.bf16.msra.mxu0 %v2868
        %3128 = vmatprep.subr.bf16.mxu0 %v2853
        %3129 = vmatpush1.bf16.msra.mxu0 %v2852
        %3130 = vmatprep.subr.bf16.mxu0 0
        %3131 = vmatpush2.bf16.msra.mxu0 0
        %3132 = vmatprep.subr.bf16.mxu0 0
        %3133 = vmatpush2.bf16.msra.mxu0 0
        %3134 = vmatprep.subr.bf16.mxu0 0
        %3135 = vmatpush2.bf16.msra.mxu0 0
        %3136 = vmatprep.subr.bf16.mxu0 0
        %3137 = vmatpush2.bf16.msra.mxu0 0
        %3138 = vmatprep.subr.bf16.mxu0 0
        %3139 = vmatpush2.bf16.msra.mxu0 0
        %3140 = vmatprep.subr.bf16.mxu0 0
        %3141 = vmatpush2.bf16.msra.mxu0 0
        %3142 = vmatprep.subr.bf16.mxu0 0
        %3143 = vmatpush2.bf16.msra.mxu0 0
        %3144 = vmatprep.subr.bf16.mxu0 0
        %3145 = vmatpush2.bf16.msra.mxu0 0
        %3146 = vmatprep.mubr.bf16.mxu0 0
        %3147 = vmatmul.mubr.bf16.gmra.mxu0 %v2907
        %v3148 = vpop.f32.mrf.mxu0
        %v3149 = vadd.f32 %v2709, %v3148
        %v3150 = vpop.f32.mrf.mxu0
        %v3151 = vadd.f32 %v2713, %v3150
        %v3152 = vpop.f32.mrf.mxu0
        %v3153 = vpop.f32.mrf.mxu0
        %3154 = vdwg.mxu0
        %3155 = vmatprep.subr.bf16.mxu0 0
        %3156 = vmatpush1.bf16.msra.mxu0 0
        %3157 = vmatprep.subr.bf16.mxu0 0
        %3158 = vmatpush1.bf16.msra.mxu0 0
        %3159 = vmatprep.subr.bf16.mxu0 0
        %3160 = vmatpush1.bf16.msra.mxu0 0
        %3161 = vmatprep.subr.bf16.mxu0 0
        %3162 = vmatpush1.bf16.msra.mxu0 0
        %3163 = vmatprep.subr.bf16.mxu0 0
        %3164 = vmatpush1.bf16.msra.mxu0 0
        %3165 = vmatprep.subr.bf16.mxu0 0
        %3166 = vmatpush1.bf16.msra.mxu0 0
        %3167 = vmatprep.subr.bf16.mxu0 %v2871
        %3168 = vmatpush1.bf16.msra.mxu0 %v2870
        %3169 = vmatprep.subr.bf16.mxu0 %v2855
        %3170 = vmatpush1.bf16.msra.mxu0 %v2854
        %3171 = vmatprep.subr.bf16.mxu0 0
        %3172 = vmatpush2.bf16.msra.mxu0 0
        %3173 = vmatprep.subr.bf16.mxu0 0
        %3174 = vmatpush2.bf16.msra.mxu0 0
        %3175 = vmatprep.subr.bf16.mxu0 0
        %3176 = vmatpush2.bf16.msra.mxu0 0
        %3177 = vmatprep.subr.bf16.mxu0 0
        %3178 = vmatpush2.bf16.msra.mxu0 0
        %3179 = vmatprep.subr.bf16.mxu0 0
        %3180 = vmatpush2.bf16.msra.mxu0 0
        %3181 = vmatprep.subr.bf16.mxu0 0
        %3182 = vmatpush2.bf16.msra.mxu0 0
        %3183 = vmatprep.subr.bf16.mxu0 0
        %3184 = vmatpush2.bf16.msra.mxu0 0
        %3185 = vmatprep.subr.bf16.mxu0 0
        %3186 = vmatpush2.bf16.msra.mxu0 0
        %3187 = vmatprep.mubr.bf16.mxu0 0
        %3188 = vmatmul.mubr.bf16.gmra.mxu0 %v2907
        %v3189 = vpop.f32.mrf.mxu0
        %v3190 = vadd.f32 %v2717, %v3189
        %v3191 = vpop.f32.mrf.mxu0
        %v3192 = vadd.f32 %v2721, %v3191
        %v3193 = vpop.f32.mrf.mxu0
        %v3194 = vpop.f32.mrf.mxu0
        %3195 = vdwg.mxu0
        %3196 = vmatprep.subr.bf16.mxu0 0
        %3197 = vmatpush1.bf16.msra.mxu0 0
        %3198 = vmatprep.subr.bf16.mxu0 0
        %3199 = vmatpush1.bf16.msra.mxu0 0
        %3200 = vmatprep.subr.bf16.mxu0 0
        %3201 = vmatpush1.bf16.msra.mxu0 0
        %3202 = vmatprep.subr.bf16.mxu0 0
        %3203 = vmatpush1.bf16.msra.mxu0 0
        %3204 = vmatprep.subr.bf16.mxu0 0
        %3205 = vmatpush1.bf16.msra.mxu0 0
        %3206 = vmatprep.subr.bf16.mxu0 0
        %3207 = vmatpush1.bf16.msra.mxu0 0
        %3208 = vmatprep.subr.bf16.mxu0 %v2873
        %3209 = vmatpush1.bf16.msra.mxu0 %v2872
        %3210 = vmatprep.subr.bf16.mxu0 %v2857
        %3211 = vmatpush1.bf16.msra.mxu0 %v2856
        %3212 = vmatprep.subr.bf16.mxu0 0
        %3213 = vmatpush2.bf16.msra.mxu0 0
        %3214 = vmatprep.subr.bf16.mxu0 0
        %3215 = vmatpush2.bf16.msra.mxu0 0
        %3216 = vmatprep.subr.bf16.mxu0 0
        %3217 = vmatpush2.bf16.msra.mxu0 0
        %3218 = vmatprep.subr.bf16.mxu0 0
        %3219 = vmatpush2.bf16.msra.mxu0 0
        %3220 = vmatprep.subr.bf16.mxu0 0
        %3221 = vmatpush2.bf16.msra.mxu0 0
        %3222 = vmatprep.subr.bf16.mxu0 0
        %3223 = vmatpush2.bf16.msra.mxu0 0
        %3224 = vmatprep.subr.bf16.mxu0 0
        %3225 = vmatpush2.bf16.msra.mxu0 0
        %3226 = vmatprep.subr.bf16.mxu0 0
        %3227 = vmatpush2.bf16.msra.mxu0 0
        %3228 = vmatprep.mubr.bf16.mxu0 0
        %3229 = vmatmul.mubr.bf16.gmra.mxu0 %v2907
        %v3230 = vpop.f32.mrf.mxu0
        %v3231 = vadd.f32 %v2725, %v3230
        %v3232 = vpop.f32.mrf.mxu0
        %v3233 = vadd.f32 %v2729, %v3232
        %v3234 = vpop.f32.mrf.mxu0
        %v3235 = vpop.f32.mrf.mxu0
        %3236 = vdwg.mxu0
        %v3237 = vmax.f32 %v2944, 0.0
        %v3238 = vmax.f32 %v2946, 0.0
        %v3239 = vmax.f32 %v2985, 0.0
        %v3240 = vmax.f32 %v2987, 0.0
        %v3241 = vmax.f32 %v3026, 0.0
        %v3242 = vmax.f32 %v3028, 0.0
        %v3243 = vmax.f32 %v3067, 0.0
        %v3244 = vmax.f32 %v3069, 0.0
        %v3245 = vmax.f32 %v3108, 0.0
        %v3246 = vmax.f32 %v3110, 0.0
        %v3247 = vmax.f32 %v3149, 0.0
        %v3248 = vmax.f32 %v3151, 0.0
        %v3249 = vmax.f32 %v3190, 0.0
        %v3250 = vmax.f32 %v3192, 0.0
        %v3251 = vmax.f32 %v3231, 0.0
        %v3252 = vmax.f32 %v3233, 0.0
        %v3253 = vld [vmem:[#allocation30] sm:$0xf]
        %v3254 = vld [vmem:[#allocation30 + $0x4] sm:$0xf]
        %v3255 = vld [vmem:[#allocation30 + $0x8] sm:$0xf]
        %v3256 = vld [vmem:[#allocation30 + $0xc] sm:$0xf]
        %v3257 = vld [vmem:[#allocation30 + $0x10] sm:$0xf]
        %v3258 = vld [vmem:[#allocation30 + $0x14] sm:$0xf]
        %v3259 = vld [vmem:[#allocation30 + $0x18] sm:$0xf]
        %v3260 = vld [vmem:[#allocation30 + $0x1c] sm:$0xf]
        %v3261 = vld [vmem:[#allocation30 + $0x20] sm:$0xf]
        %v3262 = vld [vmem:[#allocation30 + $0x24] sm:$0xf]
        %v3263 = vld [vmem:[#allocation30 + $0x28] sm:$0xf]
        %v3264 = vld [vmem:[#allocation30 + $0x2c] sm:$0xf]
        %v3265 = vld [vmem:[#allocation30 + $0x30] sm:$0xf]
        %v3266 = vld [vmem:[#allocation30 + $0x34] sm:$0xf]
        %v3267 = vld [vmem:[#allocation30 + $0x38] sm:$0xf]
        %v3268 = vld [vmem:[#allocation30 + $0x3c] sm:$0xf]
        %v3269 = vld [vmem:[#allocation30 + $0x40] sm:$0xf]
        %v3270 = vld [vmem:[#allocation30 + $0x44] sm:$0xf]
        %v3271 = vld [vmem:[#allocation30 + $0x48] sm:$0xf]
        %v3272 = vld [vmem:[#allocation30 + $0x4c] sm:$0xf]
        %v3273 = vld [vmem:[#allocation30 + $0x50] sm:$0xf]
        %v3274 = vld [vmem:[#allocation30 + $0x54] sm:$0xf]
        %v3275 = vld [vmem:[#allocation30 + $0x58] sm:$0xf]
        %v3276 = vld [vmem:[#allocation30 + $0x5c] sm:$0xf]
        %v3277 = vld [vmem:[#allocation30 + $0x60] sm:$0xf]
        %v3278 = vld [vmem:[#allocation30 + $0x64] sm:$0xf]
        %v3279 = vld [vmem:[#allocation30 + $0x68] sm:$0xf]
        %v3280 = vld [vmem:[#allocation30 + $0x6c] sm:$0xf]
        %v3281 = vld [vmem:[#allocation30 + $0x70] sm:$0xf]
        %v3282 = vld [vmem:[#allocation30 + $0x74] sm:$0xf]
        %v3283 = vld [vmem:[#allocation30 + $0x78] sm:$0xf]
        %v3284 = vld [vmem:[#allocation30 + $0x7c] sm:$0xf]
        %v3285 = vld [vmem:[#allocation30 + $0x80] sm:$0xf]
        %v3286 = vld [vmem:[#allocation30 + $0x84] sm:$0xf]
        %v3287 = vld [vmem:[#allocation30 + $0x88] sm:$0xf]
        %v3288 = vld [vmem:[#allocation30 + $0x8c] sm:$0xf]
        %v3289 = vld [vmem:[#allocation30 + $0x90] sm:$0xf]
        %v3290 = vld [vmem:[#allocation30 + $0x94] sm:$0xf]
        %v3291 = vld [vmem:[#allocation30 + $0x98] sm:$0xf]
        %v3292 = vld [vmem:[#allocation30 + $0x9c] sm:$0xf]
        %v3293 = vld [vmem:[#allocation30 + $0xa0] sm:$0xf]
        %v3294 = vld [vmem:[#allocation30 + $0xa4] sm:$0xf]
        %v3295 = vld [vmem:[#allocation30 + $0xa8] sm:$0xf]
        %v3296 = vld [vmem:[#allocation30 + $0xac] sm:$0xf]
        %v3297 = vld [vmem:[#allocation30 + $0xb0] sm:$0xf]
        %v3298 = vld [vmem:[#allocation30 + $0xb4] sm:$0xf]
        %v3299 = vld [vmem:[#allocation30 + $0xb8] sm:$0xf]
        %v3300 = vld [vmem:[#allocation30 + $0xbc] sm:$0xf]
        %v3301 = vld [vmem:[#allocation30 + $0xc0] sm:$0xf]
        %v3302 = vld [vmem:[#allocation30 + $0xc4] sm:$0xf]
        %v3303 = vld [vmem:[#allocation30 + $0xc8] sm:$0xf]
        %v3304 = vld [vmem:[#allocation30 + $0xcc] sm:$0xf]
        %v3305 = vld [vmem:[#allocation30 + $0xd0] sm:$0xf]
        %v3306 = vld [vmem:[#allocation30 + $0xd4] sm:$0xf]
        %v3307 = vld [vmem:[#allocation30 + $0xd8] sm:$0xf]
        %v3308 = vld [vmem:[#allocation30 + $0xdc] sm:$0xf]
        %v3309 = vld [vmem:[#allocation30 + $0xe0] sm:$0xf]
        %v3310 = vld [vmem:[#allocation30 + $0xe4] sm:$0xf]
        %v3311 = vld [vmem:[#allocation30 + $0xe8] sm:$0xf]
        %v3312 = vld [vmem:[#allocation30 + $0xec] sm:$0xf]
        %v3313 = vld [vmem:[#allocation30 + $0xf0] sm:$0xf]
        %v3314 = vld [vmem:[#allocation30 + $0xf4] sm:$0xf]
        %v3315 = vld [vmem:[#allocation30 + $0xf8] sm:$0xf]
        %v3316 = vld [vmem:[#allocation30 + $0xfc] sm:$0xf]
        %v3317 = vld [vmem:[#allocation30 + $0x100] sm:$0xf]
        %v3318 = vld [vmem:[#allocation30 + $0x104] sm:$0xf]
        %v3319 = vld [vmem:[#allocation30 + $0x108] sm:$0xf]
        %v3320 = vld [vmem:[#allocation30 + $0x10c] sm:$0xf]
        %v3321 = vld [vmem:[#allocation30 + $0x110] sm:$0xf]
        %v3322 = vld [vmem:[#allocation30 + $0x114] sm:$0xf]
        %v3323 = vld [vmem:[#allocation30 + $0x118] sm:$0xf]
        %v3324 = vld [vmem:[#allocation30 + $0x11c] sm:$0xf]
        %v3325 = vld [vmem:[#allocation30 + $0x120] sm:$0xf]
        %v3326 = vld [vmem:[#allocation30 + $0x124] sm:$0xf]
        %v3327 = vld [vmem:[#allocation30 + $0x128] sm:$0xf]
        %v3328 = vld [vmem:[#allocation30 + $0x12c] sm:$0xf]
        %v3329 = vld [vmem:[#allocation30 + $0x130] sm:$0xf]
        %v3330 = vld [vmem:[#allocation30 + $0x134] sm:$0xf]
        %v3331 = vld [vmem:[#allocation30 + $0x138] sm:$0xf]
        %v3332 = vld [vmem:[#allocation30 + $0x13c] sm:$0xf]
        %v3333 = vld [vmem:[#allocation30 + $0x140] sm:$0xf]
        %v3334 = vld [vmem:[#allocation30 + $0x144] sm:$0xf]
        %v3335 = vld [vmem:[#allocation30 + $0x148] sm:$0xf]
        %v3336 = vld [vmem:[#allocation30 + $0x14c] sm:$0xf]
        %v3337 = vld [vmem:[#allocation30 + $0x150] sm:$0xf]
        %v3338 = vld [vmem:[#allocation30 + $0x154] sm:$0xf]
        %v3339 = vld [vmem:[#allocation30 + $0x158] sm:$0xf]
        %v3340 = vld [vmem:[#allocation30 + $0x15c] sm:$0xf]
        %v3341 = vld [vmem:[#allocation30 + $0x160] sm:$0xf]
        %v3342 = vld [vmem:[#allocation30 + $0x164] sm:$0xf]
        %v3343 = vld [vmem:[#allocation30 + $0x168] sm:$0xf]
        %v3344 = vld [vmem:[#allocation30 + $0x16c] sm:$0xf]
        %v3345 = vld [vmem:[#allocation30 + $0x170] sm:$0xf]
        %v3346 = vld [vmem:[#allocation30 + $0x174] sm:$0xf]
        %v3347 = vld [vmem:[#allocation30 + $0x178] sm:$0xf]
        %v3348 = vld [vmem:[#allocation30 + $0x17c] sm:$0xf]
        %v3349 = vld [vmem:[#allocation30 + $0x180] sm:$0xf]
        %v3350 = vld [vmem:[#allocation30 + $0x184] sm:$0xf]
        %v3351 = vld [vmem:[#allocation30 + $0x188] sm:$0xf]
        %v3352 = vld [vmem:[#allocation30 + $0x18c] sm:$0xf]
        %v3353 = vld [vmem:[#allocation30 + $0x190] sm:$0xf]
        %v3354 = vld [vmem:[#allocation30 + $0x194] sm:$0xf]
        %v3355 = vld [vmem:[#allocation30 + $0x198] sm:$0xf]
        %v3356 = vld [vmem:[#allocation30 + $0x19c] sm:$0xf]
        %v3357 = vld [vmem:[#allocation30 + $0x1a0] sm:$0xf]
        %v3358 = vld [vmem:[#allocation30 + $0x1a4] sm:$0xf]
        %v3359 = vld [vmem:[#allocation30 + $0x1a8] sm:$0xf]
        %v3360 = vld [vmem:[#allocation30 + $0x1ac] sm:$0xf]
        %v3361 = vld [vmem:[#allocation30 + $0x1b0] sm:$0xf]
        %v3362 = vld [vmem:[#allocation30 + $0x1b4] sm:$0xf]
        %v3363 = vld [vmem:[#allocation30 + $0x1b8] sm:$0xf]
        %v3364 = vld [vmem:[#allocation30 + $0x1bc] sm:$0xf]
        %v3365 = vld [vmem:[#allocation30 + $0x1c0] sm:$0xf]
        %v3366 = vld [vmem:[#allocation30 + $0x1c4] sm:$0xf]
        %v3367 = vld [vmem:[#allocation30 + $0x1c8] sm:$0xf]
        %v3368 = vld [vmem:[#allocation30 + $0x1cc] sm:$0xf]
        %v3369 = vld [vmem:[#allocation30 + $0x1d0] sm:$0xf]
        %v3370 = vld [vmem:[#allocation30 + $0x1d4] sm:$0xf]
        %v3371 = vld [vmem:[#allocation30 + $0x1d8] sm:$0xf]
        %v3372 = vld [vmem:[#allocation30 + $0x1dc] sm:$0xf]
        %v3373 = vld [vmem:[#allocation30 + $0x1e0] sm:$0xf]
        %v3374 = vld [vmem:[#allocation30 + $0x1e4] sm:$0xf]
        %v3375 = vld [vmem:[#allocation30 + $0x1e8] sm:$0xf]
        %v3376 = vld [vmem:[#allocation30 + $0x1ec] sm:$0xf]
        %v3377 = vld [vmem:[#allocation30 + $0x1f0] sm:$0xf]
        %v3378 = vld [vmem:[#allocation30 + $0x1f4] sm:$0xf]
        %v3379 = vld [vmem:[#allocation30 + $0x1f8] sm:$0xf]
        %v3380 = vld [vmem:[#allocation30 + $0x1fc] sm:$0xf]
        %v3381 = vld [vmem:[#allocation30 + $0x200] sm:$0xf]
        %v3382 = vld [vmem:[#allocation30 + $0x204] sm:$0xf]
        %v3383 = vld [vmem:[#allocation30 + $0x208] sm:$0xf]
        %v3384 = vld [vmem:[#allocation30 + $0x20c] sm:$0xf]
        %v3385 = vld [vmem:[#allocation30 + $0x210] sm:$0xf]
        %v3386 = vld [vmem:[#allocation30 + $0x214] sm:$0xf]
        %v3387 = vld [vmem:[#allocation30 + $0x218] sm:$0xf]
        %v3388 = vld [vmem:[#allocation30 + $0x21c] sm:$0xf]
        %v3389 = vld [vmem:[#allocation30 + $0x220] sm:$0xf]
        %v3390 = vld [vmem:[#allocation30 + $0x224] sm:$0xf]
        %v3391 = vld [vmem:[#allocation30 + $0x228] sm:$0xf]
        %v3392 = vld [vmem:[#allocation30 + $0x22c] sm:$0xf]
        %v3393 = vld [vmem:[#allocation30 + $0x230] sm:$0xf]
        %v3394 = vld [vmem:[#allocation30 + $0x234] sm:$0xf]
        %v3395 = vld [vmem:[#allocation30 + $0x238] sm:$0xf]
        %v3396 = vld [vmem:[#allocation30 + $0x23c] sm:$0xf]
        %v3397 = vld [vmem:[#allocation30 + $0x240] sm:$0xf]
        %v3398 = vld [vmem:[#allocation30 + $0x244] sm:$0xf]
        %v3399 = vld [vmem:[#allocation30 + $0x248] sm:$0xf]
        %v3400 = vld [vmem:[#allocation30 + $0x24c] sm:$0xf]
        %v3401 = vld [vmem:[#allocation30 + $0x250] sm:$0xf]
        %v3402 = vld [vmem:[#allocation30 + $0x254] sm:$0xf]
        %v3403 = vld [vmem:[#allocation30 + $0x258] sm:$0xf]
        %v3404 = vld [vmem:[#allocation30 + $0x25c] sm:$0xf]
        %v3405 = vld [vmem:[#allocation30 + $0x260] sm:$0xf]
        %v3406 = vld [vmem:[#allocation30 + $0x264] sm:$0xf]
        %v3407 = vld [vmem:[#allocation30 + $0x268] sm:$0xf]
        %v3408 = vld [vmem:[#allocation30 + $0x26c] sm:$0xf]
        %v3409 = vld [vmem:[#allocation30 + $0x270] sm:$0xf]
        %v3410 = vld [vmem:[#allocation30 + $0x274] sm:$0xf]
        %v3411 = vld [vmem:[#allocation30 + $0x278] sm:$0xf]
        %v3412 = vld [vmem:[#allocation30 + $0x27c] sm:$0xf]
        %v3413 = vld [vmem:[#allocation30 + $0x280] sm:$0xf]
        %v3414 = vld [vmem:[#allocation30 + $0x284] sm:$0xf]
        %v3415 = vld [vmem:[#allocation30 + $0x288] sm:$0xf]
        %v3416 = vld [vmem:[#allocation30 + $0x28c] sm:$0xf]
        %v3417 = vld [vmem:[#allocation30 + $0x290] sm:$0xf]
        %v3418 = vld [vmem:[#allocation30 + $0x294] sm:$0xf]
        %v3419 = vld [vmem:[#allocation30 + $0x298] sm:$0xf]
        %v3420 = vld [vmem:[#allocation30 + $0x29c] sm:$0xf]
        %v3421 = vld [vmem:[#allocation30 + $0x2a0] sm:$0xf]
        %v3422 = vld [vmem:[#allocation30 + $0x2a4] sm:$0xf]
        %v3423 = vld [vmem:[#allocation30 + $0x2a8] sm:$0xf]
        %v3424 = vld [vmem:[#allocation30 + $0x2ac] sm:$0xf]
        %v3425 = vld [vmem:[#allocation30 + $0x2b0] sm:$0xf]
        %v3426 = vld [vmem:[#allocation30 + $0x2b4] sm:$0xf]
        %v3427 = vld [vmem:[#allocation30 + $0x2b8] sm:$0xf]
        %v3428 = vld [vmem:[#allocation30 + $0x2bc] sm:$0xf]
        %v3429 = vld [vmem:[#allocation30 + $0x2c0] sm:$0xf]
        %v3430 = vld [vmem:[#allocation30 + $0x2c4] sm:$0xf]
        %v3431 = vld [vmem:[#allocation30 + $0x2c8] sm:$0xf]
        %v3432 = vld [vmem:[#allocation30 + $0x2cc] sm:$0xf]
        %v3433 = vld [vmem:[#allocation30 + $0x2d0] sm:$0xf]
        %v3434 = vld [vmem:[#allocation30 + $0x2d4] sm:$0xf]
        %v3435 = vld [vmem:[#allocation30 + $0x2d8] sm:$0xf]
        %v3436 = vld [vmem:[#allocation30 + $0x2dc] sm:$0xf]
        %v3437 = vld [vmem:[#allocation30 + $0x2e0] sm:$0xf]
        %v3438 = vld [vmem:[#allocation30 + $0x2e4] sm:$0xf]
        %v3439 = vld [vmem:[#allocation30 + $0x2e8] sm:$0xf]
        %v3440 = vld [vmem:[#allocation30 + $0x2ec] sm:$0xf]
        %v3441 = vld [vmem:[#allocation30 + $0x2f0] sm:$0xf]
        %v3442 = vld [vmem:[#allocation30 + $0x2f4] sm:$0xf]
        %v3443 = vld [vmem:[#allocation30 + $0x2f8] sm:$0xf]
        %v3444 = vld [vmem:[#allocation30 + $0x2fc] sm:$0xf]
        %v3445 = vld [vmem:[#allocation30 + $0x300] sm:$0xf]
        %v3446 = vld [vmem:[#allocation30 + $0x304] sm:$0xf]
        %v3447 = vld [vmem:[#allocation30 + $0x308] sm:$0xf]
        %v3448 = vld [vmem:[#allocation30 + $0x30c] sm:$0xf]
        %v3449 = vld [vmem:[#allocation30 + $0x310] sm:$0xf]
        %v3450 = vld [vmem:[#allocation30 + $0x314] sm:$0xf]
        %v3451 = vld [vmem:[#allocation30 + $0x318] sm:$0xf]
        %v3452 = vld [vmem:[#allocation30 + $0x31c] sm:$0xf]
        %v3453 = vld [vmem:[#allocation30 + $0x320] sm:$0xf]
        %v3454 = vld [vmem:[#allocation30 + $0x324] sm:$0xf]
        %v3455 = vld [vmem:[#allocation30 + $0x328] sm:$0xf]
        %v3456 = vld [vmem:[#allocation30 + $0x32c] sm:$0xf]
        %v3457 = vld [vmem:[#allocation30 + $0x330] sm:$0xf]
        %v3458 = vld [vmem:[#allocation30 + $0x334] sm:$0xf]
        %v3459 = vld [vmem:[#allocation30 + $0x338] sm:$0xf]
        %v3460 = vld [vmem:[#allocation30 + $0x33c] sm:$0xf]
        %v3461 = vld [vmem:[#allocation30 + $0x340] sm:$0xf]
        %v3462 = vld [vmem:[#allocation30 + $0x344] sm:$0xf]
        %v3463 = vld [vmem:[#allocation30 + $0x348] sm:$0xf]
        %v3464 = vld [vmem:[#allocation30 + $0x34c] sm:$0xf]
        %v3465 = vld [vmem:[#allocation30 + $0x350] sm:$0xf]
        %v3466 = vld [vmem:[#allocation30 + $0x354] sm:$0xf]
        %v3467 = vld [vmem:[#allocation30 + $0x358] sm:$0xf]
        %v3468 = vld [vmem:[#allocation30 + $0x35c] sm:$0xf]
        %v3469 = vld [vmem:[#allocation30 + $0x360] sm:$0xf]
        %v3470 = vld [vmem:[#allocation30 + $0x364] sm:$0xf]
        %v3471 = vld [vmem:[#allocation30 + $0x368] sm:$0xf]
        %v3472 = vld [vmem:[#allocation30 + $0x36c] sm:$0xf]
        %v3473 = vld [vmem:[#allocation30 + $0x370] sm:$0xf]
        %v3474 = vld [vmem:[#allocation30 + $0x374] sm:$0xf]
        %v3475 = vld [vmem:[#allocation30 + $0x378] sm:$0xf]
        %v3476 = vld [vmem:[#allocation30 + $0x37c] sm:$0xf]
        %v3477 = vld [vmem:[#allocation30 + $0x380] sm:$0xf]
        %v3478 = vld [vmem:[#allocation30 + $0x384] sm:$0xf]
        %v3479 = vld [vmem:[#allocation30 + $0x388] sm:$0xf]
        %v3480 = vld [vmem:[#allocation30 + $0x38c] sm:$0xf]
        %v3481 = vld [vmem:[#allocation30 + $0x390] sm:$0xf]
        %v3482 = vld [vmem:[#allocation30 + $0x394] sm:$0xf]
        %v3483 = vld [vmem:[#allocation30 + $0x398] sm:$0xf]
        %v3484 = vld [vmem:[#allocation30 + $0x39c] sm:$0xf]
        %v3485 = vld [vmem:[#allocation30 + $0x3a0] sm:$0xf]
        %v3486 = vld [vmem:[#allocation30 + $0x3a4] sm:$0xf]
        %v3487 = vld [vmem:[#allocation30 + $0x3a8] sm:$0xf]
        %v3488 = vld [vmem:[#allocation30 + $0x3ac] sm:$0xf]
        %v3489 = vld [vmem:[#allocation30 + $0x3b0] sm:$0xf]
        %v3490 = vld [vmem:[#allocation30 + $0x3b4] sm:$0xf]
        %v3491 = vld [vmem:[#allocation30 + $0x3b8] sm:$0xf]
        %v3492 = vld [vmem:[#allocation30 + $0x3bc] sm:$0xf]
        %v3493 = vld [vmem:[#allocation30 + $0x3c0] sm:$0xf]
        %v3494 = vld [vmem:[#allocation30 + $0x3c4] sm:$0xf]
        %v3495 = vld [vmem:[#allocation30 + $0x3c8] sm:$0xf]
        %v3496 = vld [vmem:[#allocation30 + $0x3cc] sm:$0xf]
        %v3497 = vld [vmem:[#allocation30 + $0x3d0] sm:$0xf]
        %v3498 = vld [vmem:[#allocation30 + $0x3d4] sm:$0xf]
        %v3499 = vld [vmem:[#allocation30 + $0x3d8] sm:$0xf]
        %v3500 = vld [vmem:[#allocation30 + $0x3dc] sm:$0xf]
        %v3501 = vld [vmem:[#allocation30 + $0x3e0] sm:$0xf]
        %v3502 = vld [vmem:[#allocation30 + $0x3e4] sm:$0xf]
        %v3503 = vld [vmem:[#allocation30 + $0x3e8] sm:$0xf]
        %v3504 = vld [vmem:[#allocation30 + $0x3ec] sm:$0xf]
        %v3505 = vld [vmem:[#allocation30 + $0x3f0] sm:$0xf]
        %v3506 = vld [vmem:[#allocation30 + $0x3f4] sm:$0xf]
        %v3507 = vld [vmem:[#allocation30 + $0x3f8] sm:$0xf]
        %v3508 = vld [vmem:[#allocation30 + $0x3fc] sm:$0xf]
        %v3509 = vpack.c.bf16 %v3237, %v3237
        %v3510 = vpack.c.bf16 %v3238, %v3238
        %v3511 = vpack.c.bf16 %v3239, %v3239
        %v3512 = vpack.c.bf16 %v3240, %v3240
        %v3513 = vpack.c.bf16 %v3241, %v3241
        %v3514 = vpack.c.bf16 %v3242, %v3242
        %v3515 = vpack.c.bf16 %v3243, %v3243
        %v3516 = vpack.c.bf16 %v3244, %v3244
        %v3517 = vpack.c.bf16 %v3245, %v3245
        %v3518 = vpack.c.bf16 %v3246, %v3246
        %v3519 = vpack.c.bf16 %v3247, %v3247
        %v3520 = vpack.c.bf16 %v3248, %v3248
        %v3521 = vpack.c.bf16 %v3249, %v3249
        %v3522 = vpack.c.bf16 %v3250, %v3250
        %v3523 = vpack.c.bf16 %v3251, %v3251
        %v3524 = vpack.c.bf16 %v3252, %v3252
        %v3525 = vld [vmem:[%s71] sm:$0x1]
        %v3527 = vlaneseq
        %v3528 = vshrl.u32 %v3527, 7
        %v3529 = vsub.s32 0, %v3528
        %v3530 = vrot.slane %v3525, %v3529
        %v3788 = vunpack.c.l.b16 %v3253
        %v3789 = vunpack.c.l.b16 %v3254
        %v3790 = vunpack.c.l.b16 %v3255
        %v3791 = vunpack.c.l.b16 %v3256
        %v3792 = vunpack.c.l.b16 %v3257
        %v3793 = vunpack.c.l.b16 %v3258
        %v3794 = vunpack.c.l.b16 %v3259
        %v3795 = vunpack.c.l.b16 %v3260
        %v3796 = vunpack.c.l.b16 %v3261
        %v3797 = vunpack.c.l.b16 %v3262
        %v3798 = vunpack.c.l.b16 %v3263
        %v3799 = vunpack.c.l.b16 %v3264
        %v3800 = vunpack.c.l.b16 %v3265
        %v3801 = vunpack.c.l.b16 %v3266
        %v3802 = vunpack.c.l.b16 %v3267
        %v3803 = vunpack.c.l.b16 %v3268
        %v3804 = vunpack.c.l.b16 %v3269
        %v3805 = vunpack.c.l.b16 %v3270
        %v3806 = vunpack.c.l.b16 %v3271
        %v3807 = vunpack.c.l.b16 %v3272
        %v3808 = vunpack.c.l.b16 %v3273
        %v3809 = vunpack.c.l.b16 %v3274
        %v3810 = vunpack.c.l.b16 %v3275
        %v3811 = vunpack.c.l.b16 %v3276
        %v3812 = vunpack.c.l.b16 %v3277
        %v3813 = vunpack.c.l.b16 %v3278
        %v3814 = vunpack.c.l.b16 %v3279
        %v3815 = vunpack.c.l.b16 %v3280
        %v3816 = vunpack.c.l.b16 %v3281
        %v3817 = vunpack.c.l.b16 %v3282
        %v3818 = vunpack.c.l.b16 %v3283
        %v3819 = vunpack.c.l.b16 %v3284
        %v3820 = vunpack.c.l.b16 %v3285
        %v3821 = vunpack.c.l.b16 %v3286
        %v3822 = vunpack.c.l.b16 %v3287
        %v3823 = vunpack.c.l.b16 %v3288
        %v3824 = vunpack.c.l.b16 %v3289
        %v3825 = vunpack.c.l.b16 %v3290
        %v3826 = vunpack.c.l.b16 %v3291
        %v3827 = vunpack.c.l.b16 %v3292
        %v3828 = vunpack.c.l.b16 %v3293
        %v3829 = vunpack.c.l.b16 %v3294
        %v3830 = vunpack.c.l.b16 %v3295
        %v3831 = vunpack.c.l.b16 %v3296
        %v3832 = vunpack.c.l.b16 %v3297
        %v3833 = vunpack.c.l.b16 %v3298
        %v3834 = vunpack.c.l.b16 %v3299
        %v3835 = vunpack.c.l.b16 %v3300
        %v3836 = vunpack.c.l.b16 %v3301
        %v3837 = vunpack.c.l.b16 %v3302
        %v3838 = vunpack.c.l.b16 %v3303
        %v3839 = vunpack.c.l.b16 %v3304
        %v3840 = vunpack.c.l.b16 %v3305
        %v3841 = vunpack.c.l.b16 %v3306
        %v3842 = vunpack.c.l.b16 %v3307
        %v3843 = vunpack.c.l.b16 %v3308
        %v3844 = vunpack.c.l.b16 %v3309
        %v3845 = vunpack.c.l.b16 %v3310
        %v3846 = vunpack.c.l.b16 %v3311
        %v3847 = vunpack.c.l.b16 %v3312
        %v3848 = vunpack.c.l.b16 %v3313
        %v3849 = vunpack.c.l.b16 %v3314
        %v3850 = vunpack.c.l.b16 %v3315
        %v3851 = vunpack.c.l.b16 %v3316
        %v3852 = vunpack.c.l.b16 %v3317
        %v3853 = vunpack.c.l.b16 %v3318
        %v3854 = vunpack.c.l.b16 %v3319
        %v3855 = vunpack.c.l.b16 %v3320
        %v3856 = vunpack.c.l.b16 %v3321
        %v3857 = vunpack.c.l.b16 %v3322
        %v3858 = vunpack.c.l.b16 %v3323
        %v3859 = vunpack.c.l.b16 %v3324
        %v3860 = vunpack.c.l.b16 %v3325
        %v3861 = vunpack.c.l.b16 %v3326
        %v3862 = vunpack.c.l.b16 %v3327
        %v3863 = vunpack.c.l.b16 %v3328
        %v3864 = vunpack.c.l.b16 %v3329
        %v3865 = vunpack.c.l.b16 %v3330
        %v3866 = vunpack.c.l.b16 %v3331
        %v3867 = vunpack.c.l.b16 %v3332
        %v3868 = vunpack.c.l.b16 %v3333
        %v3869 = vunpack.c.l.b16 %v3334
        %v3870 = vunpack.c.l.b16 %v3335
        %v3871 = vunpack.c.l.b16 %v3336
        %v3872 = vunpack.c.l.b16 %v3337
        %v3873 = vunpack.c.l.b16 %v3338
        %v3874 = vunpack.c.l.b16 %v3339
        %v3875 = vunpack.c.l.b16 %v3340
        %v3876 = vunpack.c.l.b16 %v3341
        %v3877 = vunpack.c.l.b16 %v3342
        %v3878 = vunpack.c.l.b16 %v3343
        %v3879 = vunpack.c.l.b16 %v3344
        %v3880 = vunpack.c.l.b16 %v3345
        %v3881 = vunpack.c.l.b16 %v3346
        %v3882 = vunpack.c.l.b16 %v3347
        %v3883 = vunpack.c.l.b16 %v3348
        %v3884 = vunpack.c.l.b16 %v3349
        %v3885 = vunpack.c.l.b16 %v3350
        %v3886 = vunpack.c.l.b16 %v3351
        %v3887 = vunpack.c.l.b16 %v3352
        %v3888 = vunpack.c.l.b16 %v3353
        %v3889 = vunpack.c.l.b16 %v3354
        %v3890 = vunpack.c.l.b16 %v3355
        %v3891 = vunpack.c.l.b16 %v3356
        %v3892 = vunpack.c.l.b16 %v3357
        %v3893 = vunpack.c.l.b16 %v3358
        %v3894 = vunpack.c.l.b16 %v3359
        %v3895 = vunpack.c.l.b16 %v3360
        %v3896 = vunpack.c.l.b16 %v3361
        %v3897 = vunpack.c.l.b16 %v3362
        %v3898 = vunpack.c.l.b16 %v3363
        %v3899 = vunpack.c.l.b16 %v3364
        %v3900 = vunpack.c.l.b16 %v3365
        %v3901 = vunpack.c.l.b16 %v3366
        %v3902 = vunpack.c.l.b16 %v3367
        %v3903 = vunpack.c.l.b16 %v3368
        %v3904 = vunpack.c.l.b16 %v3369
        %v3905 = vunpack.c.l.b16 %v3370
        %v3906 = vunpack.c.l.b16 %v3371
        %v3907 = vunpack.c.l.b16 %v3372
        %v3908 = vunpack.c.l.b16 %v3373
        %v3909 = vunpack.c.l.b16 %v3374
        %v3910 = vunpack.c.l.b16 %v3375
        %v3911 = vunpack.c.l.b16 %v3376
        %v3912 = vunpack.c.l.b16 %v3377
        %v3913 = vunpack.c.l.b16 %v3378
        %v3914 = vunpack.c.l.b16 %v3379
        %v3915 = vunpack.c.l.b16 %v3380
        %v3916 = vunpack.c.l.b16 %v3381
        %v3917 = vunpack.c.l.b16 %v3382
        %v3918 = vunpack.c.l.b16 %v3383
        %v3919 = vunpack.c.l.b16 %v3384
        %v3920 = vunpack.c.l.b16 %v3385
        %v3921 = vunpack.c.l.b16 %v3386
        %v3922 = vunpack.c.l.b16 %v3387
        %v3923 = vunpack.c.l.b16 %v3388
        %v3924 = vunpack.c.l.b16 %v3389
        %v3925 = vunpack.c.l.b16 %v3390
        %v3926 = vunpack.c.l.b16 %v3391
        %v3927 = vunpack.c.l.b16 %v3392
        %v3928 = vunpack.c.l.b16 %v3393
        %v3929 = vunpack.c.l.b16 %v3394
        %v3930 = vunpack.c.l.b16 %v3395
        %v3931 = vunpack.c.l.b16 %v3396
        %v3932 = vunpack.c.l.b16 %v3397
        %v3933 = vunpack.c.l.b16 %v3398
        %v3934 = vunpack.c.l.b16 %v3399
        %v3935 = vunpack.c.l.b16 %v3400
        %v3936 = vunpack.c.l.b16 %v3401
        %v3937 = vunpack.c.l.b16 %v3402
        %v3938 = vunpack.c.l.b16 %v3403
        %v3939 = vunpack.c.l.b16 %v3404
        %v3940 = vunpack.c.l.b16 %v3405
        %v3941 = vunpack.c.l.b16 %v3406
        %v3942 = vunpack.c.l.b16 %v3407
        %v3943 = vunpack.c.l.b16 %v3408
        %v3944 = vunpack.c.l.b16 %v3409
        %v3945 = vunpack.c.l.b16 %v3410
        %v3946 = vunpack.c.l.b16 %v3411
        %v3947 = vunpack.c.l.b16 %v3412
        %v3948 = vunpack.c.l.b16 %v3413
        %v3949 = vunpack.c.l.b16 %v3414
        %v3950 = vunpack.c.l.b16 %v3415
        %v3951 = vunpack.c.l.b16 %v3416
        %v3952 = vunpack.c.l.b16 %v3417
        %v3953 = vunpack.c.l.b16 %v3418
        %v3954 = vunpack.c.l.b16 %v3419
        %v3955 = vunpack.c.l.b16 %v3420
        %v3956 = vunpack.c.l.b16 %v3421
        %v3957 = vunpack.c.l.b16 %v3422
        %v3958 = vunpack.c.l.b16 %v3423
        %v3959 = vunpack.c.l.b16 %v3424
        %v3960 = vunpack.c.l.b16 %v3425
        %v3961 = vunpack.c.l.b16 %v3426
        %v3962 = vunpack.c.l.b16 %v3427
        %v3963 = vunpack.c.l.b16 %v3428
        %v3964 = vunpack.c.l.b16 %v3429
        %v3965 = vunpack.c.l.b16 %v3430
        %v3966 = vunpack.c.l.b16 %v3431
        %v3967 = vunpack.c.l.b16 %v3432
        %v3968 = vunpack.c.l.b16 %v3433
        %v3969 = vunpack.c.l.b16 %v3434
        %v3970 = vunpack.c.l.b16 %v3435
        %v3971 = vunpack.c.l.b16 %v3436
        %v3972 = vunpack.c.l.b16 %v3437
        %v3973 = vunpack.c.l.b16 %v3438
        %v3974 = vunpack.c.l.b16 %v3439
        %v3975 = vunpack.c.l.b16 %v3440
        %v3976 = vunpack.c.l.b16 %v3441
        %v3977 = vunpack.c.l.b16 %v3442
        %v3978 = vunpack.c.l.b16 %v3443
        %v3979 = vunpack.c.l.b16 %v3444
        %v3980 = vunpack.c.l.b16 %v3445
        %v3981 = vunpack.c.l.b16 %v3446
        %v3982 = vunpack.c.l.b16 %v3447
        %v3983 = vunpack.c.l.b16 %v3448
        %v3984 = vunpack.c.l.b16 %v3449
        %v3985 = vunpack.c.l.b16 %v3450
        %v3986 = vunpack.c.l.b16 %v3451
        %v3987 = vunpack.c.l.b16 %v3452
        %v3988 = vunpack.c.l.b16 %v3453
        %v3989 = vunpack.c.l.b16 %v3454
        %v3990 = vunpack.c.l.b16 %v3455
        %v3991 = vunpack.c.l.b16 %v3456
        %v3992 = vunpack.c.l.b16 %v3457
        %v3993 = vunpack.c.l.b16 %v3458
        %v3994 = vunpack.c.l.b16 %v3459
        %v3995 = vunpack.c.l.b16 %v3460
        %v3996 = vunpack.c.l.b16 %v3461
        %v3997 = vunpack.c.l.b16 %v3462
        %v3998 = vunpack.c.l.b16 %v3463
        %v3999 = vunpack.c.l.b16 %v3464
        %v4000 = vunpack.c.l.b16 %v3465
        %v4001 = vunpack.c.l.b16 %v3466
        %v4002 = vunpack.c.l.b16 %v3467
        %v4003 = vunpack.c.l.b16 %v3468
        %v4004 = vunpack.c.l.b16 %v3469
        %v4005 = vunpack.c.l.b16 %v3470
        %v4006 = vunpack.c.l.b16 %v3471
        %v4007 = vunpack.c.l.b16 %v3472
        %v4008 = vunpack.c.l.b16 %v3473
        %v4009 = vunpack.c.l.b16 %v3474
        %v4010 = vunpack.c.l.b16 %v3475
        %v4011 = vunpack.c.l.b16 %v3476
        %v4012 = vunpack.c.l.b16 %v3477
        %v4013 = vunpack.c.l.b16 %v3478
        %v4014 = vunpack.c.l.b16 %v3479
        %v4015 = vunpack.c.l.b16 %v3480
        %v4016 = vunpack.c.l.b16 %v3481
        %v4017 = vunpack.c.l.b16 %v3482
        %v4018 = vunpack.c.l.b16 %v3483
        %v4019 = vunpack.c.l.b16 %v3484
        %v4020 = vunpack.c.l.b16 %v3485
        %v4021 = vunpack.c.l.b16 %v3486
        %v4022 = vunpack.c.l.b16 %v3487
        %v4023 = vunpack.c.l.b16 %v3488
        %v4024 = vunpack.c.l.b16 %v3489
        %v4025 = vunpack.c.l.b16 %v3490
        %v4026 = vunpack.c.l.b16 %v3491
        %v4027 = vunpack.c.l.b16 %v3492
        %v4028 = vunpack.c.l.b16 %v3493
        %v4029 = vunpack.c.l.b16 %v3494
        %v4030 = vunpack.c.l.b16 %v3495
        %v4031 = vunpack.c.l.b16 %v3496
        %v4032 = vunpack.c.l.b16 %v3497
        %v4033 = vunpack.c.l.b16 %v3498
        %v4034 = vunpack.c.l.b16 %v3499
        %v4035 = vunpack.c.l.b16 %v3500
        %v4036 = vunpack.c.l.b16 %v3501
        %v4037 = vunpack.c.l.b16 %v3502
        %v4038 = vunpack.c.l.b16 %v3503
        %v4039 = vunpack.c.l.b16 %v3504
        %v4040 = vunpack.c.l.b16 %v3505
        %v4041 = vunpack.c.l.b16 %v3506
        %v4042 = vunpack.c.l.b16 %v3507
        %v4043 = vunpack.c.l.b16 %v3508
        %v4044 = vpack.c.b16 %v3789, %v3788
        %v4045 = vpack.c.b16 %v3791, %v3790
        %v4046 = vpack.c.b16 %v3793, %v3792
        %v4047 = vpack.c.b16 %v3795, %v3794
        %v4048 = vpack.c.b16 %v3797, %v3796
        %v4049 = vpack.c.b16 %v3799, %v3798
        %v4050 = vpack.c.b16 %v3801, %v3800
        %v4051 = vpack.c.b16 %v3803, %v3802
        %v4052 = vpack.c.b16 %v3805, %v3804
        %v4053 = vpack.c.b16 %v3807, %v3806
        %v4054 = vpack.c.b16 %v3809, %v3808
        %v4055 = vpack.c.b16 %v3811, %v3810
        %v4056 = vpack.c.b16 %v3813, %v3812
        %v4057 = vpack.c.b16 %v3815, %v3814
        %v4058 = vpack.c.b16 %v3817, %v3816
        %v4059 = vpack.c.b16 %v3819, %v3818
        %v4060 = vpack.c.b16 %v3821, %v3820
        %v4061 = vpack.c.b16 %v3823, %v3822
        %v4062 = vpack.c.b16 %v3825, %v3824
        %v4063 = vpack.c.b16 %v3827, %v3826
        %v4064 = vpack.c.b16 %v3829, %v3828
        %v4065 = vpack.c.b16 %v3831, %v3830
        %v4066 = vpack.c.b16 %v3833, %v3832
        %v4067 = vpack.c.b16 %v3835, %v3834
        %v4068 = vpack.c.b16 %v3837, %v3836
        %v4069 = vpack.c.b16 %v3839, %v3838
        %v4070 = vpack.c.b16 %v3841, %v3840
        %v4071 = vpack.c.b16 %v3843, %v3842
        %v4072 = vpack.c.b16 %v3845, %v3844
        %v4073 = vpack.c.b16 %v3847, %v3846
        %v4074 = vpack.c.b16 %v3849, %v3848
        %v4075 = vpack.c.b16 %v3851, %v3850
        %v4076 = vpack.c.b16 %v3853, %v3852
        %v4077 = vpack.c.b16 %v3855, %v3854
        %v4078 = vpack.c.b16 %v3857, %v3856
        %v4079 = vpack.c.b16 %v3859, %v3858
        %v4080 = vpack.c.b16 %v3861, %v3860
        %v4081 = vpack.c.b16 %v3863, %v3862
        %v4082 = vpack.c.b16 %v3865, %v3864
        %v4083 = vpack.c.b16 %v3867, %v3866
        %v4084 = vpack.c.b16 %v3869, %v3868
        %v4085 = vpack.c.b16 %v3871, %v3870
        %v4086 = vpack.c.b16 %v3873, %v3872
        %v4087 = vpack.c.b16 %v3875, %v3874
        %v4088 = vpack.c.b16 %v3877, %v3876
        %v4089 = vpack.c.b16 %v3879, %v3878
        %v4090 = vpack.c.b16 %v3881, %v3880
        %v4091 = vpack.c.b16 %v3883, %v3882
        %v4092 = vpack.c.b16 %v3885, %v3884
        %v4093 = vpack.c.b16 %v3887, %v3886
        %v4094 = vpack.c.b16 %v3889, %v3888
        %v4095 = vpack.c.b16 %v3891, %v3890
        %v4096 = vpack.c.b16 %v3893, %v3892
        %v4097 = vpack.c.b16 %v3895, %v3894
        %v4098 = vpack.c.b16 %v3897, %v3896
        %v4099 = vpack.c.b16 %v3899, %v3898
        %v4100 = vpack.c.b16 %v3901, %v3900
        %v4101 = vpack.c.b16 %v3903, %v3902
        %v4102 = vpack.c.b16 %v3905, %v3904
        %v4103 = vpack.c.b16 %v3907, %v3906
        %v4104 = vpack.c.b16 %v3909, %v3908
        %v4105 = vpack.c.b16 %v3911, %v3910
        %v4106 = vpack.c.b16 %v3913, %v3912
        %v4107 = vpack.c.b16 %v3915, %v3914
        %v4108 = vpack.c.b16 %v3917, %v3916
        %v4109 = vpack.c.b16 %v3919, %v3918
        %v4110 = vpack.c.b16 %v3921, %v3920
        %v4111 = vpack.c.b16 %v3923, %v3922
        %v4112 = vpack.c.b16 %v3925, %v3924
        %v4113 = vpack.c.b16 %v3927, %v3926
        %v4114 = vpack.c.b16 %v3929, %v3928
        %v4115 = vpack.c.b16 %v3931, %v3930
        %v4116 = vpack.c.b16 %v3933, %v3932
        %v4117 = vpack.c.b16 %v3935, %v3934
        %v4118 = vpack.c.b16 %v3937, %v3936
        %v4119 = vpack.c.b16 %v3939, %v3938
        %v4120 = vpack.c.b16 %v3941, %v3940
        %v4121 = vpack.c.b16 %v3943, %v3942
        %v4122 = vpack.c.b16 %v3945, %v3944
        %v4123 = vpack.c.b16 %v3947, %v3946
        %v4124 = vpack.c.b16 %v3949, %v3948
        %v4125 = vpack.c.b16 %v3951, %v3950
        %v4126 = vpack.c.b16 %v3953, %v3952
        %v4127 = vpack.c.b16 %v3955, %v3954
        %v4128 = vpack.c.b16 %v3957, %v3956
        %v4129 = vpack.c.b16 %v3959, %v3958
        %v4130 = vpack.c.b16 %v3961, %v3960
        %v4131 = vpack.c.b16 %v3963, %v3962
        %v4132 = vpack.c.b16 %v3965, %v3964
        %v4133 = vpack.c.b16 %v3967, %v3966
        %v4134 = vpack.c.b16 %v3969, %v3968
        %v4135 = vpack.c.b16 %v3971, %v3970
        %v4136 = vpack.c.b16 %v3973, %v3972
        %v4137 = vpack.c.b16 %v3975, %v3974
        %v4138 = vpack.c.b16 %v3977, %v3976
        %v4139 = vpack.c.b16 %v3979, %v3978
        %v4140 = vpack.c.b16 %v3981, %v3980
        %v4141 = vpack.c.b16 %v3983, %v3982
        %v4142 = vpack.c.b16 %v3985, %v3984
        %v4143 = vpack.c.b16 %v3987, %v3986
        %v4144 = vpack.c.b16 %v3989, %v3988
        %v4145 = vpack.c.b16 %v3991, %v3990
        %v4146 = vpack.c.b16 %v3993, %v3992
        %v4147 = vpack.c.b16 %v3995, %v3994
        %v4148 = vpack.c.b16 %v3997, %v3996
        %v4149 = vpack.c.b16 %v3999, %v3998
        %v4150 = vpack.c.b16 %v4001, %v4000
        %v4151 = vpack.c.b16 %v4003, %v4002
        %v4152 = vpack.c.b16 %v4005, %v4004
        %v4153 = vpack.c.b16 %v4007, %v4006
        %v4154 = vpack.c.b16 %v4009, %v4008
        %v4155 = vpack.c.b16 %v4011, %v4010
        %v4156 = vpack.c.b16 %v4013, %v4012
        %v4157 = vpack.c.b16 %v4015, %v4014
        %v4158 = vpack.c.b16 %v4017, %v4016
        %v4159 = vpack.c.b16 %v4019, %v4018
        %v4160 = vpack.c.b16 %v4021, %v4020
        %v4161 = vpack.c.b16 %v4023, %v4022
        %v4162 = vpack.c.b16 %v4025, %v4024
        %v4163 = vpack.c.b16 %v4027, %v4026
        %v4164 = vpack.c.b16 %v4029, %v4028
        %v4165 = vpack.c.b16 %v4031, %v4030
        %v4166 = vpack.c.b16 %v4033, %v4032
        %v4167 = vpack.c.b16 %v4035, %v4034
        %v4168 = vpack.c.b16 %v4037, %v4036
        %v4169 = vpack.c.b16 %v4039, %v4038
        %v4170 = vpack.c.b16 %v4041, %v4040
        %v4171 = vpack.c.b16 %v4043, %v4042
        %4300 = vmatprep.subr.bf16.mxu0 0
        %4301 = vmatpush1.bf16.msra.mxu0 %v4051
        %4302 = vmatprep.subr.bf16.mxu0 0
        %4303 = vmatpush1.bf16.msra.mxu0 %v4050
        %4304 = vmatprep.subr.bf16.mxu0 0
        %4305 = vmatpush1.bf16.msra.mxu0 %v4049
        %4306 = vmatprep.subr.bf16.mxu0 0
        %4307 = vmatpush1.bf16.msra.mxu0 %v4048
        %4308 = vmatprep.subr.bf16.mxu0 0
        %4309 = vmatpush1.bf16.msra.mxu0 %v4047
        %4310 = vmatprep.subr.bf16.mxu0 0
        %4311 = vmatpush1.bf16.msra.mxu0 %v4046
        %4312 = vmatprep.subr.bf16.mxu0 0
        %4313 = vmatpush1.bf16.msra.mxu0 %v4045
        %4314 = vmatprep.subr.bf16.mxu0 0
        %4315 = vmatpush1.bf16.msra.mxu0 %v4044
        %4316 = vmatprep.subr.bf16.mxu0 0
        %4317 = vmatpush2.bf16.msra.mxu0 %v4059
        %4318 = vmatprep.subr.bf16.mxu0 0
        %4319 = vmatpush2.bf16.msra.mxu0 %v4058
        %4320 = vmatprep.subr.bf16.mxu0 0
        %4321 = vmatpush2.bf16.msra.mxu0 %v4057
        %4322 = vmatprep.subr.bf16.mxu0 0
        %4323 = vmatpush2.bf16.msra.mxu0 %v4056
        %4324 = vmatprep.subr.bf16.mxu0 0
        %4325 = vmatpush2.bf16.msra.mxu0 %v4055
        %4326 = vmatprep.subr.bf16.mxu0 0
        %4327 = vmatpush2.bf16.msra.mxu0 %v4054
        %4328 = vmatprep.subr.bf16.mxu0 0
        %4329 = vmatpush2.bf16.msra.mxu0 %v4053
        %4330 = vmatprep.subr.bf16.mxu0 0
        %4331 = vmatpush2.bf16.msra.mxu0 %v4052
        %4332 = vmatprep.mubr.bf16.mxu0 %v3510
        %4333 = vmatmul.mubr.bf16.gmra.mxu0 %v3509
        %v4334 = vpop.f32.mrf.mxu0
        %v4335 = vadd.f32 %v3530, %v4334
        %v4336 = vpop.f32.mrf.mxu0
        %v4337 = vpop.f32.mrf.mxu0
        %v4338 = vpop.f32.mrf.mxu0
        %4339 = vdwg.mxu0
        %4340 = vmatprep.subr.bf16.mxu0 0
        %4341 = vmatpush1.bf16.msra.mxu0 %v4067
        %4342 = vmatprep.subr.bf16.mxu0 0
        %4343 = vmatpush1.bf16.msra.mxu0 %v4066
        %4344 = vmatprep.subr.bf16.mxu0 0
        %4345 = vmatpush1.bf16.msra.mxu0 %v4065
        %4346 = vmatprep.subr.bf16.mxu0 0
        %4347 = vmatpush1.bf16.msra.mxu0 %v4064
        %4348 = vmatprep.subr.bf16.mxu0 0
        %4349 = vmatpush1.bf16.msra.mxu0 %v4063
        %4350 = vmatprep.subr.bf16.mxu0 0
        %4351 = vmatpush1.bf16.msra.mxu0 %v4062
        %4352 = vmatprep.subr.bf16.mxu0 0
        %4353 = vmatpush1.bf16.msra.mxu0 %v4061
        %4354 = vmatprep.subr.bf16.mxu0 0
        %4355 = vmatpush1.bf16.msra.mxu0 %v4060
        %4356 = vmatprep.subr.bf16.mxu0 0
        %4357 = vmatpush2.bf16.msra.mxu0 %v4075
        %4358 = vmatprep.subr.bf16.mxu0 0
        %4359 = vmatpush2.bf16.msra.mxu0 %v4074
        %4360 = vmatprep.subr.bf16.mxu0 0
        %4361 = vmatpush2.bf16.msra.mxu0 %v4073
        %4362 = vmatprep.subr.bf16.mxu0 0
        %4363 = vmatpush2.bf16.msra.mxu0 %v4072
        %4364 = vmatprep.subr.bf16.mxu0 0
        %4365 = vmatpush2.bf16.msra.mxu0 %v4071
        %4366 = vmatprep.subr.bf16.mxu0 0
        %4367 = vmatpush2.bf16.msra.mxu0 %v4070
        %4368 = vmatprep.subr.bf16.mxu0 0
        %4369 = vmatpush2.bf16.msra.mxu0 %v4069
        %4370 = vmatprep.subr.bf16.mxu0 0
        %4371 = vmatpush2.bf16.msra.mxu0 %v4068
        %4372 = vmatprep.mubr.bf16.mxu0 %v3512
        %4373 = vmatmul.mubr.bf16.gmra.mxu0 %v3511
        %v4374 = vpop.f32.mrf.mxu0
        %v4375 = vadd.f32 %v4335, %v4374
        %v4376 = vpop.f32.mrf.mxu0
        %v4377 = vpop.f32.mrf.mxu0
        %v4378 = vpop.f32.mrf.mxu0
        %4379 = vdwg.mxu0
        %4380 = vmatprep.subr.bf16.mxu0 0
        %4381 = vmatpush1.bf16.msra.mxu0 %v4083
        %4382 = vmatprep.subr.bf16.mxu0 0
        %4383 = vmatpush1.bf16.msra.mxu0 %v4082
        %4384 = vmatprep.subr.bf16.mxu0 0
        %4385 = vmatpush1.bf16.msra.mxu0 %v4081
        %4386 = vmatprep.subr.bf16.mxu0 0
        %4387 = vmatpush1.bf16.msra.mxu0 %v4080
        %4388 = vmatprep.subr.bf16.mxu0 0
        %4389 = vmatpush1.bf16.msra.mxu0 %v4079
        %4390 = vmatprep.subr.bf16.mxu0 0
        %4391 = vmatpush1.bf16.msra.mxu0 %v4078
        %4392 = vmatprep.subr.bf16.mxu0 0
        %4393 = vmatpush1.bf16.msra.mxu0 %v4077
        %4394 = vmatprep.subr.bf16.mxu0 0
        %4395 = vmatpush1.bf16.msra.mxu0 %v4076
        %4396 = vmatprep.subr.bf16.mxu0 0
        %4397 = vmatpush2.bf16.msra.mxu0 %v4091
        %4398 = vmatprep.subr.bf16.mxu0 0
        %4399 = vmatpush2.bf16.msra.mxu0 %v4090
        %4400 = vmatprep.subr.bf16.mxu0 0
        %4401 = vmatpush2.bf16.msra.mxu0 %v4089
        %4402 = vmatprep.subr.bf16.mxu0 0
        %4403 = vmatpush2.bf16.msra.mxu0 %v4088
        %4404 = vmatprep.subr.bf16.mxu0 0
        %4405 = vmatpush2.bf16.msra.mxu0 %v4087
        %4406 = vmatprep.subr.bf16.mxu0 0
        %4407 = vmatpush2.bf16.msra.mxu0 %v4086
        %4408 = vmatprep.subr.bf16.mxu0 0
        %4409 = vmatpush2.bf16.msra.mxu0 %v4085
        %4410 = vmatprep.subr.bf16.mxu0 0
        %4411 = vmatpush2.bf16.msra.mxu0 %v4084
        %4412 = vmatprep.mubr.bf16.mxu0 %v3514
        %4413 = vmatmul.mubr.bf16.gmra.mxu0 %v3513
        %v4414 = vpop.f32.mrf.mxu0
        %v4415 = vadd.f32 %v4375, %v4414
        %v4416 = vpop.f32.mrf.mxu0
        %v4417 = vpop.f32.mrf.mxu0
        %v4418 = vpop.f32.mrf.mxu0
        %4419 = vdwg.mxu0
        %4420 = vmatprep.subr.bf16.mxu0 0
        %4421 = vmatpush1.bf16.msra.mxu0 %v4099
        %4422 = vmatprep.subr.bf16.mxu0 0
        %4423 = vmatpush1.bf16.msra.mxu0 %v4098
        %4424 = vmatprep.subr.bf16.mxu0 0
        %4425 = vmatpush1.bf16.msra.mxu0 %v4097
        %4426 = vmatprep.subr.bf16.mxu0 0
        %4427 = vmatpush1.bf16.msra.mxu0 %v4096
        %4428 = vmatprep.subr.bf16.mxu0 0
        %4429 = vmatpush1.bf16.msra.mxu0 %v4095
        %4430 = vmatprep.subr.bf16.mxu0 0
        %4431 = vmatpush1.bf16.msra.mxu0 %v4094
        %4432 = vmatprep.subr.bf16.mxu0 0
        %4433 = vmatpush1.bf16.msra.mxu0 %v4093
        %4434 = vmatprep.subr.bf16.mxu0 0
        %4435 = vmatpush1.bf16.msra.mxu0 %v4092
        %4436 = vmatprep.subr.bf16.mxu0 0
        %4437 = vmatpush2.bf16.msra.mxu0 %v4107
        %4438 = vmatprep.subr.bf16.mxu0 0
        %4439 = vmatpush2.bf16.msra.mxu0 %v4106
        %4440 = vmatprep.subr.bf16.mxu0 0
        %4441 = vmatpush2.bf16.msra.mxu0 %v4105
        %4442 = vmatprep.subr.bf16.mxu0 0
        %4443 = vmatpush2.bf16.msra.mxu0 %v4104
        %4444 = vmatprep.subr.bf16.mxu0 0
        %4445 = vmatpush2.bf16.msra.mxu0 %v4103
        %4446 = vmatprep.subr.bf16.mxu0 0
        %4447 = vmatpush2.bf16.msra.mxu0 %v4102
        %4448 = vmatprep.subr.bf16.mxu0 0
        %4449 = vmatpush2.bf16.msra.mxu0 %v4101
        %4450 = vmatprep.subr.bf16.mxu0 0
        %4451 = vmatpush2.bf16.msra.mxu0 %v4100
        %4452 = vmatprep.mubr.bf16.mxu0 %v3516
        %4453 = vmatmul.mubr.bf16.gmra.mxu0 %v3515
        %v4454 = vpop.f32.mrf.mxu0
        %v4455 = vadd.f32 %v4415, %v4454
        %v4456 = vpop.f32.mrf.mxu0
        %v4457 = vpop.f32.mrf.mxu0
        %v4458 = vpop.f32.mrf.mxu0
        %4459 = vdwg.mxu0
        %4460 = vmatprep.subr.bf16.mxu0 0
        %4461 = vmatpush1.bf16.msra.mxu0 %v4115
        %4462 = vmatprep.subr.bf16.mxu0 0
        %4463 = vmatpush1.bf16.msra.mxu0 %v4114
        %4464 = vmatprep.subr.bf16.mxu0 0
        %4465 = vmatpush1.bf16.msra.mxu0 %v4113
        %4466 = vmatprep.subr.bf16.mxu0 0
        %4467 = vmatpush1.bf16.msra.mxu0 %v4112
        %4468 = vmatprep.subr.bf16.mxu0 0
        %4469 = vmatpush1.bf16.msra.mxu0 %v4111
        %4470 = vmatprep.subr.bf16.mxu0 0
        %4471 = vmatpush1.bf16.msra.mxu0 %v4110
        %4472 = vmatprep.subr.bf16.mxu0 0
        %4473 = vmatpush1.bf16.msra.mxu0 %v4109
        %4474 = vmatprep.subr.bf16.mxu0 0
        %4475 = vmatpush1.bf16.msra.mxu0 %v4108
        %4476 = vmatprep.subr.bf16.mxu0 0
        %4477 = vmatpush2.bf16.msra.mxu0 %v4123
        %4478 = vmatprep.subr.bf16.mxu0 0
        %4479 = vmatpush2.bf16.msra.mxu0 %v4122
        %4480 = vmatprep.subr.bf16.mxu0 0
        %4481 = vmatpush2.bf16.msra.mxu0 %v4121
        %4482 = vmatprep.subr.bf16.mxu0 0
        %4483 = vmatpush2.bf16.msra.mxu0 %v4120
        %4484 = vmatprep.subr.bf16.mxu0 0
        %4485 = vmatpush2.bf16.msra.mxu0 %v4119
        %4486 = vmatprep.subr.bf16.mxu0 0
        %4487 = vmatpush2.bf16.msra.mxu0 %v4118
        %4488 = vmatprep.subr.bf16.mxu0 0
        %4489 = vmatpush2.bf16.msra.mxu0 %v4117
        %4490 = vmatprep.subr.bf16.mxu0 0
        %4491 = vmatpush2.bf16.msra.mxu0 %v4116
        %4492 = vmatprep.mubr.bf16.mxu0 %v3518
        %4493 = vmatmul.mubr.bf16.gmra.mxu0 %v3517
        %v4494 = vpop.f32.mrf.mxu0
        %v4495 = vadd.f32 %v4455, %v4494
        %v4496 = vpop.f32.mrf.mxu0
        %v4497 = vpop.f32.mrf.mxu0
        %v4498 = vpop.f32.mrf.mxu0
        %4499 = vdwg.mxu0
        %4500 = vmatprep.subr.bf16.mxu0 0
        %4501 = vmatpush1.bf16.msra.mxu0 %v4131
        %4502 = vmatprep.subr.bf16.mxu0 0
        %4503 = vmatpush1.bf16.msra.mxu0 %v4130
        %4504 = vmatprep.subr.bf16.mxu0 0
        %4505 = vmatpush1.bf16.msra.mxu0 %v4129
        %4506 = vmatprep.subr.bf16.mxu0 0
        %4507 = vmatpush1.bf16.msra.mxu0 %v4128
        %4508 = vmatprep.subr.bf16.mxu0 0
        %4509 = vmatpush1.bf16.msra.mxu0 %v4127
        %4510 = vmatprep.subr.bf16.mxu0 0
        %4511 = vmatpush1.bf16.msra.mxu0 %v4126
        %4512 = vmatprep.subr.bf16.mxu0 0
        %4513 = vmatpush1.bf16.msra.mxu0 %v4125
        %4514 = vmatprep.subr.bf16.mxu0 0
        %4515 = vmatpush1.bf16.msra.mxu0 %v4124
        %4516 = vmatprep.subr.bf16.mxu0 0
        %4517 = vmatpush2.bf16.msra.mxu0 %v4139
        %4518 = vmatprep.subr.bf16.mxu0 0
        %4519 = vmatpush2.bf16.msra.mxu0 %v4138
        %4520 = vmatprep.subr.bf16.mxu0 0
        %4521 = vmatpush2.bf16.msra.mxu0 %v4137
        %4522 = vmatprep.subr.bf16.mxu0 0
        %4523 = vmatpush2.bf16.msra.mxu0 %v4136
        %4524 = vmatprep.subr.bf16.mxu0 0
        %4525 = vmatpush2.bf16.msra.mxu0 %v4135
        %4526 = vmatprep.subr.bf16.mxu0 0
        %4527 = vmatpush2.bf16.msra.mxu0 %v4134
        %4528 = vmatprep.subr.bf16.mxu0 0
        %4529 = vmatpush2.bf16.msra.mxu0 %v4133
        %4530 = vmatprep.subr.bf16.mxu0 0
        %4531 = vmatpush2.bf16.msra.mxu0 %v4132
        %4532 = vmatprep.mubr.bf16.mxu0 %v3520
        %4533 = vmatmul.mubr.bf16.gmra.mxu0 %v3519
        %v4534 = vpop.f32.mrf.mxu0
        %v4535 = vadd.f32 %v4495, %v4534
        %v4536 = vpop.f32.mrf.mxu0
        %v4537 = vpop.f32.mrf.mxu0
        %v4538 = vpop.f32.mrf.mxu0
        %4539 = vdwg.mxu0
        %4540 = vmatprep.subr.bf16.mxu0 0
        %4541 = vmatpush1.bf16.msra.mxu0 %v4147
        %4542 = vmatprep.subr.bf16.mxu0 0
        %4543 = vmatpush1.bf16.msra.mxu0 %v4146
        %4544 = vmatprep.subr.bf16.mxu0 0
        %4545 = vmatpush1.bf16.msra.mxu0 %v4145
        %4546 = vmatprep.subr.bf16.mxu0 0
        %4547 = vmatpush1.bf16.msra.mxu0 %v4144
        %4548 = vmatprep.subr.bf16.mxu0 0
        %4549 = vmatpush1.bf16.msra.mxu0 %v4143
        %4550 = vmatprep.subr.bf16.mxu0 0
        %4551 = vmatpush1.bf16.msra.mxu0 %v4142
        %4552 = vmatprep.subr.bf16.mxu0 0
        %4553 = vmatpush1.bf16.msra.mxu0 %v4141
        %4554 = vmatprep.subr.bf16.mxu0 0
        %4555 = vmatpush1.bf16.msra.mxu0 %v4140
        %4556 = vmatprep.subr.bf16.mxu0 0
        %4557 = vmatpush2.bf16.msra.mxu0 %v4155
        %4558 = vmatprep.subr.bf16.mxu0 0
        %4559 = vmatpush2.bf16.msra.mxu0 %v4154
        %4560 = vmatprep.subr.bf16.mxu0 0
        %4561 = vmatpush2.bf16.msra.mxu0 %v4153
        %4562 = vmatprep.subr.bf16.mxu0 0
        %4563 = vmatpush2.bf16.msra.mxu0 %v4152
        %4564 = vmatprep.subr.bf16.mxu0 0
        %4565 = vmatpush2.bf16.msra.mxu0 %v4151
        %4566 = vmatprep.subr.bf16.mxu0 0
        %4567 = vmatpush2.bf16.msra.mxu0 %v4150
        %4568 = vmatprep.subr.bf16.mxu0 0
        %4569 = vmatpush2.bf16.msra.mxu0 %v4149
        %4570 = vmatprep.subr.bf16.mxu0 0
        %4571 = vmatpush2.bf16.msra.mxu0 %v4148
        %4572 = vmatprep.mubr.bf16.mxu0 %v3522
        %4573 = vmatmul.mubr.bf16.gmra.mxu0 %v3521
        %v4574 = vpop.f32.mrf.mxu0
        %v4575 = vadd.f32 %v4535, %v4574
        %v4576 = vpop.f32.mrf.mxu0
        %v4577 = vpop.f32.mrf.mxu0
        %v4578 = vpop.f32.mrf.mxu0
        %4579 = vdwg.mxu0
        %4580 = vmatprep.subr.bf16.mxu0 0
        %4581 = vmatpush1.bf16.msra.mxu0 %v4163
        %4582 = vmatprep.subr.bf16.mxu0 0
        %4583 = vmatpush1.bf16.msra.mxu0 %v4162
        %4584 = vmatprep.subr.bf16.mxu0 0
        %4585 = vmatpush1.bf16.msra.mxu0 %v4161
        %4586 = vmatprep.subr.bf16.mxu0 0
        %4587 = vmatpush1.bf16.msra.mxu0 %v4160
        %4588 = vmatprep.subr.bf16.mxu0 0
        %4589 = vmatpush1.bf16.msra.mxu0 %v4159
        %4590 = vmatprep.subr.bf16.mxu0 0
        %4591 = vmatpush1.bf16.msra.mxu0 %v4158
        %4592 = vmatprep.subr.bf16.mxu0 0
        %4593 = vmatpush1.bf16.msra.mxu0 %v4157
        %4594 = vmatprep.subr.bf16.mxu0 0
        %4595 = vmatpush1.bf16.msra.mxu0 %v4156
        %4596 = vmatprep.subr.bf16.mxu0 0
        %4597 = vmatpush2.bf16.msra.mxu0 %v4171
        %4598 = vmatprep.subr.bf16.mxu0 0
        %4599 = vmatpush2.bf16.msra.mxu0 %v4170
        %4600 = vmatprep.subr.bf16.mxu0 0
        %4601 = vmatpush2.bf16.msra.mxu0 %v4169
        %4602 = vmatprep.subr.bf16.mxu0 0
        %4603 = vmatpush2.bf16.msra.mxu0 %v4168
        %4604 = vmatprep.subr.bf16.mxu0 0
        %4605 = vmatpush2.bf16.msra.mxu0 %v4167
        %4606 = vmatprep.subr.bf16.mxu0 0
        %4607 = vmatpush2.bf16.msra.mxu0 %v4166
        %4608 = vmatprep.subr.bf16.mxu0 0
        %4609 = vmatpush2.bf16.msra.mxu0 %v4165
        %4610 = vmatprep.subr.bf16.mxu0 0
        %4611 = vmatpush2.bf16.msra.mxu0 %v4164
        %4612 = vmatprep.mubr.bf16.mxu0 %v3524
        %4613 = vmatmul.mubr.bf16.gmra.mxu0 %v3523
        %v4614 = vpop.f32.mrf.mxu0
        %v4615 = vadd.f32 %v4575, %v4614
        %v4616 = vpop.f32.mrf.mxu0
        %v4617 = vpop.f32.mrf.mxu0
        %v4618 = vpop.f32.mrf.mxu0
        %4619 = vdwg.mxu0
        %v4620 = vadd.f32 %v2628, %v4615
        %v4621 = vld [vmem:[%s73] sm:$0x1]
        %v4622 = vld [vmem:[%s75] sm:$0x1]
        %v4623 = vsel %vm2042, %v4620, 0.0
        %4624 = vadd.xlane.f32.xlu0 %v4623
        %v4625 = vpop.xlane.xlu0 %4624
        %v4626 = vmul.f32 %v4625, %v2046
        %v4627 = vsub.f32 %v4620, %v4626
        %v4628 = vmul.f32 %v4627, %v4627
        %v4629 = vsel %vm2042, %v4628, 0.0
        %4630 = vadd.xlane.f32.xlu0 %v4629
        %v4631 = vpop.xlane.xlu0 %4630
        %v4632 = vmul.f32 %v4631, %v2046
        %v4633 = vadd.f32 %v4632, 1e-05
        %v4634 = vrsqrt.pop %v4633
        %v4635 = vmul.f32 %v4627, %v4634
        %v4637 = vlaneseq
        %v4638 = vshrl.u32 %v4637, 7
        %v4639 = vsub.s32 0, %v4638
        %v4640 = vrot.slane %v4621, %v4639
        %v4642 = vmul.f32 %v4635, %v4640
        %v4644 = vlaneseq
        %v4645 = vshrl.u32 %v4644, 7
        %v4646 = vsub.s32 0, %v4645
        %v4647 = vrot.slane %v4622, %v4646
        %v4649 = vadd.f32 %v4642, %v4647
        %v4650 = vld [vmem:[%s1322] sm:$0xff]
        %v4651 = vld [vmem:[%s77] sm:$0xf]
        %v4652 = vld [vmem:[%s77 + $0x4] sm:$0xf]
        %v4653 = vpack.c.bf16 %v4650, %v4650
        %v4654 = vld [vmem:[%s79] sm:$0x1]
        %v4656 = vlaneseq
        %v4657 = vshrl.u32 %v4656, 7
        %v4658 = vsub.s32 0, %v4657
        %v4659 = vrot.slane %v4654, %v4658
        %v4663 = vunpack.c.l.b16 %v4651
        %v4664 = vunpack.c.l.b16 %v4652
        %v4665 = vpack.c.b16 %v4664, %v4663
        %v4668 = vsel %vm1513, %v4653, 0
        %4670 = vmatprep.subr.bf16.mxu0 0
        %4671 = vmatpush1.bf16.msra.mxu0 0
        %4672 = vmatprep.subr.bf16.mxu0 0
        %4673 = vmatpush1.bf16.msra.mxu0 0
        %4674 = vmatprep.subr.bf16.mxu0 0
        %4675 = vmatpush1.bf16.msra.mxu0 0
        %4676 = vmatprep.subr.bf16.mxu0 0
        %4677 = vmatpush1.bf16.msra.mxu0 0
        %4678 = vmatprep.subr.bf16.mxu0 0
        %4679 = vmatpush1.bf16.msra.mxu0 0
        %4680 = vmatprep.subr.bf16.mxu0 0
        %4681 = vmatpush1.bf16.msra.mxu0 0
        %4682 = vmatprep.subr.bf16.mxu0 0
        %4683 = vmatpush1.bf16.msra.mxu0 0
        %4684 = vmatprep.subr.bf16.mxu0 0
        %4685 = vmatpush1.bf16.msra.mxu0 %v4665
        %4686 = vmatprep.subr.bf16.mxu0 0
        %4687 = vmatpush2.bf16.msra.mxu0 0
        %4688 = vmatprep.subr.bf16.mxu0 0
        %4689 = vmatpush2.bf16.msra.mxu0 0
        %4690 = vmatprep.subr.bf16.mxu0 0
        %4691 = vmatpush2.bf16.msra.mxu0 0
        %4692 = vmatprep.subr.bf16.mxu0 0
        %4693 = vmatpush2.bf16.msra.mxu0 0
        %4694 = vmatprep.subr.bf16.mxu0 0
        %4695 = vmatpush2.bf16.msra.mxu0 0
        %4696 = vmatprep.subr.bf16.mxu0 0
        %4697 = vmatpush2.bf16.msra.mxu0 0
        %4698 = vmatprep.subr.bf16.mxu0 0
        %4699 = vmatpush2.bf16.msra.mxu0 0
        %4700 = vmatprep.subr.bf16.mxu0 0
        %4701 = vmatpush2.bf16.msra.mxu0 0
        %4702 = vmatprep.mubr.bf16.mxu0 0
        %4703 = vmatmul.mubr.bf16.gmra.mxu0 %v4668
        %v4704 = vpop.f32.mrf.mxu0
        %v4705 = vadd.f32 %v4659, %v4704
        %v4706 = vpop.f32.mrf.mxu0
        %v4707 = vpop.f32.mrf.mxu0
        %v4708 = vpop.f32.mrf.mxu0
        %4709 = vdwg.mxu0
        %v4710 = vmax.f32 %v4705, 0.0
        %v4711 = vadd.f32 %v4649, %v4710
        %4712 = vst.msk [vmem:[%s1494] sm:$0xff] %vm2042, %v4711
        %p4713 = scmp.lt.s32.totalorder %s106, 1
        %s4714 = scalar_select %p4713, %s106, 1
        %s4715 = smul.addr %s4714, 8
        %s4716 = scalar_lea.vmem %s81, %s4715
        // Predicated region
        $region257: #{iibmil_encoder_forward.3} parent=179 // pred_check
          %p4717 = pneg %p974
        $region258: #{iibmil_encoder_forward.3} parent=179 // pred_check_branch
          %4719 = sbr.rel (%p4717) target = $region260
        $region259: #{iibmil_encoder_forward.3} parent=179 // pred_region
          _
        $region260: #{iibmil_encoder_forward.3} parent=179 // pred_fallthru
          _
      $region180: #{iibmil_encoder_forward.3} parent=5 // pred_fallthru
        _
      %p4720 = scmp.le.s32.totalorder 2, %s101
      // Predicated region
      $region261: #{iibmil_encoder_forward.3} parent=5 // pred_check
        %p4721 = pneg %p4720
      $region262: #{iibmil_encoder_forward.3} parent=5 // pred_check_branch
        %4723 = sbr.rel (%p4721) target = $region264
      $region263: #{iibmil_encoder_forward.3} parent=5 // pred_region
        %s4724 = ssub.s32 %s101, 2
        // Predicated region
        $region265: #{iibmil_encoder_forward.3} parent=263 // pred_check
          %p4725 = pneg %p980
        $region266: #{iibmil_encoder_forward.3} parent=263 // pred_check_branch
          %4727 = sbr.rel (%p4725) target = $region268
        $region267: #{iibmil_encoder_forward.3} parent=263 // pred_region
          %p4728 = scmp.lt.s32.totalorder %s107, 1
          %s4729 = scalar_select %p4728, %s107, 1
          %s4730 = smul.addr %s4729, 8
          %s4731 = scalar_lea.vmem %s81, %s4730
        $region268: #{iibmil_encoder_forward.3} parent=263 // pred_fallthru
          _
      $region264: #{iibmil_encoder_forward.3} parent=5 // pred_fallthru
        _
    $region6: #{iibmil_encoder_forward.3} parent=1 // loop_footer
      %s105 = sadd.s32 1, %s101
    $region7: #{iibmil_encoder_forward.3} parent=1 // loop_footer_branch
      %100 = sbr.rel target = $region3
    $region8: #{iibmil_encoder_forward.3} parent=1 // loop_exit
      _
    %4732 = vsyncpa [#allocation3], 1
    %s4733 = scalar_lea.sflag [#allocation3], 1
    %4734 = vsyncpa %s4733, 1
    %4735 = vsyncpa [#allocation5], 1
    %s4736 = scalar_lea.sflag [#allocation5], 1
    %4737 = vsyncpa %s4736, 1
    %4738 = vsyncpa [#allocation8], 1
    %4739 = vsyncpa [#allocation11], 1
    %4740 = vsyncpa [#allocation14], 1
    %4741 = vsyncpa [#allocation17], 1
    %4742 = vsyncpa [#allocation20], 1
    %4743 = vsyncpa [#allocation23], 1
    %4744 = vsyncpa [#allocation26], 1
    %4745 = vsyncpa [#allocation29], 1

// kernel: iibmil_encoder_forward.4
$region0: #{iibmil_encoder_forward.4}
  #allocation0 [shape = 'u32[]', space=smem, size = 0x4, offset = 0x4, fixed_abs, tag = 'smem constant byte address 0x4 - core index']
  #allocation1 [shape = 'u32[144,128]{1,0:T(1,128)}', space=vmem, size = 0x12000, scoped, tag = 'internal scratch']
  %s0 = inlined_call_operand.smem [shape: u32[41], index: -1, kind: input, shape index: {}]
  %s1 = sld [smem:[%s0]]
  %s2 = scalar_lea.smem %s0, 1
  %s3 = sld [smem:[%s2]]
  %s4 = scalar_lea.smem %s0, 2
  %s5 = sld [smem:[%s4]]
  %s6 = scalar_lea.smem %s0, 3
  %s7 = sld [smem:[%s6]]
  %s8 = scalar_lea.smem %s0, 4
  %s9 = sld [smem:[%s8]]
  %s10 = scalar_lea.smem %s0, 5
  %s11 = sld [smem:[%s10]]
  %s12 = scalar_lea.smem %s0, 6
  %s13 = sld [smem:[%s12]]
  %s14 = scalar_lea.smem %s0, 7
  %s15 = sld [smem:[%s14]]
  %s16 = scalar_lea.smem %s0, 8
  %s17 = sld [smem:[%s16]]
  %s18 = scalar_lea.smem %s0, 9
  %s19 = sld [smem:[%s18]]
  %s20 = scalar_lea.smem %s0, 10
  %s21 = sld [smem:[%s20]]
  %s22 = scalar_lea.smem %s0, 11
  %s23 = sld [smem:[%s22]]
  %s24 = scalar_lea.smem %s0, 12
  %s25 = sld [smem:[%s24]]
  %s26 = scalar_lea.smem %s0, 13
  %s27 = sld [smem:[%s26]]
  %s28 = scalar_lea.smem %s0, 14
  %s29 = sld [smem:[%s28]]
  %s30 = scalar_lea.smem %s0, 15
  %s31 = sld [smem:[%s30]]
  %s32 = scalar_lea.smem %s0, 16
  %s33 = sld [smem:[%s32]]
  %s34 = scalar_lea.smem %s0, 17
  %s35 = sld [smem:[%s34]]
  %s36 = scalar_lea.smem %s0, 18
  %s37 = sld [smem:[%s36]]
  %s38 = scalar_lea.smem %s0, 19
  %s39 = sld [smem:[%s38]]
  %s40 = scalar_lea.smem %s0, 20
  %s41 = sld [smem:[%s40]]
  %s42 = scalar_lea.smem %s0, 21
  %s43 = sld [smem:[%s42]]
  %s44 = scalar_lea.smem %s0, 22
  %s45 = sld [smem:[%s44]]
  %s46 = scalar_lea.smem %s0, 23
  %s47 = sld [smem:[%s46]]
  %s48 = scalar_lea.smem %s0, 24
  %s49 = sld [smem:[%s48]]
  %s50 = scalar_lea.smem %s0, 25
  %s51 = sld [smem:[%s50]]
  %s52 = scalar_lea.smem %s0, 26
  %s53 = sld [smem:[%s52]]
  %s54 = scalar_lea.smem %s0, 27
  %s55 = sld [smem:[%s54]]
  %s56 = scalar_lea.smem %s0, 28
  %s57 = sld [smem:[%s56]]
  %s58 = scalar_lea.smem %s0, 29
  %s59 = sld [smem:[%s58]]
  %s60 = scalar_lea.smem %s0, 30
  %s61 = sld [smem:[%s60]]
  %s62 = scalar_lea.smem %s0, 31
  %s63 = sld [smem:[%s62]]
  %s64 = scalar_lea.smem %s0, 32
  %s65 = sld [smem:[%s64]]
  %s66 = scalar_lea.smem %s0, 33
  %s67 = sld [smem:[%s66]]
  %s68 = scalar_lea.smem %s0, 34
  %s69 = sld [smem:[%s68]]
  %s70 = scalar_lea.smem %s0, 35
  %s71 = sld [smem:[%s70]]
  %s72 = scalar_lea.smem %s0, 36
  %s73 = sld [smem:[%s72]]
  %s74 = scalar_lea.smem %s0, 37
  %s75 = sld [smem:[%s74]]
  %s76 = scalar_lea.smem %s0, 38
  %s77 = sld [smem:[%s76]]
  %s78 = scalar_lea.smem %s0, 39
  %s79 = sld [smem:[%s78]]
  %s80 = scalar_lea.smem %s0, 40
  %s81 = sld [smem:[%s80]]
  %s82 = sld [smem:[#allocation0]]
  $region193: #{iibmil_encoder_forward.4} parent=0
    _
  %s84 = ssub.s32 1, %s82
  %s85 = scalar_select 0, %s84, %s82
  loop: start=0, step=1, limit=4
  $region2: #{iibmil_encoder_forward.4} parent=0 // loop_pre_header
    _
  $region3: #{iibmil_encoder_forward.4} parent=0 // loop_header
    %s87 = sphi 0, %s91
    %p88 = scmp.ge.s32.totalorder %s87, 4
    %s97 = sphi 0, %s99
    %s100 = sphi 0, %s97
    %s101 = sphi 0, %s100
    %s117 = sphi 0, %s101
    %s123 = sphi 0, %s125
    %s126 = sphi 0, %s123
    %s127 = sphi 0, %s126
    %s143 = sphi 0, %s127
    %s147 = sphi 0, %s147
    %s149 = sphi 0, %s147
    %s150 = sphi 0, %s149
    %s164 = sphi 0, %s150
    %s168 = sphi 0, %s168
    %s170 = sphi 0, %s168
    %s171 = sphi 0, %s170
    %s185 = sphi 0, %s171
    %s189 = sphi 0, %s189
    %s191 = sphi 0, %s189
    %s192 = sphi 0, %s191
    %s206 = sphi 0, %s192
    %s210 = sphi 0, %s210
    %s212 = sphi 0, %s210
    %s213 = sphi 0, %s212
    %s227 = sphi 0, %s213
    %s231 = sphi 0, %s231
    %s233 = sphi 0, %s231
    %s234 = sphi 0, %s233
    %s248 = sphi 0, %s234
    %s252 = sphi 0, %s252
    %s254 = sphi 0, %s252
    %s255 = sphi 0, %s254
    %s269 = sphi 0, %s255
    %s273 = sphi 0, %s273
    %s275 = sphi 0, %s273
    %s276 = sphi 0, %s275
    %s290 = sphi 0, %s276
    %s294 = sphi 0, %s294
    %s296 = sphi 0, %s294
    %s297 = sphi 0, %s296
    %s311 = sphi 0, %s297
    %s315 = sphi 0, %s315
    %s317 = sphi 0, %s315
    %s318 = sphi 0, %s317
    %s332 = sphi 0, %s318
    %s336 = sphi 0, %s336
    %s338 = sphi 0, %s336
    %s339 = sphi 0, %s338
    %s353 = sphi 0, %s339
    %s357 = sphi 0, %s357
    %s359 = sphi 0, %s357
    %s360 = sphi 0, %s359
    %s374 = sphi 0, %s360
    %s378 = sphi 0, %s378
    %s380 = sphi 0, %s378
    %s381 = sphi 0, %s380
    %s395 = sphi 0, %s381
    %s399 = sphi 0, %s399
    %s401 = sphi 0, %s399
    %s402 = sphi 0, %s401
    %s416 = sphi 0, %s402
    %s420 = sphi 0, %s420
    %s422 = sphi 0, %s420
    %s423 = sphi 0, %s422
    %s437 = sphi 0, %s423
    %s441 = sphi 0, %s441
    %s443 = sphi 0, %s441
    %s444 = sphi 0, %s443
    %s458 = sphi 0, %s444
    %s462 = sphi 0, %s462
    %s464 = sphi 0, %s462
    %s465 = sphi 0, %s464
    %s479 = sphi 0, %s465
    %s483 = sphi 0, %s483
    %s485 = sphi 0, %s483
    %s486 = sphi 0, %s485
    %s500 = sphi 0, %s486
    %s504 = sphi 0, %s504
    %s506 = sphi 0, %s504
    %s507 = sphi 0, %s506
    %s521 = sphi 0, %s507
    %s525 = sphi 0, %s525
    %s527 = sphi 0, %s525
    %s528 = sphi 0, %s527
    %s542 = sphi 0, %s528
    %s546 = sphi 0, %s546
    %s548 = sphi 0, %s546
    %s549 = sphi 0, %s548
    %s563 = sphi 0, %s549
    %s567 = sphi 0, %s567
    %s569 = sphi 0, %s567
    %s570 = sphi 0, %s569
    %s584 = sphi 0, %s570
    %s588 = sphi 0, %s588
    %s590 = sphi 0, %s588
    %s591 = sphi 0, %s590
    %s605 = sphi 0, %s591
    %s609 = sphi 0, %s609
    %s611 = sphi 0, %s609
    %s612 = sphi 0, %s611
    %s626 = sphi 0, %s612
    %s630 = sphi 0, %s630
    %s632 = sphi 0, %s630
    %s633 = sphi 0, %s632
    %s647 = sphi 0, %s633
    %s651 = sphi 0, %s651
    %s653 = sphi 0, %s651
    %s654 = sphi 0, %s653
    %s668 = sphi 0, %s654
    %s672 = sphi 0, %s672
    %s674 = sphi 0, %s672
    %s675 = sphi 0, %s674
    %s689 = sphi 0, %s675
    %s693 = sphi 0, %s693
    %s695 = sphi 0, %s693
    %s696 = sphi 0, %s695
    %s710 = sphi 0, %s696
    %s714 = sphi 0, %s714
    %s716 = sphi 0, %s714
    %s717 = sphi 0, %s716
    %s731 = sphi 0, %s717
    %s735 = sphi 0, %s735
    %s737 = sphi 0, %s735
    %s738 = sphi 0, %s737
    %s752 = sphi 0, %s738
    %s756 = sphi 0, %s756
    %s758 = sphi 0, %s756
    %s759 = sphi 0, %s758
    %s773 = sphi 0, %s759
    %s777 = sphi 0, %s777
    %s779 = sphi 0, %s777
    %s780 = sphi 0, %s779
    %s794 = sphi 0, %s780
    %s798 = sphi 0, %s798
    %s800 = sphi 0, %s798
    %s801 = sphi 0, %s800
    %s815 = sphi 0, %s801
    %s819 = sphi 0, %s819
    %s821 = sphi 0, %s819
    %s822 = sphi 0, %s821
    %s836 = sphi 0, %s822
    %s840 = sphi 0, %s840
    %s842 = sphi 0, %s840
    %s843 = sphi 0, %s842
    %s857 = sphi 0, %s843
    %s861 = sphi 0, %s861
    %s863 = sphi 0, %s861
    %s864 = sphi 0, %s863
    %s878 = sphi 0, %s864
    %s882 = sphi 0, %s882
    %s884 = sphi 0, %s882
    %s885 = sphi 0, %s884
    %s899 = sphi 0, %s885
    %s903 = sphi 0, %s903
    %s905 = sphi 0, %s903
    %s906 = sphi 0, %s905
    %s920 = sphi 0, %s906
    %s924 = sphi 0, %s924
    %s926 = sphi 0, %s924
    %s927 = sphi 0, %s926
    %s941 = sphi 0, %s927
    %s947 = sphi 0, %s949
    %s950 = sphi 0, %s947
    %s951 = sphi 0, %s950
    %s967 = sphi 0, %s951
  $region4: #{iibmil_encoder_forward.4} parent=0 // loop_header_branch
    %90 = sbr.rel (%p88) target = $region8
  $region5: #{iibmil_encoder_forward.4} parent=0 // loop_body
    %s92 = ssub.s32 %s87, 1
    %s93 = ssub.s32 %s87, 2
    %s94 = sadd.s32 %s87, 1
    %s95 = ssub.s32 %s87, %s94
    %p96 = scmp.eq.s32.totalorder %s95, 0
    %s98 = sadd.s32 %s97, 1
    %s99 = scalar_select %p96, %s97, %s98
    %p102 = pneg %p96
    %p103 = scmp.eq.s32.totalorder %s87, 1
    %p104 = por %p102, %p103
    %p105 = scmp.ne.s32.totalorder %s97, %s100
    %p106 = scmp.eq.s32.totalorder %s87, 0
    %p107 = por %p105, %p106
    %p108 = scmp.ne.s32.totalorder %s97, %s100
    %p109 = scmp.eq.s32.totalorder %s92, 1
    %p110 = por %p108, %p109
    %p111 = scmp.ne.s32.totalorder %s100, %s101
    %p112 = scmp.eq.s32.totalorder %s92, 0
    %p113 = por %p111, %p112
    %p114 = scmp.ne.s32.totalorder %s100, %s101
    %p115 = scmp.eq.s32.totalorder %s93, 1
    %p116 = por %p114, %p115
    %p118 = scmp.ne.s32.totalorder %s101, %s117
    %p119 = scmp.eq.s32.totalorder %s93, 0
    %p120 = por %p118, %p119
    %s121 = ssub.s32 %s87, %s94
    %p122 = scmp.eq.s32.totalorder %s121, 0
    %s124 = sadd.s32 %s123, 1
    %s125 = scalar_select %p122, %s123, %s124
    %p128 = pneg %p122
    %p129 = scmp.eq.s32.totalorder %s87, 1
    %p130 = por %p128, %p129
    %p131 = scmp.ne.s32.totalorder %s123, %s126
    %p132 = scmp.eq.s32.totalorder %s87, 0
    %p133 = por %p131, %p132
    %p134 = scmp.ne.s32.totalorder %s123, %s126
    %p135 = scmp.eq.s32.totalorder %s92, 1
    %p136 = por %p134, %p135
    %p137 = scmp.ne.s32.totalorder %s126, %s127
    %p138 = scmp.eq.s32.totalorder %s92, 0
    %p139 = por %p137, %p138
    %p140 = scmp.ne.s32.totalorder %s126, %s127
    %p141 = scmp.eq.s32.totalorder %s93, 1
    %p142 = por %p140, %p141
    %p144 = scmp.ne.s32.totalorder %s127, %s143
    %p145 = scmp.eq.s32.totalorder %s93, 0
    %p146 = por %p144, %p145
    %s148 = sadd.s32 %s147, 1
    %p151 = scmp.eq.s32.totalorder %s87, 1
    %p152 = scmp.ne.s32.totalorder %s147, %s149
    %p153 = scmp.eq.s32.totalorder %s87, 0
    %p154 = por %p152, %p153
    %p155 = scmp.ne.s32.totalorder %s147, %s149
    %p156 = scmp.eq.s32.totalorder %s92, 1
    %p157 = por %p155, %p156
    %p158 = scmp.ne.s32.totalorder %s149, %s150
    %p159 = scmp.eq.s32.totalorder %s92, 0
    %p160 = por %p158, %p159
    %p161 = scmp.ne.s32.totalorder %s149, %s150
    %p162 = scmp.eq.s32.totalorder %s93, 1
    %p163 = por %p161, %p162
    %p165 = scmp.ne.s32.totalorder %s150, %s164
    %p166 = scmp.eq.s32.totalorder %s93, 0
    %p167 = por %p165, %p166
    %s169 = sadd.s32 %s168, 1
    %p172 = scmp.eq.s32.totalorder %s87, 1
    %p173 = scmp.ne.s32.totalorder %s168, %s170
    %p174 = scmp.eq.s32.totalorder %s87, 0
    %p175 = por %p173, %p174
    %p176 = scmp.ne.s32.totalorder %s168, %s170
    %p177 = scmp.eq.s32.totalorder %s92, 1
    %p178 = por %p176, %p177
    %p179 = scmp.ne.s32.totalorder %s170, %s171
    %p180 = scmp.eq.s32.totalorder %s92, 0
    %p181 = por %p179, %p180
    %p182 = scmp.ne.s32.totalorder %s170, %s171
    %p183 = scmp.eq.s32.totalorder %s93, 1
    %p184 = por %p182, %p183
    %p186 = scmp.ne.s32.totalorder %s171, %s185
    %p187 = scmp.eq.s32.totalorder %s93, 0
    %p188 = por %p186, %p187
    %s190 = sadd.s32 %s189, 1
    %p193 = scmp.eq.s32.totalorder %s87, 1
    %p194 = scmp.ne.s32.totalorder %s189, %s191
    %p195 = scmp.eq.s32.totalorder %s87, 0
    %p196 = por %p194, %p195
    %p197 = scmp.ne.s32.totalorder %s189, %s191
    %p198 = scmp.eq.s32.totalorder %s92, 1
    %p199 = por %p197, %p198
    %p200 = scmp.ne.s32.totalorder %s191, %s192
    %p201 = scmp.eq.s32.totalorder %s92, 0
    %p202 = por %p200, %p201
    %p203 = scmp.ne.s32.totalorder %s191, %s192
    %p204 = scmp.eq.s32.totalorder %s93, 1
    %p205 = por %p203, %p204
    %p207 = scmp.ne.s32.totalorder %s192, %s206
    %p208 = scmp.eq.s32.totalorder %s93, 0
    %p209 = por %p207, %p208
    %s211 = sadd.s32 %s210, 1
    %p214 = scmp.eq.s32.totalorder %s87, 1
    %p215 = scmp.ne.s32.totalorder %s210, %s212
    %p216 = scmp.eq.s32.totalorder %s87, 0
    %p217 = por %p215, %p216
    %p218 = scmp.ne.s32.totalorder %s210, %s212
    %p219 = scmp.eq.s32.totalorder %s92, 1
    %p220 = por %p218, %p219
    %p221 = scmp.ne.s32.totalorder %s212, %s213
    %p222 = scmp.eq.s32.totalorder %s92, 0
    %p223 = por %p221, %p222
    %p224 = scmp.ne.s32.totalorder %s212, %s213
    %p225 = scmp.eq.s32.totalorder %s93, 1
    %p226 = por %p224, %p225
    %p228 = scmp.ne.s32.totalorder %s213, %s227
    %p229 = scmp.eq.s32.totalorder %s93, 0
    %p230 = por %p228, %p229
    %s232 = sadd.s32 %s231, 1
    %p235 = scmp.eq.s32.totalorder %s87, 1
    %p236 = scmp.ne.s32.totalorder %s231, %s233
    %p237 = scmp.eq.s32.totalorder %s87, 0
    %p238 = por %p236, %p237
    %p239 = scmp.ne.s32.totalorder %s231, %s233
    %p240 = scmp.eq.s32.totalorder %s92, 1
    %p241 = por %p239, %p240
    %p242 = scmp.ne.s32.totalorder %s233, %s234
    %p243 = scmp.eq.s32.totalorder %s92, 0
    %p244 = por %p242, %p243
    %p245 = scmp.ne.s32.totalorder %s233, %s234
    %p246 = scmp.eq.s32.totalorder %s93, 1
    %p247 = por %p245, %p246
    %p249 = scmp.ne.s32.totalorder %s234, %s248
    %p250 = scmp.eq.s32.totalorder %s93, 0
    %p251 = por %p249, %p250
    %s253 = sadd.s32 %s252, 1
    %p256 = scmp.eq.s32.totalorder %s87, 1
    %p257 = scmp.ne.s32.totalorder %s252, %s254
    %p258 = scmp.eq.s32.totalorder %s87, 0
    %p259 = por %p257, %p258
    %p260 = scmp.ne.s32.totalorder %s252, %s254
    %p261 = scmp.eq.s32.totalorder %s92, 1
    %p262 = por %p260, %p261
    %p263 = scmp.ne.s32.totalorder %s254, %s255
    %p264 = scmp.eq.s32.totalorder %s92, 0
    %p265 = por %p263, %p264
    %p266 = scmp.ne.s32.totalorder %s254, %s255
    %p267 = scmp.eq.s32.totalorder %s93, 1
    %p268 = por %p266, %p267
    %p270 = scmp.ne.s32.totalorder %s255, %s269
    %p271 = scmp.eq.s32.totalorder %s93, 0
    %p272 = por %p270, %p271
    %s274 = sadd.s32 %s273, 1
    %p277 = scmp.eq.s32.totalorder %s87, 1
    %p278 = scmp.ne.s32.totalorder %s273, %s275
    %p279 = scmp.eq.s32.totalorder %s87, 0
    %p280 = por %p278, %p279
    %p281 = scmp.ne.s32.totalorder %s273, %s275
    %p282 = scmp.eq.s32.totalorder %s92, 1
    %p283 = por %p281, %p282
    %p284 = scmp.ne.s32.totalorder %s275, %s276
    %p285 = scmp.eq.s32.totalorder %s92, 0
    %p286 = por %p284, %p285
    %p287 = scmp.ne.s32.totalorder %s275, %s276
    %p288 = scmp.eq.s32.totalorder %s93, 1
    %p289 = por %p287, %p288
    %p291 = scmp.ne.s32.totalorder %s276, %s290
    %p292 = scmp.eq.s32.totalorder %s93, 0
    %p293 = por %p291, %p292
    %s295 = sadd.s32 %s294, 1
    %p298 = scmp.eq.s32.totalorder %s87, 1
    %p299 = scmp.ne.s32.totalorder %s294, %s296
    %p300 = scmp.eq.s32.totalorder %s87, 0
    %p301 = por %p299, %p300
    %p302 = scmp.ne.s32.totalorder %s294, %s296
    %p303 = scmp.eq.s32.totalorder %s92, 1
    %p304 = por %p302, %p303
    %p305 = scmp.ne.s32.totalorder %s296, %s297
    %p306 = scmp.eq.s32.totalorder %s92, 0
    %p307 = por %p305, %p306
    %p308 = scmp.ne.s32.totalorder %s296, %s297
    %p309 = scmp.eq.s32.totalorder %s93, 1
    %p310 = por %p308, %p309
    %p312 = scmp.ne.s32.totalorder %s297, %s311
    %p313 = scmp.eq.s32.totalorder %s93, 0
    %p314 = por %p312, %p313
    %s316 = sadd.s32 %s315, 1
    %p319 = scmp.eq.s32.totalorder %s87, 1
    %p320 = scmp.ne.s32.totalorder %s315, %s317
    %p321 = scmp.eq.s32.totalorder %s87, 0
    %p322 = por %p320, %p321
    %p323 = scmp.ne.s32.totalorder %s315, %s317
    %p324 = scmp.eq.s32.totalorder %s92, 1
    %p325 = por %p323, %p324
    %p326 = scmp.ne.s32.totalorder %s317, %s318
    %p327 = scmp.eq.s32.totalorder %s92, 0
    %p328 = por %p326, %p327
    %p329 = scmp.ne.s32.totalorder %s317, %s318
    %p330 = scmp.eq.s32.totalorder %s93, 1
    %p331 = por %p329, %p330
    %p333 = scmp.ne.s32.totalorder %s318, %s332
    %p334 = scmp.eq.s32.totalorder %s93, 0
    %p335 = por %p333, %p334
    %s337 = sadd.s32 %s336, 1
    %p340 = scmp.eq.s32.totalorder %s87, 1
    %p341 = scmp.ne.s32.totalorder %s336, %s338
    %p342 = scmp.eq.s32.totalorder %s87, 0
    %p343 = por %p341, %p342
    %p344 = scmp.ne.s32.totalorder %s336, %s338
    %p345 = scmp.eq.s32.totalorder %s92, 1
    %p346 = por %p344, %p345
    %p347 = scmp.ne.s32.totalorder %s338, %s339
    %p348 = scmp.eq.s32.totalorder %s92, 0
    %p349 = por %p347, %p348
    %p350 = scmp.ne.s32.totalorder %s338, %s339
    %p351 = scmp.eq.s32.totalorder %s93, 1
    %p352 = por %p350, %p351
    %p354 = scmp.ne.s32.totalorder %s339, %s353
    %p355 = scmp.eq.s32.totalorder %s93, 0
    %p356 = por %p354, %p355
    %s358 = sadd.s32 %s357, 1
    %p361 = scmp.eq.s32.totalorder %s87, 1
    %p362 = scmp.ne.s32.totalorder %s357, %s359
    %p363 = scmp.eq.s32.totalorder %s87, 0
    %p364 = por %p362, %p363
    %p365 = scmp.ne.s32.totalorder %s357, %s359
    %p366 = scmp.eq.s32.totalorder %s92, 1
    %p367 = por %p365, %p366
    %p368 = scmp.ne.s32.totalorder %s359, %s360
    %p369 = scmp.eq.s32.totalorder %s92, 0
    %p370 = por %p368, %p369
    %p371 = scmp.ne.s32.totalorder %s359, %s360
    %p372 = scmp.eq.s32.totalorder %s93, 1
    %p373 = por %p371, %p372
    %p375 = scmp.ne.s32.totalorder %s360, %s374
    %p376 = scmp.eq.s32.totalorder %s93, 0
    %p377 = por %p375, %p376
    %s379 = sadd.s32 %s378, 1
    %p382 = scmp.eq.s32.totalorder %s87, 1
    %p383 = scmp.ne.s32.totalorder %s378, %s380
    %p384 = scmp.eq.s32.totalorder %s87, 0
    %p385 = por %p383, %p384
    %p386 = scmp.ne.s32.totalorder %s378, %s380
    %p387 = scmp.eq.s32.totalorder %s92, 1
    %p388 = por %p386, %p387
    %p389 = scmp.ne.s32.totalorder %s380, %s381
    %p390 = scmp.eq.s32.totalorder %s92, 0
    %p391 = por %p389, %p390
    %p392 = scmp.ne.s32.totalorder %s380, %s381
    %p393 = scmp.eq.s32.totalorder %s93, 1
    %p394 = por %p392, %p393
    %p396 = scmp.ne.s32.totalorder %s381, %s395
    %p397 = scmp.eq.s32.totalorder %s93, 0
    %p398 = por %p396, %p397
    %s400 = sadd.s32 %s399, 1
    %p403 = scmp.eq.s32.totalorder %s87, 1
    %p404 = scmp.ne.s32.totalorder %s399, %s401
    %p405 = scmp.eq.s32.totalorder %s87, 0
    %p406 = por %p404, %p405
    %p407 = scmp.ne.s32.totalorder %s399, %s401
    %p408 = scmp.eq.s32.totalorder %s92, 1
    %p409 = por %p407, %p408
    %p410 = scmp.ne.s32.totalorder %s401, %s402
    %p411 = scmp.eq.s32.totalorder %s92, 0
    %p412 = por %p410, %p411
    %p413 = scmp.ne.s32.totalorder %s401, %s402
    %p414 = scmp.eq.s32.totalorder %s93, 1
    %p415 = por %p413, %p414
    %p417 = scmp.ne.s32.totalorder %s402, %s416
    %p418 = scmp.eq.s32.totalorder %s93, 0
    %p419 = por %p417, %p418
    %s421 = sadd.s32 %s420, 1
    %p424 = scmp.eq.s32.totalorder %s87, 1
    %p425 = scmp.ne.s32.totalorder %s420, %s422
    %p426 = scmp.eq.s32.totalorder %s87, 0
    %p427 = por %p425, %p426
    %p428 = scmp.ne.s32.totalorder %s420, %s422
    %p429 = scmp.eq.s32.totalorder %s92, 1
    %p430 = por %p428, %p429
    %p431 = scmp.ne.s32.totalorder %s422, %s423
    %p432 = scmp.eq.s32.totalorder %s92, 0
    %p433 = por %p431, %p432
    %p434 = scmp.ne.s32.totalorder %s422, %s423
    %p435 = scmp.eq.s32.totalorder %s93, 1
    %p436 = por %p434, %p435
    %p438 = scmp.ne.s32.totalorder %s423, %s437
    %p439 = scmp.eq.s32.totalorder %s93, 0
    %p440 = por %p438, %p439
    %s442 = sadd.s32 %s441, 1
    %p445 = scmp.eq.s32.totalorder %s87, 1
    %p446 = scmp.ne.s32.totalorder %s441, %s443
    %p447 = scmp.eq.s32.totalorder %s87, 0
    %p448 = por %p446, %p447
    %p449 = scmp.ne.s32.totalorder %s441, %s443
    %p450 = scmp.eq.s32.totalorder %s92, 1
    %p451 = por %p449, %p450
    %p452 = scmp.ne.s32.totalorder %s443, %s444
    %p453 = scmp.eq.s32.totalorder %s92, 0
    %p454 = por %p452, %p453
    %p455 = scmp.ne.s32.totalorder %s443, %s444
    %p456 = scmp.eq.s32.totalorder %s93, 1
    %p457 = por %p455, %p456
    %p459 = scmp.ne.s32.totalorder %s444, %s458
    %p460 = scmp.eq.s32.totalorder %s93, 0
    %p461 = por %p459, %p460
    %s463 = sadd.s32 %s462, 1
    %p466 = scmp.eq.s32.totalorder %s87, 1
    %p467 = scmp.ne.s32.totalorder %s462, %s464
    %p468 = scmp.eq.s32.totalorder %s87, 0
    %p469 = por %p467, %p468
    %p470 = scmp.ne.s32.totalorder %s462, %s464
    %p471 = scmp.eq.s32.totalorder %s92, 1
    %p472 = por %p470, %p471
    %p473 = scmp.ne.s32.totalorder %s464, %s465
    %p474 = scmp.eq.s32.totalorder %s92, 0
    %p475 = por %p473, %p474
    %p476 = scmp.ne.s32.totalorder %s464, %s465
    %p477 = scmp.eq.s32.totalorder %s93, 1
    %p478 = por %p476, %p477
    %p480 = scmp.ne.s32.totalorder %s465, %s479
    %p481 = scmp.eq.s32.totalorder %s93, 0
    %p482 = por %p480, %p481
    %s484 = sadd.s32 %s483, 1
    %p487 = scmp.eq.s32.totalorder %s87, 1
    %p488 = scmp.ne.s32.totalorder %s483, %s485
    %p489 = scmp.eq.s32.totalorder %s87, 0
    %p490 = por %p488, %p489
    %p491 = scmp.ne.s32.totalorder %s483, %s485
    %p492 = scmp.eq.s32.totalorder %s92, 1
    %p493 = por %p491, %p492
    %p494 = scmp.ne.s32.totalorder %s485, %s486
    %p495 = scmp.eq.s32.totalorder %s92, 0
    %p496 = por %p494, %p495
    %p497 = scmp.ne.s32.totalorder %s485, %s486
    %p498 = scmp.eq.s32.totalorder %s93, 1
    %p499 = por %p497, %p498
    %p501 = scmp.ne.s32.totalorder %s486, %s500
    %p502 = scmp.eq.s32.totalorder %s93, 0
    %p503 = por %p501, %p502
    %s505 = sadd.s32 %s504, 1
    %p508 = scmp.eq.s32.totalorder %s87, 1
    %p509 = scmp.ne.s32.totalorder %s504, %s506
    %p510 = scmp.eq.s32.totalorder %s87, 0
    %p511 = por %p509, %p510
    %p512 = scmp.ne.s32.totalorder %s504, %s506
    %p513 = scmp.eq.s32.totalorder %s92, 1
    %p514 = por %p512, %p513
    %p515 = scmp.ne.s32.totalorder %s506, %s507
    %p516 = scmp.eq.s32.totalorder %s92, 0
    %p517 = por %p515, %p516
    %p518 = scmp.ne.s32.totalorder %s506, %s507
    %p519 = scmp.eq.s32.totalorder %s93, 1
    %p520 = por %p518, %p519
    %p522 = scmp.ne.s32.totalorder %s507, %s521
    %p523 = scmp.eq.s32.totalorder %s93, 0
    %p524 = por %p522, %p523
    %s526 = sadd.s32 %s525, 1
    %p529 = scmp.eq.s32.totalorder %s87, 1
    %p530 = scmp.ne.s32.totalorder %s525, %s527
    %p531 = scmp.eq.s32.totalorder %s87, 0
    %p532 = por %p530, %p531
    %p533 = scmp.ne.s32.totalorder %s525, %s527
    %p534 = scmp.eq.s32.totalorder %s92, 1
    %p535 = por %p533, %p534
    %p536 = scmp.ne.s32.totalorder %s527, %s528
    %p537 = scmp.eq.s32.totalorder %s92, 0
    %p538 = por %p536, %p537
    %p539 = scmp.ne.s32.totalorder %s527, %s528
    %p540 = scmp.eq.s32.totalorder %s93, 1
    %p541 = por %p539, %p540
    %p543 = scmp.ne.s32.totalorder %s528, %s542
    %p544 = scmp.eq.s32.totalorder %s93, 0
    %p545 = por %p543, %p544
    %s547 = sadd.s32 %s546, 1
    %p550 = scmp.eq.s32.totalorder %s87, 1
    %p551 = scmp.ne.s32.totalorder %s546, %s548
    %p552 = scmp.eq.s32.totalorder %s87, 0
    %p553 = por %p551, %p552
    %p554 = scmp.ne.s32.totalorder %s546, %s548
    %p555 = scmp.eq.s32.totalorder %s92, 1
    %p556 = por %p554, %p555
    %p557 = scmp.ne.s32.totalorder %s548, %s549
    %p558 = scmp.eq.s32.totalorder %s92, 0
    %p559 = por %p557, %p558
    %p560 = scmp.ne.s32.totalorder %s548, %s549
    %p561 = scmp.eq.s32.totalorder %s93, 1
    %p562 = por %p560, %p561
    %p564 = scmp.ne.s32.totalorder %s549, %s563
    %p565 = scmp.eq.s32.totalorder %s93, 0
    %p566 = por %p564, %p565
    %s568 = sadd.s32 %s567, 1
    %p571 = scmp.eq.s32.totalorder %s87, 1
    %p572 = scmp.ne.s32.totalorder %s567, %s569
    %p573 = scmp.eq.s32.totalorder %s87, 0
    %p574 = por %p572, %p573
    %p575 = scmp.ne.s32.totalorder %s567, %s569
    %p576 = scmp.eq.s32.totalorder %s92, 1
    %p577 = por %p575, %p576
    %p578 = scmp.ne.s32.totalorder %s569, %s570
    %p579 = scmp.eq.s32.totalorder %s92, 0
    %p580 = por %p578, %p579
    %p581 = scmp.ne.s32.totalorder %s569, %s570
    %p582 = scmp.eq.s32.totalorder %s93, 1
    %p583 = por %p581, %p582
    %p585 = scmp.ne.s32.totalorder %s570, %s584
    %p586 = scmp.eq.s32.totalorder %s93, 0
    %p587 = por %p585, %p586
    %s589 = sadd.s32 %s588, 1
    %p592 = scmp.eq.s32.totalorder %s87, 1
    %p593 = scmp.ne.s32.totalorder %s588, %s590
    %p594 = scmp.eq.s32.totalorder %s87, 0
    %p595 = por %p593, %p594
    %p596 = scmp.ne.s32.totalorder %s588, %s590
    %p597 = scmp.eq.s32.totalorder %s92, 1
    %p598 = por %p596, %p597
    %p599 = scmp.ne.s32.totalorder %s590, %s591
    %p600 = scmp.eq.s32.totalorder %s92, 0
    %p601 = por %p599, %p600
    %p602 = scmp.ne.s32.totalorder %s590, %s591
    %p603 = scmp.eq.s32.totalorder %s93, 1
    %p604 = por %p602, %p603
    %p606 = scmp.ne.s32.totalorder %s591, %s605
    %p607 = scmp.eq.s32.totalorder %s93, 0
    %p608 = por %p606, %p607
    %s610 = sadd.s32 %s609, 1
    %p613 = scmp.eq.s32.totalorder %s87, 1
    %p614 = scmp.ne.s32.totalorder %s609, %s611
    %p615 = scmp.eq.s32.totalorder %s87, 0
    %p616 = por %p614, %p615
    %p617 = scmp.ne.s32.totalorder %s609, %s611
    %p618 = scmp.eq.s32.totalorder %s92, 1
    %p619 = por %p617, %p618
    %p620 = scmp.ne.s32.totalorder %s611, %s612
    %p621 = scmp.eq.s32.totalorder %s92, 0
    %p622 = por %p620, %p621
    %p623 = scmp.ne.s32.totalorder %s611, %s612
    %p624 = scmp.eq.s32.totalorder %s93, 1
    %p625 = por %p623, %p624
    %p627 = scmp.ne.s32.totalorder %s612, %s626
    %p628 = scmp.eq.s32.totalorder %s93, 0
    %p629 = por %p627, %p628
    %s631 = sadd.s32 %s630, 1
    %p634 = scmp.eq.s32.totalorder %s87, 1
    %p635 = scmp.ne.s32.totalorder %s630, %s632
    %p636 = scmp.eq.s32.totalorder %s87, 0
    %p637 = por %p635, %p636
    %p638 = scmp.ne.s32.totalorder %s630, %s632
    %p639 = scmp.eq.s32.totalorder %s92, 1
    %p640 = por %p638, %p639
    %p641 = scmp.ne.s32.totalorder %s632, %s633
    %p642 = scmp.eq.s32.totalorder %s92, 0
    %p643 = por %p641, %p642
    %p644 = scmp.ne.s32.totalorder %s632, %s633
    %p645 = scmp.eq.s32.totalorder %s93, 1
    %p646 = por %p644, %p645
    %p648 = scmp.ne.s32.totalorder %s633, %s647
    %p649 = scmp.eq.s32.totalorder %s93, 0
    %p650 = por %p648, %p649
    %s652 = sadd.s32 %s651, 1
    %p655 = scmp.eq.s32.totalorder %s87, 1
    %p656 = scmp.ne.s32.totalorder %s651, %s653
    %p657 = scmp.eq.s32.totalorder %s87, 0
    %p658 = por %p656, %p657
    %p659 = scmp.ne.s32.totalorder %s651, %s653
    %p660 = scmp.eq.s32.totalorder %s92, 1
    %p661 = por %p659, %p660
    %p662 = scmp.ne.s32.totalorder %s653, %s654
    %p663 = scmp.eq.s32.totalorder %s92, 0
    %p664 = por %p662, %p663
    %p665 = scmp.ne.s32.totalorder %s653, %s654
    %p666 = scmp.eq.s32.totalorder %s93, 1
    %p667 = por %p665, %p666
    %p669 = scmp.ne.s32.totalorder %s654, %s668
    %p670 = scmp.eq.s32.totalorder %s93, 0
    %p671 = por %p669, %p670
    %s673 = sadd.s32 %s672, 1
    %p676 = scmp.eq.s32.totalorder %s87, 1
    %p677 = scmp.ne.s32.totalorder %s672, %s674
    %p678 = scmp.eq.s32.totalorder %s87, 0
    %p679 = por %p677, %p678
    %p680 = scmp.ne.s32.totalorder %s672, %s674
    %p681 = scmp.eq.s32.totalorder %s92, 1
    %p682 = por %p680, %p681
    %p683 = scmp.ne.s32.totalorder %s674, %s675
    %p684 = scmp.eq.s32.totalorder %s92, 0
    %p685 = por %p683, %p684
    %p686 = scmp.ne.s32.totalorder %s674, %s675
    %p687 = scmp.eq.s32.totalorder %s93, 1
    %p688 = por %p686, %p687
    %p690 = scmp.ne.s32.totalorder %s675, %s689
    %p691 = scmp.eq.s32.totalorder %s93, 0
    %p692 = por %p690, %p691
    %s694 = sadd.s32 %s693, 1
    %p697 = scmp.eq.s32.totalorder %s87, 1
    %p698 = scmp.ne.s32.totalorder %s693, %s695
    %p699 = scmp.eq.s32.totalorder %s87, 0
    %p700 = por %p698, %p699
    %p701 = scmp.ne.s32.totalorder %s693, %s695
    %p702 = scmp.eq.s32.totalorder %s92, 1
    %p703 = por %p701, %p702
    %p704 = scmp.ne.s32.totalorder %s695, %s696
    %p705 = scmp.eq.s32.totalorder %s92, 0
    %p706 = por %p704, %p705
    %p707 = scmp.ne.s32.totalorder %s695, %s696
    %p708 = scmp.eq.s32.totalorder %s93, 1
    %p709 = por %p707, %p708
    %p711 = scmp.ne.s32.totalorder %s696, %s710
    %p712 = scmp.eq.s32.totalorder %s93, 0
    %p713 = por %p711, %p712
    %s715 = sadd.s32 %s714, 1
    %p718 = scmp.eq.s32.totalorder %s87, 1
    %p719 = scmp.ne.s32.totalorder %s714, %s716
    %p720 = scmp.eq.s32.totalorder %s87, 0
    %p721 = por %p719, %p720
    %p722 = scmp.ne.s32.totalorder %s714, %s716
    %p723 = scmp.eq.s32.totalorder %s92, 1
    %p724 = por %p722, %p723
    %p725 = scmp.ne.s32.totalorder %s716, %s717
    %p726 = scmp.eq.s32.totalorder %s92, 0
    %p727 = por %p725, %p726
    %p728 = scmp.ne.s32.totalorder %s716, %s717
    %p729 = scmp.eq.s32.totalorder %s93, 1
    %p730 = por %p728, %p729
    %p732 = scmp.ne.s32.totalorder %s717, %s731
    %p733 = scmp.eq.s32.totalorder %s93, 0
    %p734 = por %p732, %p733
    %s736 = sadd.s32 %s735, 1
    %p739 = scmp.eq.s32.totalorder %s87, 1
    %p740 = scmp.ne.s32.totalorder %s735, %s737
    %p741 = scmp.eq.s32.totalorder %s87, 0
    %p742 = por %p740, %p741
    %p743 = scmp.ne.s32.totalorder %s735, %s737
    %p744 = scmp.eq.s32.totalorder %s92, 1
    %p745 = por %p743, %p744
    %p746 = scmp.ne.s32.totalorder %s737, %s738
    %p747 = scmp.eq.s32.totalorder %s92, 0
    %p748 = por %p746, %p747
    %p749 = scmp.ne.s32.totalorder %s737, %s738
    %p750 = scmp.eq.s32.totalorder %s93, 1
    %p751 = por %p749, %p750
    %p753 = scmp.ne.s32.totalorder %s738, %s752
    %p754 = scmp.eq.s32.totalorder %s93, 0
    %p755 = por %p753, %p754
    %s757 = sadd.s32 %s756, 1
    %p760 = scmp.eq.s32.totalorder %s87, 1
    %p761 = scmp.ne.s32.totalorder %s756, %s758
    %p762 = scmp.eq.s32.totalorder %s87, 0
    %p763 = por %p761, %p762
    %p764 = scmp.ne.s32.totalorder %s756, %s758
    %p765 = scmp.eq.s32.totalorder %s92, 1
    %p766 = por %p764, %p765
    %p767 = scmp.ne.s32.totalorder %s758, %s759
    %p768 = scmp.eq.s32.totalorder %s92, 0
    %p769 = por %p767, %p768
    %p770 = scmp.ne.s32.totalorder %s758, %s759
    %p771 = scmp.eq.s32.totalorder %s93, 1
    %p772 = por %p770, %p771
    %p774 = scmp.ne.s32.totalorder %s759, %s773
    %p775 = scmp.eq.s32.totalorder %s93, 0
    %p776 = por %p774, %p775
    %s778 = sadd.s32 %s777, 1
    %p781 = scmp.eq.s32.totalorder %s87, 1
    %p782 = scmp.ne.s32.totalorder %s777, %s779
    %p783 = scmp.eq.s32.totalorder %s87, 0
    %p784 = por %p782, %p783
    %p785 = scmp.ne.s32.totalorder %s777, %s779
    %p786 = scmp.eq.s32.totalorder %s92, 1
    %p787 = por %p785, %p786
    %p788 = scmp.ne.s32.totalorder %s779, %s780
    %p789 = scmp.eq.s32.totalorder %s92, 0
    %p790 = por %p788, %p789
    %p791 = scmp.ne.s32.totalorder %s779, %s780
    %p792 = scmp.eq.s32.totalorder %s93, 1
    %p793 = por %p791, %p792
    %p795 = scmp.ne.s32.totalorder %s780, %s794
    %p796 = scmp.eq.s32.totalorder %s93, 0
    %p797 = por %p795, %p796
    %s799 = sadd.s32 %s798, 1
    %p802 = scmp.eq.s32.totalorder %s87, 1
    %p803 = scmp.ne.s32.totalorder %s798, %s800
    %p804 = scmp.eq.s32.totalorder %s87, 0
    %p805 = por %p803, %p804
    %p806 = scmp.ne.s32.totalorder %s798, %s800
    %p807 = scmp.eq.s32.totalorder %s92, 1
    %p808 = por %p806, %p807
    %p809 = scmp.ne.s32.totalorder %s800, %s801
    %p810 = scmp.eq.s32.totalorder %s92, 0
    %p811 = por %p809, %p810
    %p812 = scmp.ne.s32.totalorder %s800, %s801
    %p813 = scmp.eq.s32.totalorder %s93, 1
    %p814 = por %p812, %p813
    %p816 = scmp.ne.s32.totalorder %s801, %s815
    %p817 = scmp.eq.s32.totalorder %s93, 0
    %p818 = por %p816, %p817
    %s820 = sadd.s32 %s819, 1
    %p823 = scmp.eq.s32.totalorder %s87, 1
    %p824 = scmp.ne.s32.totalorder %s819, %s821
    %p825 = scmp.eq.s32.totalorder %s87, 0
    %p826 = por %p824, %p825
    %p827 = scmp.ne.s32.totalorder %s819, %s821
    %p828 = scmp.eq.s32.totalorder %s92, 1
    %p829 = por %p827, %p828
    %p830 = scmp.ne.s32.totalorder %s821, %s822
    %p831 = scmp.eq.s32.totalorder %s92, 0
    %p832 = por %p830, %p831
    %p833 = scmp.ne.s32.totalorder %s821, %s822
    %p834 = scmp.eq.s32.totalorder %s93, 1
    %p835 = por %p833, %p834
    %p837 = scmp.ne.s32.totalorder %s822, %s836
    %p838 = scmp.eq.s32.totalorder %s93, 0
    %p839 = por %p837, %p838
    %s841 = sadd.s32 %s840, 1
    %p844 = scmp.eq.s32.totalorder %s87, 1
    %p845 = scmp.ne.s32.totalorder %s840, %s842
    %p846 = scmp.eq.s32.totalorder %s87, 0
    %p847 = por %p845, %p846
    %p848 = scmp.ne.s32.totalorder %s840, %s842
    %p849 = scmp.eq.s32.totalorder %s92, 1
    %p850 = por %p848, %p849
    %p851 = scmp.ne.s32.totalorder %s842, %s843
    %p852 = scmp.eq.s32.totalorder %s92, 0
    %p853 = por %p851, %p852
    %p854 = scmp.ne.s32.totalorder %s842, %s843
    %p855 = scmp.eq.s32.totalorder %s93, 1
    %p856 = por %p854, %p855
    %p858 = scmp.ne.s32.totalorder %s843, %s857
    %p859 = scmp.eq.s32.totalorder %s93, 0
    %p860 = por %p858, %p859
    %s862 = sadd.s32 %s861, 1
    %p865 = scmp.eq.s32.totalorder %s87, 1
    %p866 = scmp.ne.s32.totalorder %s861, %s863
    %p867 = scmp.eq.s32.totalorder %s87, 0
    %p868 = por %p866, %p867
    %p869 = scmp.ne.s32.totalorder %s861, %s863
    %p870 = scmp.eq.s32.totalorder %s92, 1
    %p871 = por %p869, %p870
    %p872 = scmp.ne.s32.totalorder %s863, %s864
    %p873 = scmp.eq.s32.totalorder %s92, 0
    %p874 = por %p872, %p873
    %p875 = scmp.ne.s32.totalorder %s863, %s864
    %p876 = scmp.eq.s32.totalorder %s93, 1
    %p877 = por %p875, %p876
    %p879 = scmp.ne.s32.totalorder %s864, %s878
    %p880 = scmp.eq.s32.totalorder %s93, 0
    %p881 = por %p879, %p880
    %s883 = sadd.s32 %s882, 1
    %p886 = scmp.eq.s32.totalorder %s87, 1
    %p887 = scmp.ne.s32.totalorder %s882, %s884
    %p888 = scmp.eq.s32.totalorder %s87, 0
    %p889 = por %p887, %p888
    %p890 = scmp.ne.s32.totalorder %s882, %s884
    %p891 = scmp.eq.s32.totalorder %s92, 1
    %p892 = por %p890, %p891
    %p893 = scmp.ne.s32.totalorder %s884, %s885
    %p894 = scmp.eq.s32.totalorder %s92, 0
    %p895 = por %p893, %p894
    %p896 = scmp.ne.s32.totalorder %s884, %s885
    %p897 = scmp.eq.s32.totalorder %s93, 1
    %p898 = por %p896, %p897
    %p900 = scmp.ne.s32.totalorder %s885, %s899
    %p901 = scmp.eq.s32.totalorder %s93, 0
    %p902 = por %p900, %p901
    %s904 = sadd.s32 %s903, 1
    %p907 = scmp.eq.s32.totalorder %s87, 1
    %p908 = scmp.ne.s32.totalorder %s903, %s905
    %p909 = scmp.eq.s32.totalorder %s87, 0
    %p910 = por %p908, %p909
    %p911 = scmp.ne.s32.totalorder %s903, %s905
    %p912 = scmp.eq.s32.totalorder %s92, 1
    %p913 = por %p911, %p912
    %p914 = scmp.ne.s32.totalorder %s905, %s906
    %p915 = scmp.eq.s32.totalorder %s92, 0
    %p916 = por %p914, %p915
    %p917 = scmp.ne.s32.totalorder %s905, %s906
    %p918 = scmp.eq.s32.totalorder %s93, 1
    %p919 = por %p917, %p918
    %p921 = scmp.ne.s32.totalorder %s906, %s920
    %p922 = scmp.eq.s32.totalorder %s93, 0
    %p923 = por %p921, %p922
    %s925 = sadd.s32 %s924, 1
    %p928 = scmp.eq.s32.totalorder %s87, 1
    %p929 = scmp.ne.s32.totalorder %s924, %s926
    %p930 = scmp.eq.s32.totalorder %s87, 0
    %p931 = por %p929, %p930
    %p932 = scmp.ne.s32.totalorder %s924, %s926
    %p933 = scmp.eq.s32.totalorder %s92, 1
    %p934 = por %p932, %p933
    %p935 = scmp.ne.s32.totalorder %s926, %s927
    %p936 = scmp.eq.s32.totalorder %s92, 0
    %p937 = por %p935, %p936
    %p938 = scmp.ne.s32.totalorder %s926, %s927
    %p939 = scmp.eq.s32.totalorder %s93, 1
    %p940 = por %p938, %p939
    %p942 = scmp.ne.s32.totalorder %s927, %s941
    %p943 = scmp.eq.s32.totalorder %s93, 0
    %p944 = por %p942, %p943
    %s945 = ssub.s32 %s87, %s94
    %p946 = scmp.eq.s32.totalorder %s945, 0
    %s948 = sadd.s32 %s947, 1
    %s949 = scalar_select %p946, %s947, %s948
    %p952 = pneg %p946
    %p953 = scmp.eq.s32.totalorder %s87, 1
    %p954 = por %p952, %p953
    %p955 = scmp.ne.s32.totalorder %s947, %s950
    %p956 = scmp.eq.s32.totalorder %s87, 0
    %p957 = por %p955, %p956
    %p958 = scmp.ne.s32.totalorder %s947, %s950
    %p959 = scmp.eq.s32.totalorder %s92, 1
    %p960 = por %p958, %p959
    %p961 = scmp.ne.s32.totalorder %s950, %s951
    %p962 = scmp.eq.s32.totalorder %s92, 0
    %p963 = por %p961, %p962
    %p964 = scmp.ne.s32.totalorder %s950, %s951
    %p965 = scmp.eq.s32.totalorder %s93, 1
    %p966 = por %p964, %p965
    %p968 = scmp.ne.s32.totalorder %s951, %s967
    %p969 = scmp.eq.s32.totalorder %s93, 0
    %p970 = por %p968, %p969
    %p971 = scmp.le.s32.totalorder 1, %s87
    %p972 = scmp.lt.s32.totalorder %s87, 3
    %p973 = pnand %p971, %p972
    %p974 = pneg %p973
    // Predicated region
    $region9: #{iibmil_encoder_forward.4} parent=5 // pred_check
      _
    $region10: #{iibmil_encoder_forward.4} parent=5 // pred_check_branch
      %976 = sbr.rel (%p973) target = $region12
    $region11: #{iibmil_encoder_forward.4} parent=5 // pred_region
      %s977 = ssub.s32 %s87, 1
      // Predicated region
      $region13: #{iibmil_encoder_forward.4} parent=11 // pred_check
        %p978 = pneg %p160
      $region14: #{iibmil_encoder_forward.4} parent=11 // pred_check_branch
        %980 = sbr.rel (%p978) target = $region16
      $region15: #{iibmil_encoder_forward.4} parent=11 // pred_region
        _
      $region16: #{iibmil_encoder_forward.4} parent=11 // pred_fallthru
        _
      // Predicated region
      $region17: #{iibmil_encoder_forward.4} parent=11 // pred_check
        %p981 = pneg %p181
      $region18: #{iibmil_encoder_forward.4} parent=11 // pred_check_branch
        %983 = sbr.rel (%p981) target = $region20
      $region19: #{iibmil_encoder_forward.4} parent=11 // pred_region
        _
      $region20: #{iibmil_encoder_forward.4} parent=11 // pred_fallthru
        _
      // Predicated region
      $region21: #{iibmil_encoder_forward.4} parent=11 // pred_check
        %p984 = pneg %p202
      $region22: #{iibmil_encoder_forward.4} parent=11 // pred_check_branch
        %986 = sbr.rel (%p984) target = $region24
      $region23: #{iibmil_encoder_forward.4} parent=11 // pred_region
        _
      $region24: #{iibmil_encoder_forward.4} parent=11 // pred_fallthru
        _
      // Predicated region
      $region25: #{iibmil_encoder_forward.4} parent=11 // pred_check
        %p987 = pneg %p223
      $region26: #{iibmil_encoder_forward.4} parent=11 // pred_check_branch
        %989 = sbr.rel (%p987) target = $region28
      $region27: #{iibmil_encoder_forward.4} parent=11 // pred_region
        _
      $region28: #{iibmil_encoder_forward.4} parent=11 // pred_fallthru
        _
      // Predicated region
      $region29: #{iibmil_encoder_forward.4} parent=11 // pred_check
        %p990 = pneg %p244
      $region30: #{iibmil_encoder_forward.4} parent=11 // pred_check_branch
        %992 = sbr.rel (%p990) target = $region32
      $region31: #{iibmil_encoder_forward.4} parent=11 // pred_region
        _
      $region32: #{iibmil_encoder_forward.4} parent=11 // pred_fallthru
        _
      // Predicated region
      $region33: #{iibmil_encoder_forward.4} parent=11 // pred_check
        %p993 = pneg %p265
      $region34: #{iibmil_encoder_forward.4} parent=11 // pred_check_branch
        %995 = sbr.rel (%p993) target = $region36
      $region35: #{iibmil_encoder_forward.4} parent=11 // pred_region
        _
      $region36: #{iibmil_encoder_forward.4} parent=11 // pred_fallthru
        _
      // Predicated region
      $region37: #{iibmil_encoder_forward.4} parent=11 // pred_check
        %p996 = pneg %p286
      $region38: #{iibmil_encoder_forward.4} parent=11 // pred_check_branch
        %998 = sbr.rel (%p996) target = $region40
      $region39: #{iibmil_encoder_forward.4} parent=11 // pred_region
        _
      $region40: #{iibmil_encoder_forward.4} parent=11 // pred_fallthru
        _
      // Predicated region
      $region41: #{iibmil_encoder_forward.4} parent=11 // pred_check
        %p999 = pneg %p307
      $region42: #{iibmil_encoder_forward.4} parent=11 // pred_check_branch
        %1001 = sbr.rel (%p999) target = $region44
      $region43: #{iibmil_encoder_forward.4} parent=11 // pred_region
        _
      $region44: #{iibmil_encoder_forward.4} parent=11 // pred_fallthru
        _
      // Predicated region
      $region45: #{iibmil_encoder_forward.4} parent=11 // pred_check
        %p1002 = pneg %p328
      $region46: #{iibmil_encoder_forward.4} parent=11 // pred_check_branch
        %1004 = sbr.rel (%p1002) target = $region48
      $region47: #{iibmil_encoder_forward.4} parent=11 // pred_region
        _
      $region48: #{iibmil_encoder_forward.4} parent=11 // pred_fallthru
        _
      // Predicated region
      $region49: #{iibmil_encoder_forward.4} parent=11 // pred_check
        %p1005 = pneg %p349
      $region50: #{iibmil_encoder_forward.4} parent=11 // pred_check_branch
        %1007 = sbr.rel (%p1005) target = $region52
      $region51: #{iibmil_encoder_forward.4} parent=11 // pred_region
        _
      $region52: #{iibmil_encoder_forward.4} parent=11 // pred_fallthru
        _
      // Predicated region
      $region53: #{iibmil_encoder_forward.4} parent=11 // pred_check
        %p1008 = pneg %p370
      $region54: #{iibmil_encoder_forward.4} parent=11 // pred_check_branch
        %1010 = sbr.rel (%p1008) target = $region56
      $region55: #{iibmil_encoder_forward.4} parent=11 // pred_region
        _
      $region56: #{iibmil_encoder_forward.4} parent=11 // pred_fallthru
        _
      // Predicated region
      $region57: #{iibmil_encoder_forward.4} parent=11 // pred_check
        %p1011 = pneg %p391
      $region58: #{iibmil_encoder_forward.4} parent=11 // pred_check_branch
        %1013 = sbr.rel (%p1011) target = $region60
      $region59: #{iibmil_encoder_forward.4} parent=11 // pred_region
        _
      $region60: #{iibmil_encoder_forward.4} parent=11 // pred_fallthru
        _
      // Predicated region
      $region61: #{iibmil_encoder_forward.4} parent=11 // pred_check
        %p1014 = pneg %p412
      $region62: #{iibmil_encoder_forward.4} parent=11 // pred_check_branch
        %1016 = sbr.rel (%p1014) target = $region64
      $region63: #{iibmil_encoder_forward.4} parent=11 // pred_region
        _
      $region64: #{iibmil_encoder_forward.4} parent=11 // pred_fallthru
        _
      // Predicated region
      $region65: #{iibmil_encoder_forward.4} parent=11 // pred_check
        %p1017 = pneg %p433
      $region66: #{iibmil_encoder_forward.4} parent=11 // pred_check_branch
        %1019 = sbr.rel (%p1017) target = $region68
      $region67: #{iibmil_encoder_forward.4} parent=11 // pred_region
        _
      $region68: #{iibmil_encoder_forward.4} parent=11 // pred_fallthru
        _
      // Predicated region
      $region69: #{iibmil_encoder_forward.4} parent=11 // pred_check
        %p1020 = pneg %p454
      $region70: #{iibmil_encoder_forward.4} parent=11 // pred_check_branch
        %1022 = sbr.rel (%p1020) target = $region72
      $region71: #{iibmil_encoder_forward.4} parent=11 // pred_region
        _
      $region72: #{iibmil_encoder_forward.4} parent=11 // pred_fallthru
        _
      // Predicated region
      $region73: #{iibmil_encoder_forward.4} parent=11 // pred_check
        %p1023 = pneg %p475
      $region74: #{iibmil_encoder_forward.4} parent=11 // pred_check_branch
        %1025 = sbr.rel (%p1023) target = $region76
      $region75: #{iibmil_encoder_forward.4} parent=11 // pred_region
        _
      $region76: #{iibmil_encoder_forward.4} parent=11 // pred_fallthru
        _
      // Predicated region
      $region77: #{iibmil_encoder_forward.4} parent=11 // pred_check
        %p1026 = pneg %p496
      $region78: #{iibmil_encoder_forward.4} parent=11 // pred_check_branch
        %1028 = sbr.rel (%p1026) target = $region80
      $region79: #{iibmil_encoder_forward.4} parent=11 // pred_region
        _
      $region80: #{iibmil_encoder_forward.4} parent=11 // pred_fallthru
        _
      // Predicated region
      $region81: #{iibmil_encoder_forward.4} parent=11 // pred_check
        %p1029 = pneg %p517
      $region82: #{iibmil_encoder_forward.4} parent=11 // pred_check_branch
        %1031 = sbr.rel (%p1029) target = $region84
      $region83: #{iibmil_encoder_forward.4} parent=11 // pred_region
        _
      $region84: #{iibmil_encoder_forward.4} parent=11 // pred_fallthru
        _
      // Predicated region
      $region85: #{iibmil_encoder_forward.4} parent=11 // pred_check
        %p1032 = pneg %p538
      $region86: #{iibmil_encoder_forward.4} parent=11 // pred_check_branch
        %1034 = sbr.rel (%p1032) target = $region88
      $region87: #{iibmil_encoder_forward.4} parent=11 // pred_region
        _
      $region88: #{iibmil_encoder_forward.4} parent=11 // pred_fallthru
        _
      // Predicated region
      $region89: #{iibmil_encoder_forward.4} parent=11 // pred_check
        %p1035 = pneg %p559
      $region90: #{iibmil_encoder_forward.4} parent=11 // pred_check_branch
        %1037 = sbr.rel (%p1035) target = $region92
      $region91: #{iibmil_encoder_forward.4} parent=11 // pred_region
        _
      $region92: #{iibmil_encoder_forward.4} parent=11 // pred_fallthru
        _
      // Predicated region
      $region93: #{iibmil_encoder_forward.4} parent=11 // pred_check
        %p1038 = pneg %p580
      $region94: #{iibmil_encoder_forward.4} parent=11 // pred_check_branch
        %1040 = sbr.rel (%p1038) target = $region96
      $region95: #{iibmil_encoder_forward.4} parent=11 // pred_region
        _
      $region96: #{iibmil_encoder_forward.4} parent=11 // pred_fallthru
        _
      // Predicated region
      $region97: #{iibmil_encoder_forward.4} parent=11 // pred_check
        %p1041 = pneg %p601
      $region98: #{iibmil_encoder_forward.4} parent=11 // pred_check_branch
        %1043 = sbr.rel (%p1041) target = $region100
      $region99: #{iibmil_encoder_forward.4} parent=11 // pred_region
        _
      $region100: #{iibmil_encoder_forward.4} parent=11 // pred_fallthru
        _
      // Predicated region
      $region101: #{iibmil_encoder_forward.4} parent=11 // pred_check
        %p1044 = pneg %p622
      $region102: #{iibmil_encoder_forward.4} parent=11 // pred_check_branch
        %1046 = sbr.rel (%p1044) target = $region104
      $region103: #{iibmil_encoder_forward.4} parent=11 // pred_region
        _
      $region104: #{iibmil_encoder_forward.4} parent=11 // pred_fallthru
        _
      // Predicated region
      $region105: #{iibmil_encoder_forward.4} parent=11 // pred_check
        %p1047 = pneg %p643
      $region106: #{iibmil_encoder_forward.4} parent=11 // pred_check_branch
        %1049 = sbr.rel (%p1047) target = $region108
      $region107: #{iibmil_encoder_forward.4} parent=11 // pred_region
        _
      $region108: #{iibmil_encoder_forward.4} parent=11 // pred_fallthru
        _
      // Predicated region
      $region109: #{iibmil_encoder_forward.4} parent=11 // pred_check
        %p1050 = pneg %p664
      $region110: #{iibmil_encoder_forward.4} parent=11 // pred_check_branch
        %1052 = sbr.rel (%p1050) target = $region112
      $region111: #{iibmil_encoder_forward.4} parent=11 // pred_region
        _
      $region112: #{iibmil_encoder_forward.4} parent=11 // pred_fallthru
        _
      // Predicated region
      $region113: #{iibmil_encoder_forward.4} parent=11 // pred_check
        %p1053 = pneg %p685
      $region114: #{iibmil_encoder_forward.4} parent=11 // pred_check_branch
        %1055 = sbr.rel (%p1053) target = $region116
      $region115: #{iibmil_encoder_forward.4} parent=11 // pred_region
        _
      $region116: #{iibmil_encoder_forward.4} parent=11 // pred_fallthru
        _
      // Predicated region
      $region117: #{iibmil_encoder_forward.4} parent=11 // pred_check
        %p1056 = pneg %p706
      $region118: #{iibmil_encoder_forward.4} parent=11 // pred_check_branch
        %1058 = sbr.rel (%p1056) target = $region120
      $region119: #{iibmil_encoder_forward.4} parent=11 // pred_region
        _
      $region120: #{iibmil_encoder_forward.4} parent=11 // pred_fallthru
        _
      // Predicated region
      $region121: #{iibmil_encoder_forward.4} parent=11 // pred_check
        %p1059 = pneg %p727
      $region122: #{iibmil_encoder_forward.4} parent=11 // pred_check_branch
        %1061 = sbr.rel (%p1059) target = $region124
      $region123: #{iibmil_encoder_forward.4} parent=11 // pred_region
        _
      $region124: #{iibmil_encoder_forward.4} parent=11 // pred_fallthru
        _
      // Predicated region
      $region125: #{iibmil_encoder_forward.4} parent=11 // pred_check
        %p1062 = pneg %p748
      $region126: #{iibmil_encoder_forward.4} parent=11 // pred_check_branch
        %1064 = sbr.rel (%p1062) target = $region128
      $region127: #{iibmil_encoder_forward.4} parent=11 // pred_region
        _
      $region128: #{iibmil_encoder_forward.4} parent=11 // pred_fallthru
        _
      // Predicated region
      $region129: #{iibmil_encoder_forward.4} parent=11 // pred_check
        %p1065 = pneg %p769
      $region130: #{iibmil_encoder_forward.4} parent=11 // pred_check_branch
        %1067 = sbr.rel (%p1065) target = $region132
      $region131: #{iibmil_encoder_forward.4} parent=11 // pred_region
        _
      $region132: #{iibmil_encoder_forward.4} parent=11 // pred_fallthru
        _
      // Predicated region
      $region133: #{iibmil_encoder_forward.4} parent=11 // pred_check
        %p1068 = pneg %p790
      $region134: #{iibmil_encoder_forward.4} parent=11 // pred_check_branch
        %1070 = sbr.rel (%p1068) target = $region136
      $region135: #{iibmil_encoder_forward.4} parent=11 // pred_region
        _
      $region136: #{iibmil_encoder_forward.4} parent=11 // pred_fallthru
        _
      // Predicated region
      $region137: #{iibmil_encoder_forward.4} parent=11 // pred_check
        %p1071 = pneg %p811
      $region138: #{iibmil_encoder_forward.4} parent=11 // pred_check_branch
        %1073 = sbr.rel (%p1071) target = $region140
      $region139: #{iibmil_encoder_forward.4} parent=11 // pred_region
        _
      $region140: #{iibmil_encoder_forward.4} parent=11 // pred_fallthru
        _
      // Predicated region
      $region141: #{iibmil_encoder_forward.4} parent=11 // pred_check
        %p1074 = pneg %p832
      $region142: #{iibmil_encoder_forward.4} parent=11 // pred_check_branch
        %1076 = sbr.rel (%p1074) target = $region144
      $region143: #{iibmil_encoder_forward.4} parent=11 // pred_region
        _
      $region144: #{iibmil_encoder_forward.4} parent=11 // pred_fallthru
        _
      // Predicated region
      $region145: #{iibmil_encoder_forward.4} parent=11 // pred_check
        %p1077 = pneg %p853
      $region146: #{iibmil_encoder_forward.4} parent=11 // pred_check_branch
        %1079 = sbr.rel (%p1077) target = $region148
      $region147: #{iibmil_encoder_forward.4} parent=11 // pred_region
        _
      $region148: #{iibmil_encoder_forward.4} parent=11 // pred_fallthru
        _
      // Predicated region
      $region149: #{iibmil_encoder_forward.4} parent=11 // pred_check
        %p1080 = pneg %p874
      $region150: #{iibmil_encoder_forward.4} parent=11 // pred_check_branch
        %1082 = sbr.rel (%p1080) target = $region152
      $region151: #{iibmil_encoder_forward.4} parent=11 // pred_region
        _
      $region152: #{iibmil_encoder_forward.4} parent=11 // pred_fallthru
        _
      // Predicated region
      $region153: #{iibmil_encoder_forward.4} parent=11 // pred_check
        %p1083 = pneg %p895
      $region154: #{iibmil_encoder_forward.4} parent=11 // pred_check_branch
        %1085 = sbr.rel (%p1083) target = $region156
      $region155: #{iibmil_encoder_forward.4} parent=11 // pred_region
        _
      $region156: #{iibmil_encoder_forward.4} parent=11 // pred_fallthru
        _
      // Predicated region
      $region157: #{iibmil_encoder_forward.4} parent=11 // pred_check
        %p1086 = pneg %p916
      $region158: #{iibmil_encoder_forward.4} parent=11 // pred_check_branch
        %1088 = sbr.rel (%p1086) target = $region160
      $region159: #{iibmil_encoder_forward.4} parent=11 // pred_region
        _
      $region160: #{iibmil_encoder_forward.4} parent=11 // pred_fallthru
        _
      // Predicated region
      $region161: #{iibmil_encoder_forward.4} parent=11 // pred_check
        %p1089 = pneg %p937
      $region162: #{iibmil_encoder_forward.4} parent=11 // pred_check_branch
        %1091 = sbr.rel (%p1089) target = $region164
      $region163: #{iibmil_encoder_forward.4} parent=11 // pred_region
        _
      $region164: #{iibmil_encoder_forward.4} parent=11 // pred_fallthru
        _
    $region12: #{iibmil_encoder_forward.4} parent=5 // pred_fallthru
      _
    %p1092 = scmp.lt.s32.totalorder %s87, 2
    // Predicated region
    $region165: #{iibmil_encoder_forward.4} parent=5 // pred_check
      %p1093 = pneg %p1092
    $region166: #{iibmil_encoder_forward.4} parent=5 // pred_check_branch
      %1095 = sbr.rel (%p1093) target = $region168
    $region167: #{iibmil_encoder_forward.4} parent=5 // pred_region
      // Predicated region
      $region169: #{iibmil_encoder_forward.4} parent=167 // pred_check
        %p1096 = pneg %p107
      $region170: #{iibmil_encoder_forward.4} parent=167 // pred_check_branch
        %1098 = sbr.rel (%p1096) target = $region172
      $region171: #{iibmil_encoder_forward.4} parent=167 // pred_region
        %p1099 = scmp.lt.s32.totalorder %s87, 1
        %s1100 = scalar_select %p1099, %s87, 1
        %s1101 = smul.addr %s1100, 8
        %s1102 = scalar_lea.vmem %s1, %s1101
      $region172: #{iibmil_encoder_forward.4} parent=167 // pred_fallthru
        _
      // Predicated region
      $region173: #{iibmil_encoder_forward.4} parent=167 // pred_check
        %p1103 = pneg %p133
      $region174: #{iibmil_encoder_forward.4} parent=167 // pred_check_branch
        %1105 = sbr.rel (%p1103) target = $region176
      $region175: #{iibmil_encoder_forward.4} parent=167 // pred_region
        %p1106 = scmp.lt.s32.totalorder %s87, 1
        %s1107 = scalar_select %p1106, %s87, 1
        %s1108 = smul.addr %s1107, 8
        %s1109 = scalar_lea.vmem %s3, %s1108
      $region176: #{iibmil_encoder_forward.4} parent=167 // pred_fallthru
        _
    $region168: #{iibmil_encoder_forward.4} parent=5 // pred_fallthru
      _
    %p1110 = scmp.le.s32.totalorder 1, %s87
    %p1111 = scmp.lt.s32.totalorder %s87, 3
    %p1112 = pnand %p1110, %p1111
    %p1113 = pneg %p1112
    // Predicated region
    $region177: #{iibmil_encoder_forward.4} parent=5 // pred_check
      _
    $region178: #{iibmil_encoder_forward.4} parent=5 // pred_check_branch
      %1115 = sbr.rel (%p1112) target = $region180
    $region179: #{iibmil_encoder_forward.4} parent=5 // pred_region
      %s1116 = ssub.s32 %s87, 1
      %p1117 = scmp.lt.s32.totalorder %s92, 1
      %s1118 = scalar_select %p1117, %s92, 1
      %s1119 = smul.addr %s1118, 8
      %s1120 = scalar_lea.vmem %s1, %s1119
      %p1121 = pneg %p113
      %p1122 = pneg %p110
      %p1123 = scmp.lt.s32.totalorder %s92, 1
      %s1124 = scalar_select %p1123, %s92, 1
      %s1125 = smul.addr %s1124, 8
      %s1126 = scalar_lea.vmem %s3, %s1125
      %p1127 = pneg %p139
      %p1128 = pneg %p136
      %p1129 = pneg %p160
      %p1130 = pneg %p157
      %p1131 = pneg %p181
      %p1132 = pneg %p178
      %p1133 = pneg %p202
      %p1134 = pneg %p199
      %p1135 = pneg %p223
      %p1136 = pneg %p220
      %p1137 = pneg %p244
      %p1138 = pneg %p241
      %p1139 = pneg %p265
      %p1140 = pneg %p262
      %p1141 = pneg %p286
      %p1142 = pneg %p283
      %p1143 = pneg %p307
      %p1144 = pneg %p304
      %p1145 = pneg %p328
      %p1146 = pneg %p325
      %p1147 = pneg %p349
      %p1148 = pneg %p346
      %p1149 = pneg %p370
      %p1150 = pneg %p367
      %p1151 = pneg %p391
      %p1152 = pneg %p388
      %p1153 = pneg %p412
      %p1154 = pneg %p409
      %p1155 = pneg %p433
      %p1156 = pneg %p430
      %p1157 = pneg %p454
      %p1158 = pneg %p451
      %p1159 = pneg %p475
      %p1160 = pneg %p472
      %p1161 = pneg %p496
      %p1162 = pneg %p493
      %p1163 = pneg %p517
      %p1164 = pneg %p514
      %p1165 = pneg %p538
      %p1166 = pneg %p535
      %p1167 = pneg %p559
      %p1168 = pneg %p556
      %p1169 = pneg %p580
      %p1170 = pneg %p577
      %p1171 = pneg %p601
      %p1172 = pneg %p598
      %p1173 = pneg %p622
      %p1174 = pneg %p619
      %p1175 = pneg %p643
      %p1176 = pneg %p640
      %p1177 = pneg %p664
      %p1178 = pneg %p661
      %p1179 = pneg %p685
      %p1180 = pneg %p682
      %p1181 = pneg %p706
      %p1182 = pneg %p703
      %p1183 = pneg %p727
      %p1184 = pneg %p724
      %p1185 = pneg %p748
      %p1186 = pneg %p745
      %p1187 = pneg %p769
      %p1188 = pneg %p766
      %p1189 = pneg %p790
      %p1190 = pneg %p787
      %p1191 = pneg %p811
      %p1192 = pneg %p808
      %p1193 = pneg %p832
      %p1194 = pneg %p829
      %p1195 = pneg %p853
      %p1196 = pneg %p850
      %p1197 = pneg %p874
      %p1198 = pneg %p871
      %p1199 = pneg %p895
      %p1200 = pneg %p892
      %p1201 = pneg %p916
      %p1202 = pneg %p913
      %p1203 = pneg %p937
      %p1204 = pneg %p934
      %p1205 = pneg %p963
      %p1206 = pneg %p960
      %p1207 = scmp.lt.s32.totalorder %s92, 1
      %s1208 = scalar_select %p1207, %s92, 1
      %s1209 = smul.addr %s1208, 8
      %s1210 = scalar_lea.vmem %s81, %s1209
      %p1211 = scmp.lt.s32.totalorder %s92, 1
      %s1212 = scalar_select %p1211, %s92, 1
      %s1213 = smul.addr %s1212, 8
      %s1214 = scalar_lea.vmem %s1, %s1213
      %p1215 = scmp.lt.s32.totalorder %s92, 1
      %s1216 = scalar_select %p1215, %s92, 1
      %s1217 = smul.addr %s1216, 8
      %s1218 = scalar_lea.vmem %s3, %s1217
      %p1219 = scmp.lt.s32.totalorder %s92, 1
      %s1220 = scalar_select %p1219, %s92, 1
      %s1221 = smul.addr %s1220, 8
      %s1222 = scalar_lea.vmem %s81, %s1221
      %v1224 = vld [vmem:[%s1214] sm:$0xff]
      %v1225 = vld [vmem:[%s5] sm:$0xf]
      %v1226 = vld [vmem:[%s5 + $0x4] sm:$0xf]
      %v1227 = vld [vmem:[%s5 + $0x8] sm:$0xf]
      %v1228 = vld [vmem:[%s5 + $0xc] sm:$0xf]
      %v1229 = vpack.c.bf16 %v1224, %v1224
      %v1230 = vld [vmem:[%s7] sm:$0x1]
      %v1232 = vlaneseq
      %v1233 = vshrl.u32 %v1232, 7
      %v1234 = vsub.s32 0, %v1233
      %v1235 = vrot.slane %v1230, %v1234
      %v1241 = vunpack.c.l.b16 %v1225
      %v1242 = vunpack.c.l.b16 %v1226
      %v1243 = vunpack.c.l.b16 %v1227
      %v1244 = vunpack.c.l.b16 %v1228
      %v1245 = vpack.c.b16 %v1242, %v1241
      %v1246 = vpack.c.b16 %v1244, %v1243
      %vm1249 = vcmask 261120
      %v1251 = vsel %vm1249, %v1229, 0
      %1253 = vmatprep.subr.bf16.mxu0 0
      %1254 = vmatpush1.bf16.msra.mxu0 0
      %1255 = vmatprep.subr.bf16.mxu0 0
      %1256 = vmatpush1.bf16.msra.mxu0 0
      %1257 = vmatprep.subr.bf16.mxu0 0
      %1258 = vmatpush1.bf16.msra.mxu0 0
      %1259 = vmatprep.subr.bf16.mxu0 0
      %1260 = vmatpush1.bf16.msra.mxu0 0
      %1261 = vmatprep.subr.bf16.mxu0 0
      %1262 = vmatpush1.bf16.msra.mxu0 0
      %1263 = vmatprep.subr.bf16.mxu0 0
      %1264 = vmatpush1.bf16.msra.mxu0 0
      %1265 = vmatprep.subr.bf16.mxu0 0
      %1266 = vmatpush1.bf16.msra.mxu0 %v1246
      %1267 = vmatprep.subr.bf16.mxu0 0
      %1268 = vmatpush1.bf16.msra.mxu0 %v1245
      %1269 = vmatprep.subr.bf16.mxu0 0
      %1270 = vmatpush2.bf16.msra.mxu0 0
      %1271 = vmatprep.subr.bf16.mxu0 0
      %1272 = vmatpush2.bf16.msra.mxu0 0
      %1273 = vmatprep.subr.bf16.mxu0 0
      %1274 = vmatpush2.bf16.msra.mxu0 0
      %1275 = vmatprep.subr.bf16.mxu0 0
      %1276 = vmatpush2.bf16.msra.mxu0 0
      %1277 = vmatprep.subr.bf16.mxu0 0
      %1278 = vmatpush2.bf16.msra.mxu0 0
      %1279 = vmatprep.subr.bf16.mxu0 0
      %1280 = vmatpush2.bf16.msra.mxu0 0
      %1281 = vmatprep.subr.bf16.mxu0 0
      %1282 = vmatpush2.bf16.msra.mxu0 0
      %1283 = vmatprep.subr.bf16.mxu0 0
      %1284 = vmatpush2.bf16.msra.mxu0 0
      %1285 = vmatprep.mubr.bf16.mxu0 0
      %1286 = vmatmul.mubr.bf16.gmra.mxu0 %v1251
      %v1287 = vpop.f32.mrf.mxu0
      %v1288 = vadd.f32 %v1235, %v1287
      %v1289 = vpop.f32.mrf.mxu0
      %v1290 = vpop.f32.mrf.mxu0
      %v1291 = vpop.f32.mrf.mxu0
      %1292 = vdwg.mxu0
      %v1293 = vtanh.pop %v1288
      %v1294 = vld [vmem:[%s9] sm:$0x1]
      %v1295 = vld [vmem:[%s11] sm:$0x1]
      %vm1296 = vcmask 523264
      %v1297 = vsel %vm1296, %v1293, 0.0
      %1298 = vadd.xlane.f32.xlu0 %v1297
      %v1299 = vpop.xlane.xlu0 %1298
      %v1300 = vrcp.pop 64.0
      %v1301 = vmul.f32 %v1299, %v1300
      %v1302 = vsub.f32 %v1293, %v1301
      %v1303 = vmul.f32 %v1302, %v1302
      %v1304 = vsel %vm1296, %v1303, 0.0
      %1305 = vadd.xlane.f32.xlu0 %v1304
      %v1306 = vpop.xlane.xlu0 %1305
      %v1307 = vmul.f32 %v1306, %v1300
      %v1308 = vadd.f32 %v1307, 1e-05
      %v1309 = vrsqrt.pop %v1308
      %v1310 = vmul.f32 %v1302, %v1309
      %v1312 = vlaneseq
      %v1313 = vshrl.u32 %v1312, 7
      %v1314 = vsub.s32 0, %v1313
      %v1315 = vrot.slane %v1294, %v1314
      %v1317 = vmul.f32 %v1310, %v1315
      %v1319 = vlaneseq
      %v1320 = vshrl.u32 %v1319, 7
      %v1321 = vsub.s32 0, %v1320
      %v1322 = vrot.slane %v1295, %v1321
      %v1324 = vadd.f32 %v1317, %v1322
      %v1325 = vld [vmem:[%s13] sm:$0xf]
      %v1326 = vld [vmem:[%s13 + $0x4] sm:$0xf]
      %v1327 = vld [vmem:[%s13 + $0x8] sm:$0xf]
      %v1328 = vld [vmem:[%s13 + $0xc] sm:$0xf]
      %v1329 = vld [vmem:[%s13 + $0x10] sm:$0xf]
      %v1330 = vld [vmem:[%s13 + $0x14] sm:$0xf]
      %v1331 = vld [vmem:[%s13 + $0x18] sm:$0xf]
      %v1332 = vld [vmem:[%s13 + $0x1c] sm:$0xf]
      %v1333 = vpack.c.bf16 %v1324, %v1324
      %v1334 = vld [vmem:[%s15] sm:$0x1]
      %v1336 = vlaneseq
      %v1337 = vshrl.u32 %v1336, 7
      %v1338 = vsub.s32 0, %v1337
      %v1339 = vrot.slane %v1334, %v1338
      %v1349 = vunpack.c.l.b16 %v1325
      %v1350 = vunpack.c.l.b16 %v1326
      %v1351 = vunpack.c.l.b16 %v1327
      %v1352 = vunpack.c.l.b16 %v1328
      %v1353 = vunpack.c.l.b16 %v1329
      %v1354 = vunpack.c.l.b16 %v1330
      %v1355 = vunpack.c.l.b16 %v1331
      %v1356 = vunpack.c.l.b16 %v1332
      %v1357 = vpack.c.b16 %v1350, %v1349
      %v1358 = vpack.c.b16 %v1352, %v1351
      %v1359 = vpack.c.b16 %v1354, %v1353
      %v1360 = vpack.c.b16 %v1356, %v1355
      %v1366 = vsel %vm1296, %v1333, 0
      %1368 = vmatprep.subr.bf16.mxu0 0
      %1369 = vmatpush1.bf16.msra.mxu0 0
      %1370 = vmatprep.subr.bf16.mxu0 0
      %1371 = vmatpush1.bf16.msra.mxu0 0
      %1372 = vmatprep.subr.bf16.mxu0 0
      %1373 = vmatpush1.bf16.msra.mxu0 0
      %1374 = vmatprep.subr.bf16.mxu0 0
      %1375 = vmatpush1.bf16.msra.mxu0 0
      %1376 = vmatprep.subr.bf16.mxu0 0
      %1377 = vmatpush1.bf16.msra.mxu0 %v1360
      %1378 = vmatprep.subr.bf16.mxu0 0
      %1379 = vmatpush1.bf16.msra.mxu0 %v1359
      %1380 = vmatprep.subr.bf16.mxu0 0
      %1381 = vmatpush1.bf16.msra.mxu0 %v1358
      %1382 = vmatprep.subr.bf16.mxu0 0
      %1383 = vmatpush1.bf16.msra.mxu0 %v1357
      %1384 = vmatprep.subr.bf16.mxu0 0
      %1385 = vmatpush2.bf16.msra.mxu0 0
      %1386 = vmatprep.subr.bf16.mxu0 0
      %1387 = vmatpush2.bf16.msra.mxu0 0
      %1388 = vmatprep.subr.bf16.mxu0 0
      %1389 = vmatpush2.bf16.msra.mxu0 0
      %1390 = vmatprep.subr.bf16.mxu0 0
      %1391 = vmatpush2.bf16.msra.mxu0 0
      %1392 = vmatprep.subr.bf16.mxu0 0
      %1393 = vmatpush2.bf16.msra.mxu0 0
      %1394 = vmatprep.subr.bf16.mxu0 0
      %1395 = vmatpush2.bf16.msra.mxu0 0
      %1396 = vmatprep.subr.bf16.mxu0 0
      %1397 = vmatpush2.bf16.msra.mxu0 0
      %1398 = vmatprep.subr.bf16.mxu0 0
      %1399 = vmatpush2.bf16.msra.mxu0 0
      %1400 = vmatprep.mubr.bf16.mxu0 0
      %1401 = vmatmul.mubr.bf16.gmra.mxu0 %v1366
      %v1402 = vpop.f32.mrf.mxu0
      %v1403 = vadd.f32 %v1339, %v1402
      %v1404 = vpop.f32.mrf.mxu0
      %v1405 = vpop.f32.mrf.mxu0
      %v1406 = vpop.f32.mrf.mxu0
      %1407 = vdwg.mxu0
      %v1408 = vtanh.pop %v1403
      %v1409 = vld [vmem:[%s17] sm:$0x1]
      %v1410 = vld [vmem:[%s19] sm:$0x1]
      %1411 = vadd.xlane.f32.xlu0 %v1408
      %v1412 = vpop.xlane.xlu0 %1411
      %v1413 = vrcp.pop 128.0
      %v1414 = vmul.f32 %v1412, %v1413
      %v1415 = vsub.f32 %v1408, %v1414
      %v1416 = vmul.f32 %v1415, %v1415
      %1417 = vadd.xlane.f32.xlu0 %v1416
      %v1418 = vpop.xlane.xlu0 %1417
      %v1419 = vmul.f32 %v1418, %v1413
      %v1420 = vadd.f32 %v1419, 1e-05
      %v1421 = vrsqrt.pop %v1420
      %v1422 = vmul.f32 %v1415, %v1421
      %v1424 = vlaneseq
      %v1425 = vshrl.u32 %v1424, 7
      %v1426 = vsub.s32 0, %v1425
      %v1427 = vrot.slane %v1409, %v1426
      %v1429 = vmul.f32 %v1422, %v1427
      %v1431 = vlaneseq
      %v1432 = vshrl.u32 %v1431, 7
      %v1433 = vsub.s32 0, %v1432
      %v1434 = vrot.slane %v1410, %v1433
      %v1436 = vadd.f32 %v1429, %v1434
      %v1437 = vld [vmem:[%s21] sm:$0xf]
      %v1438 = vld [vmem:[%s21 + $0x4] sm:$0xf]
      %v1439 = vld [vmem:[%s21 + $0x8] sm:$0xf]
      %v1440 = vld [vmem:[%s21 + $0xc] sm:$0xf]
      %v1441 = vld [vmem:[%s21 + $0x10] sm:$0xf]
      %v1442 = vld [vmem:[%s21 + $0x14] sm:$0xf]
      %v1443 = vld [vmem:[%s21 + $0x18] sm:$0xf]
      %v1444 = vld [vmem:[%s21 + $0x1c] sm:$0xf]
      %v1445 = vld [vmem:[%s21 + $0x20] sm:$0xf]
      %v1446 = vld [vmem:[%s21 + $0x24] sm:$0xf]
      %v1447 = vld [vmem:[%s21 + $0x28] sm:$0xf]
      %v1448 = vld [vmem:[%s21 + $0x2c] sm:$0xf]
      %v1449 = vld [vmem:[%s21 + $0x30] sm:$0xf]
      %v1450 = vld [vmem:[%s21 + $0x34] sm:$0xf]
      %v1451 = vld [vmem:[%s21 + $0x38] sm:$0xf]
      %v1452 = vld [vmem:[%s21 + $0x3c] sm:$0xf]
      %v1453 = vpack.c.bf16 %v1436, %v1436
      %v1454 = vld [vmem:[%s23] sm:$0x1]
      %v1456 = vlaneseq
      %v1457 = vshrl.u32 %v1456, 7
      %v1458 = vsub.s32 0, %v1457
      %v1459 = vrot.slane %v1454, %v1458
      %v1477 = vunpack.c.l.b16 %v1437
      %v1478 = vunpack.c.l.b16 %v1438
      %v1479 = vunpack.c.l.b16 %v1439
      %v1480 = vunpack.c.l.b16 %v1440
      %v1481 = vunpack.c.l.b16 %v1441
      %v1482 = vunpack.c.l.b16 %v1442
      %v1483 = vunpack.c.l.b16 %v1443
      %v1484 = vunpack.c.l.b16 %v1444
      %v1485 = vunpack.c.l.b16 %v1445
      %v1486 = vunpack.c.l.b16 %v1446
      %v1487 = vunpack.c.l.b16 %v1447
      %v1488 = vunpack.c.l.b16 %v1448
      %v1489 = vunpack.c.l.b16 %v1449
      %v1490 = vunpack.c.l.b16 %v1450
      %v1491 = vunpack.c.l.b16 %v1451
      %v1492 = vunpack.c.l.b16 %v1452
      %v1493 = vpack.c.b16 %v1478, %v1477
      %v1494 = vpack.c.b16 %v1480, %v1479
      %v1495 = vpack.c.b16 %v1482, %v1481
      %v1496 = vpack.c.b16 %v1484, %v1483
      %v1497 = vpack.c.b16 %v1486, %v1485
      %v1498 = vpack.c.b16 %v1488, %v1487
      %v1499 = vpack.c.b16 %v1490, %v1489
      %v1500 = vpack.c.b16 %v1492, %v1491
      %1509 = vmatprep.subr.bf16.mxu0 0
      %1510 = vmatpush1.bf16.msra.mxu0 %v1500
      %1511 = vmatprep.subr.bf16.mxu0 0
      %1512 = vmatpush1.bf16.msra.mxu0 %v1499
      %1513 = vmatprep.subr.bf16.mxu0 0
      %1514 = vmatpush1.bf16.msra.mxu0 %v1498
      %1515 = vmatprep.subr.bf16.mxu0 0
      %1516 = vmatpush1.bf16.msra.mxu0 %v1497
      %1517 = vmatprep.subr.bf16.mxu0 0
      %1518 = vmatpush1.bf16.msra.mxu0 %v1496
      %1519 = vmatprep.subr.bf16.mxu0 0
      %1520 = vmatpush1.bf16.msra.mxu0 %v1495
      %1521 = vmatprep.subr.bf16.mxu0 0
      %1522 = vmatpush1.bf16.msra.mxu0 %v1494
      %1523 = vmatprep.subr.bf16.mxu0 0
      %1524 = vmatpush1.bf16.msra.mxu0 %v1493
      %1525 = vmatprep.subr.bf16.mxu0 0
      %1526 = vmatpush2.bf16.msra.mxu0 0
      %1527 = vmatprep.subr.bf16.mxu0 0
      %1528 = vmatpush2.bf16.msra.mxu0 0
      %1529 = vmatprep.subr.bf16.mxu0 0
      %1530 = vmatpush2.bf16.msra.mxu0 0
      %1531 = vmatprep.subr.bf16.mxu0 0
      %1532 = vmatpush2.bf16.msra.mxu0 0
      %1533 = vmatprep.subr.bf16.mxu0 0
      %1534 = vmatpush2.bf16.msra.mxu0 0
      %1535 = vmatprep.subr.bf16.mxu0 0
      %1536 = vmatpush2.bf16.msra.mxu0 0
      %1537 = vmatprep.subr.bf16.mxu0 0
      %1538 = vmatpush2.bf16.msra.mxu0 0
      %1539 = vmatprep.subr.bf16.mxu0 0
      %1540 = vmatpush2.bf16.msra.mxu0 0
      %1541 = vmatprep.mubr.bf16.mxu0 0
      %1542 = vmatmul.mubr.bf16.gmra.mxu0 %v1453
      %v1543 = vpop.f32.mrf.mxu0
      %v1544 = vadd.f32 %v1459, %v1543
      %v1545 = vpop.f32.mrf.mxu0
      %v1546 = vpop.f32.mrf.mxu0
      %v1547 = vpop.f32.mrf.mxu0
      %1548 = vdwg.mxu0
      %v1549 = vtanh.pop %v1544
      %v1550 = vld [vmem:[%s25] sm:$0x1]
      %v1551 = vld [vmem:[%s27] sm:$0x1]
      %v1552 = vsel %vm1296, %v1549, 0.0
      %1553 = vadd.xlane.f32.xlu0 %v1552
      %v1554 = vpop.xlane.xlu0 %1553
      %v1555 = vmul.f32 %v1554, %v1300
      %v1556 = vsub.f32 %v1549, %v1555
      %v1557 = vmul.f32 %v1556, %v1556
      %v1558 = vsel %vm1296, %v1557, 0.0
      %1559 = vadd.xlane.f32.xlu0 %v1558
      %v1560 = vpop.xlane.xlu0 %1559
      %v1561 = vmul.f32 %v1560, %v1300
      %v1562 = vadd.f32 %v1561, 1e-05
      %v1563 = vrsqrt.pop %v1562
      %v1564 = vmul.f32 %v1556, %v1563
      %v1566 = vlaneseq
      %v1567 = vshrl.u32 %v1566, 7
      %v1568 = vsub.s32 0, %v1567
      %v1569 = vrot.slane %v1550, %v1568
      %v1571 = vmul.f32 %v1564, %v1569
      %v1573 = vlaneseq
      %v1574 = vshrl.u32 %v1573, 7
      %v1575 = vsub.s32 0, %v1574
      %v1576 = vrot.slane %v1551, %v1575
      %v1578 = vadd.f32 %v1571, %v1576
      %v1579 = vld [vmem:[%s29] sm:$0xf]
      %v1580 = vld [vmem:[%s29 + $0x4] sm:$0xf]
      %v1581 = vld [vmem:[%s29 + $0x8] sm:$0xf]
      %v1582 = vld [vmem:[%s29 + $0xc] sm:$0xf]
      %v1583 = vld [vmem:[%s29 + $0x10] sm:$0xf]
      %v1584 = vld [vmem:[%s29 + $0x14] sm:$0xf]
      %v1585 = vld [vmem:[%s29 + $0x18] sm:$0xf]
      %v1586 = vld [vmem:[%s29 + $0x1c] sm:$0xf]
      %v1587 = vpack.c.bf16 %v1578, %v1578
      %v1588 = vld [vmem:[%s31] sm:$0x1]
      %v1590 = vlaneseq
      %v1591 = vshrl.u32 %v1590, 7
      %v1592 = vsub.s32 0, %v1591
      %v1593 = vrot.slane %v1588, %v1592
      %v1603 = vunpack.c.l.b16 %v1579
      %v1604 = vunpack.c.l.b16 %v1580
      %v1605 = vunpack.c.l.b16 %v1581
      %v1606 = vunpack.c.l.b16 %v1582
      %v1607 = vunpack.c.l.b16 %v1583
      %v1608 = vunpack.c.l.b16 %v1584
      %v1609 = vunpack.c.l.b16 %v1585
      %v1610 = vunpack.c.l.b16 %v1586
      %v1611 = vpack.c.b16 %v1604, %v1603
      %v1612 = vpack.c.b16 %v1606, %v1605
      %v1613 = vpack.c.b16 %v1608, %v1607
      %v1614 = vpack.c.b16 %v1610, %v1609
      %v1620 = vsel %vm1296, %v1587, 0
      %1622 = vmatprep.subr.bf16.mxu0 0
      %1623 = vmatpush1.bf16.msra.mxu0 0
      %1624 = vmatprep.subr.bf16.mxu0 0
      %1625 = vmatpush1.bf16.msra.mxu0 0
      %1626 = vmatprep.subr.bf16.mxu0 0
      %1627 = vmatpush1.bf16.msra.mxu0 0
      %1628 = vmatprep.subr.bf16.mxu0 0
      %1629 = vmatpush1.bf16.msra.mxu0 0
      %1630 = vmatprep.subr.bf16.mxu0 0
      %1631 = vmatpush1.bf16.msra.mxu0 %v1614
      %1632 = vmatprep.subr.bf16.mxu0 0
      %1633 = vmatpush1.bf16.msra.mxu0 %v1613
      %1634 = vmatprep.subr.bf16.mxu0 0
      %1635 = vmatpush1.bf16.msra.mxu0 %v1612
      %1636 = vmatprep.subr.bf16.mxu0 0
      %1637 = vmatpush1.bf16.msra.mxu0 %v1611
      %1638 = vmatprep.subr.bf16.mxu0 0
      %1639 = vmatpush2.bf16.msra.mxu0 0
      %1640 = vmatprep.subr.bf16.mxu0 0
      %1641 = vmatpush2.bf16.msra.mxu0 0
      %1642 = vmatprep.subr.bf16.mxu0 0
      %1643 = vmatpush2.bf16.msra.mxu0 0
      %1644 = vmatprep.subr.bf16.mxu0 0
      %1645 = vmatpush2.bf16.msra.mxu0 0
      %1646 = vmatprep.subr.bf16.mxu0 0
      %1647 = vmatpush2.bf16.msra.mxu0 0
      %1648 = vmatprep.subr.bf16.mxu0 0
      %1649 = vmatpush2.bf16.msra.mxu0 0
      %1650 = vmatprep.subr.bf16.mxu0 0
      %1651 = vmatpush2.bf16.msra.mxu0 0
      %1652 = vmatprep.subr.bf16.mxu0 0
      %1653 = vmatpush2.bf16.msra.mxu0 0
      %1654 = vmatprep.mubr.bf16.mxu0 0
      %1655 = vmatmul.mubr.bf16.gmra.mxu0 %v1620
      %v1656 = vpop.f32.mrf.mxu0
      %v1657 = vadd.f32 %v1593, %v1656
      %v1658 = vpop.f32.mrf.mxu0
      %v1659 = vpop.f32.mrf.mxu0
      %v1660 = vpop.f32.mrf.mxu0
      %1661 = vdwg.mxu0
      %v1662 = vtanh.pop %v1657
      %v1663 = vld [vmem:[%s33] sm:$0x1]
      %v1664 = vld [vmem:[%s35] sm:$0x1]
      %v1665 = vsel %vm1296, %v1662, 0.0
      %1666 = vadd.xlane.f32.xlu0 %v1665
      %v1667 = vpop.xlane.xlu0 %1666
      %v1668 = vmul.f32 %v1667, %v1300
      %v1669 = vsub.f32 %v1662, %v1668
      %v1670 = vmul.f32 %v1669, %v1669
      %v1671 = vsel %vm1296, %v1670, 0.0
      %1672 = vadd.xlane.f32.xlu0 %v1671
      %v1673 = vpop.xlane.xlu0 %1672
      %v1674 = vmul.f32 %v1673, %v1300
      %v1675 = vadd.f32 %v1674, 1e-05
      %v1676 = vrsqrt.pop %v1675
      %v1677 = vmul.f32 %v1669, %v1676
      %v1679 = vlaneseq
      %v1680 = vshrl.u32 %v1679, 7
      %v1681 = vsub.s32 0, %v1680
      %v1682 = vrot.slane %v1663, %v1681
      %v1684 = vmul.f32 %v1677, %v1682
      %v1686 = vlaneseq
      %v1687 = vshrl.u32 %v1686, 7
      %v1688 = vsub.s32 0, %v1687
      %v1689 = vrot.slane %v1664, %v1688
      %v1691 = vadd.f32 %v1684, %v1689
      %v1692 = vld [vmem:[%s37] sm:$0xf]
      %v1693 = vld [vmem:[%s37 + $0x4] sm:$0xf]
      %v1694 = vld [vmem:[%s37 + $0x8] sm:$0xf]
      %v1695 = vld [vmem:[%s37 + $0xc] sm:$0xf]
      %v1696 = vld [vmem:[%s37 + $0x10] sm:$0xf]
      %v1697 = vld [vmem:[%s37 + $0x14] sm:$0xf]
      %v1698 = vld [vmem:[%s37 + $0x18] sm:$0xf]
      %v1699 = vld [vmem:[%s37 + $0x1c] sm:$0xf]
      %v1700 = vpack.c.bf16 %v1691, %v1691
      %v1701 = vld [vmem:[%s39] sm:$0x1]
      %v1703 = vlaneseq
      %v1704 = vshrl.u32 %v1703, 7
      %v1705 = vsub.s32 0, %v1704
      %v1706 = vrot.slane %v1701, %v1705
      %v1716 = vunpack.c.l.b16 %v1692
      %v1717 = vunpack.c.l.b16 %v1693
      %v1718 = vunpack.c.l.b16 %v1694
      %v1719 = vunpack.c.l.b16 %v1695
      %v1720 = vunpack.c.l.b16 %v1696
      %v1721 = vunpack.c.l.b16 %v1697
      %v1722 = vunpack.c.l.b16 %v1698
      %v1723 = vunpack.c.l.b16 %v1699
      %v1724 = vpack.c.b16 %v1717, %v1716
      %v1725 = vpack.c.b16 %v1719, %v1718
      %v1726 = vpack.c.b16 %v1721, %v1720
      %v1727 = vpack.c.b16 %v1723, %v1722
      %v1733 = vsel %vm1296, %v1700, 0
      %1735 = vmatprep.subr.bf16.mxu0 0
      %1736 = vmatpush1.bf16.msra.mxu0 0
      %1737 = vmatprep.subr.bf16.mxu0 0
      %1738 = vmatpush1.bf16.msra.mxu0 0
      %1739 = vmatprep.subr.bf16.mxu0 0
      %1740 = vmatpush1.bf16.msra.mxu0 0
      %1741 = vmatprep.subr.bf16.mxu0 0
      %1742 = vmatpush1.bf16.msra.mxu0 0
      %1743 = vmatprep.subr.bf16.mxu0 0
      %1744 = vmatpush1.bf16.msra.mxu0 %v1727
      %1745 = vmatprep.subr.bf16.mxu0 0
      %1746 = vmatpush1.bf16.msra.mxu0 %v1726
      %1747 = vmatprep.subr.bf16.mxu0 0
      %1748 = vmatpush1.bf16.msra.mxu0 %v1725
      %1749 = vmatprep.subr.bf16.mxu0 0
      %1750 = vmatpush1.bf16.msra.mxu0 %v1724
      %1751 = vmatprep.subr.bf16.mxu0 0
      %1752 = vmatpush2.bf16.msra.mxu0 0
      %1753 = vmatprep.subr.bf16.mxu0 0
      %1754 = vmatpush2.bf16.msra.mxu0 0
      %1755 = vmatprep.subr.bf16.mxu0 0
      %1756 = vmatpush2.bf16.msra.mxu0 0
      %1757 = vmatprep.subr.bf16.mxu0 0
      %1758 = vmatpush2.bf16.msra.mxu0 0
      %1759 = vmatprep.subr.bf16.mxu0 0
      %1760 = vmatpush2.bf16.msra.mxu0 0
      %1761 = vmatprep.subr.bf16.mxu0 0
      %1762 = vmatpush2.bf16.msra.mxu0 0
      %1763 = vmatprep.subr.bf16.mxu0 0
      %1764 = vmatpush2.bf16.msra.mxu0 0
      %1765 = vmatprep.subr.bf16.mxu0 0
      %1766 = vmatpush2.bf16.msra.mxu0 0
      %1767 = vmatprep.mubr.bf16.mxu0 0
      %1768 = vmatmul.mubr.bf16.gmra.mxu0 %v1733
      %v1769 = vpop.f32.mrf.mxu0
      %v1770 = vadd.f32 %v1706, %v1769
      %v1771 = vpop.f32.mrf.mxu0
      %v1772 = vpop.f32.mrf.mxu0
      %v1773 = vpop.f32.mrf.mxu0
      %1774 = vdwg.mxu0
      %v1775 = vtanh.pop %v1770
      %v1776 = vld [vmem:[%s41] sm:$0x1]
      %v1777 = vld [vmem:[%s43] sm:$0x1]
      %v1778 = vsel %vm1249, %v1775, 0.0
      %1779 = vadd.xlane.f32.xlu0 %v1778
      %v1780 = vpop.xlane.xlu0 %1779
      %v1781 = vrcp.pop 32.0
      %v1782 = vmul.f32 %v1780, %v1781
      %v1783 = vsub.f32 %v1775, %v1782
      %v1784 = vmul.f32 %v1783, %v1783
      %v1785 = vsel %vm1249, %v1784, 0.0
      %1786 = vadd.xlane.f32.xlu0 %v1785
      %v1787 = vpop.xlane.xlu0 %1786
      %v1788 = vmul.f32 %v1787, %v1781
      %v1789 = vadd.f32 %v1788, 1e-05
      %v1790 = vrsqrt.pop %v1789
      %v1791 = vmul.f32 %v1783, %v1790
      %v1793 = vlaneseq
      %v1794 = vshrl.u32 %v1793, 7
      %v1795 = vsub.s32 0, %v1794
      %v1796 = vrot.slane %v1776, %v1795
      %v1798 = vmul.f32 %v1791, %v1796
      %v1800 = vlaneseq
      %v1801 = vshrl.u32 %v1800, 7
      %v1802 = vsub.s32 0, %v1801
      %v1803 = vrot.slane %v1777, %v1802
      %v1805 = vadd.f32 %v1798, %v1803
      %v1806 = vld [vmem:[%s45] sm:$0xf]
      %v1807 = vld [vmem:[%s45 + $0x4] sm:$0xf]
      %v1808 = vld [vmem:[%s45 + $0x8] sm:$0xf]
      %v1809 = vld [vmem:[%s45 + $0xc] sm:$0xf]
      %v1810 = vpack.c.bf16 %v1805, %v1805
      %v1811 = vld [vmem:[%s47] sm:$0x1]
      %v1813 = vlaneseq
      %v1814 = vshrl.u32 %v1813, 7
      %v1815 = vsub.s32 0, %v1814
      %v1816 = vrot.slane %v1811, %v1815
      %v1822 = vunpack.c.l.b16 %v1806
      %v1823 = vunpack.c.l.b16 %v1807
      %v1824 = vunpack.c.l.b16 %v1808
      %v1825 = vunpack.c.l.b16 %v1809
      %v1826 = vpack.c.b16 %v1823, %v1822
      %v1827 = vpack.c.b16 %v1825, %v1824
      %v1831 = vsel %vm1249, %v1810, 0
      %1833 = vmatprep.subr.bf16.mxu0 0
      %1834 = vmatpush1.bf16.msra.mxu0 0
      %1835 = vmatprep.subr.bf16.mxu0 0
      %1836 = vmatpush1.bf16.msra.mxu0 0
      %1837 = vmatprep.subr.bf16.mxu0 0
      %1838 = vmatpush1.bf16.msra.mxu0 0
      %1839 = vmatprep.subr.bf16.mxu0 0
      %1840 = vmatpush1.bf16.msra.mxu0 0
      %1841 = vmatprep.subr.bf16.mxu0 0
      %1842 = vmatpush1.bf16.msra.mxu0 0
      %1843 = vmatprep.subr.bf16.mxu0 0
      %1844 = vmatpush1.bf16.msra.mxu0 0
      %1845 = vmatprep.subr.bf16.mxu0 0
      %1846 = vmatpush1.bf16.msra.mxu0 %v1827
      %1847 = vmatprep.subr.bf16.mxu0 0
      %1848 = vmatpush1.bf16.msra.mxu0 %v1826
      %1849 = vmatprep.subr.bf16.mxu0 0
      %1850 = vmatpush2.bf16.msra.mxu0 0
      %1851 = vmatprep.subr.bf16.mxu0 0
      %1852 = vmatpush2.bf16.msra.mxu0 0
      %1853 = vmatprep.subr.bf16.mxu0 0
      %1854 = vmatpush2.bf16.msra.mxu0 0
      %1855 = vmatprep.subr.bf16.mxu0 0
      %1856 = vmatpush2.bf16.msra.mxu0 0
      %1857 = vmatprep.subr.bf16.mxu0 0
      %1858 = vmatpush2.bf16.msra.mxu0 0
      %1859 = vmatprep.subr.bf16.mxu0 0
      %1860 = vmatpush2.bf16.msra.mxu0 0
      %1861 = vmatprep.subr.bf16.mxu0 0
      %1862 = vmatpush2.bf16.msra.mxu0 0
      %1863 = vmatprep.subr.bf16.mxu0 0
      %1864 = vmatpush2.bf16.msra.mxu0 0
      %1865 = vmatprep.mubr.bf16.mxu0 0
      %1866 = vmatmul.mubr.bf16.gmra.mxu0 %v1831
      %v1867 = vpop.f32.mrf.mxu0
      %v1868 = vadd.f32 %v1816, %v1867
      %v1869 = vpop.f32.mrf.mxu0
      %v1870 = vpop.f32.mrf.mxu0
      %v1871 = vpop.f32.mrf.mxu0
      %1872 = vdwg.mxu0
      %v1873 = vld [vmem:[%s49] sm:$0xf]
      %v1874 = vld [vmem:[%s49 + $0x4] sm:$0xf]
      %v1875 = vld [vmem:[%s49 + $0x8] sm:$0xf]
      %v1876 = vld [vmem:[%s49 + $0xc] sm:$0xf]
      %v1877 = vld [vmem:[%s51] sm:$0x1]
      %v1879 = vlaneseq
      %v1880 = vshrl.u32 %v1879, 7
      %v1881 = vsub.s32 0, %v1880
      %v1882 = vrot.slane %v1877, %v1881
      %v1888 = vunpack.c.l.b16 %v1873
      %v1889 = vunpack.c.l.b16 %v1874
      %v1890 = vunpack.c.l.b16 %v1875
      %v1891 = vunpack.c.l.b16 %v1876
      %v1892 = vpack.c.b16 %v1889, %v1888
      %v1893 = vpack.c.b16 %v1891, %v1890
      %1896 = vmatprep.subr.bf16.mxu0 0
      %1897 = vmatpush1.bf16.msra.mxu0 0
      %1898 = vmatprep.subr.bf16.mxu0 0
      %1899 = vmatpush1.bf16.msra.mxu0 0
      %1900 = vmatprep.subr.bf16.mxu0 0
      %1901 = vmatpush1.bf16.msra.mxu0 0
      %1902 = vmatprep.subr.bf16.mxu0 0
      %1903 = vmatpush1.bf16.msra.mxu0 0
      %1904 = vmatprep.subr.bf16.mxu0 0
      %1905 = vmatpush1.bf16.msra.mxu0 0
      %1906 = vmatprep.subr.bf16.mxu0 0
      %1907 = vmatpush1.bf16.msra.mxu0 0
      %1908 = vmatprep.subr.bf16.mxu0 0
      %1909 = vmatpush1.bf16.msra.mxu0 %v1893
      %1910 = vmatprep.subr.bf16.mxu0 0
      %1911 = vmatpush1.bf16.msra.mxu0 %v1892
      %1912 = vmatprep.subr.bf16.mxu0 0
      %1913 = vmatpush2.bf16.msra.mxu0 0
      %1914 = vmatprep.subr.bf16.mxu0 0
      %1915 = vmatpush2.bf16.msra.mxu0 0
      %1916 = vmatprep.subr.bf16.mxu0 0
      %1917 = vmatpush2.bf16.msra.mxu0 0
      %1918 = vmatprep.subr.bf16.mxu0 0
      %1919 = vmatpush2.bf16.msra.mxu0 0
      %1920 = vmatprep.subr.bf16.mxu0 0
      %1921 = vmatpush2.bf16.msra.mxu0 0
      %1922 = vmatprep.subr.bf16.mxu0 0
      %1923 = vmatpush2.bf16.msra.mxu0 0
      %1924 = vmatprep.subr.bf16.mxu0 0
      %1925 = vmatpush2.bf16.msra.mxu0 0
      %1926 = vmatprep.subr.bf16.mxu0 0
      %1927 = vmatpush2.bf16.msra.mxu0 0
      %1928 = vmatprep.mubr.bf16.mxu0 0
      %1929 = vmatmul.mubr.bf16.gmra.mxu0 %v1831
      %v1930 = vpop.f32.mrf.mxu0
      %v1931 = vadd.f32 %v1882, %v1930
      %v1932 = vpop.f32.mrf.mxu0
      %v1933 = vpop.f32.mrf.mxu0
      %v1934 = vpop.f32.mrf.mxu0
      %1935 = vdwg.mxu0
      %v1936 = vld [vmem:[%s53] sm:$0xf]
      %v1937 = vld [vmem:[%s53 + $0x4] sm:$0xf]
      %v1938 = vld [vmem:[%s53 + $0x8] sm:$0xf]
      %v1939 = vld [vmem:[%s53 + $0xc] sm:$0xf]
      %v1940 = vld [vmem:[%s55] sm:$0x1]
      %v1942 = vlaneseq
      %v1943 = vshrl.u32 %v1942, 7
      %v1944 = vsub.s32 0, %v1943
      %v1945 = vrot.slane %v1940, %v1944
      %v1951 = vunpack.c.l.b16 %v1936
      %v1952 = vunpack.c.l.b16 %v1937
      %v1953 = vunpack.c.l.b16 %v1938
      %v1954 = vunpack.c.l.b16 %v1939
      %v1955 = vpack.c.b16 %v1952, %v1951
      %v1956 = vpack.c.b16 %v1954, %v1953
      %1959 = vmatprep.subr.bf16.mxu0 0
      %1960 = vmatpush1.bf16.msra.mxu0 0
      %1961 = vmatprep.subr.bf16.mxu0 0
      %1962 = vmatpush1.bf16.msra.mxu0 0
      %1963 = vmatprep.subr.bf16.mxu0 0
      %1964 = vmatpush1.bf16.msra.mxu0 0
      %1965 = vmatprep.subr.bf16.mxu0 0
      %1966 = vmatpush1.bf16.msra.mxu0 0
      %1967 = vmatprep.subr.bf16.mxu0 0
      %1968 = vmatpush1.bf16.msra.mxu0 0
      %1969 = vmatprep.subr.bf16.mxu0 0
      %1970 = vmatpush1.bf16.msra.mxu0 0
      %1971 = vmatprep.subr.bf16.mxu0 0
      %1972 = vmatpush1.bf16.msra.mxu0 %v1956
      %1973 = vmatprep.subr.bf16.mxu0 0
      %1974 = vmatpush1.bf16.msra.mxu0 %v1955
      %1975 = vmatprep.subr.bf16.mxu0 0
      %1976 = vmatpush2.bf16.msra.mxu0 0
      %1977 = vmatprep.subr.bf16.mxu0 0
      %1978 = vmatpush2.bf16.msra.mxu0 0
      %1979 = vmatprep.subr.bf16.mxu0 0
      %1980 = vmatpush2.bf16.msra.mxu0 0
      %1981 = vmatprep.subr.bf16.mxu0 0
      %1982 = vmatpush2.bf16.msra.mxu0 0
      %1983 = vmatprep.subr.bf16.mxu0 0
      %1984 = vmatpush2.bf16.msra.mxu0 0
      %1985 = vmatprep.subr.bf16.mxu0 0
      %1986 = vmatpush2.bf16.msra.mxu0 0
      %1987 = vmatprep.subr.bf16.mxu0 0
      %1988 = vmatpush2.bf16.msra.mxu0 0
      %1989 = vmatprep.subr.bf16.mxu0 0
      %1990 = vmatpush2.bf16.msra.mxu0 0
      %1991 = vmatprep.mubr.bf16.mxu0 0
      %1992 = vmatmul.mubr.bf16.gmra.mxu0 %v1831
      %v1993 = vpop.f32.mrf.mxu0
      %v1994 = vadd.f32 %v1945, %v1993
      %v1995 = vpop.f32.mrf.mxu0
      %v1996 = vpop.f32.mrf.mxu0
      %v1997 = vpop.f32.mrf.mxu0
      %1998 = vdwg.mxu0
      %v1999 = vld [vmem:[%s57] sm:$0xf]
      %v2000 = vld [vmem:[%s57 + $0x4] sm:$0xf]
      %v2001 = vld [vmem:[%s57 + $0x8] sm:$0xf]
      %v2002 = vld [vmem:[%s57 + $0xc] sm:$0xf]
      %v2003 = vmul.f32 %v1868, 0.25
      %v2004 = vpack.c.bf16 %v2003, %v2003
      %v2005 = vpack.c.bf16 %v1931, %v1931
      %vm2006 = vcmask 130048
      %v2008 = vsel %vm2006, %v2004, 0
      %v2011 = vsel %vm2006, %v2005, 0
      %2013 = vmatprep.subr.bf16.mxu0 0
      %2014 = vmatpush1.bf16.xpose.msra.mxu0 0
      %2015 = vmatprep.subr.bf16.mxu0 0
      %2016 = vmatpush1.bf16.xpose.msra.mxu0 0
      %2017 = vmatprep.subr.bf16.mxu0 0
      %2018 = vmatpush1.bf16.xpose.msra.mxu0 0
      %2019 = vmatprep.subr.bf16.mxu0 0
      %2020 = vmatpush1.bf16.xpose.msra.mxu0 0
      %2021 = vmatprep.subr.bf16.mxu0 0
      %2022 = vmatpush1.bf16.xpose.msra.mxu0 0
      %2023 = vmatprep.subr.bf16.mxu0 0
      %2024 = vmatpush1.bf16.xpose.msra.mxu0 0
      %2025 = vmatprep.subr.bf16.mxu0 0
      %2026 = vmatpush1.bf16.xpose.msra.mxu0 0
      %2027 = vmatprep.subr.bf16.mxu0 0
      %2028 = vmatpush1.bf16.xpose.msra.mxu0 %v2011
      %2029 = vmatprep.subr.bf16.mxu0 0
      %2030 = vmatpush2.bf16.xpose.msra.mxu0 0
      %2031 = vmatprep.subr.bf16.mxu0 0
      %2032 = vmatpush2.bf16.xpose.msra.mxu0 0
      %2033 = vmatprep.subr.bf16.mxu0 0
      %2034 = vmatpush2.bf16.xpose.msra.mxu0 0
      %2035 = vmatprep.subr.bf16.mxu0 0
      %2036 = vmatpush2.bf16.xpose.msra.mxu0 0
      %2037 = vmatprep.subr.bf16.mxu0 0
      %2038 = vmatpush2.bf16.xpose.msra.mxu0 0
      %2039 = vmatprep.subr.bf16.mxu0 0
      %2040 = vmatpush2.bf16.xpose.msra.mxu0 0
      %2041 = vmatprep.subr.bf16.mxu0 0
      %2042 = vmatpush2.bf16.xpose.msra.mxu0 0
      %2043 = vmatprep.subr.bf16.mxu0 0
      %2044 = vmatpush2.bf16.xpose.msra.mxu0 0
      %2045 = vmatprep.mubr.bf16.mxu0 0
      %2046 = vmatmul.mubr.bf16.gmra.mxu0 %v2008
      %v2047 = vpop.f32.mrf.mxu0
      %v2048 = vadd.f32 0.0, %v2047
      %v2049 = vpop.f32.mrf.mxu0
      %v2050 = vpop.f32.mrf.mxu0
      %v2051 = vpop.f32.mrf.mxu0
      %2052 = vdwg.mxu0
      %vm2053 = vcmask 64512
      %v2054 = vsel %vm2053, %v2048, -inf
      %2055 = vmax.xlane.f32.xlu0 %v2054
      %v2056 = vpop.xlane.xlu0 %2055
      %v2057 = vsub.f32 %v2048, %v2056
      %v2058 = vmul.f32 %v2057, 1.442695
      %v2059 = vpow.pop %v2058
      %v2060 = vsel %vm2053, %v2059, 0.0
      %2061 = vadd.xlane.f32.xlu0 %v2060
      %v2062 = vpop.xlane.xlu0 %2061
      %v2063 = vrcp.pop %v2062
      %v2064 = vmul.f32 %v2059, %v2063
      %v2065 = vpack.c.bf16 %v2064, %v2064
      %v2066 = vpack.c.bf16 %v1994, %v1994
      %v2068 = vsel %vm2053, %v2065, 0
      %vm2070 = vcmask 1043456
      %v2072 = vsel %vm2070, %v2066, 0
      %2074 = vmatprep.subr.bf16.mxu0 0
      %2075 = vmatpush1.bf16.msra.mxu0 0
      %2076 = vmatprep.subr.bf16.mxu0 0
      %2077 = vmatpush1.bf16.msra.mxu0 0
      %2078 = vmatprep.subr.bf16.mxu0 0
      %2079 = vmatpush1.bf16.msra.mxu0 0
      %2080 = vmatprep.subr.bf16.mxu0 0
      %2081 = vmatpush1.bf16.msra.mxu0 0
      %2082 = vmatprep.subr.bf16.mxu0 0
      %2083 = vmatpush1.bf16.msra.mxu0 0
      %2084 = vmatprep.subr.bf16.mxu0 0
      %2085 = vmatpush1.bf16.msra.mxu0 0
      %2086 = vmatprep.subr.bf16.mxu0 0
      %2087 = vmatpush1.bf16.msra.mxu0 0
      %2088 = vmatprep.subr.bf16.mxu0 0
      %2089 = vmatpush1.bf16.msra.mxu0 %v2072
      %2090 = vmatprep.subr.bf16.mxu0 0
      %2091 = vmatpush2.bf16.msra.mxu0 0
      %2092 = vmatprep.subr.bf16.mxu0 0
      %2093 = vmatpush2.bf16.msra.mxu0 0
      %2094 = vmatprep.subr.bf16.mxu0 0
      %2095 = vmatpush2.bf16.msra.mxu0 0
      %2096 = vmatprep.subr.bf16.mxu0 0
      %2097 = vmatpush2.bf16.msra.mxu0 0
      %2098 = vmatprep.subr.bf16.mxu0 0
      %2099 = vmatpush2.bf16.msra.mxu0 0
      %2100 = vmatprep.subr.bf16.mxu0 0
      %2101 = vmatpush2.bf16.msra.mxu0 0
      %2102 = vmatprep.subr.bf16.mxu0 0
      %2103 = vmatpush2.bf16.msra.mxu0 0
      %2104 = vmatprep.subr.bf16.mxu0 0
      %2105 = vmatpush2.bf16.msra.mxu0 0
      %2106 = vmatprep.mubr.bf16.mxu0 0
      %2107 = vmatmul.mubr.bf16.gmra.mxu0 %v2068
      %v2108 = vpop.f32.mrf.mxu0
      %v2109 = vadd.f32 0.0, %v2108
      %v2110 = vpop.f32.mrf.mxu0
      %v2111 = vpop.f32.mrf.mxu0
      %v2112 = vpop.f32.mrf.mxu0
      %2113 = vdwg.mxu0
      %v2114 = vpack.c.bf16 %v2109, %v2109
      %2116 = vrot.lane.b32.xlu0 %v2004, 112
      %v2117 = vpop.permute.xlu0 %2116
      %2119 = vrot.lane.b32.xlu0 %v2005, 112
      %v2120 = vpop.permute.xlu0 %2119
      %v2122 = vsel %vm2006, %v2117, 0
      %v2125 = vsel %vm2006, %v2120, 0
      %2127 = vmatprep.subr.bf16.mxu0 0
      %2128 = vmatpush1.bf16.xpose.msra.mxu0 0
      %2129 = vmatprep.subr.bf16.mxu0 0
      %2130 = vmatpush1.bf16.xpose.msra.mxu0 0
      %2131 = vmatprep.subr.bf16.mxu0 0
      %2132 = vmatpush1.bf16.xpose.msra.mxu0 0
      %2133 = vmatprep.subr.bf16.mxu0 0
      %2134 = vmatpush1.bf16.xpose.msra.mxu0 0
      %2135 = vmatprep.subr.bf16.mxu0 0
      %2136 = vmatpush1.bf16.xpose.msra.mxu0 0
      %2137 = vmatprep.subr.bf16.mxu0 0
      %2138 = vmatpush1.bf16.xpose.msra.mxu0 0
      %2139 = vmatprep.subr.bf16.mxu0 0
      %2140 = vmatpush1.bf16.xpose.msra.mxu0 0
      %2141 = vmatprep.subr.bf16.mxu0 0
      %2142 = vmatpush1.bf16.xpose.msra.mxu0 %v2125
      %2143 = vmatprep.subr.bf16.mxu0 0
      %2144 = vmatpush2.bf16.xpose.msra.mxu0 0
      %2145 = vmatprep.subr.bf16.mxu0 0
      %2146 = vmatpush2.bf16.xpose.msra.mxu0 0
      %2147 = vmatprep.subr.bf16.mxu0 0
      %2148 = vmatpush2.bf16.xpose.msra.mxu0 0
      %2149 = vmatprep.subr.bf16.mxu0 0
      %2150 = vmatpush2.bf16.xpose.msra.mxu0 0
      %2151 = vmatprep.subr.bf16.mxu0 0
      %2152 = vmatpush2.bf16.xpose.msra.mxu0 0
      %2153 = vmatprep.subr.bf16.mxu0 0
      %2154 = vmatpush2.bf16.xpose.msra.mxu0 0
      %2155 = vmatprep.subr.bf16.mxu0 0
      %2156 = vmatpush2.bf16.xpose.msra.mxu0 0
      %2157 = vmatprep.subr.bf16.mxu0 0
      %2158 = vmatpush2.bf16.xpose.msra.mxu0 0
      %2159 = vmatprep.mubr.bf16.mxu0 0
      %2160 = vmatmul.mubr.bf16.gmra.mxu0 %v2122
      %v2161 = vpop.f32.mrf.mxu0
      %v2162 = vadd.f32 0.0, %v2161
      %v2163 = vpop.f32.mrf.mxu0
      %v2164 = vpop.f32.mrf.mxu0
      %v2165 = vpop.f32.mrf.mxu0
      %2166 = vdwg.mxu0
      %v2167 = vsel %vm2053, %v2162, -inf
      %2168 = vmax.xlane.f32.xlu0 %v2167
      %v2169 = vpop.xlane.xlu0 %2168
      %v2170 = vsub.f32 %v2162, %v2169
      %v2171 = vmul.f32 %v2170, 1.442695
      %v2172 = vpow.pop %v2171
      %v2173 = vsel %vm2053, %v2172, 0.0
      %2174 = vadd.xlane.f32.xlu0 %v2173
      %v2175 = vpop.xlane.xlu0 %2174
      %v2176 = vrcp.pop %v2175
      %v2177 = vmul.f32 %v2172, %v2176
      %v2178 = vpack.c.bf16 %v2177, %v2177
      %2180 = vrot.lane.b32.xlu0 %v2066, 112
      %v2181 = vpop.permute.xlu0 %2180
      %v2183 = vsel %vm2053, %v2178, 0
      %v2186 = vsel %vm2070, %v2181, 0
      %2188 = vmatprep.subr.bf16.mxu0 0
      %2189 = vmatpush1.bf16.msra.mxu0 0
      %2190 = vmatprep.subr.bf16.mxu0 0
      %2191 = vmatpush1.bf16.msra.mxu0 0
      %2192 = vmatprep.subr.bf16.mxu0 0
      %2193 = vmatpush1.bf16.msra.mxu0 0
      %2194 = vmatprep.subr.bf16.mxu0 0
      %2195 = vmatpush1.bf16.msra.mxu0 0
      %2196 = vmatprep.subr.bf16.mxu0 0
      %2197 = vmatpush1.bf16.msra.mxu0 0
      %2198 = vmatprep.subr.bf16.mxu0 0
      %2199 = vmatpush1.bf16.msra.mxu0 0
      %2200 = vmatprep.subr.bf16.mxu0 0
      %2201 = vmatpush1.bf16.msra.mxu0 0
      %2202 = vmatprep.subr.bf16.mxu0 0
      %2203 = vmatpush1.bf16.msra.mxu0 %v2186
      %2204 = vmatprep.subr.bf16.mxu0 0
      %2205 = vmatpush2.bf16.msra.mxu0 0
      %2206 = vmatprep.subr.bf16.mxu0 0
      %2207 = vmatpush2.bf16.msra.mxu0 0
      %2208 = vmatprep.subr.bf16.mxu0 0
      %2209 = vmatpush2.bf16.msra.mxu0 0
      %2210 = vmatprep.subr.bf16.mxu0 0
      %2211 = vmatpush2.bf16.msra.mxu0 0
      %2212 = vmatprep.subr.bf16.mxu0 0
      %2213 = vmatpush2.bf16.msra.mxu0 0
      %2214 = vmatprep.subr.bf16.mxu0 0
      %2215 = vmatpush2.bf16.msra.mxu0 0
      %2216 = vmatprep.subr.bf16.mxu0 0
      %2217 = vmatpush2.bf16.msra.mxu0 0
      %2218 = vmatprep.subr.bf16.mxu0 0
      %2219 = vmatpush2.bf16.msra.mxu0 0
      %2220 = vmatprep.mubr.bf16.mxu0 0
      %2221 = vmatmul.mubr.bf16.gmra.mxu0 %v2183
      %v2222 = vpop.f32.mrf.mxu0
      %v2223 = vadd.f32 0.0, %v2222
      %v2224 = vpop.f32.mrf.mxu0
      %v2225 = vpop.f32.mrf.mxu0
      %v2226 = vpop.f32.mrf.mxu0
      %2227 = vdwg.mxu0
      %v2228 = vpack.c.bf16 %v2223, %v2223
      %v2231 = vunpack.c.l.b16 %v2001
      %v2232 = vunpack.c.l.b16 %v2002
      %v2233 = vpack.c.b16 %v2232, %v2231
      %v2236 = vsel %vm2006, %v2228, 0
      %2238 = vmatprep.subr.bf16.mxu0 0
      %2239 = vmatpush1.bf16.msra.mxu0 0
      %2240 = vmatprep.subr.bf16.mxu0 0
      %2241 = vmatpush1.bf16.msra.mxu0 0
      %2242 = vmatprep.subr.bf16.mxu0 0
      %2243 = vmatpush1.bf16.msra.mxu0 0
      %2244 = vmatprep.subr.bf16.mxu0 0
      %2245 = vmatpush1.bf16.msra.mxu0 0
      %2246 = vmatprep.subr.bf16.mxu0 0
      %2247 = vmatpush1.bf16.msra.mxu0 0
      %2248 = vmatprep.subr.bf16.mxu0 0
      %2249 = vmatpush1.bf16.msra.mxu0 0
      %2250 = vmatprep.subr.bf16.mxu0 0
      %2251 = vmatpush1.bf16.msra.mxu0 0
      %2252 = vmatprep.subr.bf16.mxu0 0
      %2253 = vmatpush1.bf16.msra.mxu0 %v2233
      %2254 = vmatprep.subr.bf16.mxu0 0
      %2255 = vmatpush2.bf16.msra.mxu0 0
      %2256 = vmatprep.subr.bf16.mxu0 0
      %2257 = vmatpush2.bf16.msra.mxu0 0
      %2258 = vmatprep.subr.bf16.mxu0 0
      %2259 = vmatpush2.bf16.msra.mxu0 0
      %2260 = vmatprep.subr.bf16.mxu0 0
      %2261 = vmatpush2.bf16.msra.mxu0 0
      %2262 = vmatprep.subr.bf16.mxu0 0
      %2263 = vmatpush2.bf16.msra.mxu0 0
      %2264 = vmatprep.subr.bf16.mxu0 0
      %2265 = vmatpush2.bf16.msra.mxu0 0
      %2266 = vmatprep.subr.bf16.mxu0 0
      %2267 = vmatpush2.bf16.msra.mxu0 0
      %2268 = vmatprep.subr.bf16.mxu0 0
      %2269 = vmatpush2.bf16.msra.mxu0 0
      %2270 = vmatprep.mubr.bf16.mxu0 0
      %2271 = vmatmul.mubr.bf16.gmra.mxu0 %v2236
      %v2272 = vpop.f32.mrf.mxu0
      %v2273 = vadd.f32 0.0, %v2272
      %v2274 = vpop.f32.mrf.mxu0
      %v2275 = vpop.f32.mrf.mxu0
      %v2276 = vpop.f32.mrf.mxu0
      %2277 = vdwg.mxu0
      %v2280 = vunpack.c.l.b16 %v1999
      %v2281 = vunpack.c.l.b16 %v2000
      %v2282 = vpack.c.b16 %v2281, %v2280
      %v2285 = vsel %vm2006, %v2114, 0
      %2287 = vmatprep.subr.bf16.mxu0 0
      %2288 = vmatpush1.bf16.msra.mxu0 0
      %2289 = vmatprep.subr.bf16.mxu0 0
      %2290 = vmatpush1.bf16.msra.mxu0 0
      %2291 = vmatprep.subr.bf16.mxu0 0
      %2292 = vmatpush1.bf16.msra.mxu0 0
      %2293 = vmatprep.subr.bf16.mxu0 0
      %2294 = vmatpush1.bf16.msra.mxu0 0
      %2295 = vmatprep.subr.bf16.mxu0 0
      %2296 = vmatpush1.bf16.msra.mxu0 0
      %2297 = vmatprep.subr.bf16.mxu0 0
      %2298 = vmatpush1.bf16.msra.mxu0 0
      %2299 = vmatprep.subr.bf16.mxu0 0
      %2300 = vmatpush1.bf16.msra.mxu0 0
      %2301 = vmatprep.subr.bf16.mxu0 0
      %2302 = vmatpush1.bf16.msra.mxu0 %v2282
      %2303 = vmatprep.subr.bf16.mxu0 0
      %2304 = vmatpush2.bf16.msra.mxu0 0
      %2305 = vmatprep.subr.bf16.mxu0 0
      %2306 = vmatpush2.bf16.msra.mxu0 0
      %2307 = vmatprep.subr.bf16.mxu0 0
      %2308 = vmatpush2.bf16.msra.mxu0 0
      %2309 = vmatprep.subr.bf16.mxu0 0
      %2310 = vmatpush2.bf16.msra.mxu0 0
      %2311 = vmatprep.subr.bf16.mxu0 0
      %2312 = vmatpush2.bf16.msra.mxu0 0
      %2313 = vmatprep.subr.bf16.mxu0 0
      %2314 = vmatpush2.bf16.msra.mxu0 0
      %2315 = vmatprep.subr.bf16.mxu0 0
      %2316 = vmatpush2.bf16.msra.mxu0 0
      %2317 = vmatprep.subr.bf16.mxu0 0
      %2318 = vmatpush2.bf16.msra.mxu0 0
      %2319 = vmatprep.mubr.bf16.mxu0 0
      %2320 = vmatmul.mubr.bf16.gmra.mxu0 %v2285
      %v2321 = vpop.f32.mrf.mxu0
      %v2322 = vadd.f32 %v2273, %v2321
      %v2323 = vpop.f32.mrf.mxu0
      %v2324 = vpop.f32.mrf.mxu0
      %v2325 = vpop.f32.mrf.mxu0
      %2326 = vdwg.mxu0
      %v2327 = vld [vmem:[%s59] sm:$0x1]
      %v2329 = vlaneseq
      %v2330 = vshrl.u32 %v2329, 7
      %v2331 = vsub.s32 0, %v2330
      %v2332 = vrot.slane %v2327, %v2331
      %v2334 = vadd.f32 %v2322, %v2332
      %v2335 = vadd.f32 %v1805, %v2334
      %v2336 = vld [vmem:[%s61] sm:$0x1]
      %v2337 = vld [vmem:[%s63] sm:$0x1]
      %v2338 = vsel %vm1249, %v2335, 0.0
      %2339 = vadd.xlane.f32.xlu0 %v2338
      %v2340 = vpop.xlane.xlu0 %2339
      %v2341 = vmul.f32 %v2340, %v1781
      %v2342 = vsub.f32 %v2335, %v2341
      %v2343 = vmul.f32 %v2342, %v2342
      %v2344 = vsel %vm1249, %v2343, 0.0
      %2345 = vadd.xlane.f32.xlu0 %v2344
      %v2346 = vpop.xlane.xlu0 %2345
      %v2347 = vmul.f32 %v2346, %v1781
      %v2348 = vadd.f32 %v2347, 1e-05
      %v2349 = vrsqrt.pop %v2348
      %v2350 = vmul.f32 %v2342, %v2349
      %v2352 = vlaneseq
      %v2353 = vshrl.u32 %v2352, 7
      %v2354 = vsub.s32 0, %v2353
      %v2355 = vrot.slane %v2336, %v2354
      %v2357 = vmul.f32 %v2350, %v2355
      %v2359 = vlaneseq
      %v2360 = vshrl.u32 %v2359, 7
      %v2361 = vsub.s32 0, %v2360
      %v2362 = vrot.slane %v2337, %v2361
      %v2364 = vadd.f32 %v2357, %v2362
      %v2365 = vld [vmem:[%s65] sm:$0xff]
      %v2366 = vld [vmem:[%s65 + $0x8] sm:$0xff]
      %v2367 = vld [vmem:[%s65 + $0x10] sm:$0xff]
      %v2368 = vld [vmem:[%s65 + $0x18] sm:$0xff]
      %v2369 = vld [vmem:[%s65 + $0x20] sm:$0xff]
      %v2370 = vld [vmem:[%s65 + $0x28] sm:$0xff]
      %v2371 = vld [vmem:[%s65 + $0x30] sm:$0xff]
      %v2372 = vld [vmem:[%s65 + $0x38] sm:$0xff]
      %v2373 = vld [vmem:[%s65 + $0x40] sm:$0xff]
      %v2374 = vld [vmem:[%s65 + $0x48] sm:$0xff]
      %v2375 = vld [vmem:[%s65 + $0x50] sm:$0xff]
      %v2376 = vld [vmem:[%s65 + $0x58] sm:$0xff]
      %v2377 = vld [vmem:[%s65 + $0x60] sm:$0xff]
      %v2378 = vld [vmem:[%s65 + $0x68] sm:$0xff]
      %v2379 = vld [vmem:[%s65 + $0x70] sm:$0xff]
      %v2380 = vld [vmem:[%s65 + $0x78] sm:$0xff]
      %v2381 = vld [vmem:[%s65 + $0x80] sm:$0xff]
      %v2382 = vld [vmem:[%s65 + $0x88] sm:$0xff]
      %v2383 = vld [vmem:[%s65 + $0x90] sm:$0xff]
      %v2384 = vld [vmem:[%s65 + $0x98] sm:$0xff]
      %v2385 = vld [vmem:[%s65 + $0xa0] sm:$0xff]
      %v2386 = vld [vmem:[%s65 + $0xa8] sm:$0xff]
      %v2387 = vld [vmem:[%s65 + $0xb0] sm:$0xff]
      %v2388 = vld [vmem:[%s65 + $0xb8] sm:$0xff]
      %v2389 = vld [vmem:[%s65 + $0xc0] sm:$0xff]
      %v2390 = vld [vmem:[%s65 + $0xc8] sm:$0xff]
      %v2391 = vld [vmem:[%s65 + $0xd0] sm:$0xff]
      %v2392 = vld [vmem:[%s65 + $0xd8] sm:$0xff]
      %v2393 = vld [vmem:[%s65 + $0xe0] sm:$0xff]
      %v2394 = vld [vmem:[%s65 + $0xe8] sm:$0xff]
      %v2395 = vld [vmem:[%s65 + $0xf0] sm:$0xff]
      %v2396 = vld [vmem:[%s65 + $0xf8] sm:$0xff]
      %v2397 = vpack.c.bf16 %v2364, %v2364
      %v2398 = vld [vmem:[%s67] sm:$0xff]
      %v2399 = vld [vmem:[%s67 + $0x8] sm:$0xff]
      %v2402 = vlaneseq
      %v2403 = vshrl.u32 %v2402, 7
      %v2404 = vsub.s32 0, %v2403
      %v2405 = vrot.slane %v2398, %v2404
      %v2406 = vlaneseq
      %v2407 = vshrl.u32 %v2406, 7
      %v2408 = vsub.s32 1, %v2407
      %v2409 = vrot.slane %v2398, %v2408
      %v2410 = vlaneseq
      %v2411 = vshrl.u32 %v2410, 7
      %v2412 = vsub.s32 2, %v2411
      %v2413 = vrot.slane %v2398, %v2412
      %v2414 = vlaneseq
      %v2415 = vshrl.u32 %v2414, 7
      %v2416 = vsub.s32 3, %v2415
      %v2417 = vrot.slane %v2398, %v2416
      %v2418 = vlaneseq
      %v2419 = vshrl.u32 %v2418, 7
      %v2420 = vsub.s32 4, %v2419
      %v2421 = vrot.slane %v2398, %v2420
      %v2422 = vlaneseq
      %v2423 = vshrl.u32 %v2422, 7
      %v2424 = vsub.s32 5, %v2423
      %v2425 = vrot.slane %v2398, %v2424
      %v2426 = vlaneseq
      %v2427 = vshrl.u32 %v2426, 7
      %v2428 = vsub.s32 6, %v2427
      %v2429 = vrot.slane %v2398, %v2428
      %v2430 = vlaneseq
      %v2431 = vshrl.u32 %v2430, 7
      %v2432 = vsub.s32 7, %v2431
      %v2433 = vrot.slane %v2398, %v2432
      %v2434 = vlaneseq
      %v2435 = vshrl.u32 %v2434, 7
      %v2436 = vsub.s32 0, %v2435
      %v2437 = vrot.slane %v2399, %v2436
      %v2438 = vlaneseq
      %v2439 = vshrl.u32 %v2438, 7
      %v2440 = vsub.s32 1, %v2439
      %v2441 = vrot.slane %v2399, %v2440
      %v2442 = vlaneseq
      %v2443 = vshrl.u32 %v2442, 7
      %v2444 = vsub.s32 2, %v2443
      %v2445 = vrot.slane %v2399, %v2444
      %v2446 = vlaneseq
      %v2447 = vshrl.u32 %v2446, 7
      %v2448 = vsub.s32 3, %v2447
      %v2449 = vrot.slane %v2399, %v2448
      %v2450 = vlaneseq
      %v2451 = vshrl.u32 %v2450, 7
      %v2452 = vsub.s32 4, %v2451
      %v2453 = vrot.slane %v2399, %v2452
      %v2454 = vlaneseq
      %v2455 = vshrl.u32 %v2454, 7
      %v2456 = vsub.s32 5, %v2455
      %v2457 = vrot.slane %v2399, %v2456
      %v2458 = vlaneseq
      %v2459 = vshrl.u32 %v2458, 7
      %v2460 = vsub.s32 6, %v2459
      %v2461 = vrot.slane %v2399, %v2460
      %v2462 = vlaneseq
      %v2463 = vshrl.u32 %v2462, 7
      %v2464 = vsub.s32 7, %v2463
      %v2465 = vrot.slane %v2399, %v2464
      %v2514 = vunpack.c.l.b16 %v2365
      %v2515 = vunpack.c.h.b16 %v2365
      %v2516 = vunpack.c.l.b16 %v2366
      %v2517 = vunpack.c.h.b16 %v2366
      %v2518 = vunpack.c.l.b16 %v2367
      %v2519 = vunpack.c.h.b16 %v2367
      %v2520 = vunpack.c.l.b16 %v2368
      %v2521 = vunpack.c.h.b16 %v2368
      %v2522 = vunpack.c.l.b16 %v2369
      %v2523 = vunpack.c.h.b16 %v2369
      %v2524 = vunpack.c.l.b16 %v2370
      %v2525 = vunpack.c.h.b16 %v2370
      %v2526 = vunpack.c.l.b16 %v2371
      %v2527 = vunpack.c.h.b16 %v2371
      %v2528 = vunpack.c.l.b16 %v2372
      %v2529 = vunpack.c.h.b16 %v2372
      %v2530 = vunpack.c.l.b16 %v2373
      %v2531 = vunpack.c.h.b16 %v2373
      %v2532 = vunpack.c.l.b16 %v2374
      %v2533 = vunpack.c.h.b16 %v2374
      %v2534 = vunpack.c.l.b16 %v2375
      %v2535 = vunpack.c.h.b16 %v2375
      %v2536 = vunpack.c.l.b16 %v2376
      %v2537 = vunpack.c.h.b16 %v2376
      %v2538 = vunpack.c.l.b16 %v2377
      %v2539 = vunpack.c.h.b16 %v2377
      %v2540 = vunpack.c.l.b16 %v2378
      %v2541 = vunpack.c.h.b16 %v2378
      %v2542 = vunpack.c.l.b16 %v2379
      %v2543 = vunpack.c.h.b16 %v2379
      %v2544 = vunpack.c.l.b16 %v2380
      %v2545 = vunpack.c.h.b16 %v2380
      %v2546 = vunpack.c.l.b16 %v2381
      %v2547 = vunpack.c.h.b16 %v2381
      %v2548 = vunpack.c.l.b16 %v2382
      %v2549 = vunpack.c.h.b16 %v2382
      %v2550 = vunpack.c.l.b16 %v2383
      %v2551 = vunpack.c.h.b16 %v2383
      %v2552 = vunpack.c.l.b16 %v2384
      %v2553 = vunpack.c.h.b16 %v2384
      %v2554 = vunpack.c.l.b16 %v2385
      %v2555 = vunpack.c.h.b16 %v2385
      %v2556 = vunpack.c.l.b16 %v2386
      %v2557 = vunpack.c.h.b16 %v2386
      %v2558 = vunpack.c.l.b16 %v2387
      %v2559 = vunpack.c.h.b16 %v2387
      %v2560 = vunpack.c.l.b16 %v2388
      %v2561 = vunpack.c.h.b16 %v2388
      %v2562 = vunpack.c.l.b16 %v2389
      %v2563 = vunpack.c.h.b16 %v2389
      %v2564 = vunpack.c.l.b16 %v2390
      %v2565 = vunpack.c.h.b16 %v2390
      %v2566 = vunpack.c.l.b16 %v2391
      %v2567 = vunpack.c.h.b16 %v2391
      %v2568 = vunpack.c.l.b16 %v2392
      %v2569 = vunpack.c.h.b16 %v2392
      %v2570 = vunpack.c.l.b16 %v2393
      %v2571 = vunpack.c.h.b16 %v2393
      %v2572 = vunpack.c.l.b16 %v2394
      %v2573 = vunpack.c.h.b16 %v2394
      %v2574 = vunpack.c.l.b16 %v2395
      %v2575 = vunpack.c.h.b16 %v2395
      %v2576 = vunpack.c.l.b16 %v2396
      %v2577 = vunpack.c.h.b16 %v2396
      %v2578 = vpack.c.b16 %v2530, %v2514
      %v2579 = vpack.c.b16 %v2531, %v2515
      %v2580 = vpack.c.b16 %v2532, %v2516
      %v2581 = vpack.c.b16 %v2533, %v2517
      %v2582 = vpack.c.b16 %v2534, %v2518
      %v2583 = vpack.c.b16 %v2535, %v2519
      %v2584 = vpack.c.b16 %v2536, %v2520
      %v2585 = vpack.c.b16 %v2537, %v2521
      %v2586 = vpack.c.b16 %v2538, %v2522
      %v2587 = vpack.c.b16 %v2539, %v2523
      %v2588 = vpack.c.b16 %v2540, %v2524
      %v2589 = vpack.c.b16 %v2541, %v2525
      %v2590 = vpack.c.b16 %v2542, %v2526
      %v2591 = vpack.c.b16 %v2543, %v2527
      %v2592 = vpack.c.b16 %v2544, %v2528
      %v2593 = vpack.c.b16 %v2545, %v2529
      %v2594 = vpack.c.b16 %v2562, %v2546
      %v2595 = vpack.c.b16 %v2563, %v2547
      %v2596 = vpack.c.b16 %v2564, %v2548
      %v2597 = vpack.c.b16 %v2565, %v2549
      %v2598 = vpack.c.b16 %v2566, %v2550
      %v2599 = vpack.c.b16 %v2567, %v2551
      %v2600 = vpack.c.b16 %v2568, %v2552
      %v2601 = vpack.c.b16 %v2569, %v2553
      %v2602 = vpack.c.b16 %v2570, %v2554
      %v2603 = vpack.c.b16 %v2571, %v2555
      %v2604 = vpack.c.b16 %v2572, %v2556
      %v2605 = vpack.c.b16 %v2573, %v2557
      %v2606 = vpack.c.b16 %v2574, %v2558
      %v2607 = vpack.c.b16 %v2575, %v2559
      %v2608 = vpack.c.b16 %v2576, %v2560
      %v2609 = vpack.c.b16 %v2577, %v2561
      %v2643 = vsel %vm1249, %v2397, 0
      %2645 = vmatprep.subr.bf16.mxu0 0
      %2646 = vmatpush1.bf16.msra.mxu0 0
      %2647 = vmatprep.subr.bf16.mxu0 0
      %2648 = vmatpush1.bf16.msra.mxu0 0
      %2649 = vmatprep.subr.bf16.mxu0 0
      %2650 = vmatpush1.bf16.msra.mxu0 0
      %2651 = vmatprep.subr.bf16.mxu0 0
      %2652 = vmatpush1.bf16.msra.mxu0 0
      %2653 = vmatprep.subr.bf16.mxu0 0
      %2654 = vmatpush1.bf16.msra.mxu0 0
      %2655 = vmatprep.subr.bf16.mxu0 0
      %2656 = vmatpush1.bf16.msra.mxu0 0
      %2657 = vmatprep.subr.bf16.mxu0 %v2595
      %2658 = vmatpush1.bf16.msra.mxu0 %v2594
      %2659 = vmatprep.subr.bf16.mxu0 %v2579
      %2660 = vmatpush1.bf16.msra.mxu0 %v2578
      %2661 = vmatprep.subr.bf16.mxu0 0
      %2662 = vmatpush2.bf16.msra.mxu0 0
      %2663 = vmatprep.subr.bf16.mxu0 0
      %2664 = vmatpush2.bf16.msra.mxu0 0
      %2665 = vmatprep.subr.bf16.mxu0 0
      %2666 = vmatpush2.bf16.msra.mxu0 0
      %2667 = vmatprep.subr.bf16.mxu0 0
      %2668 = vmatpush2.bf16.msra.mxu0 0
      %2669 = vmatprep.subr.bf16.mxu0 0
      %2670 = vmatpush2.bf16.msra.mxu0 0
      %2671 = vmatprep.subr.bf16.mxu0 0
      %2672 = vmatpush2.bf16.msra.mxu0 0
      %2673 = vmatprep.subr.bf16.mxu0 0
      %2674 = vmatpush2.bf16.msra.mxu0 0
      %2675 = vmatprep.subr.bf16.mxu0 0
      %2676 = vmatpush2.bf16.msra.mxu0 0
      %2677 = vmatprep.mubr.bf16.mxu0 0
      %2678 = vmatmul.mubr.bf16.gmra.mxu0 %v2643
      %v2679 = vpop.f32.mrf.mxu0
      %v2680 = vadd.f32 %v2405, %v2679
      %v2681 = vpop.f32.mrf.mxu0
      %v2682 = vadd.f32 %v2409, %v2681
      %v2683 = vpop.f32.mrf.mxu0
      %v2684 = vpop.f32.mrf.mxu0
      %2685 = vdwg.mxu0
      %2686 = vmatprep.subr.bf16.mxu0 0
      %2687 = vmatpush1.bf16.msra.mxu0 0
      %2688 = vmatprep.subr.bf16.mxu0 0
      %2689 = vmatpush1.bf16.msra.mxu0 0
      %2690 = vmatprep.subr.bf16.mxu0 0
      %2691 = vmatpush1.bf16.msra.mxu0 0
      %2692 = vmatprep.subr.bf16.mxu0 0
      %2693 = vmatpush1.bf16.msra.mxu0 0
      %2694 = vmatprep.subr.bf16.mxu0 0
      %2695 = vmatpush1.bf16.msra.mxu0 0
      %2696 = vmatprep.subr.bf16.mxu0 0
      %2697 = vmatpush1.bf16.msra.mxu0 0
      %2698 = vmatprep.subr.bf16.mxu0 %v2597
      %2699 = vmatpush1.bf16.msra.mxu0 %v2596
      %2700 = vmatprep.subr.bf16.mxu0 %v2581
      %2701 = vmatpush1.bf16.msra.mxu0 %v2580
      %2702 = vmatprep.subr.bf16.mxu0 0
      %2703 = vmatpush2.bf16.msra.mxu0 0
      %2704 = vmatprep.subr.bf16.mxu0 0
      %2705 = vmatpush2.bf16.msra.mxu0 0
      %2706 = vmatprep.subr.bf16.mxu0 0
      %2707 = vmatpush2.bf16.msra.mxu0 0
      %2708 = vmatprep.subr.bf16.mxu0 0
      %2709 = vmatpush2.bf16.msra.mxu0 0
      %2710 = vmatprep.subr.bf16.mxu0 0
      %2711 = vmatpush2.bf16.msra.mxu0 0
      %2712 = vmatprep.subr.bf16.mxu0 0
      %2713 = vmatpush2.bf16.msra.mxu0 0
      %2714 = vmatprep.subr.bf16.mxu0 0
      %2715 = vmatpush2.bf16.msra.mxu0 0
      %2716 = vmatprep.subr.bf16.mxu0 0
      %2717 = vmatpush2.bf16.msra.mxu0 0
      %2718 = vmatprep.mubr.bf16.mxu0 0
      %2719 = vmatmul.mubr.bf16.gmra.mxu0 %v2643
      %v2720 = vpop.f32.mrf.mxu0
      %v2721 = vadd.f32 %v2413, %v2720
      %v2722 = vpop.f32.mrf.mxu0
      %v2723 = vadd.f32 %v2417, %v2722
      %v2724 = vpop.f32.mrf.mxu0
      %v2725 = vpop.f32.mrf.mxu0
      %2726 = vdwg.mxu0
      %2727 = vmatprep.subr.bf16.mxu0 0
      %2728 = vmatpush1.bf16.msra.mxu0 0
      %2729 = vmatprep.subr.bf16.mxu0 0
      %2730 = vmatpush1.bf16.msra.mxu0 0
      %2731 = vmatprep.subr.bf16.mxu0 0
      %2732 = vmatpush1.bf16.msra.mxu0 0
      %2733 = vmatprep.subr.bf16.mxu0 0
      %2734 = vmatpush1.bf16.msra.mxu0 0
      %2735 = vmatprep.subr.bf16.mxu0 0
      %2736 = vmatpush1.bf16.msra.mxu0 0
      %2737 = vmatprep.subr.bf16.mxu0 0
      %2738 = vmatpush1.bf16.msra.mxu0 0
      %2739 = vmatprep.subr.bf16.mxu0 %v2599
      %2740 = vmatpush1.bf16.msra.mxu0 %v2598
      %2741 = vmatprep.subr.bf16.mxu0 %v2583
      %2742 = vmatpush1.bf16.msra.mxu0 %v2582
      %2743 = vmatprep.subr.bf16.mxu0 0
      %2744 = vmatpush2.bf16.msra.mxu0 0
      %2745 = vmatprep.subr.bf16.mxu0 0
      %2746 = vmatpush2.bf16.msra.mxu0 0
      %2747 = vmatprep.subr.bf16.mxu0 0
      %2748 = vmatpush2.bf16.msra.mxu0 0
      %2749 = vmatprep.subr.bf16.mxu0 0
      %2750 = vmatpush2.bf16.msra.mxu0 0
      %2751 = vmatprep.subr.bf16.mxu0 0
      %2752 = vmatpush2.bf16.msra.mxu0 0
      %2753 = vmatprep.subr.bf16.mxu0 0
      %2754 = vmatpush2.bf16.msra.mxu0 0
      %2755 = vmatprep.subr.bf16.mxu0 0
      %2756 = vmatpush2.bf16.msra.mxu0 0
      %2757 = vmatprep.subr.bf16.mxu0 0
      %2758 = vmatpush2.bf16.msra.mxu0 0
      %2759 = vmatprep.mubr.bf16.mxu0 0
      %2760 = vmatmul.mubr.bf16.gmra.mxu0 %v2643
      %v2761 = vpop.f32.mrf.mxu0
      %v2762 = vadd.f32 %v2421, %v2761
      %v2763 = vpop.f32.mrf.mxu0
      %v2764 = vadd.f32 %v2425, %v2763
      %v2765 = vpop.f32.mrf.mxu0
      %v2766 = vpop.f32.mrf.mxu0
      %2767 = vdwg.mxu0
      %2768 = vmatprep.subr.bf16.mxu0 0
      %2769 = vmatpush1.bf16.msra.mxu0 0
      %2770 = vmatprep.subr.bf16.mxu0 0
      %2771 = vmatpush1.bf16.msra.mxu0 0
      %2772 = vmatprep.subr.bf16.mxu0 0
      %2773 = vmatpush1.bf16.msra.mxu0 0
      %2774 = vmatprep.subr.bf16.mxu0 0
      %2775 = vmatpush1.bf16.msra.mxu0 0
      %2776 = vmatprep.subr.bf16.mxu0 0
      %2777 = vmatpush1.bf16.msra.mxu0 0
      %2778 = vmatprep.subr.bf16.mxu0 0
      %2779 = vmatpush1.bf16.msra.mxu0 0
      %2780 = vmatprep.subr.bf16.mxu0 %v2601
      %2781 = vmatpush1.bf16.msra.mxu0 %v2600
      %2782 = vmatprep.subr.bf16.mxu0 %v2585
      %2783 = vmatpush1.bf16.msra.mxu0 %v2584
      %2784 = vmatprep.subr.bf16.mxu0 0
      %2785 = vmatpush2.bf16.msra.mxu0 0
      %2786 = vmatprep.subr.bf16.mxu0 0
      %2787 = vmatpush2.bf16.msra.mxu0 0
      %2788 = vmatprep.subr.bf16.mxu0 0
      %2789 = vmatpush2.bf16.msra.mxu0 0
      %2790 = vmatprep.subr.bf16.mxu0 0
      %2791 = vmatpush2.bf16.msra.mxu0 0
      %2792 = vmatprep.subr.bf16.mxu0 0
      %2793 = vmatpush2.bf16.msra.mxu0 0
      %2794 = vmatprep.subr.bf16.mxu0 0
      %2795 = vmatpush2.bf16.msra.mxu0 0
      %2796 = vmatprep.subr.bf16.mxu0 0
      %2797 = vmatpush2.bf16.msra.mxu0 0
      %2798 = vmatprep.subr.bf16.mxu0 0
      %2799 = vmatpush2.bf16.msra.mxu0 0
      %2800 = vmatprep.mubr.bf16.mxu0 0
      %2801 = vmatmul.mubr.bf16.gmra.mxu0 %v2643
      %v2802 = vpop.f32.mrf.mxu0
      %v2803 = vadd.f32 %v2429, %v2802
      %v2804 = vpop.f32.mrf.mxu0
      %v2805 = vadd.f32 %v2433, %v2804
      %v2806 = vpop.f32.mrf.mxu0
      %v2807 = vpop.f32.mrf.mxu0
      %2808 = vdwg.mxu0
      %2809 = vmatprep.subr.bf16.mxu0 0
      %2810 = vmatpush1.bf16.msra.mxu0 0
      %2811 = vmatprep.subr.bf16.mxu0 0
      %2812 = vmatpush1.bf16.msra.mxu0 0
      %2813 = vmatprep.subr.bf16.mxu0 0
      %2814 = vmatpush1.bf16.msra.mxu0 0
      %2815 = vmatprep.subr.bf16.mxu0 0
      %2816 = vmatpush1.bf16.msra.mxu0 0
      %2817 = vmatprep.subr.bf16.mxu0 0
      %2818 = vmatpush1.bf16.msra.mxu0 0
      %2819 = vmatprep.subr.bf16.mxu0 0
      %2820 = vmatpush1.bf16.msra.mxu0 0
      %2821 = vmatprep.subr.bf16.mxu0 %v2603
      %2822 = vmatpush1.bf16.msra.mxu0 %v2602
      %2823 = vmatprep.subr.bf16.mxu0 %v2587
      %2824 = vmatpush1.bf16.msra.mxu0 %v2586
      %2825 = vmatprep.subr.bf16.mxu0 0
      %2826 = vmatpush2.bf16.msra.mxu0 0
      %2827 = vmatprep.subr.bf16.mxu0 0
      %2828 = vmatpush2.bf16.msra.mxu0 0
      %2829 = vmatprep.subr.bf16.mxu0 0
      %2830 = vmatpush2.bf16.msra.mxu0 0
      %2831 = vmatprep.subr.bf16.mxu0 0
      %2832 = vmatpush2.bf16.msra.mxu0 0
      %2833 = vmatprep.subr.bf16.mxu0 0
      %2834 = vmatpush2.bf16.msra.mxu0 0
      %2835 = vmatprep.subr.bf16.mxu0 0
      %2836 = vmatpush2.bf16.msra.mxu0 0
      %2837 = vmatprep.subr.bf16.mxu0 0
      %2838 = vmatpush2.bf16.msra.mxu0 0
      %2839 = vmatprep.subr.bf16.mxu0 0
      %2840 = vmatpush2.bf16.msra.mxu0 0
      %2841 = vmatprep.mubr.bf16.mxu0 0
      %2842 = vmatmul.mubr.bf16.gmra.mxu0 %v2643
      %v2843 = vpop.f32.mrf.mxu0
      %v2844 = vadd.f32 %v2437, %v2843
      %v2845 = vpop.f32.mrf.mxu0
      %v2846 = vadd.f32 %v2441, %v2845
      %v2847 = vpop.f32.mrf.mxu0
      %v2848 = vpop.f32.mrf.mxu0
      %2849 = vdwg.mxu0
      %2850 = vmatprep.subr.bf16.mxu0 0
      %2851 = vmatpush1.bf16.msra.mxu0 0
      %2852 = vmatprep.subr.bf16.mxu0 0
      %2853 = vmatpush1.bf16.msra.mxu0 0
      %2854 = vmatprep.subr.bf16.mxu0 0
      %2855 = vmatpush1.bf16.msra.mxu0 0
      %2856 = vmatprep.subr.bf16.mxu0 0
      %2857 = vmatpush1.bf16.msra.mxu0 0
      %2858 = vmatprep.subr.bf16.mxu0 0
      %2859 = vmatpush1.bf16.msra.mxu0 0
      %2860 = vmatprep.subr.bf16.mxu0 0
      %2861 = vmatpush1.bf16.msra.mxu0 0
      %2862 = vmatprep.subr.bf16.mxu0 %v2605
      %2863 = vmatpush1.bf16.msra.mxu0 %v2604
      %2864 = vmatprep.subr.bf16.mxu0 %v2589
      %2865 = vmatpush1.bf16.msra.mxu0 %v2588
      %2866 = vmatprep.subr.bf16.mxu0 0
      %2867 = vmatpush2.bf16.msra.mxu0 0
      %2868 = vmatprep.subr.bf16.mxu0 0
      %2869 = vmatpush2.bf16.msra.mxu0 0
      %2870 = vmatprep.subr.bf16.mxu0 0
      %2871 = vmatpush2.bf16.msra.mxu0 0
      %2872 = vmatprep.subr.bf16.mxu0 0
      %2873 = vmatpush2.bf16.msra.mxu0 0
      %2874 = vmatprep.subr.bf16.mxu0 0
      %2875 = vmatpush2.bf16.msra.mxu0 0
      %2876 = vmatprep.subr.bf16.mxu0 0
      %2877 = vmatpush2.bf16.msra.mxu0 0
      %2878 = vmatprep.subr.bf16.mxu0 0
      %2879 = vmatpush2.bf16.msra.mxu0 0
      %2880 = vmatprep.subr.bf16.mxu0 0
      %2881 = vmatpush2.bf16.msra.mxu0 0
      %2882 = vmatprep.mubr.bf16.mxu0 0
      %2883 = vmatmul.mubr.bf16.gmra.mxu0 %v2643
      %v2884 = vpop.f32.mrf.mxu0
      %v2885 = vadd.f32 %v2445, %v2884
      %v2886 = vpop.f32.mrf.mxu0
      %v2887 = vadd.f32 %v2449, %v2886
      %v2888 = vpop.f32.mrf.mxu0
      %v2889 = vpop.f32.mrf.mxu0
      %2890 = vdwg.mxu0
      %2891 = vmatprep.subr.bf16.mxu0 0
      %2892 = vmatpush1.bf16.msra.mxu0 0
      %2893 = vmatprep.subr.bf16.mxu0 0
      %2894 = vmatpush1.bf16.msra.mxu0 0
      %2895 = vmatprep.subr.bf16.mxu0 0
      %2896 = vmatpush1.bf16.msra.mxu0 0
      %2897 = vmatprep.subr.bf16.mxu0 0
      %2898 = vmatpush1.bf16.msra.mxu0 0
      %2899 = vmatprep.subr.bf16.mxu0 0
      %2900 = vmatpush1.bf16.msra.mxu0 0
      %2901 = vmatprep.subr.bf16.mxu0 0
      %2902 = vmatpush1.bf16.msra.mxu0 0
      %2903 = vmatprep.subr.bf16.mxu0 %v2607
      %2904 = vmatpush1.bf16.msra.mxu0 %v2606
      %2905 = vmatprep.subr.bf16.mxu0 %v2591
      %2906 = vmatpush1.bf16.msra.mxu0 %v2590
      %2907 = vmatprep.subr.bf16.mxu0 0
      %2908 = vmatpush2.bf16.msra.mxu0 0
      %2909 = vmatprep.subr.bf16.mxu0 0
      %2910 = vmatpush2.bf16.msra.mxu0 0
      %2911 = vmatprep.subr.bf16.mxu0 0
      %2912 = vmatpush2.bf16.msra.mxu0 0
      %2913 = vmatprep.subr.bf16.mxu0 0
      %2914 = vmatpush2.bf16.msra.mxu0 0
      %2915 = vmatprep.subr.bf16.mxu0 0
      %2916 = vmatpush2.bf16.msra.mxu0 0
      %2917 = vmatprep.subr.bf16.mxu0 0
      %2918 = vmatpush2.bf16.msra.mxu0 0
      %2919 = vmatprep.subr.bf16.mxu0 0
      %2920 = vmatpush2.bf16.msra.mxu0 0
      %2921 = vmatprep.subr.bf16.mxu0 0
      %2922 = vmatpush2.bf16.msra.mxu0 0
      %2923 = vmatprep.mubr.bf16.mxu0 0
      %2924 = vmatmul.mubr.bf16.gmra.mxu0 %v2643
      %v2925 = vpop.f32.mrf.mxu0
      %v2926 = vadd.f32 %v2453, %v2925
      %v2927 = vpop.f32.mrf.mxu0
      %v2928 = vadd.f32 %v2457, %v2927
      %v2929 = vpop.f32.mrf.mxu0
      %v2930 = vpop.f32.mrf.mxu0
      %2931 = vdwg.mxu0
      %2932 = vmatprep.subr.bf16.mxu0 0
      %2933 = vmatpush1.bf16.msra.mxu0 0
      %2934 = vmatprep.subr.bf16.mxu0 0
      %2935 = vmatpush1.bf16.msra.mxu0 0
      %2936 = vmatprep.subr.bf16.mxu0 0
      %2937 = vmatpush1.bf16.msra.mxu0 0
      %2938 = vmatprep.subr.bf16.mxu0 0
      %2939 = vmatpush1.bf16.msra.mxu0 0
      %2940 = vmatprep.subr.bf16.mxu0 0
      %2941 = vmatpush1.bf16.msra.mxu0 0
      %2942 = vmatprep.subr.bf16.mxu0 0
      %2943 = vmatpush1.bf16.msra.mxu0 0
      %2944 = vmatprep.subr.bf16.mxu0 %v2609
      %2945 = vmatpush1.bf16.msra.mxu0 %v2608
      %2946 = vmatprep.subr.bf16.mxu0 %v2593
      %2947 = vmatpush1.bf16.msra.mxu0 %v2592
      %2948 = vmatprep.subr.bf16.mxu0 0
      %2949 = vmatpush2.bf16.msra.mxu0 0
      %2950 = vmatprep.subr.bf16.mxu0 0
      %2951 = vmatpush2.bf16.msra.mxu0 0
      %2952 = vmatprep.subr.bf16.mxu0 0
      %2953 = vmatpush2.bf16.msra.mxu0 0
      %2954 = vmatprep.subr.bf16.mxu0 0
      %2955 = vmatpush2.bf16.msra.mxu0 0
      %2956 = vmatprep.subr.bf16.mxu0 0
      %2957 = vmatpush2.bf16.msra.mxu0 0
      %2958 = vmatprep.subr.bf16.mxu0 0
      %2959 = vmatpush2.bf16.msra.mxu0 0
      %2960 = vmatprep.subr.bf16.mxu0 0
      %2961 = vmatpush2.bf16.msra.mxu0 0
      %2962 = vmatprep.subr.bf16.mxu0 0
      %2963 = vmatpush2.bf16.msra.mxu0 0
      %2964 = vmatprep.mubr.bf16.mxu0 0
      %2965 = vmatmul.mubr.bf16.gmra.mxu0 %v2643
      %v2966 = vpop.f32.mrf.mxu0
      %v2967 = vadd.f32 %v2461, %v2966
      %v2968 = vpop.f32.mrf.mxu0
      %v2969 = vadd.f32 %v2465, %v2968
      %v2970 = vpop.f32.mrf.mxu0
      %v2971 = vpop.f32.mrf.mxu0
      %2972 = vdwg.mxu0
      %v2973 = vmax.f32 %v2680, 0.0
      %v2974 = vmax.f32 %v2682, 0.0
      %v2975 = vmax.f32 %v2721, 0.0
      %v2976 = vmax.f32 %v2723, 0.0
      %v2977 = vmax.f32 %v2762, 0.0
      %v2978 = vmax.f32 %v2764, 0.0
      %v2979 = vmax.f32 %v2803, 0.0
      %v2980 = vmax.f32 %v2805, 0.0
      %v2981 = vmax.f32 %v2844, 0.0
      %v2982 = vmax.f32 %v2846, 0.0
      %v2983 = vmax.f32 %v2885, 0.0
      %v2984 = vmax.f32 %v2887, 0.0
      %v2985 = vmax.f32 %v2926, 0.0
      %v2986 = vmax.f32 %v2928, 0.0
      %v2987 = vmax.f32 %v2967, 0.0
      %v2988 = vmax.f32 %v2969, 0.0
      %v2989 = vld [vmem:[%s69] sm:$0xf]
      %v2990 = vld [vmem:[%s69 + $0x4] sm:$0xf]
      %v2991 = vld [vmem:[%s69 + $0x8] sm:$0xf]
      %v2992 = vld [vmem:[%s69 + $0xc] sm:$0xf]
      %v2993 = vld [vmem:[%s69 + $0x10] sm:$0xf]
      %v2994 = vld [vmem:[%s69 + $0x14] sm:$0xf]
      %v2995 = vld [vmem:[%s69 + $0x18] sm:$0xf]
      %v2996 = vld [vmem:[%s69 + $0x1c] sm:$0xf]
      %v2997 = vld [vmem:[%s69 + $0x20] sm:$0xf]
      %v2998 = vld [vmem:[%s69 + $0x24] sm:$0xf]
      %v2999 = vld [vmem:[%s69 + $0x28] sm:$0xf]
      %v3000 = vld [vmem:[%s69 + $0x2c] sm:$0xf]
      %v3001 = vld [vmem:[%s69 + $0x30] sm:$0xf]
      %v3002 = vld [vmem:[%s69 + $0x34] sm:$0xf]
      %v3003 = vld [vmem:[%s69 + $0x38] sm:$0xf]
      %v3004 = vld [vmem:[%s69 + $0x3c] sm:$0xf]
      %v3005 = vld [vmem:[%s69 + $0x40] sm:$0xf]
      %v3006 = vld [vmem:[%s69 + $0x44] sm:$0xf]
      %v3007 = vld [vmem:[%s69 + $0x48] sm:$0xf]
      %v3008 = vld [vmem:[%s69 + $0x4c] sm:$0xf]
      %v3009 = vld [vmem:[%s69 + $0x50] sm:$0xf]
      %v3010 = vld [vmem:[%s69 + $0x54] sm:$0xf]
      %v3011 = vld [vmem:[%s69 + $0x58] sm:$0xf]
      %v3012 = vld [vmem:[%s69 + $0x5c] sm:$0xf]
      %v3013 = vld [vmem:[%s69 + $0x60] sm:$0xf]
      %v3014 = vld [vmem:[%s69 + $0x64] sm:$0xf]
      %v3015 = vld [vmem:[%s69 + $0x68] sm:$0xf]
      %v3016 = vld [vmem:[%s69 + $0x6c] sm:$0xf]
      %v3017 = vld [vmem:[%s69 + $0x70] sm:$0xf]
      %v3018 = vld [vmem:[%s69 + $0x74] sm:$0xf]
      %v3019 = vld [vmem:[%s69 + $0x78] sm:$0xf]
      %v3020 = vld [vmem:[%s69 + $0x7c] sm:$0xf]
      %v3021 = vld [vmem:[%s69 + $0x80] sm:$0xf]
      %v3022 = vld [vmem:[%s69 + $0x84] sm:$0xf]
      %v3023 = vld [vmem:[%s69 + $0x88] sm:$0xf]
      %v3024 = vld [vmem:[%s69 + $0x8c] sm:$0xf]
      %v3025 = vld [vmem:[%s69 + $0x90] sm:$0xf]
      %v3026 = vld [vmem:[%s69 + $0x94] sm:$0xf]
      %v3027 = vld [vmem:[%s69 + $0x98] sm:$0xf]
      %v3028 = vld [vmem:[%s69 + $0x9c] sm:$0xf]
      %v3029 = vld [vmem:[%s69 + $0xa0] sm:$0xf]
      %v3030 = vld [vmem:[%s69 + $0xa4] sm:$0xf]
      %v3031 = vld [vmem:[%s69 + $0xa8] sm:$0xf]
      %v3032 = vld [vmem:[%s69 + $0xac] sm:$0xf]
      %v3033 = vld [vmem:[%s69 + $0xb0] sm:$0xf]
      %v3034 = vld [vmem:[%s69 + $0xb4] sm:$0xf]
      %v3035 = vld [vmem:[%s69 + $0xb8] sm:$0xf]
      %v3036 = vld [vmem:[%s69 + $0xbc] sm:$0xf]
      %v3037 = vld [vmem:[%s69 + $0xc0] sm:$0xf]
      %v3038 = vld [vmem:[%s69 + $0xc4] sm:$0xf]
      %v3039 = vld [vmem:[%s69 + $0xc8] sm:$0xf]
      %v3040 = vld [vmem:[%s69 + $0xcc] sm:$0xf]
      %v3041 = vld [vmem:[%s69 + $0xd0] sm:$0xf]
      %v3042 = vld [vmem:[%s69 + $0xd4] sm:$0xf]
      %v3043 = vld [vmem:[%s69 + $0xd8] sm:$0xf]
      %v3044 = vld [vmem:[%s69 + $0xdc] sm:$0xf]
      %v3045 = vld [vmem:[%s69 + $0xe0] sm:$0xf]
      %v3046 = vld [vmem:[%s69 + $0xe4] sm:$0xf]
      %v3047 = vld [vmem:[%s69 + $0xe8] sm:$0xf]
      %v3048 = vld [vmem:[%s69 + $0xec] sm:$0xf]
      %v3049 = vld [vmem:[%s69 + $0xf0] sm:$0xf]
      %v3050 = vld [vmem:[%s69 + $0xf4] sm:$0xf]
      %v3051 = vld [vmem:[%s69 + $0xf8] sm:$0xf]
      %v3052 = vld [vmem:[%s69 + $0xfc] sm:$0xf]
      %v3053 = vld [vmem:[%s69 + $0x100] sm:$0xf]
      %v3054 = vld [vmem:[%s69 + $0x104] sm:$0xf]
      %v3055 = vld [vmem:[%s69 + $0x108] sm:$0xf]
      %v3056 = vld [vmem:[%s69 + $0x10c] sm:$0xf]
      %v3057 = vld [vmem:[%s69 + $0x110] sm:$0xf]
      %v3058 = vld [vmem:[%s69 + $0x114] sm:$0xf]
      %v3059 = vld [vmem:[%s69 + $0x118] sm:$0xf]
      %v3060 = vld [vmem:[%s69 + $0x11c] sm:$0xf]
      %v3061 = vld [vmem:[%s69 + $0x120] sm:$0xf]
      %v3062 = vld [vmem:[%s69 + $0x124] sm:$0xf]
      %v3063 = vld [vmem:[%s69 + $0x128] sm:$0xf]
      %v3064 = vld [vmem:[%s69 + $0x12c] sm:$0xf]
      %v3065 = vld [vmem:[%s69 + $0x130] sm:$0xf]
      %v3066 = vld [vmem:[%s69 + $0x134] sm:$0xf]
      %v3067 = vld [vmem:[%s69 + $0x138] sm:$0xf]
      %v3068 = vld [vmem:[%s69 + $0x13c] sm:$0xf]
      %v3069 = vld [vmem:[%s69 + $0x140] sm:$0xf]
      %v3070 = vld [vmem:[%s69 + $0x144] sm:$0xf]
      %v3071 = vld [vmem:[%s69 + $0x148] sm:$0xf]
      %v3072 = vld [vmem:[%s69 + $0x14c] sm:$0xf]
      %v3073 = vld [vmem:[%s69 + $0x150] sm:$0xf]
      %v3074 = vld [vmem:[%s69 + $0x154] sm:$0xf]
      %v3075 = vld [vmem:[%s69 + $0x158] sm:$0xf]
      %v3076 = vld [vmem:[%s69 + $0x15c] sm:$0xf]
      %v3077 = vld [vmem:[%s69 + $0x160] sm:$0xf]
      %v3078 = vld [vmem:[%s69 + $0x164] sm:$0xf]
      %v3079 = vld [vmem:[%s69 + $0x168] sm:$0xf]
      %v3080 = vld [vmem:[%s69 + $0x16c] sm:$0xf]
      %v3081 = vld [vmem:[%s69 + $0x170] sm:$0xf]
      %v3082 = vld [vmem:[%s69 + $0x174] sm:$0xf]
      %v3083 = vld [vmem:[%s69 + $0x178] sm:$0xf]
      %v3084 = vld [vmem:[%s69 + $0x17c] sm:$0xf]
      %v3085 = vld [vmem:[%s69 + $0x180] sm:$0xf]
      %v3086 = vld [vmem:[%s69 + $0x184] sm:$0xf]
      %v3087 = vld [vmem:[%s69 + $0x188] sm:$0xf]
      %v3088 = vld [vmem:[%s69 + $0x18c] sm:$0xf]
      %v3089 = vld [vmem:[%s69 + $0x190] sm:$0xf]
      %v3090 = vld [vmem:[%s69 + $0x194] sm:$0xf]
      %v3091 = vld [vmem:[%s69 + $0x198] sm:$0xf]
      %v3092 = vld [vmem:[%s69 + $0x19c] sm:$0xf]
      %v3093 = vld [vmem:[%s69 + $0x1a0] sm:$0xf]
      %v3094 = vld [vmem:[%s69 + $0x1a4] sm:$0xf]
      %v3095 = vld [vmem:[%s69 + $0x1a8] sm:$0xf]
      %v3096 = vld [vmem:[%s69 + $0x1ac] sm:$0xf]
      %v3097 = vld [vmem:[%s69 + $0x1b0] sm:$0xf]
      %v3098 = vld [vmem:[%s69 + $0x1b4] sm:$0xf]
      %v3099 = vld [vmem:[%s69 + $0x1b8] sm:$0xf]
      %v3100 = vld [vmem:[%s69 + $0x1bc] sm:$0xf]
      %v3101 = vld [vmem:[%s69 + $0x1c0] sm:$0xf]
      %v3102 = vld [vmem:[%s69 + $0x1c4] sm:$0xf]
      %v3103 = vld [vmem:[%s69 + $0x1c8] sm:$0xf]
      %v3104 = vld [vmem:[%s69 + $0x1cc] sm:$0xf]
      %v3105 = vld [vmem:[%s69 + $0x1d0] sm:$0xf]
      %v3106 = vld [vmem:[%s69 + $0x1d4] sm:$0xf]
      %v3107 = vld [vmem:[%s69 + $0x1d8] sm:$0xf]
      %v3108 = vld [vmem:[%s69 + $0x1dc] sm:$0xf]
      %v3109 = vld [vmem:[%s69 + $0x1e0] sm:$0xf]
      %v3110 = vld [vmem:[%s69 + $0x1e4] sm:$0xf]
      %v3111 = vld [vmem:[%s69 + $0x1e8] sm:$0xf]
      %v3112 = vld [vmem:[%s69 + $0x1ec] sm:$0xf]
      %v3113 = vld [vmem:[%s69 + $0x1f0] sm:$0xf]
      %v3114 = vld [vmem:[%s69 + $0x1f4] sm:$0xf]
      %v3115 = vld [vmem:[%s69 + $0x1f8] sm:$0xf]
      %v3116 = vld [vmem:[%s69 + $0x1fc] sm:$0xf]
      %v3117 = vld [vmem:[%s69 + $0x200] sm:$0xf]
      %v3118 = vld [vmem:[%s69 + $0x204] sm:$0xf]
      %v3119 = vld [vmem:[%s69 + $0x208] sm:$0xf]
      %v3120 = vld [vmem:[%s69 + $0x20c] sm:$0xf]
      %v3121 = vld [vmem:[%s69 + $0x210] sm:$0xf]
      %v3122 = vld [vmem:[%s69 + $0x214] sm:$0xf]
      %v3123 = vld [vmem:[%s69 + $0x218] sm:$0xf]
      %v3124 = vld [vmem:[%s69 + $0x21c] sm:$0xf]
      %v3125 = vld [vmem:[%s69 + $0x220] sm:$0xf]
      %v3126 = vld [vmem:[%s69 + $0x224] sm:$0xf]
      %v3127 = vld [vmem:[%s69 + $0x228] sm:$0xf]
      %v3128 = vld [vmem:[%s69 + $0x22c] sm:$0xf]
      %v3129 = vld [vmem:[%s69 + $0x230] sm:$0xf]
      %v3130 = vld [vmem:[%s69 + $0x234] sm:$0xf]
      %v3131 = vld [vmem:[%s69 + $0x238] sm:$0xf]
      %v3132 = vld [vmem:[%s69 + $0x23c] sm:$0xf]
      %v3133 = vld [vmem:[%s69 + $0x240] sm:$0xf]
      %v3134 = vld [vmem:[%s69 + $0x244] sm:$0xf]
      %v3135 = vld [vmem:[%s69 + $0x248] sm:$0xf]
      %v3136 = vld [vmem:[%s69 + $0x24c] sm:$0xf]
      %v3137 = vld [vmem:[%s69 + $0x250] sm:$0xf]
      %v3138 = vld [vmem:[%s69 + $0x254] sm:$0xf]
      %v3139 = vld [vmem:[%s69 + $0x258] sm:$0xf]
      %v3140 = vld [vmem:[%s69 + $0x25c] sm:$0xf]
      %v3141 = vld [vmem:[%s69 + $0x260] sm:$0xf]
      %v3142 = vld [vmem:[%s69 + $0x264] sm:$0xf]
      %v3143 = vld [vmem:[%s69 + $0x268] sm:$0xf]
      %v3144 = vld [vmem:[%s69 + $0x26c] sm:$0xf]
      %v3145 = vld [vmem:[%s69 + $0x270] sm:$0xf]
      %v3146 = vld [vmem:[%s69 + $0x274] sm:$0xf]
      %v3147 = vld [vmem:[%s69 + $0x278] sm:$0xf]
      %v3148 = vld [vmem:[%s69 + $0x27c] sm:$0xf]
      %v3149 = vld [vmem:[%s69 + $0x280] sm:$0xf]
      %v3150 = vld [vmem:[%s69 + $0x284] sm:$0xf]
      %v3151 = vld [vmem:[%s69 + $0x288] sm:$0xf]
      %v3152 = vld [vmem:[%s69 + $0x28c] sm:$0xf]
      %v3153 = vld [vmem:[%s69 + $0x290] sm:$0xf]
      %v3154 = vld [vmem:[%s69 + $0x294] sm:$0xf]
      %v3155 = vld [vmem:[%s69 + $0x298] sm:$0xf]
      %v3156 = vld [vmem:[%s69 + $0x29c] sm:$0xf]
      %v3157 = vld [vmem:[%s69 + $0x2a0] sm:$0xf]
      %v3158 = vld [vmem:[%s69 + $0x2a4] sm:$0xf]
      %v3159 = vld [vmem:[%s69 + $0x2a8] sm:$0xf]
      %v3160 = vld [vmem:[%s69 + $0x2ac] sm:$0xf]
      %v3161 = vld [vmem:[%s69 + $0x2b0] sm:$0xf]
      %v3162 = vld [vmem:[%s69 + $0x2b4] sm:$0xf]
      %v3163 = vld [vmem:[%s69 + $0x2b8] sm:$0xf]
      %v3164 = vld [vmem:[%s69 + $0x2bc] sm:$0xf]
      %v3165 = vld [vmem:[%s69 + $0x2c0] sm:$0xf]
      %v3166 = vld [vmem:[%s69 + $0x2c4] sm:$0xf]
      %v3167 = vld [vmem:[%s69 + $0x2c8] sm:$0xf]
      %v3168 = vld [vmem:[%s69 + $0x2cc] sm:$0xf]
      %v3169 = vld [vmem:[%s69 + $0x2d0] sm:$0xf]
      %v3170 = vld [vmem:[%s69 + $0x2d4] sm:$0xf]
      %v3171 = vld [vmem:[%s69 + $0x2d8] sm:$0xf]
      %v3172 = vld [vmem:[%s69 + $0x2dc] sm:$0xf]
      %v3173 = vld [vmem:[%s69 + $0x2e0] sm:$0xf]
      %v3174 = vld [vmem:[%s69 + $0x2e4] sm:$0xf]
      %v3175 = vld [vmem:[%s69 + $0x2e8] sm:$0xf]
      %v3176 = vld [vmem:[%s69 + $0x2ec] sm:$0xf]
      %v3177 = vld [vmem:[%s69 + $0x2f0] sm:$0xf]
      %v3178 = vld [vmem:[%s69 + $0x2f4] sm:$0xf]
      %v3179 = vld [vmem:[%s69 + $0x2f8] sm:$0xf]
      %v3180 = vld [vmem:[%s69 + $0x2fc] sm:$0xf]
      %v3181 = vld [vmem:[%s69 + $0x300] sm:$0xf]
      %v3182 = vld [vmem:[%s69 + $0x304] sm:$0xf]
      %v3183 = vld [vmem:[%s69 + $0x308] sm:$0xf]
      %v3184 = vld [vmem:[%s69 + $0x30c] sm:$0xf]
      %v3185 = vld [vmem:[%s69 + $0x310] sm:$0xf]
      %v3186 = vld [vmem:[%s69 + $0x314] sm:$0xf]
      %v3187 = vld [vmem:[%s69 + $0x318] sm:$0xf]
      %v3188 = vld [vmem:[%s69 + $0x31c] sm:$0xf]
      %v3189 = vld [vmem:[%s69 + $0x320] sm:$0xf]
      %v3190 = vld [vmem:[%s69 + $0x324] sm:$0xf]
      %v3191 = vld [vmem:[%s69 + $0x328] sm:$0xf]
      %v3192 = vld [vmem:[%s69 + $0x32c] sm:$0xf]
      %v3193 = vld [vmem:[%s69 + $0x330] sm:$0xf]
      %v3194 = vld [vmem:[%s69 + $0x334] sm:$0xf]
      %v3195 = vld [vmem:[%s69 + $0x338] sm:$0xf]
      %v3196 = vld [vmem:[%s69 + $0x33c] sm:$0xf]
      %v3197 = vld [vmem:[%s69 + $0x340] sm:$0xf]
      %v3198 = vld [vmem:[%s69 + $0x344] sm:$0xf]
      %v3199 = vld [vmem:[%s69 + $0x348] sm:$0xf]
      %v3200 = vld [vmem:[%s69 + $0x34c] sm:$0xf]
      %v3201 = vld [vmem:[%s69 + $0x350] sm:$0xf]
      %v3202 = vld [vmem:[%s69 + $0x354] sm:$0xf]
      %v3203 = vld [vmem:[%s69 + $0x358] sm:$0xf]
      %v3204 = vld [vmem:[%s69 + $0x35c] sm:$0xf]
      %v3205 = vld [vmem:[%s69 + $0x360] sm:$0xf]
      %v3206 = vld [vmem:[%s69 + $0x364] sm:$0xf]
      %v3207 = vld [vmem:[%s69 + $0x368] sm:$0xf]
      %v3208 = vld [vmem:[%s69 + $0x36c] sm:$0xf]
      %v3209 = vld [vmem:[%s69 + $0x370] sm:$0xf]
      %v3210 = vld [vmem:[%s69 + $0x374] sm:$0xf]
      %v3211 = vld [vmem:[%s69 + $0x378] sm:$0xf]
      %v3212 = vld [vmem:[%s69 + $0x37c] sm:$0xf]
      %v3213 = vld [vmem:[%s69 + $0x380] sm:$0xf]
      %v3214 = vld [vmem:[%s69 + $0x384] sm:$0xf]
      %v3215 = vld [vmem:[%s69 + $0x388] sm:$0xf]
      %v3216 = vld [vmem:[%s69 + $0x38c] sm:$0xf]
      %v3217 = vld [vmem:[%s69 + $0x390] sm:$0xf]
      %v3218 = vld [vmem:[%s69 + $0x394] sm:$0xf]
      %v3219 = vld [vmem:[%s69 + $0x398] sm:$0xf]
      %v3220 = vld [vmem:[%s69 + $0x39c] sm:$0xf]
      %v3221 = vld [vmem:[%s69 + $0x3a0] sm:$0xf]
      %v3222 = vld [vmem:[%s69 + $0x3a4] sm:$0xf]
      %v3223 = vld [vmem:[%s69 + $0x3a8] sm:$0xf]
      %v3224 = vld [vmem:[%s69 + $0x3ac] sm:$0xf]
      %v3225 = vld [vmem:[%s69 + $0x3b0] sm:$0xf]
      %v3226 = vld [vmem:[%s69 + $0x3b4] sm:$0xf]
      %v3227 = vld [vmem:[%s69 + $0x3b8] sm:$0xf]
      %v3228 = vld [vmem:[%s69 + $0x3bc] sm:$0xf]
      %v3229 = vld [vmem:[%s69 + $0x3c0] sm:$0xf]
      %v3230 = vld [vmem:[%s69 + $0x3c4] sm:$0xf]
      %v3231 = vld [vmem:[%s69 + $0x3c8] sm:$0xf]
      %v3232 = vld [vmem:[%s69 + $0x3cc] sm:$0xf]
      %v3233 = vld [vmem:[%s69 + $0x3d0] sm:$0xf]
      %v3234 = vld [vmem:[%s69 + $0x3d4] sm:$0xf]
      %v3235 = vld [vmem:[%s69 + $0x3d8] sm:$0xf]
      %v3236 = vld [vmem:[%s69 + $0x3dc] sm:$0xf]
      %v3237 = vld [vmem:[%s69 + $0x3e0] sm:$0xf]
      %v3238 = vld [vmem:[%s69 + $0x3e4] sm:$0xf]
      %v3239 = vld [vmem:[%s69 + $0x3e8] sm:$0xf]
      %v3240 = vld [vmem:[%s69 + $0x3ec] sm:$0xf]
      %v3241 = vld [vmem:[%s69 + $0x3f0] sm:$0xf]
      %v3242 = vld [vmem:[%s69 + $0x3f4] sm:$0xf]
      %v3243 = vld [vmem:[%s69 + $0x3f8] sm:$0xf]
      %v3244 = vld [vmem:[%s69 + $0x3fc] sm:$0xf]
      %v3245 = vpack.c.bf16 %v2973, %v2973
      %v3246 = vpack.c.bf16 %v2974, %v2974
      %v3247 = vpack.c.bf16 %v2975, %v2975
      %v3248 = vpack.c.bf16 %v2976, %v2976
      %v3249 = vpack.c.bf16 %v2977, %v2977
      %v3250 = vpack.c.bf16 %v2978, %v2978
      %v3251 = vpack.c.bf16 %v2979, %v2979
      %v3252 = vpack.c.bf16 %v2980, %v2980
      %v3253 = vpack.c.bf16 %v2981, %v2981
      %v3254 = vpack.c.bf16 %v2982, %v2982
      %v3255 = vpack.c.bf16 %v2983, %v2983
      %v3256 = vpack.c.bf16 %v2984, %v2984
      %v3257 = vpack.c.bf16 %v2985, %v2985
      %v3258 = vpack.c.bf16 %v2986, %v2986
      %v3259 = vpack.c.bf16 %v2987, %v2987
      %v3260 = vpack.c.bf16 %v2988, %v2988
      %v3261 = vld [vmem:[%s71] sm:$0x1]
      %v3263 = vlaneseq
      %v3264 = vshrl.u32 %v3263, 7
      %v3265 = vsub.s32 0, %v3264
      %v3266 = vrot.slane %v3261, %v3265
      %v3524 = vunpack.c.l.b16 %v2989
      %v3525 = vunpack.c.l.b16 %v2990
      %v3526 = vunpack.c.l.b16 %v2991
      %v3527 = vunpack.c.l.b16 %v2992
      %v3528 = vunpack.c.l.b16 %v2993
      %v3529 = vunpack.c.l.b16 %v2994
      %v3530 = vunpack.c.l.b16 %v2995
      %v3531 = vunpack.c.l.b16 %v2996
      %v3532 = vunpack.c.l.b16 %v2997
      %v3533 = vunpack.c.l.b16 %v2998
      %v3534 = vunpack.c.l.b16 %v2999
      %v3535 = vunpack.c.l.b16 %v3000
      %v3536 = vunpack.c.l.b16 %v3001
      %v3537 = vunpack.c.l.b16 %v3002
      %v3538 = vunpack.c.l.b16 %v3003
      %v3539 = vunpack.c.l.b16 %v3004
      %v3540 = vunpack.c.l.b16 %v3005
      %v3541 = vunpack.c.l.b16 %v3006
      %v3542 = vunpack.c.l.b16 %v3007
      %v3543 = vunpack.c.l.b16 %v3008
      %v3544 = vunpack.c.l.b16 %v3009
      %v3545 = vunpack.c.l.b16 %v3010
      %v3546 = vunpack.c.l.b16 %v3011
      %v3547 = vunpack.c.l.b16 %v3012
      %v3548 = vunpack.c.l.b16 %v3013
      %v3549 = vunpack.c.l.b16 %v3014
      %v3550 = vunpack.c.l.b16 %v3015
      %v3551 = vunpack.c.l.b16 %v3016
      %v3552 = vunpack.c.l.b16 %v3017
      %v3553 = vunpack.c.l.b16 %v3018
      %v3554 = vunpack.c.l.b16 %v3019
      %v3555 = vunpack.c.l.b16 %v3020
      %v3556 = vunpack.c.l.b16 %v3021
      %v3557 = vunpack.c.l.b16 %v3022
      %v3558 = vunpack.c.l.b16 %v3023
      %v3559 = vunpack.c.l.b16 %v3024
      %v3560 = vunpack.c.l.b16 %v3025
      %v3561 = vunpack.c.l.b16 %v3026
      %v3562 = vunpack.c.l.b16 %v3027
      %v3563 = vunpack.c.l.b16 %v3028
      %v3564 = vunpack.c.l.b16 %v3029
      %v3565 = vunpack.c.l.b16 %v3030
      %v3566 = vunpack.c.l.b16 %v3031
      %v3567 = vunpack.c.l.b16 %v3032
      %v3568 = vunpack.c.l.b16 %v3033
      %v3569 = vunpack.c.l.b16 %v3034
      %v3570 = vunpack.c.l.b16 %v3035
      %v3571 = vunpack.c.l.b16 %v3036
      %v3572 = vunpack.c.l.b16 %v3037
      %v3573 = vunpack.c.l.b16 %v3038
      %v3574 = vunpack.c.l.b16 %v3039
      %v3575 = vunpack.c.l.b16 %v3040
      %v3576 = vunpack.c.l.b16 %v3041
      %v3577 = vunpack.c.l.b16 %v3042
      %v3578 = vunpack.c.l.b16 %v3043
      %v3579 = vunpack.c.l.b16 %v3044
      %v3580 = vunpack.c.l.b16 %v3045
      %v3581 = vunpack.c.l.b16 %v3046
      %v3582 = vunpack.c.l.b16 %v3047
      %v3583 = vunpack.c.l.b16 %v3048
      %v3584 = vunpack.c.l.b16 %v3049
      %v3585 = vunpack.c.l.b16 %v3050
      %v3586 = vunpack.c.l.b16 %v3051
      %v3587 = vunpack.c.l.b16 %v3052
      %v3588 = vunpack.c.l.b16 %v3053
      %v3589 = vunpack.c.l.b16 %v3054
      %v3590 = vunpack.c.l.b16 %v3055
      %v3591 = vunpack.c.l.b16 %v3056
      %v3592 = vunpack.c.l.b16 %v3057
      %v3593 = vunpack.c.l.b16 %v3058
      %v3594 = vunpack.c.l.b16 %v3059
      %v3595 = vunpack.c.l.b16 %v3060
      %v3596 = vunpack.c.l.b16 %v3061
      %v3597 = vunpack.c.l.b16 %v3062
      %v3598 = vunpack.c.l.b16 %v3063
      %v3599 = vunpack.c.l.b16 %v3064
      %v3600 = vunpack.c.l.b16 %v3065
      %v3601 = vunpack.c.l.b16 %v3066
      %v3602 = vunpack.c.l.b16 %v3067
      %v3603 = vunpack.c.l.b16 %v3068
      %v3604 = vunpack.c.l.b16 %v3069
      %v3605 = vunpack.c.l.b16 %v3070
      %v3606 = vunpack.c.l.b16 %v3071
      %v3607 = vunpack.c.l.b16 %v3072
      %v3608 = vunpack.c.l.b16 %v3073
      %v3609 = vunpack.c.l.b16 %v3074
      %v3610 = vunpack.c.l.b16 %v3075
      %v3611 = vunpack.c.l.b16 %v3076
      %v3612 = vunpack.c.l.b16 %v3077
      %v3613 = vunpack.c.l.b16 %v3078
      %v3614 = vunpack.c.l.b16 %v3079
      %v3615 = vunpack.c.l.b16 %v3080
      %v3616 = vunpack.c.l.b16 %v3081
      %v3617 = vunpack.c.l.b16 %v3082
      %v3618 = vunpack.c.l.b16 %v3083
      %v3619 = vunpack.c.l.b16 %v3084
      %v3620 = vunpack.c.l.b16 %v3085
      %v3621 = vunpack.c.l.b16 %v3086
      %v3622 = vunpack.c.l.b16 %v3087
      %v3623 = vunpack.c.l.b16 %v3088
      %v3624 = vunpack.c.l.b16 %v3089
      %v3625 = vunpack.c.l.b16 %v3090
      %v3626 = vunpack.c.l.b16 %v3091
      %v3627 = vunpack.c.l.b16 %v3092
      %v3628 = vunpack.c.l.b16 %v3093
      %v3629 = vunpack.c.l.b16 %v3094
      %v3630 = vunpack.c.l.b16 %v3095
      %v3631 = vunpack.c.l.b16 %v3096
      %v3632 = vunpack.c.l.b16 %v3097
      %v3633 = vunpack.c.l.b16 %v3098
      %v3634 = vunpack.c.l.b16 %v3099
      %v3635 = vunpack.c.l.b16 %v3100
      %v3636 = vunpack.c.l.b16 %v3101
      %v3637 = vunpack.c.l.b16 %v3102
      %v3638 = vunpack.c.l.b16 %v3103
      %v3639 = vunpack.c.l.b16 %v3104
      %v3640 = vunpack.c.l.b16 %v3105
      %v3641 = vunpack.c.l.b16 %v3106
      %v3642 = vunpack.c.l.b16 %v3107
      %v3643 = vunpack.c.l.b16 %v3108
      %v3644 = vunpack.c.l.b16 %v3109
      %v3645 = vunpack.c.l.b16 %v3110
      %v3646 = vunpack.c.l.b16 %v3111
      %v3647 = vunpack.c.l.b16 %v3112
      %v3648 = vunpack.c.l.b16 %v3113
      %v3649 = vunpack.c.l.b16 %v3114
      %v3650 = vunpack.c.l.b16 %v3115
      %v3651 = vunpack.c.l.b16 %v3116
      %v3652 = vunpack.c.l.b16 %v3117
      %v3653 = vunpack.c.l.b16 %v3118
      %v3654 = vunpack.c.l.b16 %v3119
      %v3655 = vunpack.c.l.b16 %v3120
      %v3656 = vunpack.c.l.b16 %v3121
      %v3657 = vunpack.c.l.b16 %v3122
      %v3658 = vunpack.c.l.b16 %v3123
      %v3659 = vunpack.c.l.b16 %v3124
      %v3660 = vunpack.c.l.b16 %v3125
      %v3661 = vunpack.c.l.b16 %v3126
      %v3662 = vunpack.c.l.b16 %v3127
      %v3663 = vunpack.c.l.b16 %v3128
      %v3664 = vunpack.c.l.b16 %v3129
      %v3665 = vunpack.c.l.b16 %v3130
      %v3666 = vunpack.c.l.b16 %v3131
      %v3667 = vunpack.c.l.b16 %v3132
      %v3668 = vunpack.c.l.b16 %v3133
      %v3669 = vunpack.c.l.b16 %v3134
      %v3670 = vunpack.c.l.b16 %v3135
      %v3671 = vunpack.c.l.b16 %v3136
      %v3672 = vunpack.c.l.b16 %v3137
      %v3673 = vunpack.c.l.b16 %v3138
      %v3674 = vunpack.c.l.b16 %v3139
      %v3675 = vunpack.c.l.b16 %v3140
      %v3676 = vunpack.c.l.b16 %v3141
      %v3677 = vunpack.c.l.b16 %v3142
      %v3678 = vunpack.c.l.b16 %v3143
      %v3679 = vunpack.c.l.b16 %v3144
      %v3680 = vunpack.c.l.b16 %v3145
      %v3681 = vunpack.c.l.b16 %v3146
      %v3682 = vunpack.c.l.b16 %v3147
      %v3683 = vunpack.c.l.b16 %v3148
      %v3684 = vunpack.c.l.b16 %v3149
      %v3685 = vunpack.c.l.b16 %v3150
      %v3686 = vunpack.c.l.b16 %v3151
      %v3687 = vunpack.c.l.b16 %v3152
      %v3688 = vunpack.c.l.b16 %v3153
      %v3689 = vunpack.c.l.b16 %v3154
      %v3690 = vunpack.c.l.b16 %v3155
      %v3691 = vunpack.c.l.b16 %v3156
      %v3692 = vunpack.c.l.b16 %v3157
      %v3693 = vunpack.c.l.b16 %v3158
      %v3694 = vunpack.c.l.b16 %v3159
      %v3695 = vunpack.c.l.b16 %v3160
      %v3696 = vunpack.c.l.b16 %v3161
      %v3697 = vunpack.c.l.b16 %v3162
      %v3698 = vunpack.c.l.b16 %v3163
      %v3699 = vunpack.c.l.b16 %v3164
      %v3700 = vunpack.c.l.b16 %v3165
      %v3701 = vunpack.c.l.b16 %v3166
      %v3702 = vunpack.c.l.b16 %v3167
      %v3703 = vunpack.c.l.b16 %v3168
      %v3704 = vunpack.c.l.b16 %v3169
      %v3705 = vunpack.c.l.b16 %v3170
      %v3706 = vunpack.c.l.b16 %v3171
      %v3707 = vunpack.c.l.b16 %v3172
      %v3708 = vunpack.c.l.b16 %v3173
      %v3709 = vunpack.c.l.b16 %v3174
      %v3710 = vunpack.c.l.b16 %v3175
      %v3711 = vunpack.c.l.b16 %v3176
      %v3712 = vunpack.c.l.b16 %v3177
      %v3713 = vunpack.c.l.b16 %v3178
      %v3714 = vunpack.c.l.b16 %v3179
      %v3715 = vunpack.c.l.b16 %v3180
      %v3716 = vunpack.c.l.b16 %v3181
      %v3717 = vunpack.c.l.b16 %v3182
      %v3718 = vunpack.c.l.b16 %v3183
      %v3719 = vunpack.c.l.b16 %v3184
      %v3720 = vunpack.c.l.b16 %v3185
      %v3721 = vunpack.c.l.b16 %v3186
      %v3722 = vunpack.c.l.b16 %v3187
      %v3723 = vunpack.c.l.b16 %v3188
      %v3724 = vunpack.c.l.b16 %v3189
      %v3725 = vunpack.c.l.b16 %v3190
      %v3726 = vunpack.c.l.b16 %v3191
      %v3727 = vunpack.c.l.b16 %v3192
      %v3728 = vunpack.c.l.b16 %v3193
      %v3729 = vunpack.c.l.b16 %v3194
      %v3730 = vunpack.c.l.b16 %v3195
      %v3731 = vunpack.c.l.b16 %v3196
      %v3732 = vunpack.c.l.b16 %v3197
      %v3733 = vunpack.c.l.b16 %v3198
      %v3734 = vunpack.c.l.b16 %v3199
      %v3735 = vunpack.c.l.b16 %v3200
      %v3736 = vunpack.c.l.b16 %v3201
      %v3737 = vunpack.c.l.b16 %v3202
      %v3738 = vunpack.c.l.b16 %v3203
      %v3739 = vunpack.c.l.b16 %v3204
      %v3740 = vunpack.c.l.b16 %v3205
      %v3741 = vunpack.c.l.b16 %v3206
      %v3742 = vunpack.c.l.b16 %v3207
      %v3743 = vunpack.c.l.b16 %v3208
      %v3744 = vunpack.c.l.b16 %v3209
      %v3745 = vunpack.c.l.b16 %v3210
      %v3746 = vunpack.c.l.b16 %v3211
      %v3747 = vunpack.c.l.b16 %v3212
      %v3748 = vunpack.c.l.b16 %v3213
      %v3749 = vunpack.c.l.b16 %v3214
      %v3750 = vunpack.c.l.b16 %v3215
      %v3751 = vunpack.c.l.b16 %v3216
      %v3752 = vunpack.c.l.b16 %v3217
      %v3753 = vunpack.c.l.b16 %v3218
      %v3754 = vunpack.c.l.b16 %v3219
      %v3755 = vunpack.c.l.b16 %v3220
      %v3756 = vunpack.c.l.b16 %v3221
      %v3757 = vunpack.c.l.b16 %v3222
      %v3758 = vunpack.c.l.b16 %v3223
      %v3759 = vunpack.c.l.b16 %v3224
      %v3760 = vunpack.c.l.b16 %v3225
      %v3761 = vunpack.c.l.b16 %v3226
      %v3762 = vunpack.c.l.b16 %v3227
      %v3763 = vunpack.c.l.b16 %v3228
      %v3764 = vunpack.c.l.b16 %v3229
      %v3765 = vunpack.c.l.b16 %v3230
      %v3766 = vunpack.c.l.b16 %v3231
      %v3767 = vunpack.c.l.b16 %v3232
      %v3768 = vunpack.c.l.b16 %v3233
      %v3769 = vunpack.c.l.b16 %v3234
      %v3770 = vunpack.c.l.b16 %v3235
      %v3771 = vunpack.c.l.b16 %v3236
      %v3772 = vunpack.c.l.b16 %v3237
      %v3773 = vunpack.c.l.b16 %v3238
      %v3774 = vunpack.c.l.b16 %v3239
      %v3775 = vunpack.c.l.b16 %v3240
      %v3776 = vunpack.c.l.b16 %v3241
      %v3777 = vunpack.c.l.b16 %v3242
      %v3778 = vunpack.c.l.b16 %v3243
      %v3779 = vunpack.c.l.b16 %v3244
      %v3780 = vpack.c.b16 %v3525, %v3524
      %v3781 = vpack.c.b16 %v3527, %v3526
      %v3782 = vpack.c.b16 %v3529, %v3528
      %v3783 = vpack.c.b16 %v3531, %v3530
      %v3784 = vpack.c.b16 %v3533, %v3532
      %v3785 = vpack.c.b16 %v3535, %v3534
      %v3786 = vpack.c.b16 %v3537, %v3536
      %v3787 = vpack.c.b16 %v3539, %v3538
      %v3788 = vpack.c.b16 %v3541, %v3540
      %v3789 = vpack.c.b16 %v3543, %v3542
      %v3790 = vpack.c.b16 %v3545, %v3544
      %v3791 = vpack.c.b16 %v3547, %v3546
      %v3792 = vpack.c.b16 %v3549, %v3548
      %v3793 = vpack.c.b16 %v3551, %v3550
      %v3794 = vpack.c.b16 %v3553, %v3552
      %v3795 = vpack.c.b16 %v3555, %v3554
      %v3796 = vpack.c.b16 %v3557, %v3556
      %v3797 = vpack.c.b16 %v3559, %v3558
      %v3798 = vpack.c.b16 %v3561, %v3560
      %v3799 = vpack.c.b16 %v3563, %v3562
      %v3800 = vpack.c.b16 %v3565, %v3564
      %v3801 = vpack.c.b16 %v3567, %v3566
      %v3802 = vpack.c.b16 %v3569, %v3568
      %v3803 = vpack.c.b16 %v3571, %v3570
      %v3804 = vpack.c.b16 %v3573, %v3572
      %v3805 = vpack.c.b16 %v3575, %v3574
      %v3806 = vpack.c.b16 %v3577, %v3576
      %v3807 = vpack.c.b16 %v3579, %v3578
      %v3808 = vpack.c.b16 %v3581, %v3580
      %v3809 = vpack.c.b16 %v3583, %v3582
      %v3810 = vpack.c.b16 %v3585, %v3584
      %v3811 = vpack.c.b16 %v3587, %v3586
      %v3812 = vpack.c.b16 %v3589, %v3588
      %v3813 = vpack.c.b16 %v3591, %v3590
      %v3814 = vpack.c.b16 %v3593, %v3592
      %v3815 = vpack.c.b16 %v3595, %v3594
      %v3816 = vpack.c.b16 %v3597, %v3596
      %v3817 = vpack.c.b16 %v3599, %v3598
      %v3818 = vpack.c.b16 %v3601, %v3600
      %v3819 = vpack.c.b16 %v3603, %v3602
      %v3820 = vpack.c.b16 %v3605, %v3604
      %v3821 = vpack.c.b16 %v3607, %v3606
      %v3822 = vpack.c.b16 %v3609, %v3608
      %v3823 = vpack.c.b16 %v3611, %v3610
      %v3824 = vpack.c.b16 %v3613, %v3612
      %v3825 = vpack.c.b16 %v3615, %v3614
      %v3826 = vpack.c.b16 %v3617, %v3616
      %v3827 = vpack.c.b16 %v3619, %v3618
      %v3828 = vpack.c.b16 %v3621, %v3620
      %v3829 = vpack.c.b16 %v3623, %v3622
      %v3830 = vpack.c.b16 %v3625, %v3624
      %v3831 = vpack.c.b16 %v3627, %v3626
      %v3832 = vpack.c.b16 %v3629, %v3628
      %v3833 = vpack.c.b16 %v3631, %v3630
      %v3834 = vpack.c.b16 %v3633, %v3632
      %v3835 = vpack.c.b16 %v3635, %v3634
      %v3836 = vpack.c.b16 %v3637, %v3636
      %v3837 = vpack.c.b16 %v3639, %v3638
      %v3838 = vpack.c.b16 %v3641, %v3640
      %v3839 = vpack.c.b16 %v3643, %v3642
      %v3840 = vpack.c.b16 %v3645, %v3644
      %v3841 = vpack.c.b16 %v3647, %v3646
      %v3842 = vpack.c.b16 %v3649, %v3648
      %v3843 = vpack.c.b16 %v3651, %v3650
      %v3844 = vpack.c.b16 %v3653, %v3652
      %v3845 = vpack.c.b16 %v3655, %v3654
      %v3846 = vpack.c.b16 %v3657, %v3656
      %v3847 = vpack.c.b16 %v3659, %v3658
      %v3848 = vpack.c.b16 %v3661, %v3660
      %v3849 = vpack.c.b16 %v3663, %v3662
      %v3850 = vpack.c.b16 %v3665, %v3664
      %v3851 = vpack.c.b16 %v3667, %v3666
      %v3852 = vpack.c.b16 %v3669, %v3668
      %v3853 = vpack.c.b16 %v3671, %v3670
      %v3854 = vpack.c.b16 %v3673, %v3672
      %v3855 = vpack.c.b16 %v3675, %v3674
      %v3856 = vpack.c.b16 %v3677, %v3676
      %v3857 = vpack.c.b16 %v3679, %v3678
      %v3858 = vpack.c.b16 %v3681, %v3680
      %v3859 = vpack.c.b16 %v3683, %v3682
      %v3860 = vpack.c.b16 %v3685, %v3684
      %v3861 = vpack.c.b16 %v3687, %v3686
      %v3862 = vpack.c.b16 %v3689, %v3688
      %v3863 = vpack.c.b16 %v3691, %v3690
      %v3864 = vpack.c.b16 %v3693, %v3692
      %v3865 = vpack.c.b16 %v3695, %v3694
      %v3866 = vpack.c.b16 %v3697, %v3696
      %v3867 = vpack.c.b16 %v3699, %v3698
      %v3868 = vpack.c.b16 %v3701, %v3700
      %v3869 = vpack.c.b16 %v3703, %v3702
      %v3870 = vpack.c.b16 %v3705, %v3704
      %v3871 = vpack.c.b16 %v3707, %v3706
      %v3872 = vpack.c.b16 %v3709, %v3708
      %v3873 = vpack.c.b16 %v3711, %v3710
      %v3874 = vpack.c.b16 %v3713, %v3712
      %v3875 = vpack.c.b16 %v3715, %v3714
      %v3876 = vpack.c.b16 %v3717, %v3716
      %v3877 = vpack.c.b16 %v3719, %v3718
      %v3878 = vpack.c.b16 %v3721, %v3720
      %v3879 = vpack.c.b16 %v3723, %v3722
      %v3880 = vpack.c.b16 %v3725, %v3724
      %v3881 = vpack.c.b16 %v3727, %v3726
      %v3882 = vpack.c.b16 %v3729, %v3728
      %v3883 = vpack.c.b16 %v3731, %v3730
      %v3884 = vpack.c.b16 %v3733, %v3732
      %v3885 = vpack.c.b16 %v3735, %v3734
      %v3886 = vpack.c.b16 %v3737, %v3736
      %v3887 = vpack.c.b16 %v3739, %v3738
      %v3888 = vpack.c.b16 %v3741, %v3740
      %v3889 = vpack.c.b16 %v3743, %v3742
      %v3890 = vpack.c.b16 %v3745, %v3744
      %v3891 = vpack.c.b16 %v3747, %v3746
      %v3892 = vpack.c.b16 %v3749, %v3748
      %v3893 = vpack.c.b16 %v3751, %v3750
      %v3894 = vpack.c.b16 %v3753, %v3752
      %v3895 = vpack.c.b16 %v3755, %v3754
      %v3896 = vpack.c.b16 %v3757, %v3756
      %v3897 = vpack.c.b16 %v3759, %v3758
      %v3898 = vpack.c.b16 %v3761, %v3760
      %v3899 = vpack.c.b16 %v3763, %v3762
      %v3900 = vpack.c.b16 %v3765, %v3764
      %v3901 = vpack.c.b16 %v3767, %v3766
      %v3902 = vpack.c.b16 %v3769, %v3768
      %v3903 = vpack.c.b16 %v3771, %v3770
      %v3904 = vpack.c.b16 %v3773, %v3772
      %v3905 = vpack.c.b16 %v3775, %v3774
      %v3906 = vpack.c.b16 %v3777, %v3776
      %v3907 = vpack.c.b16 %v3779, %v3778
      %4036 = vmatprep.subr.bf16.mxu0 0
      %4037 = vmatpush1.bf16.msra.mxu0 %v3787
      %4038 = vmatprep.subr.bf16.mxu0 0
      %4039 = vmatpush1.bf16.msra.mxu0 %v3786
      %4040 = vmatprep.subr.bf16.mxu0 0
      %4041 = vmatpush1.bf16.msra.mxu0 %v3785
      %4042 = vmatprep.subr.bf16.mxu0 0
      %4043 = vmatpush1.bf16.msra.mxu0 %v3784
      %4044 = vmatprep.subr.bf16.mxu0 0
      %4045 = vmatpush1.bf16.msra.mxu0 %v3783
      %4046 = vmatprep.subr.bf16.mxu0 0
      %4047 = vmatpush1.bf16.msra.mxu0 %v3782
      %4048 = vmatprep.subr.bf16.mxu0 0
      %4049 = vmatpush1.bf16.msra.mxu0 %v3781
      %4050 = vmatprep.subr.bf16.mxu0 0
      %4051 = vmatpush1.bf16.msra.mxu0 %v3780
      %4052 = vmatprep.subr.bf16.mxu0 0
      %4053 = vmatpush2.bf16.msra.mxu0 %v3795
      %4054 = vmatprep.subr.bf16.mxu0 0
      %4055 = vmatpush2.bf16.msra.mxu0 %v3794
      %4056 = vmatprep.subr.bf16.mxu0 0
      %4057 = vmatpush2.bf16.msra.mxu0 %v3793
      %4058 = vmatprep.subr.bf16.mxu0 0
      %4059 = vmatpush2.bf16.msra.mxu0 %v3792
      %4060 = vmatprep.subr.bf16.mxu0 0
      %4061 = vmatpush2.bf16.msra.mxu0 %v3791
      %4062 = vmatprep.subr.bf16.mxu0 0
      %4063 = vmatpush2.bf16.msra.mxu0 %v3790
      %4064 = vmatprep.subr.bf16.mxu0 0
      %4065 = vmatpush2.bf16.msra.mxu0 %v3789
      %4066 = vmatprep.subr.bf16.mxu0 0
      %4067 = vmatpush2.bf16.msra.mxu0 %v3788
      %4068 = vmatprep.mubr.bf16.mxu0 %v3246
      %4069 = vmatmul.mubr.bf16.gmra.mxu0 %v3245
      %v4070 = vpop.f32.mrf.mxu0
      %v4071 = vadd.f32 %v3266, %v4070
      %v4072 = vpop.f32.mrf.mxu0
      %v4073 = vpop.f32.mrf.mxu0
      %v4074 = vpop.f32.mrf.mxu0
      %4075 = vdwg.mxu0
      %4076 = vmatprep.subr.bf16.mxu0 0
      %4077 = vmatpush1.bf16.msra.mxu0 %v3803
      %4078 = vmatprep.subr.bf16.mxu0 0
      %4079 = vmatpush1.bf16.msra.mxu0 %v3802
      %4080 = vmatprep.subr.bf16.mxu0 0
      %4081 = vmatpush1.bf16.msra.mxu0 %v3801
      %4082 = vmatprep.subr.bf16.mxu0 0
      %4083 = vmatpush1.bf16.msra.mxu0 %v3800
      %4084 = vmatprep.subr.bf16.mxu0 0
      %4085 = vmatpush1.bf16.msra.mxu0 %v3799
      %4086 = vmatprep.subr.bf16.mxu0 0
      %4087 = vmatpush1.bf16.msra.mxu0 %v3798
      %4088 = vmatprep.subr.bf16.mxu0 0
      %4089 = vmatpush1.bf16.msra.mxu0 %v3797
      %4090 = vmatprep.subr.bf16.mxu0 0
      %4091 = vmatpush1.bf16.msra.mxu0 %v3796
      %4092 = vmatprep.subr.bf16.mxu0 0
      %4093 = vmatpush2.bf16.msra.mxu0 %v3811
      %4094 = vmatprep.subr.bf16.mxu0 0
      %4095 = vmatpush2.bf16.msra.mxu0 %v3810
      %4096 = vmatprep.subr.bf16.mxu0 0
      %4097 = vmatpush2.bf16.msra.mxu0 %v3809
      %4098 = vmatprep.subr.bf16.mxu0 0
      %4099 = vmatpush2.bf16.msra.mxu0 %v3808
      %4100 = vmatprep.subr.bf16.mxu0 0
      %4101 = vmatpush2.bf16.msra.mxu0 %v3807
      %4102 = vmatprep.subr.bf16.mxu0 0
      %4103 = vmatpush2.bf16.msra.mxu0 %v3806
      %4104 = vmatprep.subr.bf16.mxu0 0
      %4105 = vmatpush2.bf16.msra.mxu0 %v3805
      %4106 = vmatprep.subr.bf16.mxu0 0
      %4107 = vmatpush2.bf16.msra.mxu0 %v3804
      %4108 = vmatprep.mubr.bf16.mxu0 %v3248
      %4109 = vmatmul.mubr.bf16.gmra.mxu0 %v3247
      %v4110 = vpop.f32.mrf.mxu0
      %v4111 = vadd.f32 %v4071, %v4110
      %v4112 = vpop.f32.mrf.mxu0
      %v4113 = vpop.f32.mrf.mxu0
      %v4114 = vpop.f32.mrf.mxu0
      %4115 = vdwg.mxu0
      %4116 = vmatprep.subr.bf16.mxu0 0
      %4117 = vmatpush1.bf16.msra.mxu0 %v3819
      %4118 = vmatprep.subr.bf16.mxu0 0
      %4119 = vmatpush1.bf16.msra.mxu0 %v3818
      %4120 = vmatprep.subr.bf16.mxu0 0
      %4121 = vmatpush1.bf16.msra.mxu0 %v3817
      %4122 = vmatprep.subr.bf16.mxu0 0
      %4123 = vmatpush1.bf16.msra.mxu0 %v3816
      %4124 = vmatprep.subr.bf16.mxu0 0
      %4125 = vmatpush1.bf16.msra.mxu0 %v3815
      %4126 = vmatprep.subr.bf16.mxu0 0
      %4127 = vmatpush1.bf16.msra.mxu0 %v3814
      %4128 = vmatprep.subr.bf16.mxu0 0
      %4129 = vmatpush1.bf16.msra.mxu0 %v3813
      %4130 = vmatprep.subr.bf16.mxu0 0
      %4131 = vmatpush1.bf16.msra.mxu0 %v3812
      %4132 = vmatprep.subr.bf16.mxu0 0
      %4133 = vmatpush2.bf16.msra.mxu0 %v3827
      %4134 = vmatprep.subr.bf16.mxu0 0
      %4135 = vmatpush2.bf16.msra.mxu0 %v3826
      %4136 = vmatprep.subr.bf16.mxu0 0
      %4137 = vmatpush2.bf16.msra.mxu0 %v3825
      %4138 = vmatprep.subr.bf16.mxu0 0
      %4139 = vmatpush2.bf16.msra.mxu0 %v3824
      %4140 = vmatprep.subr.bf16.mxu0 0
      %4141 = vmatpush2.bf16.msra.mxu0 %v3823
      %4142 = vmatprep.subr.bf16.mxu0 0
      %4143 = vmatpush2.bf16.msra.mxu0 %v3822
      %4144 = vmatprep.subr.bf16.mxu0 0
      %4145 = vmatpush2.bf16.msra.mxu0 %v3821
      %4146 = vmatprep.subr.bf16.mxu0 0
      %4147 = vmatpush2.bf16.msra.mxu0 %v3820
      %4148 = vmatprep.mubr.bf16.mxu0 %v3250
      %4149 = vmatmul.mubr.bf16.gmra.mxu0 %v3249
      %v4150 = vpop.f32.mrf.mxu0
      %v4151 = vadd.f32 %v4111, %v4150
      %v4152 = vpop.f32.mrf.mxu0
      %v4153 = vpop.f32.mrf.mxu0
      %v4154 = vpop.f32.mrf.mxu0
      %4155 = vdwg.mxu0
      %4156 = vmatprep.subr.bf16.mxu0 0
      %4157 = vmatpush1.bf16.msra.mxu0 %v3835
      %4158 = vmatprep.subr.bf16.mxu0 0
      %4159 = vmatpush1.bf16.msra.mxu0 %v3834
      %4160 = vmatprep.subr.bf16.mxu0 0
      %4161 = vmatpush1.bf16.msra.mxu0 %v3833
      %4162 = vmatprep.subr.bf16.mxu0 0
      %4163 = vmatpush1.bf16.msra.mxu0 %v3832
      %4164 = vmatprep.subr.bf16.mxu0 0
      %4165 = vmatpush1.bf16.msra.mxu0 %v3831
      %4166 = vmatprep.subr.bf16.mxu0 0
      %4167 = vmatpush1.bf16.msra.mxu0 %v3830
      %4168 = vmatprep.subr.bf16.mxu0 0
      %4169 = vmatpush1.bf16.msra.mxu0 %v3829
      %4170 = vmatprep.subr.bf16.mxu0 0
      %4171 = vmatpush1.bf16.msra.mxu0 %v3828
      %4172 = vmatprep.subr.bf16.mxu0 0
      %4173 = vmatpush2.bf16.msra.mxu0 %v3843
      %4174 = vmatprep.subr.bf16.mxu0 0
      %4175 = vmatpush2.bf16.msra.mxu0 %v3842
      %4176 = vmatprep.subr.bf16.mxu0 0
      %4177 = vmatpush2.bf16.msra.mxu0 %v3841
      %4178 = vmatprep.subr.bf16.mxu0 0
      %4179 = vmatpush2.bf16.msra.mxu0 %v3840
      %4180 = vmatprep.subr.bf16.mxu0 0
      %4181 = vmatpush2.bf16.msra.mxu0 %v3839
      %4182 = vmatprep.subr.bf16.mxu0 0
      %4183 = vmatpush2.bf16.msra.mxu0 %v3838
      %4184 = vmatprep.subr.bf16.mxu0 0
      %4185 = vmatpush2.bf16.msra.mxu0 %v3837
      %4186 = vmatprep.subr.bf16.mxu0 0
      %4187 = vmatpush2.bf16.msra.mxu0 %v3836
      %4188 = vmatprep.mubr.bf16.mxu0 %v3252
      %4189 = vmatmul.mubr.bf16.gmra.mxu0 %v3251
      %v4190 = vpop.f32.mrf.mxu0
      %v4191 = vadd.f32 %v4151, %v4190
      %v4192 = vpop.f32.mrf.mxu0
      %v4193 = vpop.f32.mrf.mxu0
      %v4194 = vpop.f32.mrf.mxu0
      %4195 = vdwg.mxu0
      %4196 = vmatprep.subr.bf16.mxu0 0
      %4197 = vmatpush1.bf16.msra.mxu0 %v3851
      %4198 = vmatprep.subr.bf16.mxu0 0
      %4199 = vmatpush1.bf16.msra.mxu0 %v3850
      %4200 = vmatprep.subr.bf16.mxu0 0
      %4201 = vmatpush1.bf16.msra.mxu0 %v3849
      %4202 = vmatprep.subr.bf16.mxu0 0
      %4203 = vmatpush1.bf16.msra.mxu0 %v3848
      %4204 = vmatprep.subr.bf16.mxu0 0
      %4205 = vmatpush1.bf16.msra.mxu0 %v3847
      %4206 = vmatprep.subr.bf16.mxu0 0
      %4207 = vmatpush1.bf16.msra.mxu0 %v3846
      %4208 = vmatprep.subr.bf16.mxu0 0
      %4209 = vmatpush1.bf16.msra.mxu0 %v3845
      %4210 = vmatprep.subr.bf16.mxu0 0
      %4211 = vmatpush1.bf16.msra.mxu0 %v3844
      %4212 = vmatprep.subr.bf16.mxu0 0
      %4213 = vmatpush2.bf16.msra.mxu0 %v3859
      %4214 = vmatprep.subr.bf16.mxu0 0
      %4215 = vmatpush2.bf16.msra.mxu0 %v3858
      %4216 = vmatprep.subr.bf16.mxu0 0
      %4217 = vmatpush2.bf16.msra.mxu0 %v3857
      %4218 = vmatprep.subr.bf16.mxu0 0
      %4219 = vmatpush2.bf16.msra.mxu0 %v3856
      %4220 = vmatprep.subr.bf16.mxu0 0
      %4221 = vmatpush2.bf16.msra.mxu0 %v3855
      %4222 = vmatprep.subr.bf16.mxu0 0
      %4223 = vmatpush2.bf16.msra.mxu0 %v3854
      %4224 = vmatprep.subr.bf16.mxu0 0
      %4225 = vmatpush2.bf16.msra.mxu0 %v3853
      %4226 = vmatprep.subr.bf16.mxu0 0
      %4227 = vmatpush2.bf16.msra.mxu0 %v3852
      %4228 = vmatprep.mubr.bf16.mxu0 %v3254
      %4229 = vmatmul.mubr.bf16.gmra.mxu0 %v3253
      %v4230 = vpop.f32.mrf.mxu0
      %v4231 = vadd.f32 %v4191, %v4230
      %v4232 = vpop.f32.mrf.mxu0
      %v4233 = vpop.f32.mrf.mxu0
      %v4234 = vpop.f32.mrf.mxu0
      %4235 = vdwg.mxu0
      %4236 = vmatprep.subr.bf16.mxu0 0
      %4237 = vmatpush1.bf16.msra.mxu0 %v3867
      %4238 = vmatprep.subr.bf16.mxu0 0
      %4239 = vmatpush1.bf16.msra.mxu0 %v3866
      %4240 = vmatprep.subr.bf16.mxu0 0
      %4241 = vmatpush1.bf16.msra.mxu0 %v3865
      %4242 = vmatprep.subr.bf16.mxu0 0
      %4243 = vmatpush1.bf16.msra.mxu0 %v3864
      %4244 = vmatprep.subr.bf16.mxu0 0
      %4245 = vmatpush1.bf16.msra.mxu0 %v3863
      %4246 = vmatprep.subr.bf16.mxu0 0
      %4247 = vmatpush1.bf16.msra.mxu0 %v3862
      %4248 = vmatprep.subr.bf16.mxu0 0
      %4249 = vmatpush1.bf16.msra.mxu0 %v3861
      %4250 = vmatprep.subr.bf16.mxu0 0
      %4251 = vmatpush1.bf16.msra.mxu0 %v3860
      %4252 = vmatprep.subr.bf16.mxu0 0
      %4253 = vmatpush2.bf16.msra.mxu0 %v3875
      %4254 = vmatprep.subr.bf16.mxu0 0
      %4255 = vmatpush2.bf16.msra.mxu0 %v3874
      %4256 = vmatprep.subr.bf16.mxu0 0
      %4257 = vmatpush2.bf16.msra.mxu0 %v3873
      %4258 = vmatprep.subr.bf16.mxu0 0
      %4259 = vmatpush2.bf16.msra.mxu0 %v3872
      %4260 = vmatprep.subr.bf16.mxu0 0
      %4261 = vmatpush2.bf16.msra.mxu0 %v3871
      %4262 = vmatprep.subr.bf16.mxu0 0
      %4263 = vmatpush2.bf16.msra.mxu0 %v3870
      %4264 = vmatprep.subr.bf16.mxu0 0
      %4265 = vmatpush2.bf16.msra.mxu0 %v3869
      %4266 = vmatprep.subr.bf16.mxu0 0
      %4267 = vmatpush2.bf16.msra.mxu0 %v3868
      %4268 = vmatprep.mubr.bf16.mxu0 %v3256
      %4269 = vmatmul.mubr.bf16.gmra.mxu0 %v3255
      %v4270 = vpop.f32.mrf.mxu0
      %v4271 = vadd.f32 %v4231, %v4270
      %v4272 = vpop.f32.mrf.mxu0
      %v4273 = vpop.f32.mrf.mxu0
      %v4274 = vpop.f32.mrf.mxu0
      %4275 = vdwg.mxu0
      %4276 = vmatprep.subr.bf16.mxu0 0
      %4277 = vmatpush1.bf16.msra.mxu0 %v3883
      %4278 = vmatprep.subr.bf16.mxu0 0
      %4279 = vmatpush1.bf16.msra.mxu0 %v3882
      %4280 = vmatprep.subr.bf16.mxu0 0
      %4281 = vmatpush1.bf16.msra.mxu0 %v3881
      %4282 = vmatprep.subr.bf16.mxu0 0
      %4283 = vmatpush1.bf16.msra.mxu0 %v3880
      %4284 = vmatprep.subr.bf16.mxu0 0
      %4285 = vmatpush1.bf16.msra.mxu0 %v3879
      %4286 = vmatprep.subr.bf16.mxu0 0
      %4287 = vmatpush1.bf16.msra.mxu0 %v3878
      %4288 = vmatprep.subr.bf16.mxu0 0
      %4289 = vmatpush1.bf16.msra.mxu0 %v3877
      %4290 = vmatprep.subr.bf16.mxu0 0
      %4291 = vmatpush1.bf16.msra.mxu0 %v3876
      %4292 = vmatprep.subr.bf16.mxu0 0
      %4293 = vmatpush2.bf16.msra.mxu0 %v3891
      %4294 = vmatprep.subr.bf16.mxu0 0
      %4295 = vmatpush2.bf16.msra.mxu0 %v3890
      %4296 = vmatprep.subr.bf16.mxu0 0
      %4297 = vmatpush2.bf16.msra.mxu0 %v3889
      %4298 = vmatprep.subr.bf16.mxu0 0
      %4299 = vmatpush2.bf16.msra.mxu0 %v3888
      %4300 = vmatprep.subr.bf16.mxu0 0
      %4301 = vmatpush2.bf16.msra.mxu0 %v3887
      %4302 = vmatprep.subr.bf16.mxu0 0
      %4303 = vmatpush2.bf16.msra.mxu0 %v3886
      %4304 = vmatprep.subr.bf16.mxu0 0
      %4305 = vmatpush2.bf16.msra.mxu0 %v3885
      %4306 = vmatprep.subr.bf16.mxu0 0
      %4307 = vmatpush2.bf16.msra.mxu0 %v3884
      %4308 = vmatprep.mubr.bf16.mxu0 %v3258
      %4309 = vmatmul.mubr.bf16.gmra.mxu0 %v3257
      %v4310 = vpop.f32.mrf.mxu0
      %v4311 = vadd.f32 %v4271, %v4310
      %v4312 = vpop.f32.mrf.mxu0
      %v4313 = vpop.f32.mrf.mxu0
      %v4314 = vpop.f32.mrf.mxu0
      %4315 = vdwg.mxu0
      %4316 = vmatprep.subr.bf16.mxu0 0
      %4317 = vmatpush1.bf16.msra.mxu0 %v3899
      %4318 = vmatprep.subr.bf16.mxu0 0
      %4319 = vmatpush1.bf16.msra.mxu0 %v3898
      %4320 = vmatprep.subr.bf16.mxu0 0
      %4321 = vmatpush1.bf16.msra.mxu0 %v3897
      %4322 = vmatprep.subr.bf16.mxu0 0
      %4323 = vmatpush1.bf16.msra.mxu0 %v3896
      %4324 = vmatprep.subr.bf16.mxu0 0
      %4325 = vmatpush1.bf16.msra.mxu0 %v3895
      %4326 = vmatprep.subr.bf16.mxu0 0
      %4327 = vmatpush1.bf16.msra.mxu0 %v3894
      %4328 = vmatprep.subr.bf16.mxu0 0
      %4329 = vmatpush1.bf16.msra.mxu0 %v3893
      %4330 = vmatprep.subr.bf16.mxu0 0
      %4331 = vmatpush1.bf16.msra.mxu0 %v3892
      %4332 = vmatprep.subr.bf16.mxu0 0
      %4333 = vmatpush2.bf16.msra.mxu0 %v3907
      %4334 = vmatprep.subr.bf16.mxu0 0
      %4335 = vmatpush2.bf16.msra.mxu0 %v3906
      %4336 = vmatprep.subr.bf16.mxu0 0
      %4337 = vmatpush2.bf16.msra.mxu0 %v3905
      %4338 = vmatprep.subr.bf16.mxu0 0
      %4339 = vmatpush2.bf16.msra.mxu0 %v3904
      %4340 = vmatprep.subr.bf16.mxu0 0
      %4341 = vmatpush2.bf16.msra.mxu0 %v3903
      %4342 = vmatprep.subr.bf16.mxu0 0
      %4343 = vmatpush2.bf16.msra.mxu0 %v3902
      %4344 = vmatprep.subr.bf16.mxu0 0
      %4345 = vmatpush2.bf16.msra.mxu0 %v3901
      %4346 = vmatprep.subr.bf16.mxu0 0
      %4347 = vmatpush2.bf16.msra.mxu0 %v3900
      %4348 = vmatprep.mubr.bf16.mxu0 %v3260
      %4349 = vmatmul.mubr.bf16.gmra.mxu0 %v3259
      %v4350 = vpop.f32.mrf.mxu0
      %v4351 = vadd.f32 %v4311, %v4350
      %v4352 = vpop.f32.mrf.mxu0
      %v4353 = vpop.f32.mrf.mxu0
      %v4354 = vpop.f32.mrf.mxu0
      %4355 = vdwg.mxu0
      %v4356 = vadd.f32 %v2364, %v4351
      %v4357 = vld [vmem:[%s73] sm:$0x1]
      %v4358 = vld [vmem:[%s75] sm:$0x1]
      %v4359 = vsel %vm1249, %v4356, 0.0
      %4360 = vadd.xlane.f32.xlu0 %v4359
      %v4361 = vpop.xlane.xlu0 %4360
      %v4362 = vmul.f32 %v4361, %v1781
      %v4363 = vsub.f32 %v4356, %v4362
      %v4364 = vmul.f32 %v4363, %v4363
      %v4365 = vsel %vm1249, %v4364, 0.0
      %4366 = vadd.xlane.f32.xlu0 %v4365
      %v4367 = vpop.xlane.xlu0 %4366
      %v4368 = vmul.f32 %v4367, %v1781
      %v4369 = vadd.f32 %v4368, 1e-05
      %v4370 = vrsqrt.pop %v4369
      %v4371 = vmul.f32 %v4363, %v4370
      %v4373 = vlaneseq
      %v4374 = vshrl.u32 %v4373, 7
      %v4375 = vsub.s32 0, %v4374
      %v4376 = vrot.slane %v4357, %v4375
      %v4378 = vmul.f32 %v4371, %v4376
      %v4380 = vlaneseq
      %v4381 = vshrl.u32 %v4380, 7
      %v4382 = vsub.s32 0, %v4381
      %v4383 = vrot.slane %v4358, %v4382
      %v4385 = vadd.f32 %v4378, %v4383
      %v4386 = vld [vmem:[%s1218] sm:$0xff]
      %v4387 = vld [vmem:[%s77] sm:$0xf]
      %v4388 = vld [vmem:[%s77 + $0x4] sm:$0xf]
      %v4389 = vpack.c.bf16 %v4386, %v4386
      %v4390 = vld [vmem:[%s79] sm:$0x1]
      %v4392 = vlaneseq
      %v4393 = vshrl.u32 %v4392, 7
      %v4394 = vsub.s32 0, %v4393
      %v4395 = vrot.slane %v4390, %v4394
      %v4399 = vunpack.c.l.b16 %v4387
      %v4400 = vunpack.c.l.b16 %v4388
      %v4401 = vpack.c.b16 %v4400, %v4399
      %v4404 = vsel %vm2006, %v4389, 0
      %4406 = vmatprep.subr.bf16.mxu0 0
      %4407 = vmatpush1.bf16.msra.mxu0 0
      %4408 = vmatprep.subr.bf16.mxu0 0
      %4409 = vmatpush1.bf16.msra.mxu0 0
      %4410 = vmatprep.subr.bf16.mxu0 0
      %4411 = vmatpush1.bf16.msra.mxu0 0
      %4412 = vmatprep.subr.bf16.mxu0 0
      %4413 = vmatpush1.bf16.msra.mxu0 0
      %4414 = vmatprep.subr.bf16.mxu0 0
      %4415 = vmatpush1.bf16.msra.mxu0 0
      %4416 = vmatprep.subr.bf16.mxu0 0
      %4417 = vmatpush1.bf16.msra.mxu0 0
      %4418 = vmatprep.subr.bf16.mxu0 0
      %4419 = vmatpush1.bf16.msra.mxu0 0
      %4420 = vmatprep.subr.bf16.mxu0 0
      %4421 = vmatpush1.bf16.msra.mxu0 %v4401
      %4422 = vmatprep.subr.bf16.mxu0 0
      %4423 = vmatpush2.bf16.msra.mxu0 0
      %4424 = vmatprep.subr.bf16.mxu0 0
      %4425 = vmatpush2.bf16.msra.mxu0 0
      %4426 = vmatprep.subr.bf16.mxu0 0
      %4427 = vmatpush2.bf16.msra.mxu0 0
      %4428 = vmatprep.subr.bf16.mxu0 0
      %4429 = vmatpush2.bf16.msra.mxu0 0
      %4430 = vmatprep.subr.bf16.mxu0 0
      %4431 = vmatpush2.bf16.msra.mxu0 0
      %4432 = vmatprep.subr.bf16.mxu0 0
      %4433 = vmatpush2.bf16.msra.mxu0 0
      %4434 = vmatprep.subr.bf16.mxu0 0
      %4435 = vmatpush2.bf16.msra.mxu0 0
      %4436 = vmatprep.subr.bf16.mxu0 0
      %4437 = vmatpush2.bf16.msra.mxu0 0
      %4438 = vmatprep.mubr.bf16.mxu0 0
      %4439 = vmatmul.mubr.bf16.gmra.mxu0 %v4404
      %v4440 = vpop.f32.mrf.mxu0
      %v4441 = vadd.f32 %v4395, %v4440
      %v4442 = vpop.f32.mrf.mxu0
      %v4443 = vpop.f32.mrf.mxu0
      %v4444 = vpop.f32.mrf.mxu0
      %4445 = vdwg.mxu0
      %v4446 = vmax.f32 %v4441, 0.0
      %v4447 = vadd.f32 %v4385, %v4446
      %4448 = vst.msk [vmem:[%s1222] sm:$0xff] %vm1249, %v4447
      %p4449 = scmp.lt.s32.totalorder %s92, 1
      %s4450 = scalar_select %p4449, %s92, 1
      %s4451 = smul.addr %s4450, 8
      %s4452 = scalar_lea.vmem %s81, %s4451
      // Predicated region
      $region181: #{iibmil_encoder_forward.4} parent=179 // pred_check
        %p4453 = pneg %p960
      $region182: #{iibmil_encoder_forward.4} parent=179 // pred_check_branch
        %4455 = sbr.rel (%p4453) target = $region184
      $region183: #{iibmil_encoder_forward.4} parent=179 // pred_region
        _
      $region184: #{iibmil_encoder_forward.4} parent=179 // pred_fallthru
        _
    $region180: #{iibmil_encoder_forward.4} parent=5 // pred_fallthru
      _
    %p4456 = scmp.le.s32.totalorder 2, %s87
    // Predicated region
    $region185: #{iibmil_encoder_forward.4} parent=5 // pred_check
      %p4457 = pneg %p4456
    $region186: #{iibmil_encoder_forward.4} parent=5 // pred_check_branch
      %4459 = sbr.rel (%p4457) target = $region188
    $region187: #{iibmil_encoder_forward.4} parent=5 // pred_region
      %s4460 = ssub.s32 %s87, 2
      // Predicated region
      $region189: #{iibmil_encoder_forward.4} parent=187 // pred_check
        %p4461 = pneg %p966
      $region190: #{iibmil_encoder_forward.4} parent=187 // pred_check_branch
        %4463 = sbr.rel (%p4461) target = $region192
      $region191: #{iibmil_encoder_forward.4} parent=187 // pred_region
        %p4464 = scmp.lt.s32.totalorder %s93, 1
        %s4465 = scalar_select %p4464, %s93, 1
        %s4466 = smul.addr %s4465, 8
        %s4467 = scalar_lea.vmem %s81, %s4466
      $region192: #{iibmil_encoder_forward.4} parent=187 // pred_fallthru
        _
    $region188: #{iibmil_encoder_forward.4} parent=5 // pred_fallthru
      _
  $region6: #{iibmil_encoder_forward.4} parent=0 // loop_footer
    %s91 = sadd.s32 1, %s87
  $region7: #{iibmil_encoder_forward.4} parent=0 // loop_footer_branch
    %86 = sbr.rel target = $region3
  $region8: #{iibmil_encoder_forward.4} parent=0 // loop_exit
    _

</llo_original>
